<compile_context>
chip_gen: v5e
topology: v5e:2x2
jax: 0.10.0
libtpu: 0.0.40
codegen_flags: <defaults>
</compile_context>

<pallas_src>
import functools

import jax
import jax.numpy as jnp
from jax import lax
from jax.experimental import pallas as pl
from jax.experimental.pallas import tpu as pltpu

NUM_HIDDENS = 256
NUM_HEADS = 4
HEAD_DIM = NUM_HIDDENS // NUM_HEADS     # 64
FFN_DIM = 1024
VOCAB = 29
PAD_VOCAB = 128                         # lane-dense padded logits width
MAX_POS = 12
NUM_LAYERS = 4
LN_EPS = 1e-5


# ----------------------------- kernel helpers ------------------------------

def _layernorm(x, w, b):
    # LayerNorm over the last dim (256), PyTorch semantics (biased variance).
    mu = jnp.mean(x, axis=-1, keepdims=True)
    var = jnp.mean((x - mu) ** 2, axis=-1, keepdims=True)
    return (x - mu) * lax.rsqrt(var + LN_EPS) * w + b


def _mha(xq, xkv, wq, wk, wv, wo, B, Tq, Tk):
    """Multi-head attention with the batch folded into rows.

    xq: (B*Tq, H) f32, xkv: (B*Tk, H) f32; weights are bf16 (H, H).
    The reference's masked_fill is a no-op (result discarded) -> no mask.
    Per-head outputs are accumulated through the matching rows of Wo so no
    head concatenation is required.
    """
    Q = jnp.dot(xq.astype(jnp.bfloat16), wq, preferred_element_type=jnp.float32)
    K = jnp.dot(xkv.astype(jnp.bfloat16), wk, preferred_element_type=jnp.float32)
    V = jnp.dot(xkv.astype(jnp.bfloat16), wv, preferred_element_type=jnp.float32)
    scale = 1.0 / (HEAD_DIM ** 0.5)

    outs = []
    for b in range(B):                      # static loop, tiny batch
        Qb = Q[b * Tq:(b + 1) * Tq]
        Kb = K[b * Tk:(b + 1) * Tk]
        Vb = V[b * Tk:(b + 1) * Tk]
        acc = jnp.zeros((Tq, NUM_HIDDENS), jnp.float32)
        for h in range(NUM_HEADS):          # static loop over 4 heads
            cs = slice(h * HEAD_DIM, (h + 1) * HEAD_DIM)
            A = jnp.dot(Qb[:, cs], Kb[:, cs].T,
                        preferred_element_type=jnp.float32) * scale
            A = A - jnp.max(A, axis=-1, keepdims=True)
            E = jnp.exp(A)
            P = E * pl.reciprocal(jnp.sum(E, axis=-1, keepdims=True), approx=True)
            Oh = jnp.dot(P.astype(jnp.bfloat16), Vb[:, cs].astype(jnp.bfloat16),
                         preferred_element_type=jnp.float32)
            acc = acc + jnp.dot(Oh.astype(jnp.bfloat16), wo[cs, :],
                                preferred_element_type=jnp.float32)
        outs.append(acc)
    return jnp.concatenate(outs, axis=0)    # (B*Tq, H)


# ----------------------------- fused decoder kernel ------------------------

def fused_decoder_kernel(ids_ref, xen_ref, word_ref, pos_ref,
                         wq1, wk1, wv1, wo1, ln1w, ln1b,
                         wq2, wk2, wv2, wo2, ln2w, ln2b,
                         w1, w2, ln3w, ln3b,
                         dense_w,
                         out_ref,
                         x_scratch,
                         *, B, T, S):
    layer = pl.program_id(0)
    BT = B * T

    # ---- layer 0: fused embedding (word one-hot matmul + positional add) ---
    @pl.when(layer == 0)
    def _embed():
        ids = ids_ref[...]                                        # (BT, 1) i32
        vocab_iota = lax.broadcasted_iota(jnp.int32, (BT, VOCAB), 1)
        onehot = (ids == vocab_iota).astype(jnp.float32)          # (BT, VOCAB)
        word = jnp.dot(onehot, word_ref[...],
                       preferred_element_type=jnp.float32)        # (BT, H)
        pos = jnp.concatenate([pos_ref[...][:T]] * B, axis=0)     # (BT, H)
        x_scratch[...] = word + pos

    x = x_scratch[...]                                            # (BT, H) f32
    xen = xen_ref[...]                                            # (B*S, H)

    # ---- one decoder block (masks are no-ops in the reference) ----
    # 1) self-attention + AddNorm
    x1 = _mha(x, x, wq1[0], wk1[0], wv1[0], wo1[0], B, T, T)
    x = x + _layernorm(x1, ln1w[0], ln1b[0])

    # 2) cross-attention + AddNorm
    x1 = _mha(x, xen, wq2[0], wk2[0], wv2[0], wo2[0], B, T, S)
    x = x + _layernorm(x1, ln2w[0], ln2b[0])

    # 3) position-wise FFN (Linear->ReLU->Linear->ReLU) + AddNorm
    h = jnp.maximum(jnp.dot(x.astype(jnp.bfloat16), w1[0],
                            preferred_element_type=jnp.float32), 0.0)
    x1 = jnp.maximum(jnp.dot(h.astype(jnp.bfloat16), w2[0],
                             preferred_element_type=jnp.float32), 0.0)
    x = x + _layernorm(x1, ln3w[0], ln3b[0])

    x_scratch[...] = x

    # ---- final dense projection, written once at the last layer ----
    @pl.when(layer == pl.num_programs(0) - 1)
    def _dense():
        out_ref[...] = jnp.dot(x.astype(jnp.bfloat16), dense_w[...],
                               preferred_element_type=jnp.float32)


def fused_decoder(params, ids, xen_flat, B, T, S):
    BT = B * T

    def wspec(p):       # stacked per-layer weights: (L, a, b) -> (1, a, b)
        return pl.BlockSpec((1,) + p.shape[1:], lambda l: (l, 0, 0))

    def cspec(p):       # layer-invariant arrays: full block, constant index
        nd = p.ndim
        return pl.BlockSpec(p.shape, lambda l, _nd=nd: (0,) * _nd)

    blk = params["blocks"]
    stacked_names = ("wq1", "wk1", "wv1", "wo1", "ln1w", "ln1b",
                     "wq2", "wk2", "wv2", "wo2", "ln2w", "ln2b",
                     "w1", "w2", "ln3w", "ln3b")

    inputs = (ids, xen_flat, params["word_ebd"], params["pos_ebd"],
              *[blk[k] for k in stacked_names],
              params["dense_w"])

    in_specs = ([cspec(ids), cspec(xen_flat),
                 cspec(params["word_ebd"]), cspec(params["pos_ebd"])]
                + [wspec(blk[k]) for k in stacked_names]
                + [cspec(params["dense_w"])])

    kernel = functools.partial(fused_decoder_kernel, B=B, T=T, S=S)

    return pl.pallas_call(
        kernel,
        out_shape=jax.ShapeDtypeStruct((BT, PAD_VOCAB), jnp.float32),
        grid_spec=pltpu.PrefetchScalarGridSpec(
            num_scalar_prefetch=0,
            grid=(NUM_LAYERS,),
            in_specs=in_specs,
            out_specs=pl.BlockSpec((BT, PAD_VOCAB), lambda l: (0, 0)),
            scratch_shapes=[pltpu.VMEM((BT, NUM_HIDDENS), jnp.float32)],
        ),
        compiler_params=pltpu.CompilerParams(
            dimension_semantics=("arbitrary",),
        ),
    )(*inputs)


# ----------------------------- parameters ----------------------------------

def init_params(key):
    n_keys = 2 + NUM_LAYERS * 10 + 1
    keys = iter(jax.random.split(key, n_keys))

    def lin(n_in, n_out, scale):
        w = jax.random.normal(next(keys), (n_in, n_out), jnp.float32) * scale
        return w.astype(jnp.bfloat16)

    # Embedding tables kept in f32 (tiny); gathered via one-hot matmul.
    word_ebd = jax.random.normal(next(keys), (VOCAB, NUM_HIDDENS), jnp.float32)
    pos_ebd = jax.random.normal(next(keys), (MAX_POS, NUM_HIDDENS), jnp.float32)

    names = ("wq1", "wk1", "wv1", "wo1", "wq2", "wk2", "wv2", "wo2", "w1", "w2")
    per_layer = {k: [] for k in names}
    for _ in range(NUM_LAYERS):
        for k in ("wq1", "wk1", "wv1", "wo1", "wq2", "wk2", "wv2", "wo2"):
            per_layer[k].append(lin(NUM_HIDDENS, NUM_HIDDENS, 0.05))
        per_layer["w1"].append(lin(NUM_HIDDENS, FFN_DIM, 0.05))
        per_layer["w2"].append(lin(FFN_DIM, NUM_HIDDENS, 0.03))

    blocks = {k: jnp.stack(v) for k, v in per_layer.items()}
    ones = jnp.ones((NUM_LAYERS, 1, NUM_HIDDENS), jnp.float32)
    zeros = jnp.zeros((NUM_LAYERS, 1, NUM_HIDDENS), jnp.float32)
    blocks["ln1w"] = ones
    blocks["ln2w"] = ones
    blocks["ln3w"] = ones
    blocks["ln1b"] = zeros
    blocks["ln2b"] = zeros
    blocks["ln3b"] = zeros

    dense = jax.random.normal(next(keys), (NUM_HIDDENS, VOCAB), jnp.float32) * 0.05
    dense_w = jnp.pad(dense, ((0, 0), (0, PAD_VOCAB - VOCAB))).astype(jnp.bfloat16)

    return dict(word_ebd=word_ebd, pos_ebd=pos_ebd, blocks=blocks,
                dense_w=dense_w)


# ----------------------------- full decoder --------------------------------

@jax.jit
def decoder_forward(params, X_t, O_m, X_en, I_m):
    # O_m / I_m are accepted for interface parity; the reference applies
    # masked_fill NON-in-place and discards the result, so masks are no-ops.
    del O_m, I_m
    B, T = X_t.shape
    S = X_en.shape[1]
    ids = X_t.reshape(B * T, 1).astype(jnp.int32)
    xen_flat = X_en.reshape(B * S, NUM_HIDDENS).astype(jnp.float32)
    logits = fused_decoder(params, ids, xen_flat, B, T, S)   # (B*T, 128)
    return logits.reshape(B, T, PAD_VOCAB)[:, :, :VOCAB]


# ----------------------------- main -----------------------------------------

if __name__ == "__main__":
    key = jax.random.PRNGKey(0)
    kp, kt, ke = jax.random.split(key, 3)

    params = init_params(kp)

    B, T, S = 2, 8, 8
    X_t = jax.random.randint(kt, (B, T), 0, VOCAB, dtype=jnp.int32)
    X_en = jax.random.normal(ke, (B, S, NUM_HIDDENS), jnp.float32)
    O_m = jnp.ones((B, T), jnp.float32)
    I_m = jnp.ones((B, S), jnp.float32)

    out = decoder_forward(params, X_t, O_m, X_en, I_m)
    out = jax.block_until_ready(out)

    assert out.shape == (B, T, VOCAB), out.shape
    assert out.dtype == jnp.float32, out.dtype
    assert bool(jnp.all(jnp.isfinite(out)))
    print("KERNEL_OK")
</pallas_src>

<mosaic_0001>
module attributes {stable_mosaic.version = 11 : i64} {
  func.func @fused_decoder_kernel(%arg0: i32, %arg1: memref<16x1xi32, #tpu.memory_space<vmem>>, %arg2: memref<16x256xf32, #tpu.memory_space<vmem>>, %arg3: memref<29x256xf32, #tpu.memory_space<vmem>>, %arg4: memref<12x256xf32, #tpu.memory_space<vmem>>, %arg5: memref<1x256x256xbf16, #tpu.memory_space<vmem>>, %arg6: memref<1x256x256xbf16, #tpu.memory_space<vmem>>, %arg7: memref<1x256x256xbf16, #tpu.memory_space<vmem>>, %arg8: memref<1x256x256xbf16, #tpu.memory_space<vmem>>, %arg9: memref<1x1x256xf32, #tpu.memory_space<vmem>>, %arg10: memref<1x1x256xf32, #tpu.memory_space<vmem>>, %arg11: memref<1x256x256xbf16, #tpu.memory_space<vmem>>, %arg12: memref<1x256x256xbf16, #tpu.memory_space<vmem>>, %arg13: memref<1x256x256xbf16, #tpu.memory_space<vmem>>, %arg14: memref<1x256x256xbf16, #tpu.memory_space<vmem>>, %arg15: memref<1x1x256xf32, #tpu.memory_space<vmem>>, %arg16: memref<1x1x256xf32, #tpu.memory_space<vmem>>, %arg17: memref<1x256x1024xbf16, #tpu.memory_space<vmem>>, %arg18: memref<1x1024x256xbf16, #tpu.memory_space<vmem>>, %arg19: memref<1x1x256xf32, #tpu.memory_space<vmem>>, %arg20: memref<1x1x256xf32, #tpu.memory_space<vmem>>, %arg21: memref<256x128xbf16, #tpu.memory_space<vmem>>, %arg22: memref<16x128xf32, #tpu.memory_space<vmem>>, %arg23: memref<16x256xf32, #tpu.memory_space<vmem>>) attributes {dimension_semantics = [#tpu.dimension_semantics<arbitrary>], iteration_bounds = array<i64: 4>, scalar_prefetch = 0 : i64, scratch_operands = 1 : i64, tpu.core_type = #tpu.core_type<tc>, window_params = [{pipeline_mode = #tpu.pipeline_mode<synchronous>, transform_indices = @transform_0, window_bounds = array<i64: 16, 1>}, {pipeline_mode = #tpu.pipeline_mode<synchronous>, transform_indices = @transform_1, window_bounds = array<i64: 16, 256>}, {pipeline_mode = #tpu.pipeline_mode<synchronous>, transform_indices = @transform_2, window_bounds = array<i64: 29, 256>}, {pipeline_mode = #tpu.pipeline_mode<synchronous>, transform_indices = @transform_3, window_bounds = array<i64: 12, 256>}, {transform_indices = @transform_4, window_bounds = array<i64: 1, 256, 256>}, {transform_indices = @transform_5, window_bounds = array<i64: 1, 256, 256>}, {transform_indices = @transform_6, window_bounds = array<i64: 1, 256, 256>}, {transform_indices = @transform_7, window_bounds = array<i64: 1, 256, 256>}, {transform_indices = @transform_8, window_bounds = array<i64: 1, 1, 256>}, {transform_indices = @transform_9, window_bounds = array<i64: 1, 1, 256>}, {transform_indices = @transform_10, window_bounds = array<i64: 1, 256, 256>}, {transform_indices = @transform_11, window_bounds = array<i64: 1, 256, 256>}, {transform_indices = @transform_12, window_bounds = array<i64: 1, 256, 256>}, {transform_indices = @transform_13, window_bounds = array<i64: 1, 256, 256>}, {transform_indices = @transform_14, window_bounds = array<i64: 1, 1, 256>}, {transform_indices = @transform_15, window_bounds = array<i64: 1, 1, 256>}, {transform_indices = @transform_16, window_bounds = array<i64: 1, 256, 1024>}, {transform_indices = @transform_17, window_bounds = array<i64: 1, 1024, 256>}, {transform_indices = @transform_18, window_bounds = array<i64: 1, 1, 256>}, {transform_indices = @transform_19, window_bounds = array<i64: 1, 1, 256>}, {pipeline_mode = #tpu.pipeline_mode<synchronous>, transform_indices = @transform_20, window_bounds = array<i64: 256, 128>}, {pipeline_mode = #tpu.pipeline_mode<synchronous>, transform_indices = @transform_21, window_bounds = array<i64: 16, 128>}]} {
    %c0_i32 = arith.constant 0 : i32
    %0 = arith.cmpi eq, %arg0, %c0_i32 : i32
    %1 = arith.extui %0 : i1 to i32
    %c0_i32_0 = arith.constant 0 : i32
    %2 = arith.cmpi ne, %1, %c0_i32_0 : i32
    scf.if %2 {
      %c0_179 = arith.constant 0 : index
      %c0_180 = arith.constant 0 : index
      %532 = vector.load %arg1[%c0_179, %c0_180] : memref<16x1xi32, #tpu.memory_space<vmem>>, vector<16x1xi32>
      %533 = tpu.iota {dimensions = array<i32: 1>} : vector<16x29xi32>
      %534 = vector.broadcast %532 : vector<16x1xi32> to vector<16x29xi32>
      %535 = arith.cmpi eq, %534, %533 : vector<16x29xi32>
      %536 = arith.extui %535 : vector<16x29xi1> to vector<16x29xi32>
      %537 = arith.sitofp %536 : vector<16x29xi32> to vector<16x29xf32>
      %c0_181 = arith.constant 0 : index
      %c0_182 = arith.constant 0 : index
      %538 = vector.load %arg3[%c0_181, %c0_182] : memref<29x256xf32, #tpu.memory_space<vmem>>, vector<29x256xf32>
      %cst_183 = arith.constant dense<0.000000e+00> : vector<16x256xf32>
      %539 = tpu.matmul %537, %538, %cst_183 {dimension_numbers = #tpu.dot_dimension_numbers<[1], [0], [0], [1], [0, 0, 1, 1], [], []>} : vector<16x29xf32>, vector<29x256xf32>, vector<16x256xf32> -> vector<16x256xf32>
      %c0_184 = arith.constant 0 : index
      %c0_185 = arith.constant 0 : index
      %540 = vector.load %arg4[%c0_184, %c0_185] : memref<12x256xf32, #tpu.memory_space<vmem>>, vector<12x256xf32>
      %541 = vector.extract_strided_slice %540 {offsets = [0, 0], sizes = [8, 256], strides = [1, 1]} : vector<12x256xf32> to vector<8x256xf32>
      %542 = tpu.concatenate %541, %541 in 0 : vector<8x256xf32>, vector<8x256xf32> -> vector<16x256xf32>
      %543 = arith.addf %539, %542 : vector<16x256xf32>
      %c0_186 = arith.constant 0 : index
      %c0_187 = arith.constant 0 : index
      %544 = vector.load %arg23[%c0_186, %c0_187] : memref<16x256xf32, #tpu.memory_space<vmem>>, vector<16x256xf32>
      tpu.vector_store %arg23[%c0_186, %c0_187], %543 {strides = array<i32>} : memref<16x256xf32, #tpu.memory_space<vmem>>, vector<16x256xf32>,
    } else {
    }
    %c0 = arith.constant 0 : index
    %c0_1 = arith.constant 0 : index
    %3 = vector.load %arg23[%c0, %c0_1] : memref<16x256xf32, #tpu.memory_space<vmem>>, vector<16x256xf32>
    %c0_2 = arith.constant 0 : index
    %c0_3 = arith.constant 0 : index
    %4 = vector.load %arg2[%c0_2, %c0_3] : memref<16x256xf32, #tpu.memory_space<vmem>>, vector<16x256xf32>
    %c0_4 = arith.constant 0 : index
    %c0_5 = arith.constant 0 : index
    %c0_6 = arith.constant 0 : index
    %5 = vector.load %arg5[%c0_4, %c0_5, %c0_6] : memref<1x256x256xbf16, #tpu.memory_space<vmem>>, vector<1x256x256xbf16>
    %6 = vector.shape_cast %5 : vector<1x256x256xbf16> to vector<256x256xbf16>
    %c0_7 = arith.constant 0 : index
    %c0_8 = arith.constant 0 : index
    %c0_9 = arith.constant 0 : index
    %7 = vector.load %arg6[%c0_7, %c0_8, %c0_9] : memref<1x256x256xbf16, #tpu.memory_space<vmem>>, vector<1x256x256xbf16>
    %8 = vector.shape_cast %7 : vector<1x256x256xbf16> to vector<256x256xbf16>
    %c0_10 = arith.constant 0 : index
    %c0_11 = arith.constant 0 : index
    %c0_12 = arith.constant 0 : index
    %9 = vector.load %arg7[%c0_10, %c0_11, %c0_12] : memref<1x256x256xbf16, #tpu.memory_space<vmem>>, vector<1x256x256xbf16>
    %10 = vector.shape_cast %9 : vector<1x256x256xbf16> to vector<256x256xbf16>
    %c0_13 = arith.constant 0 : index
    %c0_14 = arith.constant 0 : index
    %c0_15 = arith.constant 0 : index
    %11 = vector.load %arg8[%c0_13, %c0_14, %c0_15] : memref<1x256x256xbf16, #tpu.memory_space<vmem>>, vector<1x256x256xbf16>
    %12 = vector.shape_cast %11 : vector<1x256x256xbf16> to vector<256x256xbf16>
    %13 = arith.truncf %3 : vector<16x256xf32> to vector<16x256xbf16>
    %cst = arith.constant dense<0.000000e+00> : vector<16x256xf32>
    %14 = tpu.matmul %13, %6, %cst {dimension_numbers = #tpu.dot_dimension_numbers<[1], [0], [0], [1], [0, 0, 1, 1], [], []>} : vector<16x256xbf16>, vector<256x256xbf16>, vector<16x256xf32> -> vector<16x256xf32>
    %15 = arith.truncf %3 : vector<16x256xf32> to vector<16x256xbf16>
    %cst_16 = arith.constant dense<0.000000e+00> : vector<16x256xf32>
    %16 = tpu.matmul %15, %8, %cst_16 {dimension_numbers = #tpu.dot_dimension_numbers<[1], [0], [0], [1], [0, 0, 1, 1], [], []>} : vector<16x256xbf16>, vector<256x256xbf16>, vector<16x256xf32> -> vector<16x256xf32>
    %17 = arith.truncf %3 : vector<16x256xf32> to vector<16x256xbf16>
    %cst_17 = arith.constant dense<0.000000e+00> : vector<16x256xf32>
    %18 = tpu.matmul %17, %10, %cst_17 {dimension_numbers = #tpu.dot_dimension_numbers<[1], [0], [0], [1], [0, 0, 1, 1], [], []>} : vector<16x256xbf16>, vector<256x256xbf16>, vector<16x256xf32> -> vector<16x256xf32>
    %19 = vector.extract_strided_slice %14 {offsets = [0, 0], sizes = [8, 256], strides = [1, 1]} : vector<16x256xf32> to vector<8x256xf32>
    %20 = vector.extract_strided_slice %16 {offsets = [0, 0], sizes = [8, 256], strides = [1, 1]} : vector<16x256xf32> to vector<8x256xf32>
    %21 = vector.extract_strided_slice %18 {offsets = [0, 0], sizes = [8, 256], strides = [1, 1]} : vector<16x256xf32> to vector<8x256xf32>
    %cst_18 = arith.constant 0.000000e+00 : f32
    %22 = vector.broadcast %cst_18 : f32 to vector<8x256xf32>
    %23 = vector.extract_strided_slice %19 {offsets = [0, 0], sizes = [8, 64], strides = [1, 1]} : vector<8x256xf32> to vector<8x64xf32>
    %24 = vector.extract_strided_slice %20 {offsets = [0, 0], sizes = [8, 64], strides = [1, 1]} : vector<8x256xf32> to vector<8x64xf32>
    %25 = tpu.transpose %24, [1, 0] : vector<8x64xf32> -> vector<64x8xf32>
    %cst_19 = arith.constant dense<0.000000e+00> : vector<8x8xf32>
    %26 = tpu.matmul %23, %25, %cst_19 {dimension_numbers = #tpu.dot_dimension_numbers<[1], [0], [0], [1], [0, 0, 1, 1], [], []>} : vector<8x64xf32>, vector<64x8xf32>, vector<8x8xf32> -> vector<8x8xf32>
    %cst_20 = arith.constant 1.250000e-01 : f32
    %27 = vector.broadcast %cst_20 : f32 to vector<8x8xf32>
    %28 = arith.mulf %26, %27 : vector<8x8xf32>
    %cst_21 = arith.constant dense<0xFF800000> : vector<8xf32>
    %29 = vector.multi_reduction <maximumf>, %28, %cst_21 [1] : vector<8x8xf32> to vector<8xf32>
    %30 = vector.shape_cast %29 : vector<8xf32> to vector<8x1xf32>
    %31 = vector.broadcast %30 : vector<8x1xf32> to vector<8x8xf32>
    %32 = arith.subf %28, %31 : vector<8x8xf32>
    %33 = math.exp %32 : vector<8x8xf32>
    %cst_22 = arith.constant dense<0.000000e+00> : vector<8xf32>
    %34 = vector.multi_reduction <add>, %33, %cst_22 [1] : vector<8x8xf32> to vector<8xf32>
    %35 = vector.shape_cast %34 : vector<8xf32> to vector<8x1xf32>
    %36 = tpu.reciprocal %35 {approx = true} : vector<8x1xf32> -> vector<8x1xf32>
    %37 = vector.broadcast %36 : vector<8x1xf32> to vector<8x8xf32>
    %38 = arith.mulf %33, %37 : vector<8x8xf32>
    %39 = arith.truncf %38 : vector<8x8xf32> to vector<8x8xbf16>
    %40 = vector.extract_strided_slice %21 {offsets = [0, 0], sizes = [8, 64], strides = [1, 1]} : vector<8x256xf32> to vector<8x64xf32>
    %41 = arith.truncf %40 : vector<8x64xf32> to vector<8x64xbf16>
    %cst_23 = arith.constant dense<0.000000e+00> : vector<8x64xf32>
    %42 = tpu.matmul %39, %41, %cst_23 {dimension_numbers = #tpu.dot_dimension_numbers<[1], [0], [0], [1], [0, 0, 1, 1], [], []>} : vector<8x8xbf16>, vector<8x64xbf16>, vector<8x64xf32> -> vector<8x64xf32>
    %43 = arith.truncf %42 : vector<8x64xf32> to vector<8x64xbf16>
    %44 = vector.extract_strided_slice %12 {offsets = [0, 0], sizes = [64, 256], strides = [1, 1]} : vector<256x256xbf16> to vector<64x256xbf16>
    %cst_24 = arith.constant dense<0.000000e+00> : vector<8x256xf32>
    %45 = tpu.matmul %43, %44, %cst_24 {dimension_numbers = #tpu.dot_dimension_numbers<[1], [0], [0], [1], [0, 0, 1, 1], [], []>} : vector<8x64xbf16>, vector<64x256xbf16>, vector<8x256xf32> -> vector<8x256xf32>
    %46 = arith.addf %22, %45 : vector<8x256xf32>
    %47 = vector.extract_strided_slice %19 {offsets = [0, 64], sizes = [8, 64], strides = [1, 1]} : vector<8x256xf32> to vector<8x64xf32>
    %48 = vector.extract_strided_slice %20 {offsets = [0, 64], sizes = [8, 64], strides = [1, 1]} : vector<8x256xf32> to vector<8x64xf32>
    %49 = tpu.transpose %48, [1, 0] : vector<8x64xf32> -> vector<64x8xf32>
    %cst_25 = arith.constant dense<0.000000e+00> : vector<8x8xf32>
    %50 = tpu.matmul %47, %49, %cst_25 {dimension_numbers = #tpu.dot_dimension_numbers<[1], [0], [0], [1], [0, 0, 1, 1], [], []>} : vector<8x64xf32>, vector<64x8xf32>, vector<8x8xf32> -> vector<8x8xf32>
    %cst_26 = arith.constant 1.250000e-01 : f32
    %51 = vector.broadcast %cst_26 : f32 to vector<8x8xf32>
    %52 = arith.mulf %50, %51 : vector<8x8xf32>
    %cst_27 = arith.constant dense<0xFF800000> : vector<8xf32>
    %53 = vector.multi_reduction <maximumf>, %52, %cst_27 [1] : vector<8x8xf32> to vector<8xf32>
    %54 = vector.shape_cast %53 : vector<8xf32> to vector<8x1xf32>
    %55 = vector.broadcast %54 : vector<8x1xf32> to vector<8x8xf32>
    %56 = arith.subf %52, %55 : vector<8x8xf32>
    %57 = math.exp %56 : vector<8x8xf32>
    %cst_28 = arith.constant dense<0.000000e+00> : vector<8xf32>
    %58 = vector.multi_reduction <add>, %57, %cst_28 [1] : vector<8x8xf32> to vector<8xf32>
    %59 = vector.shape_cast %58 : vector<8xf32> to vector<8x1xf32>
    %60 = tpu.reciprocal %59 {approx = true} : vector<8x1xf32> -> vector<8x1xf32>
    %61 = vector.broadcast %60 : vector<8x1xf32> to vector<8x8xf32>
    %62 = arith.mulf %57, %61 : vector<8x8xf32>
    %63 = arith.truncf %62 : vector<8x8xf32> to vector<8x8xbf16>
    %64 = vector.extract_strided_slice %21 {offsets = [0, 64], sizes = [8, 64], strides = [1, 1]} : vector<8x256xf32> to vector<8x64xf32>
    %65 = arith.truncf %64 : vector<8x64xf32> to vector<8x64xbf16>
    %cst_29 = arith.constant dense<0.000000e+00> : vector<8x64xf32>
    %66 = tpu.matmul %63, %65, %cst_29 {dimension_numbers = #tpu.dot_dimension_numbers<[1], [0], [0], [1], [0, 0, 1, 1], [], []>} : vector<8x8xbf16>, vector<8x64xbf16>, vector<8x64xf32> -> vector<8x64xf32>
    %67 = arith.truncf %66 : vector<8x64xf32> to vector<8x64xbf16>
    %68 = vector.extract_strided_slice %12 {offsets = [64, 0], sizes = [64, 256], strides = [1, 1]} : vector<256x256xbf16> to vector<64x256xbf16>
    %cst_30 = arith.constant dense<0.000000e+00> : vector<8x256xf32>
    %69 = tpu.matmul %67, %68, %cst_30 {dimension_numbers = #tpu.dot_dimension_numbers<[1], [0], [0], [1], [0, 0, 1, 1], [], []>} : vector<8x64xbf16>, vector<64x256xbf16>, vector<8x256xf32> -> vector<8x256xf32>
    %70 = arith.addf %46, %69 : vector<8x256xf32>
    %71 = vector.extract_strided_slice %19 {offsets = [0, 128], sizes = [8, 64], strides = [1, 1]} : vector<8x256xf32> to vector<8x64xf32>
    %72 = vector.extract_strided_slice %20 {offsets = [0, 128], sizes = [8, 64], strides = [1, 1]} : vector<8x256xf32> to vector<8x64xf32>
    %73 = tpu.transpose %72, [1, 0] : vector<8x64xf32> -> vector<64x8xf32>
    %cst_31 = arith.constant dense<0.000000e+00> : vector<8x8xf32>
    %74 = tpu.matmul %71, %73, %cst_31 {dimension_numbers = #tpu.dot_dimension_numbers<[1], [0], [0], [1], [0, 0, 1, 1], [], []>} : vector<8x64xf32>, vector<64x8xf32>, vector<8x8xf32> -> vector<8x8xf32>
    %cst_32 = arith.constant 1.250000e-01 : f32
    %75 = vector.broadcast %cst_32 : f32 to vector<8x8xf32>
    %76 = arith.mulf %74, %75 : vector<8x8xf32>
    %cst_33 = arith.constant dense<0xFF800000> : vector<8xf32>
    %77 = vector.multi_reduction <maximumf>, %76, %cst_33 [1] : vector<8x8xf32> to vector<8xf32>
    %78 = vector.shape_cast %77 : vector<8xf32> to vector<8x1xf32>
    %79 = vector.broadcast %78 : vector<8x1xf32> to vector<8x8xf32>
    %80 = arith.subf %76, %79 : vector<8x8xf32>
    %81 = math.exp %80 : vector<8x8xf32>
    %cst_34 = arith.constant dense<0.000000e+00> : vector<8xf32>
    %82 = vector.multi_reduction <add>, %81, %cst_34 [1] : vector<8x8xf32> to vector<8xf32>
    %83 = vector.shape_cast %82 : vector<8xf32> to vector<8x1xf32>
    %84 = tpu.reciprocal %83 {approx = true} : vector<8x1xf32> -> vector<8x1xf32>
    %85 = vector.broadcast %84 : vector<8x1xf32> to vector<8x8xf32>
    %86 = arith.mulf %81, %85 : vector<8x8xf32>
    %87 = arith.truncf %86 : vector<8x8xf32> to vector<8x8xbf16>
    %88 = vector.extract_strided_slice %21 {offsets = [0, 128], sizes = [8, 64], strides = [1, 1]} : vector<8x256xf32> to vector<8x64xf32>
    %89 = arith.truncf %88 : vector<8x64xf32> to vector<8x64xbf16>
    %cst_35 = arith.constant dense<0.000000e+00> : vector<8x64xf32>
    %90 = tpu.matmul %87, %89, %cst_35 {dimension_numbers = #tpu.dot_dimension_numbers<[1], [0], [0], [1], [0, 0, 1, 1], [], []>} : vector<8x8xbf16>, vector<8x64xbf16>, vector<8x64xf32> -> vector<8x64xf32>
    %91 = arith.truncf %90 : vector<8x64xf32> to vector<8x64xbf16>
    %92 = vector.extract_strided_slice %12 {offsets = [128, 0], sizes = [64, 256], strides = [1, 1]} : vector<256x256xbf16> to vector<64x256xbf16>
    %cst_36 = arith.constant dense<0.000000e+00> : vector<8x256xf32>
    %93 = tpu.matmul %91, %92, %cst_36 {dimension_numbers = #tpu.dot_dimension_numbers<[1], [0], [0], [1], [0, 0, 1, 1], [], []>} : vector<8x64xbf16>, vector<64x256xbf16>, vector<8x256xf32> -> vector<8x256xf32>
    %94 = arith.addf %70, %93 : vector<8x256xf32>
    %95 = vector.extract_strided_slice %19 {offsets = [0, 192], sizes = [8, 64], strides = [1, 1]} : vector<8x256xf32> to vector<8x64xf32>
    %96 = vector.extract_strided_slice %20 {offsets = [0, 192], sizes = [8, 64], strides = [1, 1]} : vector<8x256xf32> to vector<8x64xf32>
    %97 = tpu.transpose %96, [1, 0] : vector<8x64xf32> -> vector<64x8xf32>
    %cst_37 = arith.constant dense<0.000000e+00> : vector<8x8xf32>
    %98 = tpu.matmul %95, %97, %cst_37 {dimension_numbers = #tpu.dot_dimension_numbers<[1], [0], [0], [1], [0, 0, 1, 1], [], []>} : vector<8x64xf32>, vector<64x8xf32>, vector<8x8xf32> -> vector<8x8xf32>
    %cst_38 = arith.constant 1.250000e-01 : f32
    %99 = vector.broadcast %cst_38 : f32 to vector<8x8xf32>
    %100 = arith.mulf %98, %99 : vector<8x8xf32>
    %cst_39 = arith.constant dense<0xFF800000> : vector<8xf32>
    %101 = vector.multi_reduction <maximumf>, %100, %cst_39 [1] : vector<8x8xf32> to vector<8xf32>
    %102 = vector.shape_cast %101 : vector<8xf32> to vector<8x1xf32>
    %103 = vector.broadcast %102 : vector<8x1xf32> to vector<8x8xf32>
    %104 = arith.subf %100, %103 : vector<8x8xf32>
    %105 = math.exp %104 : vector<8x8xf32>
    %cst_40 = arith.constant dense<0.000000e+00> : vector<8xf32>
    %106 = vector.multi_reduction <add>, %105, %cst_40 [1] : vector<8x8xf32> to vector<8xf32>
    %107 = vector.shape_cast %106 : vector<8xf32> to vector<8x1xf32>
    %108 = tpu.reciprocal %107 {approx = true} : vector<8x1xf32> -> vector<8x1xf32>
    %109 = vector.broadcast %108 : vector<8x1xf32> to vector<8x8xf32>
    %110 = arith.mulf %105, %109 : vector<8x8xf32>
    %111 = arith.truncf %110 : vector<8x8xf32> to vector<8x8xbf16>
    %112 = vector.extract_strided_slice %21 {offsets = [0, 192], sizes = [8, 64], strides = [1, 1]} : vector<8x256xf32> to vector<8x64xf32>
    %113 = arith.truncf %112 : vector<8x64xf32> to vector<8x64xbf16>
    %cst_41 = arith.constant dense<0.000000e+00> : vector<8x64xf32>
    %114 = tpu.matmul %111, %113, %cst_41 {dimension_numbers = #tpu.dot_dimension_numbers<[1], [0], [0], [1], [0, 0, 1, 1], [], []>} : vector<8x8xbf16>, vector<8x64xbf16>, vector<8x64xf32> -> vector<8x64xf32>
    %115 = arith.truncf %114 : vector<8x64xf32> to vector<8x64xbf16>
    %116 = vector.extract_strided_slice %12 {offsets = [192, 0], sizes = [64, 256], strides = [1, 1]} : vector<256x256xbf16> to vector<64x256xbf16>
    %cst_42 = arith.constant dense<0.000000e+00> : vector<8x256xf32>
    %117 = tpu.matmul %115, %116, %cst_42 {dimension_numbers = #tpu.dot_dimension_numbers<[1], [0], [0], [1], [0, 0, 1, 1], [], []>} : vector<8x64xbf16>, vector<64x256xbf16>, vector<8x256xf32> -> vector<8x256xf32>
    %118 = arith.addf %94, %117 : vector<8x256xf32>
    %119 = vector.extract_strided_slice %14 {offsets = [8, 0], sizes = [8, 256], strides = [1, 1]} : vector<16x256xf32> to vector<8x256xf32>
    %120 = vector.extract_strided_slice %16 {offsets = [8, 0], sizes = [8, 256], strides = [1, 1]} : vector<16x256xf32> to vector<8x256xf32>
    %121 = vector.extract_strided_slice %18 {offsets = [8, 0], sizes = [8, 256], strides = [1, 1]} : vector<16x256xf32> to vector<8x256xf32>
    %cst_43 = arith.constant 0.000000e+00 : f32
    %122 = vector.broadcast %cst_43 : f32 to vector<8x256xf32>
    %123 = vector.extract_strided_slice %119 {offsets = [0, 0], sizes = [8, 64], strides = [1, 1]} : vector<8x256xf32> to vector<8x64xf32>
    %124 = vector.extract_strided_slice %120 {offsets = [0, 0], sizes = [8, 64], strides = [1, 1]} : vector<8x256xf32> to vector<8x64xf32>
    %125 = tpu.transpose %124, [1, 0] : vector<8x64xf32> -> vector<64x8xf32>
    %cst_44 = arith.constant dense<0.000000e+00> : vector<8x8xf32>
    %126 = tpu.matmul %123, %125, %cst_44 {dimension_numbers = #tpu.dot_dimension_numbers<[1], [0], [0], [1], [0, 0, 1, 1], [], []>} : vector<8x64xf32>, vector<64x8xf32>, vector<8x8xf32> -> vector<8x8xf32>
    %cst_45 = arith.constant 1.250000e-01 : f32
    %127 = vector.broadcast %cst_45 : f32 to vector<8x8xf32>
    %128 = arith.mulf %126, %127 : vector<8x8xf32>
    %cst_46 = arith.constant dense<0xFF800000> : vector<8xf32>
    %129 = vector.multi_reduction <maximumf>, %128, %cst_46 [1] : vector<8x8xf32> to vector<8xf32>
    %130 = vector.shape_cast %129 : vector<8xf32> to vector<8x1xf32>
    %131 = vector.broadcast %130 : vector<8x1xf32> to vector<8x8xf32>
    %132 = arith.subf %128, %131 : vector<8x8xf32>
    %133 = math.exp %132 : vector<8x8xf32>
    %cst_47 = arith.constant dense<0.000000e+00> : vector<8xf32>
    %134 = vector.multi_reduction <add>, %133, %cst_47 [1] : vector<8x8xf32> to vector<8xf32>
    %135 = vector.shape_cast %134 : vector<8xf32> to vector<8x1xf32>
    %136 = tpu.reciprocal %135 {approx = true} : vector<8x1xf32> -> vector<8x1xf32>
    %137 = vector.broadcast %136 : vector<8x1xf32> to vector<8x8xf32>
    %138 = arith.mulf %133, %137 : vector<8x8xf32>
    %139 = arith.truncf %138 : vector<8x8xf32> to vector<8x8xbf16>
    %140 = vector.extract_strided_slice %121 {offsets = [0, 0], sizes = [8, 64], strides = [1, 1]} : vector<8x256xf32> to vector<8x64xf32>
    %141 = arith.truncf %140 : vector<8x64xf32> to vector<8x64xbf16>
    %cst_48 = arith.constant dense<0.000000e+00> : vector<8x64xf32>
    %142 = tpu.matmul %139, %141, %cst_48 {dimension_numbers = #tpu.dot_dimension_numbers<[1], [0], [0], [1], [0, 0, 1, 1], [], []>} : vector<8x8xbf16>, vector<8x64xbf16>, vector<8x64xf32> -> vector<8x64xf32>
    %143 = arith.truncf %142 : vector<8x64xf32> to vector<8x64xbf16>
    %144 = vector.extract_strided_slice %12 {offsets = [0, 0], sizes = [64, 256], strides = [1, 1]} : vector<256x256xbf16> to vector<64x256xbf16>
    %cst_49 = arith.constant dense<0.000000e+00> : vector<8x256xf32>
    %145 = tpu.matmul %143, %144, %cst_49 {dimension_numbers = #tpu.dot_dimension_numbers<[1], [0], [0], [1], [0, 0, 1, 1], [], []>} : vector<8x64xbf16>, vector<64x256xbf16>, vector<8x256xf32> -> vector<8x256xf32>
    %146 = arith.addf %122, %145 : vector<8x256xf32>
    %147 = vector.extract_strided_slice %119 {offsets = [0, 64], sizes = [8, 64], strides = [1, 1]} : vector<8x256xf32> to vector<8x64xf32>
    %148 = vector.extract_strided_slice %120 {offsets = [0, 64], sizes = [8, 64], strides = [1, 1]} : vector<8x256xf32> to vector<8x64xf32>
    %149 = tpu.transpose %148, [1, 0] : vector<8x64xf32> -> vector<64x8xf32>
    %cst_50 = arith.constant dense<0.000000e+00> : vector<8x8xf32>
    %150 = tpu.matmul %147, %149, %cst_50 {dimension_numbers = #tpu.dot_dimension_numbers<[1], [0], [0], [1], [0, 0, 1, 1], [], []>} : vector<8x64xf32>, vector<64x8xf32>, vector<8x8xf32> -> vector<8x8xf32>
    %cst_51 = arith.constant 1.250000e-01 : f32
    %151 = vector.broadcast %cst_51 : f32 to vector<8x8xf32>
    %152 = arith.mulf %150, %151 : vector<8x8xf32>
    %cst_52 = arith.constant dense<0xFF800000> : vector<8xf32>
    %153 = vector.multi_reduction <maximumf>, %152, %cst_52 [1] : vector<8x8xf32> to vector<8xf32>
    %154 = vector.shape_cast %153 : vector<8xf32> to vector<8x1xf32>
    %155 = vector.broadcast %154 : vector<8x1xf32> to vector<8x8xf32>
    %156 = arith.subf %152, %155 : vector<8x8xf32>
    %157 = math.exp %156 : vector<8x8xf32>
    %cst_53 = arith.constant dense<0.000000e+00> : vector<8xf32>
    %158 = vector.multi_reduction <add>, %157, %cst_53 [1] : vector<8x8xf32> to vector<8xf32>
    %159 = vector.shape_cast %158 : vector<8xf32> to vector<8x1xf32>
    %160 = tpu.reciprocal %159 {approx = true} : vector<8x1xf32> -> vector<8x1xf32>
    %161 = vector.broadcast %160 : vector<8x1xf32> to vector<8x8xf32>
    %162 = arith.mulf %157, %161 : vector<8x8xf32>
    %163 = arith.truncf %162 : vector<8x8xf32> to vector<8x8xbf16>
    %164 = vector.extract_strided_slice %121 {offsets = [0, 64], sizes = [8, 64], strides = [1, 1]} : vector<8x256xf32> to vector<8x64xf32>
    %165 = arith.truncf %164 : vector<8x64xf32> to vector<8x64xbf16>
    %cst_54 = arith.constant dense<0.000000e+00> : vector<8x64xf32>
    %166 = tpu.matmul %163, %165, %cst_54 {dimension_numbers = #tpu.dot_dimension_numbers<[1], [0], [0], [1], [0, 0, 1, 1], [], []>} : vector<8x8xbf16>, vector<8x64xbf16>, vector<8x64xf32> -> vector<8x64xf32>
    %167 = arith.truncf %166 : vector<8x64xf32> to vector<8x64xbf16>
    %168 = vector.extract_strided_slice %12 {offsets = [64, 0], sizes = [64, 256], strides = [1, 1]} : vector<256x256xbf16> to vector<64x256xbf16>
    %cst_55 = arith.constant dense<0.000000e+00> : vector<8x256xf32>
    %169 = tpu.matmul %167, %168, %cst_55 {dimension_numbers = #tpu.dot_dimension_numbers<[1], [0], [0], [1], [0, 0, 1, 1], [], []>} : vector<8x64xbf16>, vector<64x256xbf16>, vector<8x256xf32> -> vector<8x256xf32>
    %170 = arith.addf %146, %169 : vector<8x256xf32>
    %171 = vector.extract_strided_slice %119 {offsets = [0, 128], sizes = [8, 64], strides = [1, 1]} : vector<8x256xf32> to vector<8x64xf32>
    %172 = vector.extract_strided_slice %120 {offsets = [0, 128], sizes = [8, 64], strides = [1, 1]} : vector<8x256xf32> to vector<8x64xf32>
    %173 = tpu.transpose %172, [1, 0] : vector<8x64xf32> -> vector<64x8xf32>
    %cst_56 = arith.constant dense<0.000000e+00> : vector<8x8xf32>
    %174 = tpu.matmul %171, %173, %cst_56 {dimension_numbers = #tpu.dot_dimension_numbers<[1], [0], [0], [1], [0, 0, 1, 1], [], []>} : vector<8x64xf32>, vector<64x8xf32>, vector<8x8xf32> -> vector<8x8xf32>
    %cst_57 = arith.constant 1.250000e-01 : f32
    %175 = vector.broadcast %cst_57 : f32 to vector<8x8xf32>
    %176 = arith.mulf %174, %175 : vector<8x8xf32>
    %cst_58 = arith.constant dense<0xFF800000> : vector<8xf32>
    %177 = vector.multi_reduction <maximumf>, %176, %cst_58 [1] : vector<8x8xf32> to vector<8xf32>
    %178 = vector.shape_cast %177 : vector<8xf32> to vector<8x1xf32>
    %179 = vector.broadcast %178 : vector<8x1xf32> to vector<8x8xf32>
    %180 = arith.subf %176, %179 : vector<8x8xf32>
    %181 = math.exp %180 : vector<8x8xf32>
    %cst_59 = arith.constant dense<0.000000e+00> : vector<8xf32>
    %182 = vector.multi_reduction <add>, %181, %cst_59 [1] : vector<8x8xf32> to vector<8xf32>
    %183 = vector.shape_cast %182 : vector<8xf32> to vector<8x1xf32>
    %184 = tpu.reciprocal %183 {approx = true} : vector<8x1xf32> -> vector<8x1xf32>
    %185 = vector.broadcast %184 : vector<8x1xf32> to vector<8x8xf32>
    %186 = arith.mulf %181, %185 : vector<8x8xf32>
    %187 = arith.truncf %186 : vector<8x8xf32> to vector<8x8xbf16>
    %188 = vector.extract_strided_slice %121 {offsets = [0, 128], sizes = [8, 64], strides = [1, 1]} : vector<8x256xf32> to vector<8x64xf32>
    %189 = arith.truncf %188 : vector<8x64xf32> to vector<8x64xbf16>
    %cst_60 = arith.constant dense<0.000000e+00> : vector<8x64xf32>
    %190 = tpu.matmul %187, %189, %cst_60 {dimension_numbers = #tpu.dot_dimension_numbers<[1], [0], [0], [1], [0, 0, 1, 1], [], []>} : vector<8x8xbf16>, vector<8x64xbf16>, vector<8x64xf32> -> vector<8x64xf32>
    %191 = arith.truncf %190 : vector<8x64xf32> to vector<8x64xbf16>
    %192 = vector.extract_strided_slice %12 {offsets = [128, 0], sizes = [64, 256], strides = [1, 1]} : vector<256x256xbf16> to vector<64x256xbf16>
    %cst_61 = arith.constant dense<0.000000e+00> : vector<8x256xf32>
    %193 = tpu.matmul %191, %192, %cst_61 {dimension_numbers = #tpu.dot_dimension_numbers<[1], [0], [0], [1], [0, 0, 1, 1], [], []>} : vector<8x64xbf16>, vector<64x256xbf16>, vector<8x256xf32> -> vector<8x256xf32>
    %194 = arith.addf %170, %193 : vector<8x256xf32>
    %195 = vector.extract_strided_slice %119 {offsets = [0, 192], sizes = [8, 64], strides = [1, 1]} : vector<8x256xf32> to vector<8x64xf32>
    %196 = vector.extract_strided_slice %120 {offsets = [0, 192], sizes = [8, 64], strides = [1, 1]} : vector<8x256xf32> to vector<8x64xf32>
    %197 = tpu.transpose %196, [1, 0] : vector<8x64xf32> -> vector<64x8xf32>
    %cst_62 = arith.constant dense<0.000000e+00> : vector<8x8xf32>
    %198 = tpu.matmul %195, %197, %cst_62 {dimension_numbers = #tpu.dot_dimension_numbers<[1], [0], [0], [1], [0, 0, 1, 1], [], []>} : vector<8x64xf32>, vector<64x8xf32>, vector<8x8xf32> -> vector<8x8xf32>
    %cst_63 = arith.constant 1.250000e-01 : f32
    %199 = vector.broadcast %cst_63 : f32 to vector<8x8xf32>
    %200 = arith.mulf %198, %199 : vector<8x8xf32>
    %cst_64 = arith.constant dense<0xFF800000> : vector<8xf32>
    %201 = vector.multi_reduction <maximumf>, %200, %cst_64 [1] : vector<8x8xf32> to vector<8xf32>
    %202 = vector.shape_cast %201 : vector<8xf32> to vector<8x1xf32>
    %203 = vector.broadcast %202 : vector<8x1xf32> to vector<8x8xf32>
    %204 = arith.subf %200, %203 : vector<8x8xf32>
    %205 = math.exp %204 : vector<8x8xf32>
    %cst_65 = arith.constant dense<0.000000e+00> : vector<8xf32>
    %206 = vector.multi_reduction <add>, %205, %cst_65 [1] : vector<8x8xf32> to vector<8xf32>
    %207 = vector.shape_cast %206 : vector<8xf32> to vector<8x1xf32>
    %208 = tpu.reciprocal %207 {approx = true} : vector<8x1xf32> -> vector<8x1xf32>
    %209 = vector.broadcast %208 : vector<8x1xf32> to vector<8x8xf32>
    %210 = arith.mulf %205, %209 : vector<8x8xf32>
    %211 = arith.truncf %210 : vector<8x8xf32> to vector<8x8xbf16>
    %212 = vector.extract_strided_slice %121 {offsets = [0, 192], sizes = [8, 64], strides = [1, 1]} : vector<8x256xf32> to vector<8x64xf32>
    %213 = arith.truncf %212 : vector<8x64xf32> to vector<8x64xbf16>
    %cst_66 = arith.constant dense<0.000000e+00> : vector<8x64xf32>
    %214 = tpu.matmul %211, %213, %cst_66 {dimension_numbers = #tpu.dot_dimension_numbers<[1], [0], [0], [1], [0, 0, 1, 1], [], []>} : vector<8x8xbf16>, vector<8x64xbf16>, vector<8x64xf32> -> vector<8x64xf32>
    %215 = arith.truncf %214 : vector<8x64xf32> to vector<8x64xbf16>
    %216 = vector.extract_strided_slice %12 {offsets = [192, 0], sizes = [64, 256], strides = [1, 1]} : vector<256x256xbf16> to vector<64x256xbf16>
    %cst_67 = arith.constant dense<0.000000e+00> : vector<8x256xf32>
    %217 = tpu.matmul %215, %216, %cst_67 {dimension_numbers = #tpu.dot_dimension_numbers<[1], [0], [0], [1], [0, 0, 1, 1], [], []>} : vector<8x64xbf16>, vector<64x256xbf16>, vector<8x256xf32> -> vector<8x256xf32>
    %218 = arith.addf %194, %217 : vector<8x256xf32>
    %219 = tpu.concatenate %118, %218 in 0 : vector<8x256xf32>, vector<8x256xf32> -> vector<16x256xf32>
    %c0_68 = arith.constant 0 : index
    %c0_69 = arith.constant 0 : index
    %c0_70 = arith.constant 0 : index
    %220 = vector.load %arg9[%c0_68, %c0_69, %c0_70] : memref<1x1x256xf32, #tpu.memory_space<vmem>>, vector<1x1x256xf32>
    %221 = vector.shape_cast %220 : vector<1x1x256xf32> to vector<1x256xf32>
    %c0_71 = arith.constant 0 : index
    %c0_72 = arith.constant 0 : index
    %c0_73 = arith.constant 0 : index
    %222 = vector.load %arg10[%c0_71, %c0_72, %c0_73] : memref<1x1x256xf32, #tpu.memory_space<vmem>>, vector<1x1x256xf32>
    %223 = vector.shape_cast %222 : vector<1x1x256xf32> to vector<1x256xf32>
    %cst_74 = arith.constant dense<0.000000e+00> : vector<16xf32>
    %224 = vector.multi_reduction <add>, %219, %cst_74 [1] : vector<16x256xf32> to vector<16xf32>
    %225 = vector.shape_cast %224 : vector<16xf32> to vector<16x1xf32>
    %cst_75 = arith.constant 2.560000e+02 : f32
    %226 = vector.broadcast %cst_75 : f32 to vector<16x1xf32>
    %227 = arith.divf %225, %226 : vector<16x1xf32>
    %228 = vector.broadcast %227 : vector<16x1xf32> to vector<16x256xf32>
    %229 = arith.subf %219, %228 : vector<16x256xf32>
    %230 = arith.mulf %229, %229 : vector<16x256xf32>
    %cst_76 = arith.constant dense<0.000000e+00> : vector<16xf32>
    %231 = vector.multi_reduction <add>, %230, %cst_76 [1] : vector<16x256xf32> to vector<16xf32>
    %232 = vector.shape_cast %231 : vector<16xf32> to vector<16x1xf32>
    %cst_77 = arith.constant 2.560000e+02 : f32
    %233 = vector.broadcast %cst_77 : f32 to vector<16x1xf32>
    %234 = arith.divf %232, %233 : vector<16x1xf32>
    %235 = vector.broadcast %227 : vector<16x1xf32> to vector<16x256xf32>
    %236 = arith.subf %219, %235 : vector<16x256xf32>
    %cst_78 = arith.constant 9.99999974E-6 : f32
    %237 = vector.broadcast %cst_78 : f32 to vector<16x1xf32>
    %238 = arith.addf %234, %237 : vector<16x1xf32>
    %239 = math.rsqrt %238 : vector<16x1xf32>
    %240 = vector.broadcast %239 : vector<16x1xf32> to vector<16x256xf32>
    %241 = arith.mulf %236, %240 : vector<16x256xf32>
    %242 = vector.broadcast %221 : vector<1x256xf32> to vector<16x256xf32>
    %243 = arith.mulf %241, %242 : vector<16x256xf32>
    %244 = vector.broadcast %223 : vector<1x256xf32> to vector<16x256xf32>
    %245 = arith.addf %243, %244 : vector<16x256xf32>
    %246 = arith.addf %3, %245 : vector<16x256xf32>
    %c0_79 = arith.constant 0 : index
    %c0_80 = arith.constant 0 : index
    %c0_81 = arith.constant 0 : index
    %247 = vector.load %arg11[%c0_79, %c0_80, %c0_81] : memref<1x256x256xbf16, #tpu.memory_space<vmem>>, vector<1x256x256xbf16>
    %248 = vector.shape_cast %247 : vector<1x256x256xbf16> to vector<256x256xbf16>
    %c0_82 = arith.constant 0 : index
    %c0_83 = arith.constant 0 : index
    %c0_84 = arith.constant 0 : index
    %249 = vector.load %arg12[%c0_82, %c0_83, %c0_84] : memref<1x256x256xbf16, #tpu.memory_space<vmem>>, vector<1x256x256xbf16>
    %250 = vector.shape_cast %249 : vector<1x256x256xbf16> to vector<256x256xbf16>
    %c0_85 = arith.constant 0 : index
    %c0_86 = arith.constant 0 : index
    %c0_87 = arith.constant 0 : index
    %251 = vector.load %arg13[%c0_85, %c0_86, %c0_87] : memref<1x256x256xbf16, #tpu.memory_space<vmem>>, vector<1x256x256xbf16>
    %252 = vector.shape_cast %251 : vector<1x256x256xbf16> to vector<256x256xbf16>
    %c0_88 = arith.constant 0 : index
    %c0_89 = arith.constant 0 : index
    %c0_90 = arith.constant 0 : index
    %253 = vector.load %arg14[%c0_88, %c0_89, %c0_90] : memref<1x256x256xbf16, #tpu.memory_space<vmem>>, vector<1x256x256xbf16>
    %254 = vector.shape_cast %253 : vector<1x256x256xbf16> to vector<256x256xbf16>
    %255 = arith.truncf %246 : vector<16x256xf32> to vector<16x256xbf16>
    %cst_91 = arith.constant dense<0.000000e+00> : vector<16x256xf32>
    %256 = tpu.matmul %255, %248, %cst_91 {dimension_numbers = #tpu.dot_dimension_numbers<[1], [0], [0], [1], [0, 0, 1, 1], [], []>} : vector<16x256xbf16>, vector<256x256xbf16>, vector<16x256xf32> -> vector<16x256xf32>
    %257 = arith.truncf %4 : vector<16x256xf32> to vector<16x256xbf16>
    %cst_92 = arith.constant dense<0.000000e+00> : vector<16x256xf32>
    %258 = tpu.matmul %257, %250, %cst_92 {dimension_numbers = #tpu.dot_dimension_numbers<[1], [0], [0], [1], [0, 0, 1, 1], [], []>} : vector<16x256xbf16>, vector<256x256xbf16>, vector<16x256xf32> -> vector<16x256xf32>
    %259 = arith.truncf %4 : vector<16x256xf32> to vector<16x256xbf16>
    %cst_93 = arith.constant dense<0.000000e+00> : vector<16x256xf32>
    %260 = tpu.matmul %259, %252, %cst_93 {dimension_numbers = #tpu.dot_dimension_numbers<[1], [0], [0], [1], [0, 0, 1, 1], [], []>} : vector<16x256xbf16>, vector<256x256xbf16>, vector<16x256xf32> -> vector<16x256xf32>
    %261 = vector.extract_strided_slice %256 {offsets = [0, 0], sizes = [8, 256], strides = [1, 1]} : vector<16x256xf32> to vector<8x256xf32>
    %262 = vector.extract_strided_slice %258 {offsets = [0, 0], sizes = [8, 256], strides = [1, 1]} : vector<16x256xf32> to vector<8x256xf32>
    %263 = vector.extract_strided_slice %260 {offsets = [0, 0], sizes = [8, 256], strides = [1, 1]} : vector<16x256xf32> to vector<8x256xf32>
    %cst_94 = arith.constant 0.000000e+00 : f32
    %264 = vector.broadcast %cst_94 : f32 to vector<8x256xf32>
    %265 = vector.extract_strided_slice %261 {offsets = [0, 0], sizes = [8, 64], strides = [1, 1]} : vector<8x256xf32> to vector<8x64xf32>
    %266 = vector.extract_strided_slice %262 {offsets = [0, 0], sizes = [8, 64], strides = [1, 1]} : vector<8x256xf32> to vector<8x64xf32>
    %267 = tpu.transpose %266, [1, 0] : vector<8x64xf32> -> vector<64x8xf32>
    %cst_95 = arith.constant dense<0.000000e+00> : vector<8x8xf32>
    %268 = tpu.matmul %265, %267, %cst_95 {dimension_numbers = #tpu.dot_dimension_numbers<[1], [0], [0], [1], [0, 0, 1, 1], [], []>} : vector<8x64xf32>, vector<64x8xf32>, vector<8x8xf32> -> vector<8x8xf32>
    %cst_96 = arith.constant 1.250000e-01 : f32
    %269 = vector.broadcast %cst_96 : f32 to vector<8x8xf32>
    %270 = arith.mulf %268, %269 : vector<8x8xf32>
    %cst_97 = arith.constant dense<0xFF800000> : vector<8xf32>
    %271 = vector.multi_reduction <maximumf>, %270, %cst_97 [1] : vector<8x8xf32> to vector<8xf32>
    %272 = vector.shape_cast %271 : vector<8xf32> to vector<8x1xf32>
    %273 = vector.broadcast %272 : vector<8x1xf32> to vector<8x8xf32>
    %274 = arith.subf %270, %273 : vector<8x8xf32>
    %275 = math.exp %274 : vector<8x8xf32>
    %cst_98 = arith.constant dense<0.000000e+00> : vector<8xf32>
    %276 = vector.multi_reduction <add>, %275, %cst_98 [1] : vector<8x8xf32> to vector<8xf32>
    %277 = vector.shape_cast %276 : vector<8xf32> to vector<8x1xf32>
    %278 = tpu.reciprocal %277 {approx = true} : vector<8x1xf32> -> vector<8x1xf32>
    %279 = vector.broadcast %278 : vector<8x1xf32> to vector<8x8xf32>
    %280 = arith.mulf %275, %279 : vector<8x8xf32>
    %281 = arith.truncf %280 : vector<8x8xf32> to vector<8x8xbf16>
    %282 = vector.extract_strided_slice %263 {offsets = [0, 0], sizes = [8, 64], strides = [1, 1]} : vector<8x256xf32> to vector<8x64xf32>
    %283 = arith.truncf %282 : vector<8x64xf32> to vector<8x64xbf16>
    %cst_99 = arith.constant dense<0.000000e+00> : vector<8x64xf32>
    %284 = tpu.matmul %281, %283, %cst_99 {dimension_numbers = #tpu.dot_dimension_numbers<[1], [0], [0], [1], [0, 0, 1, 1], [], []>} : vector<8x8xbf16>, vector<8x64xbf16>, vector<8x64xf32> -> vector<8x64xf32>
    %285 = arith.truncf %284 : vector<8x64xf32> to vector<8x64xbf16>
    %286 = vector.extract_strided_slice %254 {offsets = [0, 0], sizes = [64, 256], strides = [1, 1]} : vector<256x256xbf16> to vector<64x256xbf16>
    %cst_100 = arith.constant dense<0.000000e+00> : vector<8x256xf32>
    %287 = tpu.matmul %285, %286, %cst_100 {dimension_numbers = #tpu.dot_dimension_numbers<[1], [0], [0], [1], [0, 0, 1, 1], [], []>} : vector<8x64xbf16>, vector<64x256xbf16>, vector<8x256xf32> -> vector<8x256xf32>
    %288 = arith.addf %264, %287 : vector<8x256xf32>
    %289 = vector.extract_strided_slice %261 {offsets = [0, 64], sizes = [8, 64], strides = [1, 1]} : vector<8x256xf32> to vector<8x64xf32>
    %290 = vector.extract_strided_slice %262 {offsets = [0, 64], sizes = [8, 64], strides = [1, 1]} : vector<8x256xf32> to vector<8x64xf32>
    %291 = tpu.transpose %290, [1, 0] : vector<8x64xf32> -> vector<64x8xf32>
    %cst_101 = arith.constant dense<0.000000e+00> : vector<8x8xf32>
    %292 = tpu.matmul %289, %291, %cst_101 {dimension_numbers = #tpu.dot_dimension_numbers<[1], [0], [0], [1], [0, 0, 1, 1], [], []>} : vector<8x64xf32>, vector<64x8xf32>, vector<8x8xf32> -> vector<8x8xf32>
    %cst_102 = arith.constant 1.250000e-01 : f32
    %293 = vector.broadcast %cst_102 : f32 to vector<8x8xf32>
    %294 = arith.mulf %292, %293 : vector<8x8xf32>
    %cst_103 = arith.constant dense<0xFF800000> : vector<8xf32>
    %295 = vector.multi_reduction <maximumf>, %294, %cst_103 [1] : vector<8x8xf32> to vector<8xf32>
    %296 = vector.shape_cast %295 : vector<8xf32> to vector<8x1xf32>
    %297 = vector.broadcast %296 : vector<8x1xf32> to vector<8x8xf32>
    %298 = arith.subf %294, %297 : vector<8x8xf32>
    %299 = math.exp %298 : vector<8x8xf32>
    %cst_104 = arith.constant dense<0.000000e+00> : vector<8xf32>
    %300 = vector.multi_reduction <add>, %299, %cst_104 [1] : vector<8x8xf32> to vector<8xf32>
    %301 = vector.shape_cast %300 : vector<8xf32> to vector<8x1xf32>
    %302 = tpu.reciprocal %301 {approx = true} : vector<8x1xf32> -> vector<8x1xf32>
    %303 = vector.broadcast %302 : vector<8x1xf32> to vector<8x8xf32>
    %304 = arith.mulf %299, %303 : vector<8x8xf32>
    %305 = arith.truncf %304 : vector<8x8xf32> to vector<8x8xbf16>
    %306 = vector.extract_strided_slice %263 {offsets = [0, 64], sizes = [8, 64], strides = [1, 1]} : vector<8x256xf32> to vector<8x64xf32>
    %307 = arith.truncf %306 : vector<8x64xf32> to vector<8x64xbf16>
    %cst_105 = arith.constant dense<0.000000e+00> : vector<8x64xf32>
    %308 = tpu.matmul %305, %307, %cst_105 {dimension_numbers = #tpu.dot_dimension_numbers<[1], [0], [0], [1], [0, 0, 1, 1], [], []>} : vector<8x8xbf16>, vector<8x64xbf16>, vector<8x64xf32> -> vector<8x64xf32>
    %309 = arith.truncf %308 : vector<8x64xf32> to vector<8x64xbf16>
    %310 = vector.extract_strided_slice %254 {offsets = [64, 0], sizes = [64, 256], strides = [1, 1]} : vector<256x256xbf16> to vector<64x256xbf16>
    %cst_106 = arith.constant dense<0.000000e+00> : vector<8x256xf32>
    %311 = tpu.matmul %309, %310, %cst_106 {dimension_numbers = #tpu.dot_dimension_numbers<[1], [0], [0], [1], [0, 0, 1, 1], [], []>} : vector<8x64xbf16>, vector<64x256xbf16>, vector<8x256xf32> -> vector<8x256xf32>
    %312 = arith.addf %288, %311 : vector<8x256xf32>
    %313 = vector.extract_strided_slice %261 {offsets = [0, 128], sizes = [8, 64], strides = [1, 1]} : vector<8x256xf32> to vector<8x64xf32>
    %314 = vector.extract_strided_slice %262 {offsets = [0, 128], sizes = [8, 64], strides = [1, 1]} : vector<8x256xf32> to vector<8x64xf32>
    %315 = tpu.transpose %314, [1, 0] : vector<8x64xf32> -> vector<64x8xf32>
    %cst_107 = arith.constant dense<0.000000e+00> : vector<8x8xf32>
    %316 = tpu.matmul %313, %315, %cst_107 {dimension_numbers = #tpu.dot_dimension_numbers<[1], [0], [0], [1], [0, 0, 1, 1], [], []>} : vector<8x64xf32>, vector<64x8xf32>, vector<8x8xf32> -> vector<8x8xf32>
    %cst_108 = arith.constant 1.250000e-01 : f32
    %317 = vector.broadcast %cst_108 : f32 to vector<8x8xf32>
    %318 = arith.mulf %316, %317 : vector<8x8xf32>
    %cst_109 = arith.constant dense<0xFF800000> : vector<8xf32>
    %319 = vector.multi_reduction <maximumf>, %318, %cst_109 [1] : vector<8x8xf32> to vector<8xf32>
    %320 = vector.shape_cast %319 : vector<8xf32> to vector<8x1xf32>
    %321 = vector.broadcast %320 : vector<8x1xf32> to vector<8x8xf32>
    %322 = arith.subf %318, %321 : vector<8x8xf32>
    %323 = math.exp %322 : vector<8x8xf32>
    %cst_110 = arith.constant dense<0.000000e+00> : vector<8xf32>
    %324 = vector.multi_reduction <add>, %323, %cst_110 [1] : vector<8x8xf32> to vector<8xf32>
    %325 = vector.shape_cast %324 : vector<8xf32> to vector<8x1xf32>
    %326 = tpu.reciprocal %325 {approx = true} : vector<8x1xf32> -> vector<8x1xf32>
    %327 = vector.broadcast %326 : vector<8x1xf32> to vector<8x8xf32>
    %328 = arith.mulf %323, %327 : vector<8x8xf32>
    %329 = arith.truncf %328 : vector<8x8xf32> to vector<8x8xbf16>
    %330 = vector.extract_strided_slice %263 {offsets = [0, 128], sizes = [8, 64], strides = [1, 1]} : vector<8x256xf32> to vector<8x64xf32>
    %331 = arith.truncf %330 : vector<8x64xf32> to vector<8x64xbf16>
    %cst_111 = arith.constant dense<0.000000e+00> : vector<8x64xf32>
    %332 = tpu.matmul %329, %331, %cst_111 {dimension_numbers = #tpu.dot_dimension_numbers<[1], [0], [0], [1], [0, 0, 1, 1], [], []>} : vector<8x8xbf16>, vector<8x64xbf16>, vector<8x64xf32> -> vector<8x64xf32>
    %333 = arith.truncf %332 : vector<8x64xf32> to vector<8x64xbf16>
    %334 = vector.extract_strided_slice %254 {offsets = [128, 0], sizes = [64, 256], strides = [1, 1]} : vector<256x256xbf16> to vector<64x256xbf16>
    %cst_112 = arith.constant dense<0.000000e+00> : vector<8x256xf32>
    %335 = tpu.matmul %333, %334, %cst_112 {dimension_numbers = #tpu.dot_dimension_numbers<[1], [0], [0], [1], [0, 0, 1, 1], [], []>} : vector<8x64xbf16>, vector<64x256xbf16>, vector<8x256xf32> -> vector<8x256xf32>
    %336 = arith.addf %312, %335 : vector<8x256xf32>
    %337 = vector.extract_strided_slice %261 {offsets = [0, 192], sizes = [8, 64], strides = [1, 1]} : vector<8x256xf32> to vector<8x64xf32>
    %338 = vector.extract_strided_slice %262 {offsets = [0, 192], sizes = [8, 64], strides = [1, 1]} : vector<8x256xf32> to vector<8x64xf32>
    %339 = tpu.transpose %338, [1, 0] : vector<8x64xf32> -> vector<64x8xf32>
    %cst_113 = arith.constant dense<0.000000e+00> : vector<8x8xf32>
    %340 = tpu.matmul %337, %339, %cst_113 {dimension_numbers = #tpu.dot_dimension_numbers<[1], [0], [0], [1], [0, 0, 1, 1], [], []>} : vector<8x64xf32>, vector<64x8xf32>, vector<8x8xf32> -> vector<8x8xf32>
    %cst_114 = arith.constant 1.250000e-01 : f32
    %341 = vector.broadcast %cst_114 : f32 to vector<8x8xf32>
    %342 = arith.mulf %340, %341 : vector<8x8xf32>
    %cst_115 = arith.constant dense<0xFF800000> : vector<8xf32>
    %343 = vector.multi_reduction <maximumf>, %342, %cst_115 [1] : vector<8x8xf32> to vector<8xf32>
    %344 = vector.shape_cast %343 : vector<8xf32> to vector<8x1xf32>
    %345 = vector.broadcast %344 : vector<8x1xf32> to vector<8x8xf32>
    %346 = arith.subf %342, %345 : vector<8x8xf32>
    %347 = math.exp %346 : vector<8x8xf32>
    %cst_116 = arith.constant dense<0.000000e+00> : vector<8xf32>
    %348 = vector.multi_reduction <add>, %347, %cst_116 [1] : vector<8x8xf32> to vector<8xf32>
    %349 = vector.shape_cast %348 : vector<8xf32> to vector<8x1xf32>
    %350 = tpu.reciprocal %349 {approx = true} : vector<8x1xf32> -> vector<8x1xf32>
    %351 = vector.broadcast %350 : vector<8x1xf32> to vector<8x8xf32>
    %352 = arith.mulf %347, %351 : vector<8x8xf32>
    %353 = arith.truncf %352 : vector<8x8xf32> to vector<8x8xbf16>
    %354 = vector.extract_strided_slice %263 {offsets = [0, 192], sizes = [8, 64], strides = [1, 1]} : vector<8x256xf32> to vector<8x64xf32>
    %355 = arith.truncf %354 : vector<8x64xf32> to vector<8x64xbf16>
    %cst_117 = arith.constant dense<0.000000e+00> : vector<8x64xf32>
    %356 = tpu.matmul %353, %355, %cst_117 {dimension_numbers = #tpu.dot_dimension_numbers<[1], [0], [0], [1], [0, 0, 1, 1], [], []>} : vector<8x8xbf16>, vector<8x64xbf16>, vector<8x64xf32> -> vector<8x64xf32>
    %357 = arith.truncf %356 : vector<8x64xf32> to vector<8x64xbf16>
    %358 = vector.extract_strided_slice %254 {offsets = [192, 0], sizes = [64, 256], strides = [1, 1]} : vector<256x256xbf16> to vector<64x256xbf16>
    %cst_118 = arith.constant dense<0.000000e+00> : vector<8x256xf32>
    %359 = tpu.matmul %357, %358, %cst_118 {dimension_numbers = #tpu.dot_dimension_numbers<[1], [0], [0], [1], [0, 0, 1, 1], [], []>} : vector<8x64xbf16>, vector<64x256xbf16>, vector<8x256xf32> -> vector<8x256xf32>
    %360 = arith.addf %336, %359 : vector<8x256xf32>
    %361 = vector.extract_strided_slice %256 {offsets = [8, 0], sizes = [8, 256], strides = [1, 1]} : vector<16x256xf32> to vector<8x256xf32>
    %362 = vector.extract_strided_slice %258 {offsets = [8, 0], sizes = [8, 256], strides = [1, 1]} : vector<16x256xf32> to vector<8x256xf32>
    %363 = vector.extract_strided_slice %260 {offsets = [8, 0], sizes = [8, 256], strides = [1, 1]} : vector<16x256xf32> to vector<8x256xf32>
    %cst_119 = arith.constant 0.000000e+00 : f32
    %364 = vector.broadcast %cst_119 : f32 to vector<8x256xf32>
    %365 = vector.extract_strided_slice %361 {offsets = [0, 0], sizes = [8, 64], strides = [1, 1]} : vector<8x256xf32> to vector<8x64xf32>
    %366 = vector.extract_strided_slice %362 {offsets = [0, 0], sizes = [8, 64], strides = [1, 1]} : vector<8x256xf32> to vector<8x64xf32>
    %367 = tpu.transpose %366, [1, 0] : vector<8x64xf32> -> vector<64x8xf32>
    %cst_120 = arith.constant dense<0.000000e+00> : vector<8x8xf32>
    %368 = tpu.matmul %365, %367, %cst_120 {dimension_numbers = #tpu.dot_dimension_numbers<[1], [0], [0], [1], [0, 0, 1, 1], [], []>} : vector<8x64xf32>, vector<64x8xf32>, vector<8x8xf32> -> vector<8x8xf32>
    %cst_121 = arith.constant 1.250000e-01 : f32
    %369 = vector.broadcast %cst_121 : f32 to vector<8x8xf32>
    %370 = arith.mulf %368, %369 : vector<8x8xf32>
    %cst_122 = arith.constant dense<0xFF800000> : vector<8xf32>
    %371 = vector.multi_reduction <maximumf>, %370, %cst_122 [1] : vector<8x8xf32> to vector<8xf32>
    %372 = vector.shape_cast %371 : vector<8xf32> to vector<8x1xf32>
    %373 = vector.broadcast %372 : vector<8x1xf32> to vector<8x8xf32>
    %374 = arith.subf %370, %373 : vector<8x8xf32>
    %375 = math.exp %374 : vector<8x8xf32>
    %cst_123 = arith.constant dense<0.000000e+00> : vector<8xf32>
    %376 = vector.multi_reduction <add>, %375, %cst_123 [1] : vector<8x8xf32> to vector<8xf32>
    %377 = vector.shape_cast %376 : vector<8xf32> to vector<8x1xf32>
    %378 = tpu.reciprocal %377 {approx = true} : vector<8x1xf32> -> vector<8x1xf32>
    %379 = vector.broadcast %378 : vector<8x1xf32> to vector<8x8xf32>
    %380 = arith.mulf %375, %379 : vector<8x8xf32>
    %381 = arith.truncf %380 : vector<8x8xf32> to vector<8x8xbf16>
    %382 = vector.extract_strided_slice %363 {offsets = [0, 0], sizes = [8, 64], strides = [1, 1]} : vector<8x256xf32> to vector<8x64xf32>
    %383 = arith.truncf %382 : vector<8x64xf32> to vector<8x64xbf16>
    %cst_124 = arith.constant dense<0.000000e+00> : vector<8x64xf32>
    %384 = tpu.matmul %381, %383, %cst_124 {dimension_numbers = #tpu.dot_dimension_numbers<[1], [0], [0], [1], [0, 0, 1, 1], [], []>} : vector<8x8xbf16>, vector<8x64xbf16>, vector<8x64xf32> -> vector<8x64xf32>
    %385 = arith.truncf %384 : vector<8x64xf32> to vector<8x64xbf16>
    %386 = vector.extract_strided_slice %254 {offsets = [0, 0], sizes = [64, 256], strides = [1, 1]} : vector<256x256xbf16> to vector<64x256xbf16>
    %cst_125 = arith.constant dense<0.000000e+00> : vector<8x256xf32>
    %387 = tpu.matmul %385, %386, %cst_125 {dimension_numbers = #tpu.dot_dimension_numbers<[1], [0], [0], [1], [0, 0, 1, 1], [], []>} : vector<8x64xbf16>, vector<64x256xbf16>, vector<8x256xf32> -> vector<8x256xf32>
    %388 = arith.addf %364, %387 : vector<8x256xf32>
    %389 = vector.extract_strided_slice %361 {offsets = [0, 64], sizes = [8, 64], strides = [1, 1]} : vector<8x256xf32> to vector<8x64xf32>
    %390 = vector.extract_strided_slice %362 {offsets = [0, 64], sizes = [8, 64], strides = [1, 1]} : vector<8x256xf32> to vector<8x64xf32>
    %391 = tpu.transpose %390, [1, 0] : vector<8x64xf32> -> vector<64x8xf32>
    %cst_126 = arith.constant dense<0.000000e+00> : vector<8x8xf32>
    %392 = tpu.matmul %389, %391, %cst_126 {dimension_numbers = #tpu.dot_dimension_numbers<[1], [0], [0], [1], [0, 0, 1, 1], [], []>} : vector<8x64xf32>, vector<64x8xf32>, vector<8x8xf32> -> vector<8x8xf32>
    %cst_127 = arith.constant 1.250000e-01 : f32
    %393 = vector.broadcast %cst_127 : f32 to vector<8x8xf32>
    %394 = arith.mulf %392, %393 : vector<8x8xf32>
    %cst_128 = arith.constant dense<0xFF800000> : vector<8xf32>
    %395 = vector.multi_reduction <maximumf>, %394, %cst_128 [1] : vector<8x8xf32> to vector<8xf32>
    %396 = vector.shape_cast %395 : vector<8xf32> to vector<8x1xf32>
    %397 = vector.broadcast %396 : vector<8x1xf32> to vector<8x8xf32>
    %398 = arith.subf %394, %397 : vector<8x8xf32>
    %399 = math.exp %398 : vector<8x8xf32>
    %cst_129 = arith.constant dense<0.000000e+00> : vector<8xf32>
    %400 = vector.multi_reduction <add>, %399, %cst_129 [1] : vector<8x8xf32> to vector<8xf32>
    %401 = vector.shape_cast %400 : vector<8xf32> to vector<8x1xf32>
    %402 = tpu.reciprocal %401 {approx = true} : vector<8x1xf32> -> vector<8x1xf32>
    %403 = vector.broadcast %402 : vector<8x1xf32> to vector<8x8xf32>
    %404 = arith.mulf %399, %403 : vector<8x8xf32>
    %405 = arith.truncf %404 : vector<8x8xf32> to vector<8x8xbf16>
    %406 = vector.extract_strided_slice %363 {offsets = [0, 64], sizes = [8, 64], strides = [1, 1]} : vector<8x256xf32> to vector<8x64xf32>
    %407 = arith.truncf %406 : vector<8x64xf32> to vector<8x64xbf16>
    %cst_130 = arith.constant dense<0.000000e+00> : vector<8x64xf32>
    %408 = tpu.matmul %405, %407, %cst_130 {dimension_numbers = #tpu.dot_dimension_numbers<[1], [0], [0], [1], [0, 0, 1, 1], [], []>} : vector<8x8xbf16>, vector<8x64xbf16>, vector<8x64xf32> -> vector<8x64xf32>
    %409 = arith.truncf %408 : vector<8x64xf32> to vector<8x64xbf16>
    %410 = vector.extract_strided_slice %254 {offsets = [64, 0], sizes = [64, 256], strides = [1, 1]} : vector<256x256xbf16> to vector<64x256xbf16>
    %cst_131 = arith.constant dense<0.000000e+00> : vector<8x256xf32>
    %411 = tpu.matmul %409, %410, %cst_131 {dimension_numbers = #tpu.dot_dimension_numbers<[1], [0], [0], [1], [0, 0, 1, 1], [], []>} : vector<8x64xbf16>, vector<64x256xbf16>, vector<8x256xf32> -> vector<8x256xf32>
    %412 = arith.addf %388, %411 : vector<8x256xf32>
    %413 = vector.extract_strided_slice %361 {offsets = [0, 128], sizes = [8, 64], strides = [1, 1]} : vector<8x256xf32> to vector<8x64xf32>
    %414 = vector.extract_strided_slice %362 {offsets = [0, 128], sizes = [8, 64], strides = [1, 1]} : vector<8x256xf32> to vector<8x64xf32>
    %415 = tpu.transpose %414, [1, 0] : vector<8x64xf32> -> vector<64x8xf32>
    %cst_132 = arith.constant dense<0.000000e+00> : vector<8x8xf32>
    %416 = tpu.matmul %413, %415, %cst_132 {dimension_numbers = #tpu.dot_dimension_numbers<[1], [0], [0], [1], [0, 0, 1, 1], [], []>} : vector<8x64xf32>, vector<64x8xf32>, vector<8x8xf32> -> vector<8x8xf32>
    %cst_133 = arith.constant 1.250000e-01 : f32
    %417 = vector.broadcast %cst_133 : f32 to vector<8x8xf32>
    %418 = arith.mulf %416, %417 : vector<8x8xf32>
    %cst_134 = arith.constant dense<0xFF800000> : vector<8xf32>
    %419 = vector.multi_reduction <maximumf>, %418, %cst_134 [1] : vector<8x8xf32> to vector<8xf32>
    %420 = vector.shape_cast %419 : vector<8xf32> to vector<8x1xf32>
    %421 = vector.broadcast %420 : vector<8x1xf32> to vector<8x8xf32>
    %422 = arith.subf %418, %421 : vector<8x8xf32>
    %423 = math.exp %422 : vector<8x8xf32>
    %cst_135 = arith.constant dense<0.000000e+00> : vector<8xf32>
    %424 = vector.multi_reduction <add>, %423, %cst_135 [1] : vector<8x8xf32> to vector<8xf32>
    %425 = vector.shape_cast %424 : vector<8xf32> to vector<8x1xf32>
    %426 = tpu.reciprocal %425 {approx = true} : vector<8x1xf32> -> vector<8x1xf32>
    %427 = vector.broadcast %426 : vector<8x1xf32> to vector<8x8xf32>
    %428 = arith.mulf %423, %427 : vector<8x8xf32>
    %429 = arith.truncf %428 : vector<8x8xf32> to vector<8x8xbf16>
    %430 = vector.extract_strided_slice %363 {offsets = [0, 128], sizes = [8, 64], strides = [1, 1]} : vector<8x256xf32> to vector<8x64xf32>
    %431 = arith.truncf %430 : vector<8x64xf32> to vector<8x64xbf16>
    %cst_136 = arith.constant dense<0.000000e+00> : vector<8x64xf32>
    %432 = tpu.matmul %429, %431, %cst_136 {dimension_numbers = #tpu.dot_dimension_numbers<[1], [0], [0], [1], [0, 0, 1, 1], [], []>} : vector<8x8xbf16>, vector<8x64xbf16>, vector<8x64xf32> -> vector<8x64xf32>
    %433 = arith.truncf %432 : vector<8x64xf32> to vector<8x64xbf16>
    %434 = vector.extract_strided_slice %254 {offsets = [128, 0], sizes = [64, 256], strides = [1, 1]} : vector<256x256xbf16> to vector<64x256xbf16>
    %cst_137 = arith.constant dense<0.000000e+00> : vector<8x256xf32>
    %435 = tpu.matmul %433, %434, %cst_137 {dimension_numbers = #tpu.dot_dimension_numbers<[1], [0], [0], [1], [0, 0, 1, 1], [], []>} : vector<8x64xbf16>, vector<64x256xbf16>, vector<8x256xf32> -> vector<8x256xf32>
    %436 = arith.addf %412, %435 : vector<8x256xf32>
    %437 = vector.extract_strided_slice %361 {offsets = [0, 192], sizes = [8, 64], strides = [1, 1]} : vector<8x256xf32> to vector<8x64xf32>
    %438 = vector.extract_strided_slice %362 {offsets = [0, 192], sizes = [8, 64], strides = [1, 1]} : vector<8x256xf32> to vector<8x64xf32>
    %439 = tpu.transpose %438, [1, 0] : vector<8x64xf32> -> vector<64x8xf32>
    %cst_138 = arith.constant dense<0.000000e+00> : vector<8x8xf32>
    %440 = tpu.matmul %437, %439, %cst_138 {dimension_numbers = #tpu.dot_dimension_numbers<[1], [0], [0], [1], [0, 0, 1, 1], [], []>} : vector<8x64xf32>, vector<64x8xf32>, vector<8x8xf32> -> vector<8x8xf32>
    %cst_139 = arith.constant 1.250000e-01 : f32
    %441 = vector.broadcast %cst_139 : f32 to vector<8x8xf32>
    %442 = arith.mulf %440, %441 : vector<8x8xf32>
    %cst_140 = arith.constant dense<0xFF800000> : vector<8xf32>
    %443 = vector.multi_reduction <maximumf>, %442, %cst_140 [1] : vector<8x8xf32> to vector<8xf32>
    %444 = vector.shape_cast %443 : vector<8xf32> to vector<8x1xf32>
    %445 = vector.broadcast %444 : vector<8x1xf32> to vector<8x8xf32>
    %446 = arith.subf %442, %445 : vector<8x8xf32>
    %447 = math.exp %446 : vector<8x8xf32>
    %cst_141 = arith.constant dense<0.000000e+00> : vector<8xf32>
    %448 = vector.multi_reduction <add>, %447, %cst_141 [1] : vector<8x8xf32> to vector<8xf32>
    %449 = vector.shape_cast %448 : vector<8xf32> to vector<8x1xf32>
    %450 = tpu.reciprocal %449 {approx = true} : vector<8x1xf32> -> vector<8x1xf32>
    %451 = vector.broadcast %450 : vector<8x1xf32> to vector<8x8xf32>
    %452 = arith.mulf %447, %451 : vector<8x8xf32>
    %453 = arith.truncf %452 : vector<8x8xf32> to vector<8x8xbf16>
    %454 = vector.extract_strided_slice %363 {offsets = [0, 192], sizes = [8, 64], strides = [1, 1]} : vector<8x256xf32> to vector<8x64xf32>
    %455 = arith.truncf %454 : vector<8x64xf32> to vector<8x64xbf16>
    %cst_142 = arith.constant dense<0.000000e+00> : vector<8x64xf32>
    %456 = tpu.matmul %453, %455, %cst_142 {dimension_numbers = #tpu.dot_dimension_numbers<[1], [0], [0], [1], [0, 0, 1, 1], [], []>} : vector<8x8xbf16>, vector<8x64xbf16>, vector<8x64xf32> -> vector<8x64xf32>
    %457 = arith.truncf %456 : vector<8x64xf32> to vector<8x64xbf16>
    %458 = vector.extract_strided_slice %254 {offsets = [192, 0], sizes = [64, 256], strides = [1, 1]} : vector<256x256xbf16> to vector<64x256xbf16>
    %cst_143 = arith.constant dense<0.000000e+00> : vector<8x256xf32>
    %459 = tpu.matmul %457, %458, %cst_143 {dimension_numbers = #tpu.dot_dimension_numbers<[1], [0], [0], [1], [0, 0, 1, 1], [], []>} : vector<8x64xbf16>, vector<64x256xbf16>, vector<8x256xf32> -> vector<8x256xf32>
    %460 = arith.addf %436, %459 : vector<8x256xf32>
    %461 = tpu.concatenate %360, %460 in 0 : vector<8x256xf32>, vector<8x256xf32> -> vector<16x256xf32>
    %c0_144 = arith.constant 0 : index
    %c0_145 = arith.constant 0 : index
    %c0_146 = arith.constant 0 : index
    %462 = vector.load %arg15[%c0_144, %c0_145, %c0_146] : memref<1x1x256xf32, #tpu.memory_space<vmem>>, vector<1x1x256xf32>
    %463 = vector.shape_cast %462 : vector<1x1x256xf32> to vector<1x256xf32>
    %c0_147 = arith.constant 0 : index
    %c0_148 = arith.constant 0 : index
    %c0_149 = arith.constant 0 : index
    %464 = vector.load %arg16[%c0_147, %c0_148, %c0_149] : memref<1x1x256xf32, #tpu.memory_space<vmem>>, vector<1x1x256xf32>
    %465 = vector.shape_cast %464 : vector<1x1x256xf32> to vector<1x256xf32>
    %cst_150 = arith.constant dense<0.000000e+00> : vector<16xf32>
    %466 = vector.multi_reduction <add>, %461, %cst_150 [1] : vector<16x256xf32> to vector<16xf32>
    %467 = vector.shape_cast %466 : vector<16xf32> to vector<16x1xf32>
    %cst_151 = arith.constant 2.560000e+02 : f32
    %468 = vector.broadcast %cst_151 : f32 to vector<16x1xf32>
    %469 = arith.divf %467, %468 : vector<16x1xf32>
    %470 = vector.broadcast %469 : vector<16x1xf32> to vector<16x256xf32>
    %471 = arith.subf %461, %470 : vector<16x256xf32>
    %472 = arith.mulf %471, %471 : vector<16x256xf32>
    %cst_152 = arith.constant dense<0.000000e+00> : vector<16xf32>
    %473 = vector.multi_reduction <add>, %472, %cst_152 [1] : vector<16x256xf32> to vector<16xf32>
    %474 = vector.shape_cast %473 : vector<16xf32> to vector<16x1xf32>
    %cst_153 = arith.constant 2.560000e+02 : f32
    %475 = vector.broadcast %cst_153 : f32 to vector<16x1xf32>
    %476 = arith.divf %474, %475 : vector<16x1xf32>
    %477 = vector.broadcast %469 : vector<16x1xf32> to vector<16x256xf32>
    %478 = arith.subf %461, %477 : vector<16x256xf32>
    %cst_154 = arith.constant 9.99999974E-6 : f32
    %479 = vector.broadcast %cst_154 : f32 to vector<16x1xf32>
    %480 = arith.addf %476, %479 : vector<16x1xf32>
    %481 = math.rsqrt %480 : vector<16x1xf32>
    %482 = vector.broadcast %481 : vector<16x1xf32> to vector<16x256xf32>
    %483 = arith.mulf %478, %482 : vector<16x256xf32>
    %484 = vector.broadcast %463 : vector<1x256xf32> to vector<16x256xf32>
    %485 = arith.mulf %483, %484 : vector<16x256xf32>
    %486 = vector.broadcast %465 : vector<1x256xf32> to vector<16x256xf32>
    %487 = arith.addf %485, %486 : vector<16x256xf32>
    %488 = arith.addf %246, %487 : vector<16x256xf32>
    %489 = arith.truncf %488 : vector<16x256xf32> to vector<16x256xbf16>
    %c0_155 = arith.constant 0 : index
    %c0_156 = arith.constant 0 : index
    %c0_157 = arith.constant 0 : index
    %490 = vector.load %arg17[%c0_155, %c0_156, %c0_157] : memref<1x256x1024xbf16, #tpu.memory_space<vmem>>, vector<1x256x1024xbf16>
    %491 = vector.shape_cast %490 : vector<1x256x1024xbf16> to vector<256x1024xbf16>
    %cst_158 = arith.constant dense<0.000000e+00> : vector<16x1024xf32>
    %492 = tpu.matmul %489, %491, %cst_158 {dimension_numbers = #tpu.dot_dimension_numbers<[1], [0], [0], [1], [0, 0, 1, 1], [], []>} : vector<16x256xbf16>, vector<256x1024xbf16>, vector<16x1024xf32> -> vector<16x1024xf32>
    %cst_159 = arith.constant 0.000000e+00 : f32
    %493 = vector.broadcast %cst_159 : f32 to vector<16x1024xf32>
    %494 = arith.maximumf %492, %493 : vector<16x1024xf32>
    %495 = arith.truncf %494 : vector<16x1024xf32> to vector<16x1024xbf16>
    %c0_160 = arith.constant 0 : index
    %c0_161 = arith.constant 0 : index
    %c0_162 = arith.constant 0 : index
    %496 = vector.load %arg18[%c0_160, %c0_161, %c0_162] : memref<1x1024x256xbf16, #tpu.memory_space<vmem>>, vector<1x1024x256xbf16>
    %497 = vector.shape_cast %496 : vector<1x1024x256xbf16> to vector<1024x256xbf16>
    %cst_163 = arith.constant dense<0.000000e+00> : vector<16x256xf32>
    %498 = tpu.matmul %495, %497, %cst_163 {dimension_numbers = #tpu.dot_dimension_numbers<[1], [0], [0], [1], [0, 0, 1, 1], [], []>} : vector<16x1024xbf16>, vector<1024x256xbf16>, vector<16x256xf32> -> vector<16x256xf32>
    %cst_164 = arith.constant 0.000000e+00 : f32
    %499 = vector.broadcast %cst_164 : f32 to vector<16x256xf32>
    %500 = arith.maximumf %498, %499 : vector<16x256xf32>
    %c0_165 = arith.constant 0 : index
    %c0_166 = arith.constant 0 : index
    %c0_167 = arith.constant 0 : index
    %501 = vector.load %arg19[%c0_165, %c0_166, %c0_167] : memref<1x1x256xf32, #tpu.memory_space<vmem>>, vector<1x1x256xf32>
    %502 = vector.shape_cast %501 : vector<1x1x256xf32> to vector<1x256xf32>
    %c0_168 = arith.constant 0 : index
    %c0_169 = arith.constant 0 : index
    %c0_170 = arith.constant 0 : index
    %503 = vector.load %arg20[%c0_168, %c0_169, %c0_170] : memref<1x1x256xf32, #tpu.memory_space<vmem>>, vector<1x1x256xf32>
    %504 = vector.shape_cast %503 : vector<1x1x256xf32> to vector<1x256xf32>
    %cst_171 = arith.constant dense<0.000000e+00> : vector<16xf32>
    %505 = vector.multi_reduction <add>, %500, %cst_171 [1] : vector<16x256xf32> to vector<16xf32>
    %506 = vector.shape_cast %505 : vector<16xf32> to vector<16x1xf32>
    %cst_172 = arith.constant 2.560000e+02 : f32
    %507 = vector.broadcast %cst_172 : f32 to vector<16x1xf32>
    %508 = arith.divf %506, %507 : vector<16x1xf32>
    %509 = vector.broadcast %508 : vector<16x1xf32> to vector<16x256xf32>
    %510 = arith.subf %500, %509 : vector<16x256xf32>
    %511 = arith.mulf %510, %510 : vector<16x256xf32>
    %cst_173 = arith.constant dense<0.000000e+00> : vector<16xf32>
    %512 = vector.multi_reduction <add>, %511, %cst_173 [1] : vector<16x256xf32> to vector<16xf32>
    %513 = vector.shape_cast %512 : vector<16xf32> to vector<16x1xf32>
    %cst_174 = arith.constant 2.560000e+02 : f32
    %514 = vector.broadcast %cst_174 : f32 to vector<16x1xf32>
    %515 = arith.divf %513, %514 : vector<16x1xf32>
    %516 = vector.broadcast %508 : vector<16x1xf32> to vector<16x256xf32>
    %517 = arith.subf %500, %516 : vector<16x256xf32>
    %cst_175 = arith.constant 9.99999974E-6 : f32
    %518 = vector.broadcast %cst_175 : f32 to vector<16x1xf32>
    %519 = arith.addf %515, %518 : vector<16x1xf32>
    %520 = math.rsqrt %519 : vector<16x1xf32>
    %521 = vector.broadcast %520 : vector<16x1xf32> to vector<16x256xf32>
    %522 = arith.mulf %517, %521 : vector<16x256xf32>
    %523 = vector.broadcast %502 : vector<1x256xf32> to vector<16x256xf32>
    %524 = arith.mulf %522, %523 : vector<16x256xf32>
    %525 = vector.broadcast %504 : vector<1x256xf32> to vector<16x256xf32>
    %526 = arith.addf %524, %525 : vector<16x256xf32>
    %527 = arith.addf %488, %526 : vector<16x256xf32>
    %c0_176 = arith.constant 0 : index
    %c0_177 = arith.constant 0 : index
    %528 = vector.load %arg23[%c0_176, %c0_177] : memref<16x256xf32, #tpu.memory_space<vmem>>, vector<16x256xf32>
    tpu.vector_store %arg23[%c0_176, %c0_177], %527 {strides = array<i32>} : memref<16x256xf32, #tpu.memory_space<vmem>>, vector<16x256xf32>,
    %c3_i32 = arith.constant 3 : i32
    %529 = arith.cmpi eq, %arg0, %c3_i32 : i32
    %530 = arith.extui %529 : i1 to i32
    %c0_i32_178 = arith.constant 0 : i32
    %531 = arith.cmpi ne, %530, %c0_i32_178 : i32
    scf.if %531 {
      %532 = arith.truncf %527 : vector<16x256xf32> to vector<16x256xbf16>
      %c0_179 = arith.constant 0 : index
      %c0_180 = arith.constant 0 : index
      %533 = vector.load %arg21[%c0_179, %c0_180] : memref<256x128xbf16, #tpu.memory_space<vmem>>, vector<256x128xbf16>
      %cst_181 = arith.constant dense<0.000000e+00> : vector<16x128xf32>
      %534 = tpu.matmul %532, %533, %cst_181 {dimension_numbers = #tpu.dot_dimension_numbers<[1], [0], [0], [1], [0, 0, 1, 1], [], []>} : vector<16x256xbf16>, vector<256x128xbf16>, vector<16x128xf32> -> vector<16x128xf32>
      %c0_182 = arith.constant 0 : index
      %c0_183 = arith.constant 0 : index
      %535 = vector.load %arg22[%c0_182, %c0_183] : memref<16x128xf32, #tpu.memory_space<vmem>>, vector<16x128xf32>
      tpu.vector_store %arg22[%c0_182, %c0_183], %534 {strides = array<i32>} : memref<16x128xf32, #tpu.memory_space<vmem>>, vector<16x128xf32>,
    } else {
    }
    return
  }
  func.func @transform_0(%arg0: i32) -> (i32, i32) {
    %c0_i32 = arith.constant 0 : i32
    %c0_i32_0 = arith.constant 0 : i32
    %c0_i32_1 = arith.constant 0 : i32
    return %c0_i32, %c0_i32_0 : i32, i32
  }
  func.func @transform_1(%arg0: i32) -> (i32, i32) {
    %c0_i32 = arith.constant 0 : i32
    %c0_i32_0 = arith.constant 0 : i32
    %c0_i32_1 = arith.constant 0 : i32
    return %c0_i32, %c0_i32_0 : i32, i32
  }
  func.func @transform_2(%arg0: i32) -> (i32, i32) {
    %c0_i32 = arith.constant 0 : i32
    %c0_i32_0 = arith.constant 0 : i32
    %c0_i32_1 = arith.constant 0 : i32
    return %c0_i32, %c0_i32_0 : i32, i32
  }
  func.func @transform_3(%arg0: i32) -> (i32, i32) {
    %c0_i32 = arith.constant 0 : i32
    %c0_i32_0 = arith.constant 0 : i32
    %c0_i32_1 = arith.constant 0 : i32
    return %c0_i32, %c0_i32_0 : i32, i32
  }
  func.func @transform_4(%arg0: i32) -> (i32, i32, i32) {
    %c0_i32 = arith.constant 0 : i32
    %c0_i32_0 = arith.constant 0 : i32
    %c0_i32_1 = arith.constant 0 : i32
    return %arg0, %c0_i32, %c0_i32_0 : i32, i32, i32
  }
  func.func @transform_5(%arg0: i32) -> (i32, i32, i32) {
    %c0_i32 = arith.constant 0 : i32
    %c0_i32_0 = arith.constant 0 : i32
    %c0_i32_1 = arith.constant 0 : i32
    return %arg0, %c0_i32, %c0_i32_0 : i32, i32, i32
  }
  func.func @transform_6(%arg0: i32) -> (i32, i32, i32) {
    %c0_i32 = arith.constant 0 : i32
    %c0_i32_0 = arith.constant 0 : i32
    %c0_i32_1 = arith.constant 0 : i32
    return %arg0, %c0_i32, %c0_i32_0 : i32, i32, i32
  }
  func.func @transform_7(%arg0: i32) -> (i32, i32, i32) {
    %c0_i32 = arith.constant 0 : i32
    %c0_i32_0 = arith.constant 0 : i32
    %c0_i32_1 = arith.constant 0 : i32
    return %arg0, %c0_i32, %c0_i32_0 : i32, i32, i32
  }
  func.func @transform_8(%arg0: i32) -> (i32, i32, i32) {
    %c0_i32 = arith.constant 0 : i32
    %c0_i32_0 = arith.constant 0 : i32
    %c0_i32_1 = arith.constant 0 : i32
    return %arg0, %c0_i32, %c0_i32_0 : i32, i32, i32
  }
  func.func @transform_9(%arg0: i32) -> (i32, i32, i32) {
    %c0_i32 = arith.constant 0 : i32
    %c0_i32_0 = arith.constant 0 : i32
    %c0_i32_1 = arith.constant 0 : i32
    return %arg0, %c0_i32, %c0_i32_0 : i32, i32, i32
  }
  func.func @transform_10(%arg0: i32) -> (i32, i32, i32) {
    %c0_i32 = arith.constant 0 : i32
    %c0_i32_0 = arith.constant 0 : i32
    %c0_i32_1 = arith.constant 0 : i32
    return %arg0, %c0_i32, %c0_i32_0 : i32, i32, i32
  }
  func.func @transform_11(%arg0: i32) -> (i32, i32, i32) {
    %c0_i32 = arith.constant 0 : i32
    %c0_i32_0 = arith.constant 0 : i32
    %c0_i32_1 = arith.constant 0 : i32
    return %arg0, %c0_i32, %c0_i32_0 : i32, i32, i32
  }
  func.func @transform_12(%arg0: i32) -> (i32, i32, i32) {
    %c0_i32 = arith.constant 0 : i32
    %c0_i32_0 = arith.constant 0 : i32
    %c0_i32_1 = arith.constant 0 : i32
    return %arg0, %c0_i32, %c0_i32_0 : i32, i32, i32
  }
  func.func @transform_13(%arg0: i32) -> (i32, i32, i32) {
    %c0_i32 = arith.constant 0 : i32
    %c0_i32_0 = arith.constant 0 : i32
    %c0_i32_1 = arith.constant 0 : i32
    return %arg0, %c0_i32, %c0_i32_0 : i32, i32, i32
  }
  func.func @transform_14(%arg0: i32) -> (i32, i32, i32) {
    %c0_i32 = arith.constant 0 : i32
    %c0_i32_0 = arith.constant 0 : i32
    %c0_i32_1 = arith.constant 0 : i32
    return %arg0, %c0_i32, %c0_i32_0 : i32, i32, i32
  }
  func.func @transform_15(%arg0: i32) -> (i32, i32, i32) {
    %c0_i32 = arith.constant 0 : i32
    %c0_i32_0 = arith.constant 0 : i32
    %c0_i32_1 = arith.constant 0 : i32
    return %arg0, %c0_i32, %c0_i32_0 : i32, i32, i32
  }
  func.func @transform_16(%arg0: i32) -> (i32, i32, i32) {
    %c0_i32 = arith.constant 0 : i32
    %c0_i32_0 = arith.constant 0 : i32
    %c0_i32_1 = arith.constant 0 : i32
    return %arg0, %c0_i32, %c0_i32_0 : i32, i32, i32
  }
  func.func @transform_17(%arg0: i32) -> (i32, i32, i32) {
    %c0_i32 = arith.constant 0 : i32
    %c0_i32_0 = arith.constant 0 : i32
    %c0_i32_1 = arith.constant 0 : i32
    return %arg0, %c0_i32, %c0_i32_0 : i32, i32, i32
  }
  func.func @transform_18(%arg0: i32) -> (i32, i32, i32) {
    %c0_i32 = arith.constant 0 : i32
    %c0_i32_0 = arith.constant 0 : i32
    %c0_i32_1 = arith.constant 0 : i32
    return %arg0, %c0_i32, %c0_i32_0 : i32, i32, i32
  }
  func.func @transform_19(%arg0: i32) -> (i32, i32, i32) {
    %c0_i32 = arith.constant 0 : i32
    %c0_i32_0 = arith.constant 0 : i32
    %c0_i32_1 = arith.constant 0 : i32
    return %arg0, %c0_i32, %c0_i32_0 : i32, i32, i32
  }
  func.func @transform_20(%arg0: i32) -> (i32, i32) {
    %c0_i32 = arith.constant 0 : i32
    %c0_i32_0 = arith.constant 0 : i32
    %c0_i32_1 = arith.constant 0 : i32
    return %c0_i32, %c0_i32_0 : i32, i32
  }
  func.func @transform_21(%arg0: i32) -> (i32, i32) {
    %c0_i32 = arith.constant 0 : i32
    %c0_i32_0 = arith.constant 0 : i32
    %c0_i32_1 = arith.constant 0 : i32
    return %c0_i32, %c0_i32_0 : i32, i32
  }
}

</mosaic_0001>

<llo_original>
// kernel: decoder_forward.1
$region0: #{decoder_forward.1}
  #allocation0 [shape = 'u32[]', space=smem, size = 0x4, offset = 0x4, fixed_abs, tag = 'smem constant byte address 0x4 - core index']
  #allocation1 [shape = 'u32[72,128]{1,0:T(1,128)}', space=vmem, size = 0x9000, scoped, tag = 'internal scratch']
  #allocation2 [shape = 'f32[16,256]{1,0:T(8,128)}', space=vmem, size = 0x4000, scoped, tag = 'scratch operand']
  %s0 = inlined_call_operand.vmem [shape: s32[16,1], index: 0, kind: input, shape index: {}]
  %s1 = inlined_call_operand.hbm [shape: f32[16,256], index: 1, kind: input, shape index: {}]
  %s2 = inlined_call_operand.hbm [shape: f32[29,256], index: 2, kind: input, shape index: {}]
  %s3 = inlined_call_operand.hbm [shape: f32[12,256], index: 3, kind: input, shape index: {}]
  %s4 = inlined_call_operand.hbm [shape: bf16[4,256,256], index: 4, kind: input, shape index: {}]
  %s5 = inlined_call_operand.hbm [shape: bf16[4,256,256], index: 5, kind: input, shape index: {}]
  %s6 = inlined_call_operand.hbm [shape: bf16[4,256,256], index: 6, kind: input, shape index: {}]
  %s7 = inlined_call_operand.hbm [shape: bf16[4,256,256], index: 7, kind: input, shape index: {}]
  %s8 = inlined_call_operand.hbm [shape: f32[4,1,256], index: 8, kind: input, shape index: {}]
  %s9 = inlined_call_operand.hbm [shape: f32[4,1,256], index: 9, kind: input, shape index: {}]
  %s10 = inlined_call_operand.hbm [shape: bf16[4,256,256], index: 10, kind: input, shape index: {}]
  %s11 = inlined_call_operand.hbm [shape: bf16[4,256,256], index: 11, kind: input, shape index: {}]
  %s12 = inlined_call_operand.hbm [shape: bf16[4,256,256], index: 12, kind: input, shape index: {}]
  %s13 = inlined_call_operand.hbm [shape: bf16[4,256,256], index: 13, kind: input, shape index: {}]
  %s14 = inlined_call_operand.hbm [shape: f32[4,1,256], index: 14, kind: input, shape index: {}]
  %s15 = inlined_call_operand.hbm [shape: f32[4,1,256], index: 15, kind: input, shape index: {}]
  %s16 = inlined_call_operand.hbm [shape: bf16[4,256,1024], index: 16, kind: input, shape index: {}]
  %s17 = inlined_call_operand.hbm [shape: bf16[4,1024,256], index: 17, kind: input, shape index: {}]
  %s18 = inlined_call_operand.hbm [shape: f32[4,1,256], index: 18, kind: input, shape index: {}]
  %s19 = inlined_call_operand.hbm [shape: f32[4,1,256], index: 19, kind: input, shape index: {}]
  %s20 = inlined_call_operand.hbm [shape: bf16[256,128], index: 20, kind: input, shape index: {}]
  %s21 = inlined_call_operand.hbm [shape: f32[16,128], index: 21, kind: output, shape index: {}]
  %s22 = sld [smem:[#allocation0]]
  $region205: #{decoder_forward.1} parent=0
    _
  %s24 = ssub.s32 1, %s22
  %s25 = scalar_select 0, %s24, %s22
  $region1: #{decoder_forward.1} parent=0
    #allocation3 [shape = 'u8[16384]{0}', space=vmem, size = 0x4000, scoped, tag = 'input window, operand 1, single buffered']
    #allocation4 [shape = 's32[2]{0}', space=sflag, size = 0x8, scoped, tag = 'scoped memory for decoder_forward.1']
    #allocation5 [shape = 's32[2]{0}', space=sflag, size = 0x8, scoped, tag = 'scoped memory for decoder_forward.1']
    #allocation6 [shape = 'u8[32768]{0}', space=vmem, size = 0x8000, scoped, tag = 'input window, operand 2, single buffered']
    #allocation7 [shape = 's32[1]{0}', space=sflag, size = 0x4, scoped, tag = 'scoped memory for decoder_forward.1']
    #allocation8 [shape = 'u8[16384]{0}', space=vmem, size = 0x4000, scoped, tag = 'input window, operand 3, single buffered']
    #allocation9 [shape = 'u8[262144]{0}', space=vmem, size = 0x40000, scoped, tag = 'input window, operand 4']
    #allocation10 [shape = 's32[2]{0}', space=sflag, size = 0x8, scoped, tag = 'scoped memory for decoder_forward.1']
    #allocation11 [shape = 'u8[262144]{0}', space=vmem, size = 0x40000, scoped, tag = 'input window, operand 5']
    #allocation12 [shape = 'u8[262144]{0}', space=vmem, size = 0x40000, scoped, tag = 'input window, operand 6']
    #allocation13 [shape = 's32[2]{0}', space=sflag, size = 0x8, scoped, tag = 'scoped memory for decoder_forward.1']
    #allocation14 [shape = 'u8[262144]{0}', space=vmem, size = 0x40000, scoped, tag = 'input window, operand 7']
    #allocation15 [shape = 'u8[2048]{0}', space=vmem, size = 0x800, scoped, tag = 'input window, operand 8']
    #allocation16 [shape = 's32[2]{0}', space=sflag, size = 0x8, scoped, tag = 'scoped memory for decoder_forward.1']
    #allocation17 [shape = 'u8[2048]{0}', space=vmem, size = 0x800, scoped, tag = 'input window, operand 9']
    #allocation18 [shape = 'u8[262144]{0}', space=vmem, size = 0x40000, scoped, tag = 'input window, operand 10']
    #allocation19 [shape = 's32[2]{0}', space=sflag, size = 0x8, scoped, tag = 'scoped memory for decoder_forward.1']
    #allocation20 [shape = 'u8[262144]{0}', space=vmem, size = 0x40000, scoped, tag = 'input window, operand 11']
    #allocation21 [shape = 'u8[262144]{0}', space=vmem, size = 0x40000, scoped, tag = 'input window, operand 12']
    #allocation22 [shape = 's32[2]{0}', space=sflag, size = 0x8, scoped, tag = 'scoped memory for decoder_forward.1']
    #allocation23 [shape = 'u8[262144]{0}', space=vmem, size = 0x40000, scoped, tag = 'input window, operand 13']
    #allocation24 [shape = 'u8[2048]{0}', space=vmem, size = 0x800, scoped, tag = 'input window, operand 14']
    #allocation25 [shape = 's32[2]{0}', space=sflag, size = 0x8, scoped, tag = 'scoped memory for decoder_forward.1']
    #allocation26 [shape = 'u8[2048]{0}', space=vmem, size = 0x800, scoped, tag = 'input window, operand 15']
    #allocation27 [shape = 'u8[1048576]{0}', space=vmem, size = 0x100000, scoped, tag = 'input window, operand 16']
    #allocation28 [shape = 's32[2]{0}', space=sflag, size = 0x8, scoped, tag = 'scoped memory for decoder_forward.1']
    #allocation29 [shape = 'u8[1048576]{0}', space=vmem, size = 0x100000, scoped, tag = 'input window, operand 17']
    #allocation30 [shape = 'u8[2048]{0}', space=vmem, size = 0x800, scoped, tag = 'input window, operand 18']
    #allocation31 [shape = 's32[2]{0}', space=sflag, size = 0x8, scoped, tag = 'scoped memory for decoder_forward.1']
    #allocation32 [shape = 'u8[2048]{0}', space=vmem, size = 0x800, scoped, tag = 'input window, operand 19']
    #allocation33 [shape = 'u8[65536]{0}', space=vmem, size = 0x10000, scoped, tag = 'input window, operand 20, single buffered']
    #allocation34 [shape = 's32[1]{0}', space=sflag, size = 0x4, scoped, tag = 'scoped memory for decoder_forward.1']
    #allocation35 [shape = 'u8[8192]{0}', space=vmem, size = 0x2000, scoped, tag = 'output window, operand 0, single buffered']
    %26 = vsyncpa [#allocation4], 0
    %27 = vsyncpa [#allocation7], 0
    %28 = vsyncpa [#allocation10], 0
    %s29 = scalar_lea.sflag [#allocation10], 1
    %30 = vsyncpa %s29, 0
    %31 = vsyncpa [#allocation13], 0
    %s32 = scalar_lea.sflag [#allocation13], 1
    %33 = vsyncpa %s32, 0
    %34 = vsyncpa [#allocation16], 0
    %s35 = scalar_lea.sflag [#allocation16], 1
    %36 = vsyncpa %s35, 0
    %37 = vsyncpa [#allocation19], 0
    %s38 = scalar_lea.sflag [#allocation19], 1
    %39 = vsyncpa %s38, 0
    %40 = vsyncpa [#allocation22], 0
    %s41 = scalar_lea.sflag [#allocation22], 1
    %42 = vsyncpa %s41, 0
    %43 = vsyncpa [#allocation25], 0
    %s44 = scalar_lea.sflag [#allocation25], 1
    %45 = vsyncpa %s44, 0
    %46 = vsyncpa [#allocation28], 0
    %s47 = scalar_lea.sflag [#allocation28], 1
    %48 = vsyncpa %s47, 0
    %49 = vsyncpa [#allocation31], 0
    %s50 = scalar_lea.sflag [#allocation31], 1
    %51 = vsyncpa %s50, 0
    %52 = vsyncpa [#allocation34], 0
    %53 = vsyncpa [#allocation5], 0
    loop: start=0, step=1, limit=6
    $region2: #{decoder_forward.1} parent=1 // loop_pre_header
      _
    $region3: #{decoder_forward.1} parent=1 // loop_header
      %s55 = sphi 0, %s59
      %p56 = scmp.ge.s32.totalorder %s55, 6
      %s63 = sphi 0, %s63
      %s65 = sphi 0, %s63
      %s66 = sphi 0, %s65
      %s80 = sphi 0, %s66
      %s84 = sphi 0, %s84
      %s86 = sphi 0, %s84
      %s87 = sphi 0, %s86
      %s101 = sphi 0, %s87
      %s105 = sphi 0, %s105
      %s107 = sphi 0, %s105
      %s108 = sphi 0, %s107
      %s122 = sphi 0, %s108
      %s126 = sphi 0, %s126
      %s128 = sphi 0, %s126
      %s129 = sphi 0, %s128
      %s143 = sphi 0, %s129
      %s149 = sphi 0, %s151
      %s152 = sphi 0, %s149
      %s153 = sphi 0, %s152
      %s169 = sphi 0, %s153
      %s175 = sphi 0, %s177
      %s178 = sphi 0, %s175
      %s179 = sphi 0, %s178
      %s195 = sphi 0, %s179
      %s201 = sphi 0, %s203
      %s204 = sphi 0, %s201
      %s205 = sphi 0, %s204
      %s221 = sphi 0, %s205
      %s227 = sphi 0, %s229
      %s230 = sphi 0, %s227
      %s231 = sphi 0, %s230
      %s247 = sphi 0, %s231
      %s253 = sphi 0, %s255
      %s256 = sphi 0, %s253
      %s257 = sphi 0, %s256
      %s273 = sphi 0, %s257
      %s279 = sphi 0, %s281
      %s282 = sphi 0, %s279
      %s283 = sphi 0, %s282
      %s299 = sphi 0, %s283
      %s305 = sphi 0, %s307
      %s308 = sphi 0, %s305
      %s309 = sphi 0, %s308
      %s325 = sphi 0, %s309
      %s331 = sphi 0, %s333
      %s334 = sphi 0, %s331
      %s335 = sphi 0, %s334
      %s351 = sphi 0, %s335
      %s357 = sphi 0, %s359
      %s360 = sphi 0, %s357
      %s361 = sphi 0, %s360
      %s377 = sphi 0, %s361
      %s383 = sphi 0, %s385
      %s386 = sphi 0, %s383
      %s387 = sphi 0, %s386
      %s403 = sphi 0, %s387
      %s409 = sphi 0, %s411
      %s412 = sphi 0, %s409
      %s413 = sphi 0, %s412
      %s429 = sphi 0, %s413
      %s435 = sphi 0, %s437
      %s438 = sphi 0, %s435
      %s439 = sphi 0, %s438
      %s455 = sphi 0, %s439
      %s461 = sphi 0, %s463
      %s464 = sphi 0, %s461
      %s465 = sphi 0, %s464
      %s481 = sphi 0, %s465
      %s487 = sphi 0, %s489
      %s490 = sphi 0, %s487
      %s491 = sphi 0, %s490
      %s507 = sphi 0, %s491
      %s513 = sphi 0, %s515
      %s516 = sphi 0, %s513
      %s517 = sphi 0, %s516
      %s533 = sphi 0, %s517
      %s539 = sphi 0, %s541
      %s542 = sphi 0, %s539
      %s543 = sphi 0, %s542
      %s559 = sphi 0, %s543
      %s563 = sphi 0, %s563
      %s565 = sphi 0, %s563
      %s566 = sphi 0, %s565
      %s580 = sphi 0, %s566
      %s584 = sphi 0, %s584
      %s586 = sphi 0, %s584
      %s587 = sphi 0, %s586
      %s601 = sphi 0, %s587
    $region4: #{decoder_forward.1} parent=1 // loop_header_branch
      %58 = sbr.rel (%p56) target = $region8
    $region5: #{decoder_forward.1} parent=1 // loop_body
      %s60 = ssub.s32 %s55, 1
      %s61 = ssub.s32 %s55, 2
      %s62 = sadd.s32 %s55, 1
      %s64 = sadd.s32 %s63, 1
      %p67 = scmp.eq.s32.totalorder %s55, 3
      %p68 = scmp.ne.s32.totalorder %s63, %s65
      %p69 = scmp.eq.s32.totalorder %s55, 0
      %p70 = por %p68, %p69
      %p71 = scmp.ne.s32.totalorder %s63, %s65
      %p72 = scmp.eq.s32.totalorder %s60, 3
      %p73 = por %p71, %p72
      %p74 = scmp.ne.s32.totalorder %s65, %s66
      %p75 = scmp.eq.s32.totalorder %s60, 0
      %p76 = por %p74, %p75
      %p77 = scmp.ne.s32.totalorder %s65, %s66
      %p78 = scmp.eq.s32.totalorder %s61, 3
      %p79 = por %p77, %p78
      %p81 = scmp.ne.s32.totalorder %s66, %s80
      %p82 = scmp.eq.s32.totalorder %s61, 0
      %p83 = por %p81, %p82
      %s85 = sadd.s32 %s84, 1
      %p88 = scmp.eq.s32.totalorder %s55, 3
      %p89 = scmp.ne.s32.totalorder %s84, %s86
      %p90 = scmp.eq.s32.totalorder %s55, 0
      %p91 = por %p89, %p90
      %p92 = scmp.ne.s32.totalorder %s84, %s86
      %p93 = scmp.eq.s32.totalorder %s60, 3
      %p94 = por %p92, %p93
      %p95 = scmp.ne.s32.totalorder %s86, %s87
      %p96 = scmp.eq.s32.totalorder %s60, 0
      %p97 = por %p95, %p96
      %p98 = scmp.ne.s32.totalorder %s86, %s87
      %p99 = scmp.eq.s32.totalorder %s61, 3
      %p100 = por %p98, %p99
      %p102 = scmp.ne.s32.totalorder %s87, %s101
      %p103 = scmp.eq.s32.totalorder %s61, 0
      %p104 = por %p102, %p103
      %s106 = sadd.s32 %s105, 1
      %p109 = scmp.eq.s32.totalorder %s55, 3
      %p110 = scmp.ne.s32.totalorder %s105, %s107
      %p111 = scmp.eq.s32.totalorder %s55, 0
      %p112 = por %p110, %p111
      %p113 = scmp.ne.s32.totalorder %s105, %s107
      %p114 = scmp.eq.s32.totalorder %s60, 3
      %p115 = por %p113, %p114
      %p116 = scmp.ne.s32.totalorder %s107, %s108
      %p117 = scmp.eq.s32.totalorder %s60, 0
      %p118 = por %p116, %p117
      %p119 = scmp.ne.s32.totalorder %s107, %s108
      %p120 = scmp.eq.s32.totalorder %s61, 3
      %p121 = por %p119, %p120
      %p123 = scmp.ne.s32.totalorder %s108, %s122
      %p124 = scmp.eq.s32.totalorder %s61, 0
      %p125 = por %p123, %p124
      %s127 = sadd.s32 %s126, 1
      %p130 = scmp.eq.s32.totalorder %s55, 3
      %p131 = scmp.ne.s32.totalorder %s126, %s128
      %p132 = scmp.eq.s32.totalorder %s55, 0
      %p133 = por %p131, %p132
      %p134 = scmp.ne.s32.totalorder %s126, %s128
      %p135 = scmp.eq.s32.totalorder %s60, 3
      %p136 = por %p134, %p135
      %p137 = scmp.ne.s32.totalorder %s128, %s129
      %p138 = scmp.eq.s32.totalorder %s60, 0
      %p139 = por %p137, %p138
      %p140 = scmp.ne.s32.totalorder %s128, %s129
      %p141 = scmp.eq.s32.totalorder %s61, 3
      %p142 = por %p140, %p141
      %p144 = scmp.ne.s32.totalorder %s129, %s143
      %p145 = scmp.eq.s32.totalorder %s61, 0
      %p146 = por %p144, %p145
      %s147 = ssub.s32 %s55, %s62
      %p148 = scmp.eq.s32.totalorder %s147, 0
      %s150 = sadd.s32 %s149, 1
      %s151 = scalar_select %p148, %s149, %s150
      %p154 = pneg %p148
      %p155 = scmp.eq.s32.totalorder %s55, 3
      %p156 = por %p154, %p155
      %p157 = scmp.ne.s32.totalorder %s149, %s152
      %p158 = scmp.eq.s32.totalorder %s55, 0
      %p159 = por %p157, %p158
      %p160 = scmp.ne.s32.totalorder %s149, %s152
      %p161 = scmp.eq.s32.totalorder %s60, 3
      %p162 = por %p160, %p161
      %p163 = scmp.ne.s32.totalorder %s152, %s153
      %p164 = scmp.eq.s32.totalorder %s60, 0
      %p165 = por %p163, %p164
      %p166 = scmp.ne.s32.totalorder %s152, %s153
      %p167 = scmp.eq.s32.totalorder %s61, 3
      %p168 = por %p166, %p167
      %p170 = scmp.ne.s32.totalorder %s153, %s169
      %p171 = scmp.eq.s32.totalorder %s61, 0
      %p172 = por %p170, %p171
      %s173 = ssub.s32 %s55, %s62
      %p174 = scmp.eq.s32.totalorder %s173, 0
      %s176 = sadd.s32 %s175, 1
      %s177 = scalar_select %p174, %s175, %s176
      %p180 = pneg %p174
      %p181 = scmp.eq.s32.totalorder %s55, 3
      %p182 = por %p180, %p181
      %p183 = scmp.ne.s32.totalorder %s175, %s178
      %p184 = scmp.eq.s32.totalorder %s55, 0
      %p185 = por %p183, %p184
      %p186 = scmp.ne.s32.totalorder %s175, %s178
      %p187 = scmp.eq.s32.totalorder %s60, 3
      %p188 = por %p186, %p187
      %p189 = scmp.ne.s32.totalorder %s178, %s179
      %p190 = scmp.eq.s32.totalorder %s60, 0
      %p191 = por %p189, %p190
      %p192 = scmp.ne.s32.totalorder %s178, %s179
      %p193 = scmp.eq.s32.totalorder %s61, 3
      %p194 = por %p192, %p193
      %p196 = scmp.ne.s32.totalorder %s179, %s195
      %p197 = scmp.eq.s32.totalorder %s61, 0
      %p198 = por %p196, %p197
      %s199 = ssub.s32 %s55, %s62
      %p200 = scmp.eq.s32.totalorder %s199, 0
      %s202 = sadd.s32 %s201, 1
      %s203 = scalar_select %p200, %s201, %s202
      %p206 = pneg %p200
      %p207 = scmp.eq.s32.totalorder %s55, 3
      %p208 = por %p206, %p207
      %p209 = scmp.ne.s32.totalorder %s201, %s204
      %p210 = scmp.eq.s32.totalorder %s55, 0
      %p211 = por %p209, %p210
      %p212 = scmp.ne.s32.totalorder %s201, %s204
      %p213 = scmp.eq.s32.totalorder %s60, 3
      %p214 = por %p212, %p213
      %p215 = scmp.ne.s32.totalorder %s204, %s205
      %p216 = scmp.eq.s32.totalorder %s60, 0
      %p217 = por %p215, %p216
      %p218 = scmp.ne.s32.totalorder %s204, %s205
      %p219 = scmp.eq.s32.totalorder %s61, 3
      %p220 = por %p218, %p219
      %p222 = scmp.ne.s32.totalorder %s205, %s221
      %p223 = scmp.eq.s32.totalorder %s61, 0
      %p224 = por %p222, %p223
      %s225 = ssub.s32 %s55, %s62
      %p226 = scmp.eq.s32.totalorder %s225, 0
      %s228 = sadd.s32 %s227, 1
      %s229 = scalar_select %p226, %s227, %s228
      %p232 = pneg %p226
      %p233 = scmp.eq.s32.totalorder %s55, 3
      %p234 = por %p232, %p233
      %p235 = scmp.ne.s32.totalorder %s227, %s230
      %p236 = scmp.eq.s32.totalorder %s55, 0
      %p237 = por %p235, %p236
      %p238 = scmp.ne.s32.totalorder %s227, %s230
      %p239 = scmp.eq.s32.totalorder %s60, 3
      %p240 = por %p238, %p239
      %p241 = scmp.ne.s32.totalorder %s230, %s231
      %p242 = scmp.eq.s32.totalorder %s60, 0
      %p243 = por %p241, %p242
      %p244 = scmp.ne.s32.totalorder %s230, %s231
      %p245 = scmp.eq.s32.totalorder %s61, 3
      %p246 = por %p244, %p245
      %p248 = scmp.ne.s32.totalorder %s231, %s247
      %p249 = scmp.eq.s32.totalorder %s61, 0
      %p250 = por %p248, %p249
      %s251 = ssub.s32 %s55, %s62
      %p252 = scmp.eq.s32.totalorder %s251, 0
      %s254 = sadd.s32 %s253, 1
      %s255 = scalar_select %p252, %s253, %s254
      %p258 = pneg %p252
      %p259 = scmp.eq.s32.totalorder %s55, 3
      %p260 = por %p258, %p259
      %p261 = scmp.ne.s32.totalorder %s253, %s256
      %p262 = scmp.eq.s32.totalorder %s55, 0
      %p263 = por %p261, %p262
      %p264 = scmp.ne.s32.totalorder %s253, %s256
      %p265 = scmp.eq.s32.totalorder %s60, 3
      %p266 = por %p264, %p265
      %p267 = scmp.ne.s32.totalorder %s256, %s257
      %p268 = scmp.eq.s32.totalorder %s60, 0
      %p269 = por %p267, %p268
      %p270 = scmp.ne.s32.totalorder %s256, %s257
      %p271 = scmp.eq.s32.totalorder %s61, 3
      %p272 = por %p270, %p271
      %p274 = scmp.ne.s32.totalorder %s257, %s273
      %p275 = scmp.eq.s32.totalorder %s61, 0
      %p276 = por %p274, %p275
      %s277 = ssub.s32 %s55, %s62
      %p278 = scmp.eq.s32.totalorder %s277, 0
      %s280 = sadd.s32 %s279, 1
      %s281 = scalar_select %p278, %s279, %s280
      %p284 = pneg %p278
      %p285 = scmp.eq.s32.totalorder %s55, 3
      %p286 = por %p284, %p285
      %p287 = scmp.ne.s32.totalorder %s279, %s282
      %p288 = scmp.eq.s32.totalorder %s55, 0
      %p289 = por %p287, %p288
      %p290 = scmp.ne.s32.totalorder %s279, %s282
      %p291 = scmp.eq.s32.totalorder %s60, 3
      %p292 = por %p290, %p291
      %p293 = scmp.ne.s32.totalorder %s282, %s283
      %p294 = scmp.eq.s32.totalorder %s60, 0
      %p295 = por %p293, %p294
      %p296 = scmp.ne.s32.totalorder %s282, %s283
      %p297 = scmp.eq.s32.totalorder %s61, 3
      %p298 = por %p296, %p297
      %p300 = scmp.ne.s32.totalorder %s283, %s299
      %p301 = scmp.eq.s32.totalorder %s61, 0
      %p302 = por %p300, %p301
      %s303 = ssub.s32 %s55, %s62
      %p304 = scmp.eq.s32.totalorder %s303, 0
      %s306 = sadd.s32 %s305, 1
      %s307 = scalar_select %p304, %s305, %s306
      %p310 = pneg %p304
      %p311 = scmp.eq.s32.totalorder %s55, 3
      %p312 = por %p310, %p311
      %p313 = scmp.ne.s32.totalorder %s305, %s308
      %p314 = scmp.eq.s32.totalorder %s55, 0
      %p315 = por %p313, %p314
      %p316 = scmp.ne.s32.totalorder %s305, %s308
      %p317 = scmp.eq.s32.totalorder %s60, 3
      %p318 = por %p316, %p317
      %p319 = scmp.ne.s32.totalorder %s308, %s309
      %p320 = scmp.eq.s32.totalorder %s60, 0
      %p321 = por %p319, %p320
      %p322 = scmp.ne.s32.totalorder %s308, %s309
      %p323 = scmp.eq.s32.totalorder %s61, 3
      %p324 = por %p322, %p323
      %p326 = scmp.ne.s32.totalorder %s309, %s325
      %p327 = scmp.eq.s32.totalorder %s61, 0
      %p328 = por %p326, %p327
      %s329 = ssub.s32 %s55, %s62
      %p330 = scmp.eq.s32.totalorder %s329, 0
      %s332 = sadd.s32 %s331, 1
      %s333 = scalar_select %p330, %s331, %s332
      %p336 = pneg %p330
      %p337 = scmp.eq.s32.totalorder %s55, 3
      %p338 = por %p336, %p337
      %p339 = scmp.ne.s32.totalorder %s331, %s334
      %p340 = scmp.eq.s32.totalorder %s55, 0
      %p341 = por %p339, %p340
      %p342 = scmp.ne.s32.totalorder %s331, %s334
      %p343 = scmp.eq.s32.totalorder %s60, 3
      %p344 = por %p342, %p343
      %p345 = scmp.ne.s32.totalorder %s334, %s335
      %p346 = scmp.eq.s32.totalorder %s60, 0
      %p347 = por %p345, %p346
      %p348 = scmp.ne.s32.totalorder %s334, %s335
      %p349 = scmp.eq.s32.totalorder %s61, 3
      %p350 = por %p348, %p349
      %p352 = scmp.ne.s32.totalorder %s335, %s351
      %p353 = scmp.eq.s32.totalorder %s61, 0
      %p354 = por %p352, %p353
      %s355 = ssub.s32 %s55, %s62
      %p356 = scmp.eq.s32.totalorder %s355, 0
      %s358 = sadd.s32 %s357, 1
      %s359 = scalar_select %p356, %s357, %s358
      %p362 = pneg %p356
      %p363 = scmp.eq.s32.totalorder %s55, 3
      %p364 = por %p362, %p363
      %p365 = scmp.ne.s32.totalorder %s357, %s360
      %p366 = scmp.eq.s32.totalorder %s55, 0
      %p367 = por %p365, %p366
      %p368 = scmp.ne.s32.totalorder %s357, %s360
      %p369 = scmp.eq.s32.totalorder %s60, 3
      %p370 = por %p368, %p369
      %p371 = scmp.ne.s32.totalorder %s360, %s361
      %p372 = scmp.eq.s32.totalorder %s60, 0
      %p373 = por %p371, %p372
      %p374 = scmp.ne.s32.totalorder %s360, %s361
      %p375 = scmp.eq.s32.totalorder %s61, 3
      %p376 = por %p374, %p375
      %p378 = scmp.ne.s32.totalorder %s361, %s377
      %p379 = scmp.eq.s32.totalorder %s61, 0
      %p380 = por %p378, %p379
      %s381 = ssub.s32 %s55, %s62
      %p382 = scmp.eq.s32.totalorder %s381, 0
      %s384 = sadd.s32 %s383, 1
      %s385 = scalar_select %p382, %s383, %s384
      %p388 = pneg %p382
      %p389 = scmp.eq.s32.totalorder %s55, 3
      %p390 = por %p388, %p389
      %p391 = scmp.ne.s32.totalorder %s383, %s386
      %p392 = scmp.eq.s32.totalorder %s55, 0
      %p393 = por %p391, %p392
      %p394 = scmp.ne.s32.totalorder %s383, %s386
      %p395 = scmp.eq.s32.totalorder %s60, 3
      %p396 = por %p394, %p395
      %p397 = scmp.ne.s32.totalorder %s386, %s387
      %p398 = scmp.eq.s32.totalorder %s60, 0
      %p399 = por %p397, %p398
      %p400 = scmp.ne.s32.totalorder %s386, %s387
      %p401 = scmp.eq.s32.totalorder %s61, 3
      %p402 = por %p400, %p401
      %p404 = scmp.ne.s32.totalorder %s387, %s403
      %p405 = scmp.eq.s32.totalorder %s61, 0
      %p406 = por %p404, %p405
      %s407 = ssub.s32 %s55, %s62
      %p408 = scmp.eq.s32.totalorder %s407, 0
      %s410 = sadd.s32 %s409, 1
      %s411 = scalar_select %p408, %s409, %s410
      %p414 = pneg %p408
      %p415 = scmp.eq.s32.totalorder %s55, 3
      %p416 = por %p414, %p415
      %p417 = scmp.ne.s32.totalorder %s409, %s412
      %p418 = scmp.eq.s32.totalorder %s55, 0
      %p419 = por %p417, %p418
      %p420 = scmp.ne.s32.totalorder %s409, %s412
      %p421 = scmp.eq.s32.totalorder %s60, 3
      %p422 = por %p420, %p421
      %p423 = scmp.ne.s32.totalorder %s412, %s413
      %p424 = scmp.eq.s32.totalorder %s60, 0
      %p425 = por %p423, %p424
      %p426 = scmp.ne.s32.totalorder %s412, %s413
      %p427 = scmp.eq.s32.totalorder %s61, 3
      %p428 = por %p426, %p427
      %p430 = scmp.ne.s32.totalorder %s413, %s429
      %p431 = scmp.eq.s32.totalorder %s61, 0
      %p432 = por %p430, %p431
      %s433 = ssub.s32 %s55, %s62
      %p434 = scmp.eq.s32.totalorder %s433, 0
      %s436 = sadd.s32 %s435, 1
      %s437 = scalar_select %p434, %s435, %s436
      %p440 = pneg %p434
      %p441 = scmp.eq.s32.totalorder %s55, 3
      %p442 = por %p440, %p441
      %p443 = scmp.ne.s32.totalorder %s435, %s438
      %p444 = scmp.eq.s32.totalorder %s55, 0
      %p445 = por %p443, %p444
      %p446 = scmp.ne.s32.totalorder %s435, %s438
      %p447 = scmp.eq.s32.totalorder %s60, 3
      %p448 = por %p446, %p447
      %p449 = scmp.ne.s32.totalorder %s438, %s439
      %p450 = scmp.eq.s32.totalorder %s60, 0
      %p451 = por %p449, %p450
      %p452 = scmp.ne.s32.totalorder %s438, %s439
      %p453 = scmp.eq.s32.totalorder %s61, 3
      %p454 = por %p452, %p453
      %p456 = scmp.ne.s32.totalorder %s439, %s455
      %p457 = scmp.eq.s32.totalorder %s61, 0
      %p458 = por %p456, %p457
      %s459 = ssub.s32 %s55, %s62
      %p460 = scmp.eq.s32.totalorder %s459, 0
      %s462 = sadd.s32 %s461, 1
      %s463 = scalar_select %p460, %s461, %s462
      %p466 = pneg %p460
      %p467 = scmp.eq.s32.totalorder %s55, 3
      %p468 = por %p466, %p467
      %p469 = scmp.ne.s32.totalorder %s461, %s464
      %p470 = scmp.eq.s32.totalorder %s55, 0
      %p471 = por %p469, %p470
      %p472 = scmp.ne.s32.totalorder %s461, %s464
      %p473 = scmp.eq.s32.totalorder %s60, 3
      %p474 = por %p472, %p473
      %p475 = scmp.ne.s32.totalorder %s464, %s465
      %p476 = scmp.eq.s32.totalorder %s60, 0
      %p477 = por %p475, %p476
      %p478 = scmp.ne.s32.totalorder %s464, %s465
      %p479 = scmp.eq.s32.totalorder %s61, 3
      %p480 = por %p478, %p479
      %p482 = scmp.ne.s32.totalorder %s465, %s481
      %p483 = scmp.eq.s32.totalorder %s61, 0
      %p484 = por %p482, %p483
      %s485 = ssub.s32 %s55, %s62
      %p486 = scmp.eq.s32.totalorder %s485, 0
      %s488 = sadd.s32 %s487, 1
      %s489 = scalar_select %p486, %s487, %s488
      %p492 = pneg %p486
      %p493 = scmp.eq.s32.totalorder %s55, 3
      %p494 = por %p492, %p493
      %p495 = scmp.ne.s32.totalorder %s487, %s490
      %p496 = scmp.eq.s32.totalorder %s55, 0
      %p497 = por %p495, %p496
      %p498 = scmp.ne.s32.totalorder %s487, %s490
      %p499 = scmp.eq.s32.totalorder %s60, 3
      %p500 = por %p498, %p499
      %p501 = scmp.ne.s32.totalorder %s490, %s491
      %p502 = scmp.eq.s32.totalorder %s60, 0
      %p503 = por %p501, %p502
      %p504 = scmp.ne.s32.totalorder %s490, %s491
      %p505 = scmp.eq.s32.totalorder %s61, 3
      %p506 = por %p504, %p505
      %p508 = scmp.ne.s32.totalorder %s491, %s507
      %p509 = scmp.eq.s32.totalorder %s61, 0
      %p510 = por %p508, %p509
      %s511 = ssub.s32 %s55, %s62
      %p512 = scmp.eq.s32.totalorder %s511, 0
      %s514 = sadd.s32 %s513, 1
      %s515 = scalar_select %p512, %s513, %s514
      %p518 = pneg %p512
      %p519 = scmp.eq.s32.totalorder %s55, 3
      %p520 = por %p518, %p519
      %p521 = scmp.ne.s32.totalorder %s513, %s516
      %p522 = scmp.eq.s32.totalorder %s55, 0
      %p523 = por %p521, %p522
      %p524 = scmp.ne.s32.totalorder %s513, %s516
      %p525 = scmp.eq.s32.totalorder %s60, 3
      %p526 = por %p524, %p525
      %p527 = scmp.ne.s32.totalorder %s516, %s517
      %p528 = scmp.eq.s32.totalorder %s60, 0
      %p529 = por %p527, %p528
      %p530 = scmp.ne.s32.totalorder %s516, %s517
      %p531 = scmp.eq.s32.totalorder %s61, 3
      %p532 = por %p530, %p531
      %p534 = scmp.ne.s32.totalorder %s517, %s533
      %p535 = scmp.eq.s32.totalorder %s61, 0
      %p536 = por %p534, %p535
      %s537 = ssub.s32 %s55, %s62
      %p538 = scmp.eq.s32.totalorder %s537, 0
      %s540 = sadd.s32 %s539, 1
      %s541 = scalar_select %p538, %s539, %s540
      %p544 = pneg %p538
      %p545 = scmp.eq.s32.totalorder %s55, 3
      %p546 = por %p544, %p545
      %p547 = scmp.ne.s32.totalorder %s539, %s542
      %p548 = scmp.eq.s32.totalorder %s55, 0
      %p549 = por %p547, %p548
      %p550 = scmp.ne.s32.totalorder %s539, %s542
      %p551 = scmp.eq.s32.totalorder %s60, 3
      %p552 = por %p550, %p551
      %p553 = scmp.ne.s32.totalorder %s542, %s543
      %p554 = scmp.eq.s32.totalorder %s60, 0
      %p555 = por %p553, %p554
      %p556 = scmp.ne.s32.totalorder %s542, %s543
      %p557 = scmp.eq.s32.totalorder %s61, 3
      %p558 = por %p556, %p557
      %p560 = scmp.ne.s32.totalorder %s543, %s559
      %p561 = scmp.eq.s32.totalorder %s61, 0
      %p562 = por %p560, %p561
      %s564 = sadd.s32 %s563, 1
      %p567 = scmp.eq.s32.totalorder %s55, 3
      %p568 = scmp.ne.s32.totalorder %s563, %s565
      %p569 = scmp.eq.s32.totalorder %s55, 0
      %p570 = por %p568, %p569
      %p571 = scmp.ne.s32.totalorder %s563, %s565
      %p572 = scmp.eq.s32.totalorder %s60, 3
      %p573 = por %p571, %p572
      %p574 = scmp.ne.s32.totalorder %s565, %s566
      %p575 = scmp.eq.s32.totalorder %s60, 0
      %p576 = por %p574, %p575
      %p577 = scmp.ne.s32.totalorder %s565, %s566
      %p578 = scmp.eq.s32.totalorder %s61, 3
      %p579 = por %p577, %p578
      %p581 = scmp.ne.s32.totalorder %s566, %s580
      %p582 = scmp.eq.s32.totalorder %s61, 0
      %p583 = por %p581, %p582
      %s585 = sadd.s32 %s584, 1
      %p588 = scmp.eq.s32.totalorder %s55, 3
      %p589 = scmp.ne.s32.totalorder %s584, %s586
      %p590 = scmp.eq.s32.totalorder %s55, 0
      %p591 = por %p589, %p590
      %p592 = scmp.ne.s32.totalorder %s584, %s586
      %p593 = scmp.eq.s32.totalorder %s60, 3
      %p594 = por %p592, %p593
      %p595 = scmp.ne.s32.totalorder %s586, %s587
      %p596 = scmp.eq.s32.totalorder %s60, 0
      %p597 = por %p595, %p596
      %p598 = scmp.ne.s32.totalorder %s586, %s587
      %p599 = scmp.eq.s32.totalorder %s61, 3
      %p600 = por %p598, %p599
      %p602 = scmp.ne.s32.totalorder %s587, %s601
      %p603 = scmp.eq.s32.totalorder %s61, 0
      %p604 = por %p602, %p603
      %p605 = scmp.le.s32.totalorder 1, %s55
      %p606 = scmp.lt.s32.totalorder %s55, 5
      %p607 = pnand %p605, %p606
      %p608 = pneg %p607
      // Predicated region
      $region9: #{decoder_forward.1} parent=5 // pred_check
        _
      $region10: #{decoder_forward.1} parent=5 // pred_check_branch
        %610 = sbr.rel (%p607) target = $region12
      $region11: #{decoder_forward.1} parent=5 // pred_region
        %s611 = ssub.s32 %s55, 1
        // Predicated region
        $region13: #{decoder_forward.1} parent=11 // pred_check
          %p612 = pneg %p76
        $region14: #{decoder_forward.1} parent=11 // pred_check_branch
          %614 = sbr.rel (%p612) target = $region16
        $region15: #{decoder_forward.1} parent=11 // pred_region
          _
        $region16: #{decoder_forward.1} parent=11 // pred_fallthru
          _
        // Predicated region
        $region17: #{decoder_forward.1} parent=11 // pred_check
          %p615 = pneg %p97
        $region18: #{decoder_forward.1} parent=11 // pred_check_branch
          %617 = sbr.rel (%p615) target = $region20
        $region19: #{decoder_forward.1} parent=11 // pred_region
          %619 = vsyncadd [#allocation4], 0
          %s620 = sshll.u32 %s1, 4
          %s621 = int_to_ptr.hbm [resolvable:$true] %s620
          %s622 = sshll.u32 [#allocation3], 4
          %s623 = int_to_ptr.vmem [resolvable:$true] %s622
          %628 = dma.hbm_to_vmem [thread:$0]  %s621, 512, %s623, [#allocation4], 256, 256, 16
        $region20: #{decoder_forward.1} parent=11 // pred_fallthru
          _
        // Predicated region
        $region21: #{decoder_forward.1} parent=11 // pred_check
          %p629 = pneg %p118
        $region22: #{decoder_forward.1} parent=11 // pred_check_branch
          %631 = sbr.rel (%p629) target = $region24
        $region23: #{decoder_forward.1} parent=11 // pred_region
          %633 = vsyncadd [#allocation7], 0
          %s634 = sshll.u32 %s2, 4
          %s635 = int_to_ptr.hbm [resolvable:$true] %s634
          %s636 = sshll.u32 [#allocation6], 4
          %s637 = int_to_ptr.vmem [resolvable:$true] %s636
          %642 = dma.hbm_to_vmem [thread:$0]  %s635, 1024, %s637, [#allocation7], 256, 256, 16
        $region24: #{decoder_forward.1} parent=11 // pred_fallthru
          _
        // Predicated region
        $region25: #{decoder_forward.1} parent=11 // pred_check
          %p643 = pneg %p139
        $region26: #{decoder_forward.1} parent=11 // pred_check_branch
          %645 = sbr.rel (%p643) target = $region28
        $region27: #{decoder_forward.1} parent=11 // pred_region
          %647 = vsyncadd [#allocation7], 0
          %s648 = sshll.u32 %s3, 4
          %s649 = int_to_ptr.hbm [resolvable:$true] %s648
          %s650 = sshll.u32 [#allocation8], 4
          %s651 = int_to_ptr.vmem [resolvable:$true] %s650
          %656 = dma.hbm_to_vmem [thread:$0]  %s649, 512, %s651, [#allocation7], 256, 256, 16
        $region28: #{decoder_forward.1} parent=11 // pred_fallthru
          _
        // Predicated region
        $region29: #{decoder_forward.1} parent=11 // pred_check
          %p657 = pneg %p576
        $region30: #{decoder_forward.1} parent=11 // pred_check_branch
          %659 = sbr.rel (%p657) target = $region32
        $region31: #{decoder_forward.1} parent=11 // pred_region
          %661 = vsyncadd [#allocation34], 0
          %s662 = sshll.u32 %s20, 4
          %s663 = int_to_ptr.hbm [resolvable:$true] %s662
          %s664 = sshll.u32 [#allocation33], 4
          %s665 = int_to_ptr.vmem [resolvable:$true] %s664
          %670 = dma.hbm_to_vmem [thread:$0]  %s663, 2048, %s665, [#allocation34], 64, 64, 4
        $region32: #{decoder_forward.1} parent=11 // pred_fallthru
          _
      $region12: #{decoder_forward.1} parent=5 // pred_fallthru
        _
      %p671 = scmp.lt.s32.totalorder %s55, 4
      // Predicated region
      $region33: #{decoder_forward.1} parent=5 // pred_check
        %p672 = pneg %p671
      $region34: #{decoder_forward.1} parent=5 // pred_check_branch
        %674 = sbr.rel (%p672) target = $region36
      $region35: #{decoder_forward.1} parent=5 // pred_region
        // Predicated region
        $region37: #{decoder_forward.1} parent=35 // pred_check
          %p675 = pneg %p159
        $region38: #{decoder_forward.1} parent=35 // pred_check_branch
          %677 = sbr.rel (%p675) target = $region40
        $region39: #{decoder_forward.1} parent=35 // pred_region
          %s678 = sand.u32 %s55, 1
          %s679 = scalar_lea.sflag [#allocation10], %s678
          %s680 = sand.u32 %s149, 1
          %s681 = smul.addr %s680, 256
          %s682 = scalar_lea.vmem [#allocation9], %s681
          %684 = vsyncadd %s679, 0
          %s685 = smul.addr %s55, 64
          %s686 = smul.addr %s685, 4
          %s687 = scalar_lea.hbm %s4, %s686
          %s688 = sshll.u32 %s687, 4
          %s689 = int_to_ptr.hbm [resolvable:$true] %s688
          %s690 = sshll.u32 %s682, 4
          %s691 = int_to_ptr.vmem [resolvable:$true] %s690
          %696 = dma.hbm_to_vmem [thread:$0]  %s689, 4096, %s691, %s679, 128, 128, 8
        $region40: #{decoder_forward.1} parent=35 // pred_fallthru
          _
        // Predicated region
        $region41: #{decoder_forward.1} parent=35 // pred_check
          %p697 = pneg %p185
        $region42: #{decoder_forward.1} parent=35 // pred_check_branch
          %699 = sbr.rel (%p697) target = $region44
        $region43: #{decoder_forward.1} parent=35 // pred_region
          %s700 = sand.u32 %s55, 1
          %s701 = scalar_lea.sflag [#allocation10], %s700
          %s702 = sand.u32 %s175, 1
          %s703 = smul.addr %s702, 256
          %s704 = scalar_lea.vmem [#allocation11], %s703
          %706 = vsyncadd %s701, 0
          %s707 = smul.addr %s55, 64
          %s708 = smul.addr %s707, 4
          %s709 = scalar_lea.hbm %s5, %s708
          %s710 = sshll.u32 %s709, 4
          %s711 = int_to_ptr.hbm [resolvable:$true] %s710
          %s712 = sshll.u32 %s704, 4
          %s713 = int_to_ptr.vmem [resolvable:$true] %s712
          %718 = dma.hbm_to_vmem [thread:$0]  %s711, 4096, %s713, %s701, 128, 128, 8
        $region44: #{decoder_forward.1} parent=35 // pred_fallthru
          _
        // Predicated region
        $region45: #{decoder_forward.1} parent=35 // pred_check
          %p719 = pneg %p211
        $region46: #{decoder_forward.1} parent=35 // pred_check_branch
          %721 = sbr.rel (%p719) target = $region48
        $region47: #{decoder_forward.1} parent=35 // pred_region
          %s722 = sand.u32 %s55, 1
          %s723 = scalar_lea.sflag [#allocation13], %s722
          %s724 = sand.u32 %s201, 1
          %s725 = smul.addr %s724, 256
          %s726 = scalar_lea.vmem [#allocation12], %s725
          %728 = vsyncadd %s723, 0
          %s729 = smul.addr %s55, 64
          %s730 = smul.addr %s729, 4
          %s731 = scalar_lea.hbm %s6, %s730
          %s732 = sshll.u32 %s731, 4
          %s733 = int_to_ptr.hbm [resolvable:$true] %s732
          %s734 = sshll.u32 %s726, 4
          %s735 = int_to_ptr.vmem [resolvable:$true] %s734
          %740 = dma.hbm_to_vmem [thread:$0]  %s733, 4096, %s735, %s723, 128, 128, 8
        $region48: #{decoder_forward.1} parent=35 // pred_fallthru
          _
        // Predicated region
        $region49: #{decoder_forward.1} parent=35 // pred_check
          %p741 = pneg %p237
        $region50: #{decoder_forward.1} parent=35 // pred_check_branch
          %743 = sbr.rel (%p741) target = $region52
        $region51: #{decoder_forward.1} parent=35 // pred_region
          %s744 = sand.u32 %s55, 1
          %s745 = scalar_lea.sflag [#allocation13], %s744
          %s746 = sand.u32 %s227, 1
          %s747 = smul.addr %s746, 256
          %s748 = scalar_lea.vmem [#allocation14], %s747
          %750 = vsyncadd %s745, 0
          %s751 = smul.addr %s55, 64
          %s752 = smul.addr %s751, 4
          %s753 = scalar_lea.hbm %s7, %s752
          %s754 = sshll.u32 %s753, 4
          %s755 = int_to_ptr.hbm [resolvable:$true] %s754
          %s756 = sshll.u32 %s748, 4
          %s757 = int_to_ptr.vmem [resolvable:$true] %s756
          %762 = dma.hbm_to_vmem [thread:$0]  %s755, 4096, %s757, %s745, 128, 128, 8
        $region52: #{decoder_forward.1} parent=35 // pred_fallthru
          _
        // Predicated region
        $region53: #{decoder_forward.1} parent=35 // pred_check
          %p763 = pneg %p263
        $region54: #{decoder_forward.1} parent=35 // pred_check_branch
          %765 = sbr.rel (%p763) target = $region56
        $region55: #{decoder_forward.1} parent=35 // pred_region
          %s766 = sand.u32 %s55, 1
          %s767 = scalar_lea.sflag [#allocation16], %s766
          %s768 = sand.u32 %s253, 1
          %s769 = smul.addr %s768, 2
          %s770 = scalar_lea.vmem [#allocation15], %s769
          %772 = vsyncadd %s767, 0
          %s773 = smul.addr %s55, 2
          %s774 = scalar_lea.hbm %s8, %s773
          %s776 = sshll.u32 %s774, 4
          %s777 = int_to_ptr.hbm [resolvable:$true] %s776
          %s778 = sshll.u32 %s770, 4
          %s779 = int_to_ptr.vmem [resolvable:$true] %s778
          %781 = dma.hbm_to_vmem [thread:$0]  %s777, 32, %s779, %s767
        $region56: #{decoder_forward.1} parent=35 // pred_fallthru
          _
        // Predicated region
        $region57: #{decoder_forward.1} parent=35 // pred_check
          %p782 = pneg %p289
        $region58: #{decoder_forward.1} parent=35 // pred_check_branch
          %784 = sbr.rel (%p782) target = $region60
        $region59: #{decoder_forward.1} parent=35 // pred_region
          %s785 = sand.u32 %s55, 1
          %s786 = scalar_lea.sflag [#allocation16], %s785
          %s787 = sand.u32 %s279, 1
          %s788 = smul.addr %s787, 2
          %s789 = scalar_lea.vmem [#allocation17], %s788
          %791 = vsyncadd %s786, 0
          %s792 = smul.addr %s55, 2
          %s793 = scalar_lea.hbm %s9, %s792
          %s795 = sshll.u32 %s793, 4
          %s796 = int_to_ptr.hbm [resolvable:$true] %s795
          %s797 = sshll.u32 %s789, 4
          %s798 = int_to_ptr.vmem [resolvable:$true] %s797
          %800 = dma.hbm_to_vmem [thread:$0]  %s796, 32, %s798, %s786
        $region60: #{decoder_forward.1} parent=35 // pred_fallthru
          _
        // Predicated region
        $region61: #{decoder_forward.1} parent=35 // pred_check
          %p801 = pneg %p315
        $region62: #{decoder_forward.1} parent=35 // pred_check_branch
          %803 = sbr.rel (%p801) target = $region64
        $region63: #{decoder_forward.1} parent=35 // pred_region
          %s804 = sand.u32 %s55, 1
          %s805 = scalar_lea.sflag [#allocation19], %s804
          %s806 = sand.u32 %s305, 1
          %s807 = smul.addr %s806, 256
          %s808 = scalar_lea.vmem [#allocation18], %s807
          %810 = vsyncadd %s805, 0
          %s811 = smul.addr %s55, 64
          %s812 = smul.addr %s811, 4
          %s813 = scalar_lea.hbm %s10, %s812
          %s814 = sshll.u32 %s813, 4
          %s815 = int_to_ptr.hbm [resolvable:$true] %s814
          %s816 = sshll.u32 %s808, 4
          %s817 = int_to_ptr.vmem [resolvable:$true] %s816
          %822 = dma.hbm_to_vmem [thread:$0]  %s815, 4096, %s817, %s805, 128, 128, 8
        $region64: #{decoder_forward.1} parent=35 // pred_fallthru
          _
        // Predicated region
        $region65: #{decoder_forward.1} parent=35 // pred_check
          %p823 = pneg %p341
        $region66: #{decoder_forward.1} parent=35 // pred_check_branch
          %825 = sbr.rel (%p823) target = $region68
        $region67: #{decoder_forward.1} parent=35 // pred_region
          %s826 = sand.u32 %s55, 1
          %s827 = scalar_lea.sflag [#allocation19], %s826
          %s828 = sand.u32 %s331, 1
          %s829 = smul.addr %s828, 256
          %s830 = scalar_lea.vmem [#allocation20], %s829
          %832 = vsyncadd %s827, 0
          %s833 = smul.addr %s55, 64
          %s834 = smul.addr %s833, 4
          %s835 = scalar_lea.hbm %s11, %s834
          %s836 = sshll.u32 %s835, 4
          %s837 = int_to_ptr.hbm [resolvable:$true] %s836
          %s838 = sshll.u32 %s830, 4
          %s839 = int_to_ptr.vmem [resolvable:$true] %s838
          %844 = dma.hbm_to_vmem [thread:$0]  %s837, 4096, %s839, %s827, 128, 128, 8
        $region68: #{decoder_forward.1} parent=35 // pred_fallthru
          _
        // Predicated region
        $region69: #{decoder_forward.1} parent=35 // pred_check
          %p845 = pneg %p367
        $region70: #{decoder_forward.1} parent=35 // pred_check_branch
          %847 = sbr.rel (%p845) target = $region72
        $region71: #{decoder_forward.1} parent=35 // pred_region
          %s848 = sand.u32 %s55, 1
          %s849 = scalar_lea.sflag [#allocation22], %s848
          %s850 = sand.u32 %s357, 1
          %s851 = smul.addr %s850, 256
          %s852 = scalar_lea.vmem [#allocation21], %s851
          %854 = vsyncadd %s849, 0
          %s855 = smul.addr %s55, 64
          %s856 = smul.addr %s855, 4
          %s857 = scalar_lea.hbm %s12, %s856
          %s858 = sshll.u32 %s857, 4
          %s859 = int_to_ptr.hbm [resolvable:$true] %s858
          %s860 = sshll.u32 %s852, 4
          %s861 = int_to_ptr.vmem [resolvable:$true] %s860
          %866 = dma.hbm_to_vmem [thread:$0]  %s859, 4096, %s861, %s849, 128, 128, 8
        $region72: #{decoder_forward.1} parent=35 // pred_fallthru
          _
        // Predicated region
        $region73: #{decoder_forward.1} parent=35 // pred_check
          %p867 = pneg %p393
        $region74: #{decoder_forward.1} parent=35 // pred_check_branch
          %869 = sbr.rel (%p867) target = $region76
        $region75: #{decoder_forward.1} parent=35 // pred_region
          %s870 = sand.u32 %s55, 1
          %s871 = scalar_lea.sflag [#allocation22], %s870
          %s872 = sand.u32 %s383, 1
          %s873 = smul.addr %s872, 256
          %s874 = scalar_lea.vmem [#allocation23], %s873
          %876 = vsyncadd %s871, 0
          %s877 = smul.addr %s55, 64
          %s878 = smul.addr %s877, 4
          %s879 = scalar_lea.hbm %s13, %s878
          %s880 = sshll.u32 %s879, 4
          %s881 = int_to_ptr.hbm [resolvable:$true] %s880
          %s882 = sshll.u32 %s874, 4
          %s883 = int_to_ptr.vmem [resolvable:$true] %s882
          %888 = dma.hbm_to_vmem [thread:$0]  %s881, 4096, %s883, %s871, 128, 128, 8
        $region76: #{decoder_forward.1} parent=35 // pred_fallthru
          _
        // Predicated region
        $region77: #{decoder_forward.1} parent=35 // pred_check
          %p889 = pneg %p419
        $region78: #{decoder_forward.1} parent=35 // pred_check_branch
          %891 = sbr.rel (%p889) target = $region80
        $region79: #{decoder_forward.1} parent=35 // pred_region
          %s892 = sand.u32 %s55, 1
          %s893 = scalar_lea.sflag [#allocation25], %s892
          %s894 = sand.u32 %s409, 1
          %s895 = smul.addr %s894, 2
          %s896 = scalar_lea.vmem [#allocation24], %s895
          %898 = vsyncadd %s893, 0
          %s899 = smul.addr %s55, 2
          %s900 = scalar_lea.hbm %s14, %s899
          %s902 = sshll.u32 %s900, 4
          %s903 = int_to_ptr.hbm [resolvable:$true] %s902
          %s904 = sshll.u32 %s896, 4
          %s905 = int_to_ptr.vmem [resolvable:$true] %s904
          %907 = dma.hbm_to_vmem [thread:$0]  %s903, 32, %s905, %s893
        $region80: #{decoder_forward.1} parent=35 // pred_fallthru
          _
        // Predicated region
        $region81: #{decoder_forward.1} parent=35 // pred_check
          %p908 = pneg %p445
        $region82: #{decoder_forward.1} parent=35 // pred_check_branch
          %910 = sbr.rel (%p908) target = $region84
        $region83: #{decoder_forward.1} parent=35 // pred_region
          %s911 = sand.u32 %s55, 1
          %s912 = scalar_lea.sflag [#allocation25], %s911
          %s913 = sand.u32 %s435, 1
          %s914 = smul.addr %s913, 2
          %s915 = scalar_lea.vmem [#allocation26], %s914
          %917 = vsyncadd %s912, 0
          %s918 = smul.addr %s55, 2
          %s919 = scalar_lea.hbm %s15, %s918
          %s921 = sshll.u32 %s919, 4
          %s922 = int_to_ptr.hbm [resolvable:$true] %s921
          %s923 = sshll.u32 %s915, 4
          %s924 = int_to_ptr.vmem [resolvable:$true] %s923
          %926 = dma.hbm_to_vmem [thread:$0]  %s922, 32, %s924, %s912
        $region84: #{decoder_forward.1} parent=35 // pred_fallthru
          _
        // Predicated region
        $region85: #{decoder_forward.1} parent=35 // pred_check
          %p927 = pneg %p471
        $region86: #{decoder_forward.1} parent=35 // pred_check_branch
          %929 = sbr.rel (%p927) target = $region88
        $region87: #{decoder_forward.1} parent=35 // pred_region
          %s930 = sand.u32 %s55, 1
          %s931 = scalar_lea.sflag [#allocation28], %s930
          %s932 = sand.u32 %s461, 1
          %s933 = smul.addr %s932, 1024
          %s934 = scalar_lea.vmem [#allocation27], %s933
          %936 = vsyncadd %s931, 0
          %s937 = smul.addr %s55, 256
          %s938 = smul.addr %s937, 4
          %s939 = scalar_lea.hbm %s16, %s938
          %s940 = sshll.u32 %s939, 4
          %s941 = int_to_ptr.hbm [resolvable:$true] %s940
          %s942 = sshll.u32 %s934, 4
          %s943 = int_to_ptr.vmem [resolvable:$true] %s942
          %948 = dma.hbm_to_vmem [thread:$0]  %s941, 16384, %s943, %s931, 512, 512, 32
        $region88: #{decoder_forward.1} parent=35 // pred_fallthru
          _
        // Predicated region
        $region89: #{decoder_forward.1} parent=35 // pred_check
          %p949 = pneg %p497
        $region90: #{decoder_forward.1} parent=35 // pred_check_branch
          %951 = sbr.rel (%p949) target = $region92
        $region91: #{decoder_forward.1} parent=35 // pred_region
          %s952 = sand.u32 %s55, 1
          %s953 = scalar_lea.sflag [#allocation28], %s952
          %s954 = sand.u32 %s487, 1
          %s955 = smul.addr %s954, 1024
          %s956 = scalar_lea.vmem [#allocation29], %s955
          %958 = vsyncadd %s953, 0
          %s959 = smul.addr %s55, 256
          %s960 = smul.addr %s959, 4
          %s961 = scalar_lea.hbm %s17, %s960
          %s962 = sshll.u32 %s961, 4
          %s963 = int_to_ptr.hbm [resolvable:$true] %s962
          %s964 = sshll.u32 %s956, 4
          %s965 = int_to_ptr.vmem [resolvable:$true] %s964
          %970 = dma.hbm_to_vmem [thread:$0]  %s963, 16384, %s965, %s953, 128, 128, 8
        $region92: #{decoder_forward.1} parent=35 // pred_fallthru
          _
        // Predicated region
        $region93: #{decoder_forward.1} parent=35 // pred_check
          %p971 = pneg %p523
        $region94: #{decoder_forward.1} parent=35 // pred_check_branch
          %973 = sbr.rel (%p971) target = $region96
        $region95: #{decoder_forward.1} parent=35 // pred_region
          %s974 = sand.u32 %s55, 1
          %s975 = scalar_lea.sflag [#allocation31], %s974
          %s976 = sand.u32 %s513, 1
          %s977 = smul.addr %s976, 2
          %s978 = scalar_lea.vmem [#allocation30], %s977
          %980 = vsyncadd %s975, 0
          %s981 = smul.addr %s55, 2
          %s982 = scalar_lea.hbm %s18, %s981
          %s984 = sshll.u32 %s982, 4
          %s985 = int_to_ptr.hbm [resolvable:$true] %s984
          %s986 = sshll.u32 %s978, 4
          %s987 = int_to_ptr.vmem [resolvable:$true] %s986
          %989 = dma.hbm_to_vmem [thread:$0]  %s985, 32, %s987, %s975
        $region96: #{decoder_forward.1} parent=35 // pred_fallthru
          _
        // Predicated region
        $region97: #{decoder_forward.1} parent=35 // pred_check
          %p990 = pneg %p549
        $region98: #{decoder_forward.1} parent=35 // pred_check_branch
          %992 = sbr.rel (%p990) target = $region100
        $region99: #{decoder_forward.1} parent=35 // pred_region
          %s993 = sand.u32 %s55, 1
          %s994 = scalar_lea.sflag [#allocation31], %s993
          %s995 = sand.u32 %s539, 1
          %s996 = smul.addr %s995, 2
          %s997 = scalar_lea.vmem [#allocation32], %s996
          %999 = vsyncadd %s994, 0
          %s1000 = smul.addr %s55, 2
          %s1001 = scalar_lea.hbm %s19, %s1000
          %s1003 = sshll.u32 %s1001, 4
          %s1004 = int_to_ptr.hbm [resolvable:$true] %s1003
          %s1005 = sshll.u32 %s997, 4
          %s1006 = int_to_ptr.vmem [resolvable:$true] %s1005
          %1008 = dma.hbm_to_vmem [thread:$0]  %s1004, 32, %s1006, %s994
        $region100: #{decoder_forward.1} parent=35 // pred_fallthru
          _
      $region36: #{decoder_forward.1} parent=5 // pred_fallthru
        _
      %p1009 = scmp.le.s32.totalorder 1, %s55
      %p1010 = scmp.lt.s32.totalorder %s55, 5
      %p1011 = pnand %p1009, %p1010
      %p1012 = pneg %p1011
      // Predicated region
      $region101: #{decoder_forward.1} parent=5 // pred_check
        _
      $region102: #{decoder_forward.1} parent=5 // pred_check_branch
        %1014 = sbr.rel (%p1011) target = $region104
      $region103: #{decoder_forward.1} parent=5 // pred_region
        %s1015 = ssub.s32 %s55, 1
        // Predicated region
        $region105: #{decoder_forward.1} parent=103 // pred_check
          %p1016 = pneg %p97
        $region106: #{decoder_forward.1} parent=103 // pred_check_branch
          %1018 = sbr.rel (%p1016) target = $region108
        $region107: #{decoder_forward.1} parent=103 // pred_region
          %1020 = dma.done [#allocation4], 512
        $region108: #{decoder_forward.1} parent=103 // pred_fallthru
          _
        // Predicated region
        $region109: #{decoder_forward.1} parent=103 // pred_check
          %p1021 = pneg %p118
        $region110: #{decoder_forward.1} parent=103 // pred_check_branch
          %1023 = sbr.rel (%p1021) target = $region112
        $region111: #{decoder_forward.1} parent=103 // pred_region
          %1025 = dma.done [#allocation7], 1024
        $region112: #{decoder_forward.1} parent=103 // pred_fallthru
          _
        // Predicated region
        $region113: #{decoder_forward.1} parent=103 // pred_check
          %p1026 = pneg %p139
        $region114: #{decoder_forward.1} parent=103 // pred_check_branch
          %1028 = sbr.rel (%p1026) target = $region116
        $region115: #{decoder_forward.1} parent=103 // pred_region
          %1030 = dma.done [#allocation7], 512
        $region116: #{decoder_forward.1} parent=103 // pred_fallthru
          _
        %s1031 = sand.u32 %s60, 1
        %s1032 = scalar_lea.sflag [#allocation10], %s1031
        %s1033 = sand.u32 %s152, 1
        %s1034 = smul.addr %s1033, 256
        %s1035 = scalar_lea.vmem [#allocation9], %s1034
        // Predicated region
        $region117: #{decoder_forward.1} parent=103 // pred_check
          %p1036 = pneg %p165
        $region118: #{decoder_forward.1} parent=103 // pred_check_branch
          %1038 = sbr.rel (%p1036) target = $region120
        $region119: #{decoder_forward.1} parent=103 // pred_region
          %1040 = dma.done %s1032, 4096
        $region120: #{decoder_forward.1} parent=103 // pred_fallthru
          _
        %s1041 = sand.u32 %s60, 1
        %s1042 = scalar_lea.sflag [#allocation10], %s1041
        %s1043 = sand.u32 %s178, 1
        %s1044 = smul.addr %s1043, 256
        %s1045 = scalar_lea.vmem [#allocation11], %s1044
        // Predicated region
        $region121: #{decoder_forward.1} parent=103 // pred_check
          %p1046 = pneg %p191
        $region122: #{decoder_forward.1} parent=103 // pred_check_branch
          %1048 = sbr.rel (%p1046) target = $region124
        $region123: #{decoder_forward.1} parent=103 // pred_region
          %1050 = dma.done %s1042, 4096
        $region124: #{decoder_forward.1} parent=103 // pred_fallthru
          _
        %s1051 = sand.u32 %s60, 1
        %s1052 = scalar_lea.sflag [#allocation13], %s1051
        %s1053 = sand.u32 %s204, 1
        %s1054 = smul.addr %s1053, 256
        %s1055 = scalar_lea.vmem [#allocation12], %s1054
        // Predicated region
        $region125: #{decoder_forward.1} parent=103 // pred_check
          %p1056 = pneg %p217
        $region126: #{decoder_forward.1} parent=103 // pred_check_branch
          %1058 = sbr.rel (%p1056) target = $region128
        $region127: #{decoder_forward.1} parent=103 // pred_region
          %1060 = dma.done %s1052, 4096
        $region128: #{decoder_forward.1} parent=103 // pred_fallthru
          _
        %s1061 = sand.u32 %s60, 1
        %s1062 = scalar_lea.sflag [#allocation13], %s1061
        %s1063 = sand.u32 %s230, 1
        %s1064 = smul.addr %s1063, 256
        %s1065 = scalar_lea.vmem [#allocation14], %s1064
        // Predicated region
        $region129: #{decoder_forward.1} parent=103 // pred_check
          %p1066 = pneg %p243
        $region130: #{decoder_forward.1} parent=103 // pred_check_branch
          %1068 = sbr.rel (%p1066) target = $region132
        $region131: #{decoder_forward.1} parent=103 // pred_region
          %1070 = dma.done %s1062, 4096
        $region132: #{decoder_forward.1} parent=103 // pred_fallthru
          _
        %s1071 = sand.u32 %s60, 1
        %s1072 = scalar_lea.sflag [#allocation16], %s1071
        %s1073 = sand.u32 %s256, 1
        %s1074 = smul.addr %s1073, 2
        %s1075 = scalar_lea.vmem [#allocation15], %s1074
        // Predicated region
        $region133: #{decoder_forward.1} parent=103 // pred_check
          %p1076 = pneg %p269
        $region134: #{decoder_forward.1} parent=103 // pred_check_branch
          %1078 = sbr.rel (%p1076) target = $region136
        $region135: #{decoder_forward.1} parent=103 // pred_region
          %1080 = dma.done %s1072, 32
        $region136: #{decoder_forward.1} parent=103 // pred_fallthru
          _
        %s1081 = sand.u32 %s60, 1
        %s1082 = scalar_lea.sflag [#allocation16], %s1081
        %s1083 = sand.u32 %s282, 1
        %s1084 = smul.addr %s1083, 2
        %s1085 = scalar_lea.vmem [#allocation17], %s1084
        // Predicated region
        $region137: #{decoder_forward.1} parent=103 // pred_check
          %p1086 = pneg %p295
        $region138: #{decoder_forward.1} parent=103 // pred_check_branch
          %1088 = sbr.rel (%p1086) target = $region140
        $region139: #{decoder_forward.1} parent=103 // pred_region
          %1090 = dma.done %s1082, 32
        $region140: #{decoder_forward.1} parent=103 // pred_fallthru
          _
        %s1091 = sand.u32 %s60, 1
        %s1092 = scalar_lea.sflag [#allocation19], %s1091
        %s1093 = sand.u32 %s308, 1
        %s1094 = smul.addr %s1093, 256
        %s1095 = scalar_lea.vmem [#allocation18], %s1094
        // Predicated region
        $region141: #{decoder_forward.1} parent=103 // pred_check
          %p1096 = pneg %p321
        $region142: #{decoder_forward.1} parent=103 // pred_check_branch
          %1098 = sbr.rel (%p1096) target = $region144
        $region143: #{decoder_forward.1} parent=103 // pred_region
          %1100 = dma.done %s1092, 4096
        $region144: #{decoder_forward.1} parent=103 // pred_fallthru
          _
        %s1101 = sand.u32 %s60, 1
        %s1102 = scalar_lea.sflag [#allocation19], %s1101
        %s1103 = sand.u32 %s334, 1
        %s1104 = smul.addr %s1103, 256
        %s1105 = scalar_lea.vmem [#allocation20], %s1104
        // Predicated region
        $region145: #{decoder_forward.1} parent=103 // pred_check
          %p1106 = pneg %p347
        $region146: #{decoder_forward.1} parent=103 // pred_check_branch
          %1108 = sbr.rel (%p1106) target = $region148
        $region147: #{decoder_forward.1} parent=103 // pred_region
          %1110 = dma.done %s1102, 4096
        $region148: #{decoder_forward.1} parent=103 // pred_fallthru
          _
        %s1111 = sand.u32 %s60, 1
        %s1112 = scalar_lea.sflag [#allocation22], %s1111
        %s1113 = sand.u32 %s360, 1
        %s1114 = smul.addr %s1113, 256
        %s1115 = scalar_lea.vmem [#allocation21], %s1114
        // Predicated region
        $region149: #{decoder_forward.1} parent=103 // pred_check
          %p1116 = pneg %p373
        $region150: #{decoder_forward.1} parent=103 // pred_check_branch
          %1118 = sbr.rel (%p1116) target = $region152
        $region151: #{decoder_forward.1} parent=103 // pred_region
          %1120 = dma.done %s1112, 4096
        $region152: #{decoder_forward.1} parent=103 // pred_fallthru
          _
        %s1121 = sand.u32 %s60, 1
        %s1122 = scalar_lea.sflag [#allocation22], %s1121
        %s1123 = sand.u32 %s386, 1
        %s1124 = smul.addr %s1123, 256
        %s1125 = scalar_lea.vmem [#allocation23], %s1124
        // Predicated region
        $region153: #{decoder_forward.1} parent=103 // pred_check
          %p1126 = pneg %p399
        $region154: #{decoder_forward.1} parent=103 // pred_check_branch
          %1128 = sbr.rel (%p1126) target = $region156
        $region155: #{decoder_forward.1} parent=103 // pred_region
          %1130 = dma.done %s1122, 4096
        $region156: #{decoder_forward.1} parent=103 // pred_fallthru
          _
        %s1131 = sand.u32 %s60, 1
        %s1132 = scalar_lea.sflag [#allocation25], %s1131
        %s1133 = sand.u32 %s412, 1
        %s1134 = smul.addr %s1133, 2
        %s1135 = scalar_lea.vmem [#allocation24], %s1134
        // Predicated region
        $region157: #{decoder_forward.1} parent=103 // pred_check
          %p1136 = pneg %p425
        $region158: #{decoder_forward.1} parent=103 // pred_check_branch
          %1138 = sbr.rel (%p1136) target = $region160
        $region159: #{decoder_forward.1} parent=103 // pred_region
          %1140 = dma.done %s1132, 32
        $region160: #{decoder_forward.1} parent=103 // pred_fallthru
          _
        %s1141 = sand.u32 %s60, 1
        %s1142 = scalar_lea.sflag [#allocation25], %s1141
        %s1143 = sand.u32 %s438, 1
        %s1144 = smul.addr %s1143, 2
        %s1145 = scalar_lea.vmem [#allocation26], %s1144
        // Predicated region
        $region161: #{decoder_forward.1} parent=103 // pred_check
          %p1146 = pneg %p451
        $region162: #{decoder_forward.1} parent=103 // pred_check_branch
          %1148 = sbr.rel (%p1146) target = $region164
        $region163: #{decoder_forward.1} parent=103 // pred_region
          %1150 = dma.done %s1142, 32
        $region164: #{decoder_forward.1} parent=103 // pred_fallthru
          _
        %s1151 = sand.u32 %s60, 1
        %s1152 = scalar_lea.sflag [#allocation28], %s1151
        %s1153 = sand.u32 %s464, 1
        %s1154 = smul.addr %s1153, 1024
        %s1155 = scalar_lea.vmem [#allocation27], %s1154
        // Predicated region
        $region165: #{decoder_forward.1} parent=103 // pred_check
          %p1156 = pneg %p477
        $region166: #{decoder_forward.1} parent=103 // pred_check_branch
          %1158 = sbr.rel (%p1156) target = $region168
        $region167: #{decoder_forward.1} parent=103 // pred_region
          %1160 = dma.done %s1152, 16384
        $region168: #{decoder_forward.1} parent=103 // pred_fallthru
          _
        %s1161 = sand.u32 %s60, 1
        %s1162 = scalar_lea.sflag [#allocation28], %s1161
        %s1163 = sand.u32 %s490, 1
        %s1164 = smul.addr %s1163, 1024
        %s1165 = scalar_lea.vmem [#allocation29], %s1164
        // Predicated region
        $region169: #{decoder_forward.1} parent=103 // pred_check
          %p1166 = pneg %p503
        $region170: #{decoder_forward.1} parent=103 // pred_check_branch
          %1168 = sbr.rel (%p1166) target = $region172
        $region171: #{decoder_forward.1} parent=103 // pred_region
          %1170 = dma.done %s1162, 16384
        $region172: #{decoder_forward.1} parent=103 // pred_fallthru
          _
        %s1171 = sand.u32 %s60, 1
        %s1172 = scalar_lea.sflag [#allocation31], %s1171
        %s1173 = sand.u32 %s516, 1
        %s1174 = smul.addr %s1173, 2
        %s1175 = scalar_lea.vmem [#allocation30], %s1174
        // Predicated region
        $region173: #{decoder_forward.1} parent=103 // pred_check
          %p1176 = pneg %p529
        $region174: #{decoder_forward.1} parent=103 // pred_check_branch
          %1178 = sbr.rel (%p1176) target = $region176
        $region175: #{decoder_forward.1} parent=103 // pred_region
          %1180 = dma.done %s1172, 32
        $region176: #{decoder_forward.1} parent=103 // pred_fallthru
          _
        %s1181 = sand.u32 %s60, 1
        %s1182 = scalar_lea.sflag [#allocation31], %s1181
        %s1183 = sand.u32 %s542, 1
        %s1184 = smul.addr %s1183, 2
        %s1185 = scalar_lea.vmem [#allocation32], %s1184
        // Predicated region
        $region177: #{decoder_forward.1} parent=103 // pred_check
          %p1186 = pneg %p555
        $region178: #{decoder_forward.1} parent=103 // pred_check_branch
          %1188 = sbr.rel (%p1186) target = $region180
        $region179: #{decoder_forward.1} parent=103 // pred_region
          %1190 = dma.done %s1182, 32
        $region180: #{decoder_forward.1} parent=103 // pred_fallthru
          _
        // Predicated region
        $region181: #{decoder_forward.1} parent=103 // pred_check
          %p1191 = pneg %p576
        $region182: #{decoder_forward.1} parent=103 // pred_check_branch
          %1193 = sbr.rel (%p1191) target = $region184
        $region183: #{decoder_forward.1} parent=103 // pred_region
          %1195 = dma.done [#allocation34], 2048
        $region184: #{decoder_forward.1} parent=103 // pred_fallthru
          _
        %p1196 = pneg %p76
        %p1197 = pneg %p73
        %p1198 = pneg %p97
        %p1199 = pneg %p94
        %p1200 = pneg %p118
        %p1201 = pneg %p115
        %p1202 = pneg %p139
        %p1203 = pneg %p136
        %s1204 = sand.u32 %s60, 1
        %s1205 = scalar_lea.sflag [#allocation10], %s1204
        %s1206 = sand.u32 %s152, 1
        %s1207 = smul.addr %s1206, 256
        %s1208 = scalar_lea.vmem [#allocation9], %s1207
        %p1209 = pneg %p165
        %p1210 = pneg %p162
        %s1211 = sand.u32 %s60, 1
        %s1212 = scalar_lea.sflag [#allocation10], %s1211
        %s1213 = sand.u32 %s178, 1
        %s1214 = smul.addr %s1213, 256
        %s1215 = scalar_lea.vmem [#allocation11], %s1214
        %p1216 = pneg %p191
        %p1217 = pneg %p188
        %s1218 = sand.u32 %s60, 1
        %s1219 = scalar_lea.sflag [#allocation13], %s1218
        %s1220 = sand.u32 %s204, 1
        %s1221 = smul.addr %s1220, 256
        %s1222 = scalar_lea.vmem [#allocation12], %s1221
        %p1223 = pneg %p217
        %p1224 = pneg %p214
        %s1225 = sand.u32 %s60, 1
        %s1226 = scalar_lea.sflag [#allocation13], %s1225
        %s1227 = sand.u32 %s230, 1
        %s1228 = smul.addr %s1227, 256
        %s1229 = scalar_lea.vmem [#allocation14], %s1228
        %p1230 = pneg %p243
        %p1231 = pneg %p240
        %s1232 = sand.u32 %s60, 1
        %s1233 = scalar_lea.sflag [#allocation16], %s1232
        %s1234 = sand.u32 %s256, 1
        %s1235 = smul.addr %s1234, 2
        %s1236 = scalar_lea.vmem [#allocation15], %s1235
        %p1237 = pneg %p269
        %p1238 = pneg %p266
        %s1239 = sand.u32 %s60, 1
        %s1240 = scalar_lea.sflag [#allocation16], %s1239
        %s1241 = sand.u32 %s282, 1
        %s1242 = smul.addr %s1241, 2
        %s1243 = scalar_lea.vmem [#allocation17], %s1242
        %p1244 = pneg %p295
        %p1245 = pneg %p292
        %s1246 = sand.u32 %s60, 1
        %s1247 = scalar_lea.sflag [#allocation19], %s1246
        %s1248 = sand.u32 %s308, 1
        %s1249 = smul.addr %s1248, 256
        %s1250 = scalar_lea.vmem [#allocation18], %s1249
        %p1251 = pneg %p321
        %p1252 = pneg %p318
        %s1253 = sand.u32 %s60, 1
        %s1254 = scalar_lea.sflag [#allocation19], %s1253
        %s1255 = sand.u32 %s334, 1
        %s1256 = smul.addr %s1255, 256
        %s1257 = scalar_lea.vmem [#allocation20], %s1256
        %p1258 = pneg %p347
        %p1259 = pneg %p344
        %s1260 = sand.u32 %s60, 1
        %s1261 = scalar_lea.sflag [#allocation22], %s1260
        %s1262 = sand.u32 %s360, 1
        %s1263 = smul.addr %s1262, 256
        %s1264 = scalar_lea.vmem [#allocation21], %s1263
        %p1265 = pneg %p373
        %p1266 = pneg %p370
        %s1267 = sand.u32 %s60, 1
        %s1268 = scalar_lea.sflag [#allocation22], %s1267
        %s1269 = sand.u32 %s386, 1
        %s1270 = smul.addr %s1269, 256
        %s1271 = scalar_lea.vmem [#allocation23], %s1270
        %p1272 = pneg %p399
        %p1273 = pneg %p396
        %s1274 = sand.u32 %s60, 1
        %s1275 = scalar_lea.sflag [#allocation25], %s1274
        %s1276 = sand.u32 %s412, 1
        %s1277 = smul.addr %s1276, 2
        %s1278 = scalar_lea.vmem [#allocation24], %s1277
        %p1279 = pneg %p425
        %p1280 = pneg %p422
        %s1281 = sand.u32 %s60, 1
        %s1282 = scalar_lea.sflag [#allocation25], %s1281
        %s1283 = sand.u32 %s438, 1
        %s1284 = smul.addr %s1283, 2
        %s1285 = scalar_lea.vmem [#allocation26], %s1284
        %p1286 = pneg %p451
        %p1287 = pneg %p448
        %s1288 = sand.u32 %s60, 1
        %s1289 = scalar_lea.sflag [#allocation28], %s1288
        %s1290 = sand.u32 %s464, 1
        %s1291 = smul.addr %s1290, 1024
        %s1292 = scalar_lea.vmem [#allocation27], %s1291
        %p1293 = pneg %p477
        %p1294 = pneg %p474
        %s1295 = sand.u32 %s60, 1
        %s1296 = scalar_lea.sflag [#allocation28], %s1295
        %s1297 = sand.u32 %s490, 1
        %s1298 = smul.addr %s1297, 1024
        %s1299 = scalar_lea.vmem [#allocation29], %s1298
        %p1300 = pneg %p503
        %p1301 = pneg %p500
        %s1302 = sand.u32 %s60, 1
        %s1303 = scalar_lea.sflag [#allocation31], %s1302
        %s1304 = sand.u32 %s516, 1
        %s1305 = smul.addr %s1304, 2
        %s1306 = scalar_lea.vmem [#allocation30], %s1305
        %p1307 = pneg %p529
        %p1308 = pneg %p526
        %s1309 = sand.u32 %s60, 1
        %s1310 = scalar_lea.sflag [#allocation31], %s1309
        %s1311 = sand.u32 %s542, 1
        %s1312 = smul.addr %s1311, 2
        %s1313 = scalar_lea.vmem [#allocation32], %s1312
        %p1314 = pneg %p555
        %p1315 = pneg %p552
        %p1316 = pneg %p576
        %p1317 = pneg %p573
        %p1318 = pneg %p597
        %p1319 = pneg %p594
        %p1321 = scmp.eq.s32.totalorder %s60, 0
        // Predicated region
        $region185: #{decoder_forward.1} parent=103 // pred_check
          %p1322 = pneg %p1321
        $region186: #{decoder_forward.1} parent=103 // pred_check_branch
          %1324 = sbr.rel (%p1322) target = $region188
        $region187: #{decoder_forward.1} parent=103 // pred_region
          %v1325 = vld [vmem:[%s0] sm:$0xff]
          %v1326 = vld [vmem:[%s0 + $0x8] sm:$0xff]
          %v1327 = vlaneseq
          %v1328 = vand.u32 %v1327, 127
          %1329 = vset.pattern.permute.xlu0 0
          %1330 = vperm.xlu0 %1329, %v1325
          %v1331 = vpop.permute.xlu0 %1330
          %1332 = vset.pattern.permute.xlu0 0
          %1333 = vperm.xlu0 %1332, %v1326
          %v1334 = vpop.permute.xlu0 %1333
          %vm1335 = vcmp.eq.s32.totalorder %v1331, %v1328
          %vm1336 = vcmp.eq.s32.totalorder %v1334, %v1328
          %v1337 = vsel %vm1335, 1, 0
          %v1338 = vsel %vm1336, 1, 0
          %v1339 = vcvt.s32.f32 %v1337
          %v1340 = vcvt.s32.f32 %v1338
          %v1341 = vld [vmem:[#allocation6] sm:$0xff]
          %v1342 = vld [vmem:[#allocation6 + $0x8] sm:$0xff]
          %v1343 = vld [vmem:[#allocation6 + $0x10] sm:$0xff]
          %v1344 = vld [vmem:[#allocation6 + $0x18] sm:$0xff]
          %v1345 = vld [vmem:[#allocation6 + $0x20] sm:$0xff]
          %v1346 = vld [vmem:[#allocation6 + $0x28] sm:$0xff]
          %v1347 = vld [vmem:[#allocation6 + $0x30] sm:$0x1f]
          %v1348 = vld [vmem:[#allocation6 + $0x38] sm:$0x1f]
          %v1349 = vld [vmem:[#allocation8] sm:$0xff]
          %v1350 = vld [vmem:[#allocation8 + $0x8] sm:$0xff]
          %vm1351 = vcmask 236544
          %v1353 = vsel %vm1351, %v1339, 0
          %v1356 = vsel %vm1351, %v1340, 0
          %vm1358 = vcmask 1044480
          %v1360 = vsel %vm1358, %v1347, 0
          %v1363 = vsel %vm1358, %v1348, 0
          %1365 = vmatpush.msra.mxu0 0.0
          %1366 = vmatpush.msra.mxu0 0.0
          %1367 = vmatpush.msra.mxu0 0.0
          %1368 = vmatpush.msra.mxu0 0.0
          %1369 = vmatpush.msra.mxu0 0.0
          %1370 = vmatpush.msra.mxu0 0.0
          %1371 = vmatpush.msra.mxu0 0.0
          %1372 = vmatpush.msra.mxu0 0.0
          %1373 = vmatpush.msra.mxu0 0.0
          %1374 = vmatpush.msra.mxu0 0.0
          %1375 = vmatpush.msra.mxu0 0.0
          %1376 = vmatpush.msra.mxu0 0.0
          %1377 = vmatpush.msra.mxu0 %v1360
          %1378 = vmatpush.msra.mxu0 %v1345
          %1379 = vmatpush.msra.mxu0 %v1343
          %1380 = vmatpush.msra.mxu0 %v1341
          %1381 = vmatmul.f32.gmra.mxu0 %v1353
          %v1382 = vpop.f32.mrf.mxu0
          %v1383 = vadd.f32 %v1349, %v1382
          %1384 = vmatmul.f32.gmra.mxu0 %v1356
          %v1385 = vpop.f32.mrf.mxu0
          %v1386 = vadd.f32 %v1349, %v1385
          %1387 = vdwg.mxu0
          %1388 = vmatpush.msra.mxu0 0.0
          %1389 = vmatpush.msra.mxu0 0.0
          %1390 = vmatpush.msra.mxu0 0.0
          %1391 = vmatpush.msra.mxu0 0.0
          %1392 = vmatpush.msra.mxu0 0.0
          %1393 = vmatpush.msra.mxu0 0.0
          %1394 = vmatpush.msra.mxu0 0.0
          %1395 = vmatpush.msra.mxu0 0.0
          %1396 = vmatpush.msra.mxu0 0.0
          %1397 = vmatpush.msra.mxu0 0.0
          %1398 = vmatpush.msra.mxu0 0.0
          %1399 = vmatpush.msra.mxu0 0.0
          %1400 = vmatpush.msra.mxu0 %v1363
          %1401 = vmatpush.msra.mxu0 %v1346
          %1402 = vmatpush.msra.mxu0 %v1344
          %1403 = vmatpush.msra.mxu0 %v1342
          %1404 = vmatmul.f32.gmra.mxu0 %v1353
          %v1405 = vpop.f32.mrf.mxu0
          %v1406 = vadd.f32 %v1350, %v1405
          %1407 = vmatmul.f32.gmra.mxu0 %v1356
          %v1408 = vpop.f32.mrf.mxu0
          %v1409 = vadd.f32 %v1350, %v1408
          %1410 = vdwg.mxu0
          %1411 = vst [vmem:[#allocation2] sm:$0xff] %v1383
          %1412 = vst [vmem:[#allocation2 + $0x8] sm:$0xff] %v1406
          %1413 = vst [vmem:[#allocation2 + $0x10] sm:$0xff] %v1386
          %1414 = vst [vmem:[#allocation2 + $0x18] sm:$0xff] %v1409
        $region188: #{decoder_forward.1} parent=103 // pred_fallthru
          _
        %v1415 = vld [vmem:[#allocation2] sm:$0xff]
        %v1416 = vld [vmem:[#allocation2 + $0x8] sm:$0xff]
        %v1417 = vld [vmem:[#allocation2 + $0x10] sm:$0xff]
        %v1418 = vld [vmem:[#allocation2 + $0x18] sm:$0xff]
        %v1419 = vld [vmem:[#allocation3] sm:$0xff]
        %v1420 = vld [vmem:[#allocation3 + $0x8] sm:$0xff]
        %v1421 = vld [vmem:[#allocation3 + $0x10] sm:$0xff]
        %v1422 = vld [vmem:[#allocation3 + $0x18] sm:$0xff]
        %v1423 = vld [vmem:[%s1035] sm:$0xff]
        %v1424 = vld [vmem:[%s1035 + $0x8] sm:$0xff]
        %v1425 = vld [vmem:[%s1035 + $0x10] sm:$0xff]
        %v1426 = vld [vmem:[%s1035 + $0x18] sm:$0xff]
        %v1427 = vld [vmem:[%s1035 + $0x20] sm:$0xff]
        %v1428 = vld [vmem:[%s1035 + $0x28] sm:$0xff]
        %v1429 = vld [vmem:[%s1035 + $0x30] sm:$0xff]
        %v1430 = vld [vmem:[%s1035 + $0x38] sm:$0xff]
        %v1431 = vld [vmem:[%s1035 + $0x40] sm:$0xff]
        %v1432 = vld [vmem:[%s1035 + $0x48] sm:$0xff]
        %v1433 = vld [vmem:[%s1035 + $0x50] sm:$0xff]
        %v1434 = vld [vmem:[%s1035 + $0x58] sm:$0xff]
        %v1435 = vld [vmem:[%s1035 + $0x60] sm:$0xff]
        %v1436 = vld [vmem:[%s1035 + $0x68] sm:$0xff]
        %v1437 = vld [vmem:[%s1035 + $0x70] sm:$0xff]
        %v1438 = vld [vmem:[%s1035 + $0x78] sm:$0xff]
        %v1439 = vld [vmem:[%s1035 + $0x80] sm:$0xff]
        %v1440 = vld [vmem:[%s1035 + $0x88] sm:$0xff]
        %v1441 = vld [vmem:[%s1035 + $0x90] sm:$0xff]
        %v1442 = vld [vmem:[%s1035 + $0x98] sm:$0xff]
        %v1443 = vld [vmem:[%s1035 + $0xa0] sm:$0xff]
        %v1444 = vld [vmem:[%s1035 + $0xa8] sm:$0xff]
        %v1445 = vld [vmem:[%s1035 + $0xb0] sm:$0xff]
        %v1446 = vld [vmem:[%s1035 + $0xb8] sm:$0xff]
        %v1447 = vld [vmem:[%s1035 + $0xc0] sm:$0xff]
        %v1448 = vld [vmem:[%s1035 + $0xc8] sm:$0xff]
        %v1449 = vld [vmem:[%s1035 + $0xd0] sm:$0xff]
        %v1450 = vld [vmem:[%s1035 + $0xd8] sm:$0xff]
        %v1451 = vld [vmem:[%s1035 + $0xe0] sm:$0xff]
        %v1452 = vld [vmem:[%s1035 + $0xe8] sm:$0xff]
        %v1453 = vld [vmem:[%s1035 + $0xf0] sm:$0xff]
        %v1454 = vld [vmem:[%s1035 + $0xf8] sm:$0xff]
        %v1455 = vld [vmem:[%s1045] sm:$0xff]
        %v1456 = vld [vmem:[%s1045 + $0x8] sm:$0xff]
        %v1457 = vld [vmem:[%s1045 + $0x10] sm:$0xff]
        %v1458 = vld [vmem:[%s1045 + $0x18] sm:$0xff]
        %v1459 = vld [vmem:[%s1045 + $0x20] sm:$0xff]
        %v1460 = vld [vmem:[%s1045 + $0x28] sm:$0xff]
        %v1461 = vld [vmem:[%s1045 + $0x30] sm:$0xff]
        %v1462 = vld [vmem:[%s1045 + $0x38] sm:$0xff]
        %v1463 = vld [vmem:[%s1045 + $0x40] sm:$0xff]
        %v1464 = vld [vmem:[%s1045 + $0x48] sm:$0xff]
        %v1465 = vld [vmem:[%s1045 + $0x50] sm:$0xff]
        %v1466 = vld [vmem:[%s1045 + $0x58] sm:$0xff]
        %v1467 = vld [vmem:[%s1045 + $0x60] sm:$0xff]
        %v1468 = vld [vmem:[%s1045 + $0x68] sm:$0xff]
        %v1469 = vld [vmem:[%s1045 + $0x70] sm:$0xff]
        %v1470 = vld [vmem:[%s1045 + $0x78] sm:$0xff]
        %v1471 = vld [vmem:[%s1045 + $0x80] sm:$0xff]
        %v1472 = vld [vmem:[%s1045 + $0x88] sm:$0xff]
        %v1473 = vld [vmem:[%s1045 + $0x90] sm:$0xff]
        %v1474 = vld [vmem:[%s1045 + $0x98] sm:$0xff]
        %v1475 = vld [vmem:[%s1045 + $0xa0] sm:$0xff]
        %v1476 = vld [vmem:[%s1045 + $0xa8] sm:$0xff]
        %v1477 = vld [vmem:[%s1045 + $0xb0] sm:$0xff]
        %v1478 = vld [vmem:[%s1045 + $0xb8] sm:$0xff]
        %v1479 = vld [vmem:[%s1045 + $0xc0] sm:$0xff]
        %v1480 = vld [vmem:[%s1045 + $0xc8] sm:$0xff]
        %v1481 = vld [vmem:[%s1045 + $0xd0] sm:$0xff]
        %v1482 = vld [vmem:[%s1045 + $0xd8] sm:$0xff]
        %v1483 = vld [vmem:[%s1045 + $0xe0] sm:$0xff]
        %v1484 = vld [vmem:[%s1045 + $0xe8] sm:$0xff]
        %v1485 = vld [vmem:[%s1045 + $0xf0] sm:$0xff]
        %v1486 = vld [vmem:[%s1045 + $0xf8] sm:$0xff]
        %v1487 = vld [vmem:[%s1055] sm:$0xff]
        %v1488 = vld [vmem:[%s1055 + $0x8] sm:$0xff]
        %v1489 = vld [vmem:[%s1055 + $0x10] sm:$0xff]
        %v1490 = vld [vmem:[%s1055 + $0x18] sm:$0xff]
        %v1491 = vld [vmem:[%s1055 + $0x20] sm:$0xff]
        %v1492 = vld [vmem:[%s1055 + $0x28] sm:$0xff]
        %v1493 = vld [vmem:[%s1055 + $0x30] sm:$0xff]
        %v1494 = vld [vmem:[%s1055 + $0x38] sm:$0xff]
        %v1495 = vld [vmem:[%s1055 + $0x40] sm:$0xff]
        %v1496 = vld [vmem:[%s1055 + $0x48] sm:$0xff]
        %v1497 = vld [vmem:[%s1055 + $0x50] sm:$0xff]
        %v1498 = vld [vmem:[%s1055 + $0x58] sm:$0xff]
        %v1499 = vld [vmem:[%s1055 + $0x60] sm:$0xff]
        %v1500 = vld [vmem:[%s1055 + $0x68] sm:$0xff]
        %v1501 = vld [vmem:[%s1055 + $0x70] sm:$0xff]
        %v1502 = vld [vmem:[%s1055 + $0x78] sm:$0xff]
        %v1503 = vld [vmem:[%s1055 + $0x80] sm:$0xff]
        %v1504 = vld [vmem:[%s1055 + $0x88] sm:$0xff]
        %v1505 = vld [vmem:[%s1055 + $0x90] sm:$0xff]
        %v1506 = vld [vmem:[%s1055 + $0x98] sm:$0xff]
        %v1507 = vld [vmem:[%s1055 + $0xa0] sm:$0xff]
        %v1508 = vld [vmem:[%s1055 + $0xa8] sm:$0xff]
        %v1509 = vld [vmem:[%s1055 + $0xb0] sm:$0xff]
        %v1510 = vld [vmem:[%s1055 + $0xb8] sm:$0xff]
        %v1511 = vld [vmem:[%s1055 + $0xc0] sm:$0xff]
        %v1512 = vld [vmem:[%s1055 + $0xc8] sm:$0xff]
        %v1513 = vld [vmem:[%s1055 + $0xd0] sm:$0xff]
        %v1514 = vld [vmem:[%s1055 + $0xd8] sm:$0xff]
        %v1515 = vld [vmem:[%s1055 + $0xe0] sm:$0xff]
        %v1516 = vld [vmem:[%s1055 + $0xe8] sm:$0xff]
        %v1517 = vld [vmem:[%s1055 + $0xf0] sm:$0xff]
        %v1518 = vld [vmem:[%s1055 + $0xf8] sm:$0xff]
        %v1519 = vld [vmem:[%s1065] sm:$0xff]
        %v1520 = vld [vmem:[%s1065 + $0x8] sm:$0xff]
        %v1521 = vld [vmem:[%s1065 + $0x10] sm:$0xff]
        %v1522 = vld [vmem:[%s1065 + $0x18] sm:$0xff]
        %v1523 = vld [vmem:[%s1065 + $0x20] sm:$0xff]
        %v1524 = vld [vmem:[%s1065 + $0x28] sm:$0xff]
        %v1525 = vld [vmem:[%s1065 + $0x30] sm:$0xff]
        %v1526 = vld [vmem:[%s1065 + $0x38] sm:$0xff]
        %v1527 = vld [vmem:[%s1065 + $0x40] sm:$0xff]
        %v1528 = vld [vmem:[%s1065 + $0x48] sm:$0xff]
        %v1529 = vld [vmem:[%s1065 + $0x50] sm:$0xff]
        %v1530 = vld [vmem:[%s1065 + $0x58] sm:$0xff]
        %v1531 = vld [vmem:[%s1065 + $0x60] sm:$0xff]
        %v1532 = vld [vmem:[%s1065 + $0x68] sm:$0xff]
        %v1533 = vld [vmem:[%s1065 + $0x70] sm:$0xff]
        %v1534 = vld [vmem:[%s1065 + $0x78] sm:$0xff]
        %v1535 = vld [vmem:[%s1065 + $0x80] sm:$0xff]
        %v1536 = vld [vmem:[%s1065 + $0x88] sm:$0xff]
        %v1537 = vld [vmem:[%s1065 + $0x90] sm:$0xff]
        %v1538 = vld [vmem:[%s1065 + $0x98] sm:$0xff]
        %v1539 = vld [vmem:[%s1065 + $0xa0] sm:$0xff]
        %v1540 = vld [vmem:[%s1065 + $0xa8] sm:$0xff]
        %v1541 = vld [vmem:[%s1065 + $0xb0] sm:$0xff]
        %v1542 = vld [vmem:[%s1065 + $0xb8] sm:$0xff]
        %v1543 = vld [vmem:[%s1065 + $0xc0] sm:$0xff]
        %v1544 = vld [vmem:[%s1065 + $0xc8] sm:$0xff]
        %v1545 = vld [vmem:[%s1065 + $0xd0] sm:$0xff]
        %v1546 = vld [vmem:[%s1065 + $0xd8] sm:$0xff]
        %v1547 = vld [vmem:[%s1065 + $0xe0] sm:$0xff]
        %v1548 = vld [vmem:[%s1065 + $0xe8] sm:$0xff]
        %v1549 = vld [vmem:[%s1065 + $0xf0] sm:$0xff]
        %v1550 = vld [vmem:[%s1065 + $0xf8] sm:$0xff]
        %v1551 = vpack.c.bf16 %v1417, %v1415
        %v1552 = vpack.c.bf16 %v1418, %v1416
        %v1585 = vunpack.c.l.b16 %v1423
        %v1586 = vunpack.c.h.b16 %v1423
        %v1587 = vunpack.c.l.b16 %v1424
        %v1588 = vunpack.c.h.b16 %v1424
        %v1589 = vunpack.c.l.b16 %v1425
        %v1590 = vunpack.c.h.b16 %v1425
        %v1591 = vunpack.c.l.b16 %v1426
        %v1592 = vunpack.c.h.b16 %v1426
        %v1593 = vunpack.c.l.b16 %v1427
        %v1594 = vunpack.c.h.b16 %v1427
        %v1595 = vunpack.c.l.b16 %v1428
        %v1596 = vunpack.c.h.b16 %v1428
        %v1597 = vunpack.c.l.b16 %v1429
        %v1598 = vunpack.c.h.b16 %v1429
        %v1599 = vunpack.c.l.b16 %v1430
        %v1600 = vunpack.c.h.b16 %v1430
        %v1601 = vunpack.c.l.b16 %v1431
        %v1602 = vunpack.c.h.b16 %v1431
        %v1603 = vunpack.c.l.b16 %v1432
        %v1604 = vunpack.c.h.b16 %v1432
        %v1605 = vunpack.c.l.b16 %v1433
        %v1606 = vunpack.c.h.b16 %v1433
        %v1607 = vunpack.c.l.b16 %v1434
        %v1608 = vunpack.c.h.b16 %v1434
        %v1609 = vunpack.c.l.b16 %v1435
        %v1610 = vunpack.c.h.b16 %v1435
        %v1611 = vunpack.c.l.b16 %v1436
        %v1612 = vunpack.c.h.b16 %v1436
        %v1613 = vunpack.c.l.b16 %v1437
        %v1614 = vunpack.c.h.b16 %v1437
        %v1615 = vunpack.c.l.b16 %v1438
        %v1616 = vunpack.c.h.b16 %v1438
        %v1617 = vunpack.c.l.b16 %v1439
        %v1618 = vunpack.c.h.b16 %v1439
        %v1619 = vunpack.c.l.b16 %v1440
        %v1620 = vunpack.c.h.b16 %v1440
        %v1621 = vunpack.c.l.b16 %v1441
        %v1622 = vunpack.c.h.b16 %v1441
        %v1623 = vunpack.c.l.b16 %v1442
        %v1624 = vunpack.c.h.b16 %v1442
        %v1625 = vunpack.c.l.b16 %v1443
        %v1626 = vunpack.c.h.b16 %v1443
        %v1627 = vunpack.c.l.b16 %v1444
        %v1628 = vunpack.c.h.b16 %v1444
        %v1629 = vunpack.c.l.b16 %v1445
        %v1630 = vunpack.c.h.b16 %v1445
        %v1631 = vunpack.c.l.b16 %v1446
        %v1632 = vunpack.c.h.b16 %v1446
        %v1633 = vunpack.c.l.b16 %v1447
        %v1634 = vunpack.c.h.b16 %v1447
        %v1635 = vunpack.c.l.b16 %v1448
        %v1636 = vunpack.c.h.b16 %v1448
        %v1637 = vunpack.c.l.b16 %v1449
        %v1638 = vunpack.c.h.b16 %v1449
        %v1639 = vunpack.c.l.b16 %v1450
        %v1640 = vunpack.c.h.b16 %v1450
        %v1641 = vunpack.c.l.b16 %v1451
        %v1642 = vunpack.c.h.b16 %v1451
        %v1643 = vunpack.c.l.b16 %v1452
        %v1644 = vunpack.c.h.b16 %v1452
        %v1645 = vunpack.c.l.b16 %v1453
        %v1646 = vunpack.c.h.b16 %v1453
        %v1647 = vunpack.c.l.b16 %v1454
        %v1648 = vunpack.c.h.b16 %v1454
        %v1649 = vpack.c.b16 %v1587, %v1585
        %v1650 = vpack.c.b16 %v1588, %v1586
        %v1651 = vpack.c.b16 %v1591, %v1589
        %v1652 = vpack.c.b16 %v1592, %v1590
        %v1653 = vpack.c.b16 %v1595, %v1593
        %v1654 = vpack.c.b16 %v1596, %v1594
        %v1655 = vpack.c.b16 %v1599, %v1597
        %v1656 = vpack.c.b16 %v1600, %v1598
        %v1657 = vpack.c.b16 %v1603, %v1601
        %v1658 = vpack.c.b16 %v1604, %v1602
        %v1659 = vpack.c.b16 %v1607, %v1605
        %v1660 = vpack.c.b16 %v1608, %v1606
        %v1661 = vpack.c.b16 %v1611, %v1609
        %v1662 = vpack.c.b16 %v1612, %v1610
        %v1663 = vpack.c.b16 %v1615, %v1613
        %v1664 = vpack.c.b16 %v1616, %v1614
        %v1665 = vpack.c.b16 %v1619, %v1617
        %v1666 = vpack.c.b16 %v1620, %v1618
        %v1667 = vpack.c.b16 %v1623, %v1621
        %v1668 = vpack.c.b16 %v1624, %v1622
        %v1669 = vpack.c.b16 %v1627, %v1625
        %v1670 = vpack.c.b16 %v1628, %v1626
        %v1671 = vpack.c.b16 %v1631, %v1629
        %v1672 = vpack.c.b16 %v1632, %v1630
        %v1673 = vpack.c.b16 %v1635, %v1633
        %v1674 = vpack.c.b16 %v1636, %v1634
        %v1675 = vpack.c.b16 %v1639, %v1637
        %v1676 = vpack.c.b16 %v1640, %v1638
        %v1677 = vpack.c.b16 %v1643, %v1641
        %v1678 = vpack.c.b16 %v1644, %v1642
        %v1679 = vpack.c.b16 %v1647, %v1645
        %v1680 = vpack.c.b16 %v1648, %v1646
        %1713 = vmatpush.bf16.msra.mxu0 %v1663
        %1714 = vmatpush.bf16.msra.mxu0 %v1661
        %1715 = vmatpush.bf16.msra.mxu0 %v1659
        %1716 = vmatpush.bf16.msra.mxu0 %v1657
        %1717 = vmatpush.bf16.msra.mxu0 %v1655
        %1718 = vmatpush.bf16.msra.mxu0 %v1653
        %1719 = vmatpush.bf16.msra.mxu0 %v1651
        %1720 = vmatpush.bf16.msra.mxu0 %v1649
        %1721 = vmatmul.bf16.gmra.mxu0 %v1551
        %v1722 = vpop.f32.mrf.mxu0
        %v1723 = vadd.f32 0.0, %v1722
        %v1724 = vpop.f32.mrf.mxu0
        %v1725 = vadd.f32 0.0, %v1724
        %1726 = vdwg.mxu0
        %1727 = vmatpush.bf16.msra.mxu0 %v1679
        %1728 = vmatpush.bf16.msra.mxu0 %v1677
        %1729 = vmatpush.bf16.msra.mxu0 %v1675
        %1730 = vmatpush.bf16.msra.mxu0 %v1673
        %1731 = vmatpush.bf16.msra.mxu0 %v1671
        %1732 = vmatpush.bf16.msra.mxu0 %v1669
        %1733 = vmatpush.bf16.msra.mxu0 %v1667
        %1734 = vmatpush.bf16.msra.mxu0 %v1665
        %1735 = vmatmul.bf16.gmra.mxu0 %v1552
        %v1736 = vpop.f32.mrf.mxu0
        %v1737 = vadd.f32 %v1723, %v1736
        %v1738 = vpop.f32.mrf.mxu0
        %v1739 = vadd.f32 %v1725, %v1738
        %1740 = vdwg.mxu0
        %1741 = vmatpush.bf16.msra.mxu0 %v1664
        %1742 = vmatpush.bf16.msra.mxu0 %v1662
        %1743 = vmatpush.bf16.msra.mxu0 %v1660
        %1744 = vmatpush.bf16.msra.mxu0 %v1658
        %1745 = vmatpush.bf16.msra.mxu0 %v1656
        %1746 = vmatpush.bf16.msra.mxu0 %v1654
        %1747 = vmatpush.bf16.msra.mxu0 %v1652
        %1748 = vmatpush.bf16.msra.mxu0 %v1650
        %1749 = vmatmul.bf16.gmra.mxu0 %v1551
        %v1750 = vpop.f32.mrf.mxu0
        %v1751 = vadd.f32 0.0, %v1750
        %v1752 = vpop.f32.mrf.mxu0
        %v1753 = vadd.f32 0.0, %v1752
        %1754 = vdwg.mxu0
        %1755 = vmatpush.bf16.msra.mxu0 %v1680
        %1756 = vmatpush.bf16.msra.mxu0 %v1678
        %1757 = vmatpush.bf16.msra.mxu0 %v1676
        %1758 = vmatpush.bf16.msra.mxu0 %v1674
        %1759 = vmatpush.bf16.msra.mxu0 %v1672
        %1760 = vmatpush.bf16.msra.mxu0 %v1670
        %1761 = vmatpush.bf16.msra.mxu0 %v1668
        %1762 = vmatpush.bf16.msra.mxu0 %v1666
        %1763 = vmatmul.bf16.gmra.mxu0 %v1552
        %v1764 = vpop.f32.mrf.mxu0
        %v1765 = vadd.f32 %v1751, %v1764
        %v1766 = vpop.f32.mrf.mxu0
        %v1767 = vadd.f32 %v1753, %v1766
        %1768 = vdwg.mxu0
        %v1801 = vunpack.c.l.b16 %v1455
        %v1802 = vunpack.c.h.b16 %v1455
        %v1803 = vunpack.c.l.b16 %v1456
        %v1804 = vunpack.c.h.b16 %v1456
        %v1805 = vunpack.c.l.b16 %v1457
        %v1806 = vunpack.c.h.b16 %v1457
        %v1807 = vunpack.c.l.b16 %v1458
        %v1808 = vunpack.c.h.b16 %v1458
        %v1809 = vunpack.c.l.b16 %v1459
        %v1810 = vunpack.c.h.b16 %v1459
        %v1811 = vunpack.c.l.b16 %v1460
        %v1812 = vunpack.c.h.b16 %v1460
        %v1813 = vunpack.c.l.b16 %v1461
        %v1814 = vunpack.c.h.b16 %v1461
        %v1815 = vunpack.c.l.b16 %v1462
        %v1816 = vunpack.c.h.b16 %v1462
        %v1817 = vunpack.c.l.b16 %v1463
        %v1818 = vunpack.c.h.b16 %v1463
        %v1819 = vunpack.c.l.b16 %v1464
        %v1820 = vunpack.c.h.b16 %v1464
        %v1821 = vunpack.c.l.b16 %v1465
        %v1822 = vunpack.c.h.b16 %v1465
        %v1823 = vunpack.c.l.b16 %v1466
        %v1824 = vunpack.c.h.b16 %v1466
        %v1825 = vunpack.c.l.b16 %v1467
        %v1826 = vunpack.c.h.b16 %v1467
        %v1827 = vunpack.c.l.b16 %v1468
        %v1828 = vunpack.c.h.b16 %v1468
        %v1829 = vunpack.c.l.b16 %v1469
        %v1830 = vunpack.c.h.b16 %v1469
        %v1831 = vunpack.c.l.b16 %v1470
        %v1832 = vunpack.c.h.b16 %v1470
        %v1833 = vunpack.c.l.b16 %v1471
        %v1834 = vunpack.c.h.b16 %v1471
        %v1835 = vunpack.c.l.b16 %v1472
        %v1836 = vunpack.c.h.b16 %v1472
        %v1837 = vunpack.c.l.b16 %v1473
        %v1838 = vunpack.c.h.b16 %v1473
        %v1839 = vunpack.c.l.b16 %v1474
        %v1840 = vunpack.c.h.b16 %v1474
        %v1841 = vunpack.c.l.b16 %v1475
        %v1842 = vunpack.c.h.b16 %v1475
        %v1843 = vunpack.c.l.b16 %v1476
        %v1844 = vunpack.c.h.b16 %v1476
        %v1845 = vunpack.c.l.b16 %v1477
        %v1846 = vunpack.c.h.b16 %v1477
        %v1847 = vunpack.c.l.b16 %v1478
        %v1848 = vunpack.c.h.b16 %v1478
        %v1849 = vunpack.c.l.b16 %v1479
        %v1850 = vunpack.c.h.b16 %v1479
        %v1851 = vunpack.c.l.b16 %v1480
        %v1852 = vunpack.c.h.b16 %v1480
        %v1853 = vunpack.c.l.b16 %v1481
        %v1854 = vunpack.c.h.b16 %v1481
        %v1855 = vunpack.c.l.b16 %v1482
        %v1856 = vunpack.c.h.b16 %v1482
        %v1857 = vunpack.c.l.b16 %v1483
        %v1858 = vunpack.c.h.b16 %v1483
        %v1859 = vunpack.c.l.b16 %v1484
        %v1860 = vunpack.c.h.b16 %v1484
        %v1861 = vunpack.c.l.b16 %v1485
        %v1862 = vunpack.c.h.b16 %v1485
        %v1863 = vunpack.c.l.b16 %v1486
        %v1864 = vunpack.c.h.b16 %v1486
        %v1865 = vpack.c.b16 %v1803, %v1801
        %v1866 = vpack.c.b16 %v1804, %v1802
        %v1867 = vpack.c.b16 %v1807, %v1805
        %v1868 = vpack.c.b16 %v1808, %v1806
        %v1869 = vpack.c.b16 %v1811, %v1809
        %v1870 = vpack.c.b16 %v1812, %v1810
        %v1871 = vpack.c.b16 %v1815, %v1813
        %v1872 = vpack.c.b16 %v1816, %v1814
        %v1873 = vpack.c.b16 %v1819, %v1817
        %v1874 = vpack.c.b16 %v1820, %v1818
        %v1875 = vpack.c.b16 %v1823, %v1821
        %v1876 = vpack.c.b16 %v1824, %v1822
        %v1877 = vpack.c.b16 %v1827, %v1825
        %v1878 = vpack.c.b16 %v1828, %v1826
        %v1879 = vpack.c.b16 %v1831, %v1829
        %v1880 = vpack.c.b16 %v1832, %v1830
        %v1881 = vpack.c.b16 %v1835, %v1833
        %v1882 = vpack.c.b16 %v1836, %v1834
        %v1883 = vpack.c.b16 %v1839, %v1837
        %v1884 = vpack.c.b16 %v1840, %v1838
        %v1885 = vpack.c.b16 %v1843, %v1841
        %v1886 = vpack.c.b16 %v1844, %v1842
        %v1887 = vpack.c.b16 %v1847, %v1845
        %v1888 = vpack.c.b16 %v1848, %v1846
        %v1889 = vpack.c.b16 %v1851, %v1849
        %v1890 = vpack.c.b16 %v1852, %v1850
        %v1891 = vpack.c.b16 %v1855, %v1853
        %v1892 = vpack.c.b16 %v1856, %v1854
        %v1893 = vpack.c.b16 %v1859, %v1857
        %v1894 = vpack.c.b16 %v1860, %v1858
        %v1895 = vpack.c.b16 %v1863, %v1861
        %v1896 = vpack.c.b16 %v1864, %v1862
        %1929 = vmatpush.bf16.msra.mxu0 %v1879
        %1930 = vmatpush.bf16.msra.mxu0 %v1877
        %1931 = vmatpush.bf16.msra.mxu0 %v1875
        %1932 = vmatpush.bf16.msra.mxu0 %v1873
        %1933 = vmatpush.bf16.msra.mxu0 %v1871
        %1934 = vmatpush.bf16.msra.mxu0 %v1869
        %1935 = vmatpush.bf16.msra.mxu0 %v1867
        %1936 = vmatpush.bf16.msra.mxu0 %v1865
        %1937 = vmatmul.bf16.gmra.mxu0 %v1551
        %v1938 = vpop.f32.mrf.mxu0
        %v1939 = vadd.f32 0.0, %v1938
        %v1940 = vpop.f32.mrf.mxu0
        %v1941 = vadd.f32 0.0, %v1940
        %1942 = vdwg.mxu0
        %1943 = vmatpush.bf16.msra.mxu0 %v1895
        %1944 = vmatpush.bf16.msra.mxu0 %v1893
        %1945 = vmatpush.bf16.msra.mxu0 %v1891
        %1946 = vmatpush.bf16.msra.mxu0 %v1889
        %1947 = vmatpush.bf16.msra.mxu0 %v1887
        %1948 = vmatpush.bf16.msra.mxu0 %v1885
        %1949 = vmatpush.bf16.msra.mxu0 %v1883
        %1950 = vmatpush.bf16.msra.mxu0 %v1881
        %1951 = vmatmul.bf16.gmra.mxu0 %v1552
        %v1952 = vpop.f32.mrf.mxu0
        %v1953 = vadd.f32 %v1939, %v1952
        %v1954 = vpop.f32.mrf.mxu0
        %v1955 = vadd.f32 %v1941, %v1954
        %1956 = vdwg.mxu0
        %1957 = vmatpush.bf16.msra.mxu0 %v1880
        %1958 = vmatpush.bf16.msra.mxu0 %v1878
        %1959 = vmatpush.bf16.msra.mxu0 %v1876
        %1960 = vmatpush.bf16.msra.mxu0 %v1874
        %1961 = vmatpush.bf16.msra.mxu0 %v1872
        %1962 = vmatpush.bf16.msra.mxu0 %v1870
        %1963 = vmatpush.bf16.msra.mxu0 %v1868
        %1964 = vmatpush.bf16.msra.mxu0 %v1866
        %1965 = vmatmul.bf16.gmra.mxu0 %v1551
        %v1966 = vpop.f32.mrf.mxu0
        %v1967 = vadd.f32 0.0, %v1966
        %v1968 = vpop.f32.mrf.mxu0
        %v1969 = vadd.f32 0.0, %v1968
        %1970 = vdwg.mxu0
        %1971 = vmatpush.bf16.msra.mxu0 %v1896
        %1972 = vmatpush.bf16.msra.mxu0 %v1894
        %1973 = vmatpush.bf16.msra.mxu0 %v1892
        %1974 = vmatpush.bf16.msra.mxu0 %v1890
        %1975 = vmatpush.bf16.msra.mxu0 %v1888
        %1976 = vmatpush.bf16.msra.mxu0 %v1886
        %1977 = vmatpush.bf16.msra.mxu0 %v1884
        %1978 = vmatpush.bf16.msra.mxu0 %v1882
        %1979 = vmatmul.bf16.gmra.mxu0 %v1552
        %v1980 = vpop.f32.mrf.mxu0
        %v1981 = vadd.f32 %v1967, %v1980
        %v1982 = vpop.f32.mrf.mxu0
        %v1983 = vadd.f32 %v1969, %v1982
        %1984 = vdwg.mxu0
        %v2017 = vunpack.c.l.b16 %v1487
        %v2018 = vunpack.c.h.b16 %v1487
        %v2019 = vunpack.c.l.b16 %v1488
        %v2020 = vunpack.c.h.b16 %v1488
        %v2021 = vunpack.c.l.b16 %v1489
        %v2022 = vunpack.c.h.b16 %v1489
        %v2023 = vunpack.c.l.b16 %v1490
        %v2024 = vunpack.c.h.b16 %v1490
        %v2025 = vunpack.c.l.b16 %v1491
        %v2026 = vunpack.c.h.b16 %v1491
        %v2027 = vunpack.c.l.b16 %v1492
        %v2028 = vunpack.c.h.b16 %v1492
        %v2029 = vunpack.c.l.b16 %v1493
        %v2030 = vunpack.c.h.b16 %v1493
        %v2031 = vunpack.c.l.b16 %v1494
        %v2032 = vunpack.c.h.b16 %v1494
        %v2033 = vunpack.c.l.b16 %v1495
        %v2034 = vunpack.c.h.b16 %v1495
        %v2035 = vunpack.c.l.b16 %v1496
        %v2036 = vunpack.c.h.b16 %v1496
        %v2037 = vunpack.c.l.b16 %v1497
        %v2038 = vunpack.c.h.b16 %v1497
        %v2039 = vunpack.c.l.b16 %v1498
        %v2040 = vunpack.c.h.b16 %v1498
        %v2041 = vunpack.c.l.b16 %v1499
        %v2042 = vunpack.c.h.b16 %v1499
        %v2043 = vunpack.c.l.b16 %v1500
        %v2044 = vunpack.c.h.b16 %v1500
        %v2045 = vunpack.c.l.b16 %v1501
        %v2046 = vunpack.c.h.b16 %v1501
        %v2047 = vunpack.c.l.b16 %v1502
        %v2048 = vunpack.c.h.b16 %v1502
        %v2049 = vunpack.c.l.b16 %v1503
        %v2050 = vunpack.c.h.b16 %v1503
        %v2051 = vunpack.c.l.b16 %v1504
        %v2052 = vunpack.c.h.b16 %v1504
        %v2053 = vunpack.c.l.b16 %v1505
        %v2054 = vunpack.c.h.b16 %v1505
        %v2055 = vunpack.c.l.b16 %v1506
        %v2056 = vunpack.c.h.b16 %v1506
        %v2057 = vunpack.c.l.b16 %v1507
        %v2058 = vunpack.c.h.b16 %v1507
        %v2059 = vunpack.c.l.b16 %v1508
        %v2060 = vunpack.c.h.b16 %v1508
        %v2061 = vunpack.c.l.b16 %v1509
        %v2062 = vunpack.c.h.b16 %v1509
        %v2063 = vunpack.c.l.b16 %v1510
        %v2064 = vunpack.c.h.b16 %v1510
        %v2065 = vunpack.c.l.b16 %v1511
        %v2066 = vunpack.c.h.b16 %v1511
        %v2067 = vunpack.c.l.b16 %v1512
        %v2068 = vunpack.c.h.b16 %v1512
        %v2069 = vunpack.c.l.b16 %v1513
        %v2070 = vunpack.c.h.b16 %v1513
        %v2071 = vunpack.c.l.b16 %v1514
        %v2072 = vunpack.c.h.b16 %v1514
        %v2073 = vunpack.c.l.b16 %v1515
        %v2074 = vunpack.c.h.b16 %v1515
        %v2075 = vunpack.c.l.b16 %v1516
        %v2076 = vunpack.c.h.b16 %v1516
        %v2077 = vunpack.c.l.b16 %v1517
        %v2078 = vunpack.c.h.b16 %v1517
        %v2079 = vunpack.c.l.b16 %v1518
        %v2080 = vunpack.c.h.b16 %v1518
        %v2081 = vpack.c.b16 %v2019, %v2017
        %v2082 = vpack.c.b16 %v2020, %v2018
        %v2083 = vpack.c.b16 %v2023, %v2021
        %v2084 = vpack.c.b16 %v2024, %v2022
        %v2085 = vpack.c.b16 %v2027, %v2025
        %v2086 = vpack.c.b16 %v2028, %v2026
        %v2087 = vpack.c.b16 %v2031, %v2029
        %v2088 = vpack.c.b16 %v2032, %v2030
        %v2089 = vpack.c.b16 %v2035, %v2033
        %v2090 = vpack.c.b16 %v2036, %v2034
        %v2091 = vpack.c.b16 %v2039, %v2037
        %v2092 = vpack.c.b16 %v2040, %v2038
        %v2093 = vpack.c.b16 %v2043, %v2041
        %v2094 = vpack.c.b16 %v2044, %v2042
        %v2095 = vpack.c.b16 %v2047, %v2045
        %v2096 = vpack.c.b16 %v2048, %v2046
        %v2097 = vpack.c.b16 %v2051, %v2049
        %v2098 = vpack.c.b16 %v2052, %v2050
        %v2099 = vpack.c.b16 %v2055, %v2053
        %v2100 = vpack.c.b16 %v2056, %v2054
        %v2101 = vpack.c.b16 %v2059, %v2057
        %v2102 = vpack.c.b16 %v2060, %v2058
        %v2103 = vpack.c.b16 %v2063, %v2061
        %v2104 = vpack.c.b16 %v2064, %v2062
        %v2105 = vpack.c.b16 %v2067, %v2065
        %v2106 = vpack.c.b16 %v2068, %v2066
        %v2107 = vpack.c.b16 %v2071, %v2069
        %v2108 = vpack.c.b16 %v2072, %v2070
        %v2109 = vpack.c.b16 %v2075, %v2073
        %v2110 = vpack.c.b16 %v2076, %v2074
        %v2111 = vpack.c.b16 %v2079, %v2077
        %v2112 = vpack.c.b16 %v2080, %v2078
        %2145 = vmatpush.bf16.msra.mxu0 %v2095
        %2146 = vmatpush.bf16.msra.mxu0 %v2093
        %2147 = vmatpush.bf16.msra.mxu0 %v2091
        %2148 = vmatpush.bf16.msra.mxu0 %v2089
        %2149 = vmatpush.bf16.msra.mxu0 %v2087
        %2150 = vmatpush.bf16.msra.mxu0 %v2085
        %2151 = vmatpush.bf16.msra.mxu0 %v2083
        %2152 = vmatpush.bf16.msra.mxu0 %v2081
        %2153 = vmatmul.bf16.gmra.mxu0 %v1551
        %v2154 = vpop.f32.mrf.mxu0
        %v2155 = vadd.f32 0.0, %v2154
        %v2156 = vpop.f32.mrf.mxu0
        %v2157 = vadd.f32 0.0, %v2156
        %2158 = vdwg.mxu0
        %2159 = vmatpush.bf16.msra.mxu0 %v2111
        %2160 = vmatpush.bf16.msra.mxu0 %v2109
        %2161 = vmatpush.bf16.msra.mxu0 %v2107
        %2162 = vmatpush.bf16.msra.mxu0 %v2105
        %2163 = vmatpush.bf16.msra.mxu0 %v2103
        %2164 = vmatpush.bf16.msra.mxu0 %v2101
        %2165 = vmatpush.bf16.msra.mxu0 %v2099
        %2166 = vmatpush.bf16.msra.mxu0 %v2097
        %2167 = vmatmul.bf16.gmra.mxu0 %v1552
        %v2168 = vpop.f32.mrf.mxu0
        %v2169 = vadd.f32 %v2155, %v2168
        %v2170 = vpop.f32.mrf.mxu0
        %v2171 = vadd.f32 %v2157, %v2170
        %2172 = vdwg.mxu0
        %2173 = vmatpush.bf16.msra.mxu0 %v2096
        %2174 = vmatpush.bf16.msra.mxu0 %v2094
        %2175 = vmatpush.bf16.msra.mxu0 %v2092
        %2176 = vmatpush.bf16.msra.mxu0 %v2090
        %2177 = vmatpush.bf16.msra.mxu0 %v2088
        %2178 = vmatpush.bf16.msra.mxu0 %v2086
        %2179 = vmatpush.bf16.msra.mxu0 %v2084
        %2180 = vmatpush.bf16.msra.mxu0 %v2082
        %2181 = vmatmul.bf16.gmra.mxu0 %v1551
        %v2182 = vpop.f32.mrf.mxu0
        %v2183 = vadd.f32 0.0, %v2182
        %v2184 = vpop.f32.mrf.mxu0
        %v2185 = vadd.f32 0.0, %v2184
        %2186 = vdwg.mxu0
        %2187 = vmatpush.bf16.msra.mxu0 %v2112
        %2188 = vmatpush.bf16.msra.mxu0 %v2110
        %2189 = vmatpush.bf16.msra.mxu0 %v2108
        %2190 = vmatpush.bf16.msra.mxu0 %v2106
        %2191 = vmatpush.bf16.msra.mxu0 %v2104
        %2192 = vmatpush.bf16.msra.mxu0 %v2102
        %2193 = vmatpush.bf16.msra.mxu0 %v2100
        %2194 = vmatpush.bf16.msra.mxu0 %v2098
        %2195 = vmatmul.bf16.gmra.mxu0 %v1552
        %v2196 = vpop.f32.mrf.mxu0
        %v2197 = vadd.f32 %v2183, %v2196
        %v2198 = vpop.f32.mrf.mxu0
        %v2199 = vadd.f32 %v2185, %v2198
        %2200 = vdwg.mxu0
        %vm2201 = vcmask 523264
        %v2203 = vsel %vm2201, %v1737, 0
        %v2206 = vsel %vm2201, %v1953, 0
        %2208 = vmatpush.xpose.msra.mxu0 0.0
        %2209 = vmatpush.xpose.msra.mxu0 0.0
        %2210 = vmatpush.xpose.msra.mxu0 0.0
        %2211 = vmatpush.xpose.msra.mxu0 0.0
        %2212 = vmatpush.xpose.msra.mxu0 0.0
        %2213 = vmatpush.xpose.msra.mxu0 0.0
        %2214 = vmatpush.xpose.msra.mxu0 0.0
        %2215 = vmatpush.xpose.msra.mxu0 0.0
        %2216 = vmatpush.xpose.msra.mxu0 0.0
        %2217 = vmatpush.xpose.msra.mxu0 0.0
        %2218 = vmatpush.xpose.msra.mxu0 0.0
        %2219 = vmatpush.xpose.msra.mxu0 0.0
        %2220 = vmatpush.xpose.msra.mxu0 0.0
        %2221 = vmatpush.xpose.msra.mxu0 0.0
        %2222 = vmatpush.xpose.msra.mxu0 0.0
        %2223 = vmatpush.xpose.msra.mxu0 %v2206
        %2224 = vmatmul.f32.gmra.mxu0 %v2203
        %v2225 = vpop.f32.mrf.mxu0
        %v2226 = vadd.f32 0.0, %v2225
        %2227 = vdwg.mxu0
        %v2228 = vmul.f32 %v2226, 0.125
        %vm2229 = vcmask 64512
        %v2230 = vsel %vm2229, %v2228, -inf
        %2231 = vmax.xlane.f32.xlu0 %v2230
        %v2232 = vpop.xlane.xlu0 %2231
        %v2233 = vsub.f32 %v2228, %v2232
        %v2234 = vmul.f32 %v2233, 1.442695
        %v2235 = vpow.pop %v2234
        %v2236 = vsel %vm2229, %v2235, 0.0
        %2237 = vadd.xlane.f32.xlu0 %v2236
        %v2238 = vpop.xlane.xlu0 %2237
        %v2239 = vrcp.pop %v2238
        %v2240 = vmul.f32 %v2235, %v2239
        %v2241 = vpack.c.bf16 %v2240, %v2240
        %v2242 = vpack.c.bf16 %v2169, %v2169
        %v2244 = vsel %vm2229, %v2241, 0
        %vm2246 = vcmask 1043456
        %v2248 = vsel %vm2246, %v2242, 0
        %2250 = vmatpush.bf16.msra.mxu0 0
        %2251 = vmatpush.bf16.msra.mxu0 0
        %2252 = vmatpush.bf16.msra.mxu0 0
        %2253 = vmatpush.bf16.msra.mxu0 0
        %2254 = vmatpush.bf16.msra.mxu0 0
        %2255 = vmatpush.bf16.msra.mxu0 0
        %2256 = vmatpush.bf16.msra.mxu0 0
        %2257 = vmatpush.bf16.msra.mxu0 %v2248
        %2258 = vmatmul.bf16.gmra.mxu0 %v2244
        %v2259 = vpop.f32.mrf.mxu0
        %v2260 = vadd.f32 0.0, %v2259
        %v2261 = vpop.f32.mrf.mxu0
        %2262 = vdwg.mxu0
        %v2263 = vpack.c.bf16 %v2260, %v2260
        %2264 = vrot.lane.b32.xlu0 %v1737, 64
        %v2265 = vpop.permute.xlu0 %2264
        %2266 = vrot.lane.b32.xlu0 %v1953, 64
        %v2267 = vpop.permute.xlu0 %2266
        %v2268 = vsel %vm2201, %v2265, 0
        %v2270 = vsel %vm2201, %v2267, 0
        %2272 = vmatpush.xpose.msra.mxu0 0.0
        %2273 = vmatpush.xpose.msra.mxu0 0.0
        %2274 = vmatpush.xpose.msra.mxu0 0.0
        %2275 = vmatpush.xpose.msra.mxu0 0.0
        %2276 = vmatpush.xpose.msra.mxu0 0.0
        %2277 = vmatpush.xpose.msra.mxu0 0.0
        %2278 = vmatpush.xpose.msra.mxu0 0.0
        %2279 = vmatpush.xpose.msra.mxu0 0.0
        %2280 = vmatpush.xpose.msra.mxu0 0.0
        %2281 = vmatpush.xpose.msra.mxu0 0.0
        %2282 = vmatpush.xpose.msra.mxu0 0.0
        %2283 = vmatpush.xpose.msra.mxu0 0.0
        %2284 = vmatpush.xpose.msra.mxu0 0.0
        %2285 = vmatpush.xpose.msra.mxu0 0.0
        %2286 = vmatpush.xpose.msra.mxu0 0.0
        %2287 = vmatpush.xpose.msra.mxu0 %v2270
        %2288 = vmatmul.f32.gmra.mxu0 %v2268
        %v2289 = vpop.f32.mrf.mxu0
        %v2290 = vadd.f32 0.0, %v2289
        %2291 = vdwg.mxu0
        %v2292 = vmul.f32 %v2290, 0.125
        %v2293 = vsel %vm2229, %v2292, -inf
        %2294 = vmax.xlane.f32.xlu0 %v2293
        %v2295 = vpop.xlane.xlu0 %2294
        %v2296 = vsub.f32 %v2292, %v2295
        %v2297 = vmul.f32 %v2296, 1.442695
        %v2298 = vpow.pop %v2297
        %v2299 = vsel %vm2229, %v2298, 0.0
        %2300 = vadd.xlane.f32.xlu0 %v2299
        %v2301 = vpop.xlane.xlu0 %2300
        %v2302 = vrcp.pop %v2301
        %v2303 = vmul.f32 %v2298, %v2302
        %v2304 = vpack.c.bf16 %v2303, %v2303
        %2306 = vrot.lane.b32.xlu0 %v2242, 64
        %v2307 = vpop.permute.xlu0 %2306
        %v2309 = vsel %vm2229, %v2304, 0
        %v2312 = vsel %vm2246, %v2307, 0
        %2314 = vmatpush.bf16.msra.mxu0 0
        %2315 = vmatpush.bf16.msra.mxu0 0
        %2316 = vmatpush.bf16.msra.mxu0 0
        %2317 = vmatpush.bf16.msra.mxu0 0
        %2318 = vmatpush.bf16.msra.mxu0 0
        %2319 = vmatpush.bf16.msra.mxu0 0
        %2320 = vmatpush.bf16.msra.mxu0 0
        %2321 = vmatpush.bf16.msra.mxu0 %v2312
        %2322 = vmatmul.bf16.gmra.mxu0 %v2309
        %v2323 = vpop.f32.mrf.mxu0
        %v2324 = vadd.f32 0.0, %v2323
        %v2325 = vpop.f32.mrf.mxu0
        %2326 = vdwg.mxu0
        %v2327 = vpack.c.bf16 %v2324, %v2324
        %v2336 = vunpack.c.l.b16 %v1527
        %v2337 = vunpack.c.h.b16 %v1527
        %v2338 = vunpack.c.l.b16 %v1528
        %v2339 = vunpack.c.h.b16 %v1528
        %v2340 = vunpack.c.l.b16 %v1529
        %v2341 = vunpack.c.h.b16 %v1529
        %v2342 = vunpack.c.l.b16 %v1530
        %v2343 = vunpack.c.h.b16 %v1530
        %v2344 = vunpack.c.l.b16 %v1531
        %v2345 = vunpack.c.h.b16 %v1531
        %v2346 = vunpack.c.l.b16 %v1532
        %v2347 = vunpack.c.h.b16 %v1532
        %v2348 = vunpack.c.l.b16 %v1533
        %v2349 = vunpack.c.h.b16 %v1533
        %v2350 = vunpack.c.l.b16 %v1534
        %v2351 = vunpack.c.h.b16 %v1534
        %v2352 = vpack.c.b16 %v2338, %v2336
        %v2353 = vpack.c.b16 %v2339, %v2337
        %v2354 = vpack.c.b16 %v2342, %v2340
        %v2355 = vpack.c.b16 %v2343, %v2341
        %v2356 = vpack.c.b16 %v2346, %v2344
        %v2357 = vpack.c.b16 %v2347, %v2345
        %v2358 = vpack.c.b16 %v2350, %v2348
        %v2359 = vpack.c.b16 %v2351, %v2349
        %v2369 = vsel %vm2201, %v2327, 0
        %2371 = vmatpush.bf16.msra.mxu0 0
        %2372 = vmatpush.bf16.msra.mxu0 0
        %2373 = vmatpush.bf16.msra.mxu0 0
        %2374 = vmatpush.bf16.msra.mxu0 0
        %2375 = vmatpush.bf16.msra.mxu0 %v2358
        %2376 = vmatpush.bf16.msra.mxu0 %v2356
        %2377 = vmatpush.bf16.msra.mxu0 %v2354
        %2378 = vmatpush.bf16.msra.mxu0 %v2352
        %2379 = vmatmul.bf16.gmra.mxu0 %v2369
        %v2380 = vpop.f32.mrf.mxu0
        %v2381 = vadd.f32 0.0, %v2380
        %v2382 = vpop.f32.mrf.mxu0
        %2383 = vdwg.mxu0
        %2384 = vmatpush.bf16.msra.mxu0 0
        %2385 = vmatpush.bf16.msra.mxu0 0
        %2386 = vmatpush.bf16.msra.mxu0 0
        %2387 = vmatpush.bf16.msra.mxu0 0
        %2388 = vmatpush.bf16.msra.mxu0 %v2359
        %2389 = vmatpush.bf16.msra.mxu0 %v2357
        %2390 = vmatpush.bf16.msra.mxu0 %v2355
        %2391 = vmatpush.bf16.msra.mxu0 %v2353
        %2392 = vmatmul.bf16.gmra.mxu0 %v2369
        %v2393 = vpop.f32.mrf.mxu0
        %v2394 = vadd.f32 0.0, %v2393
        %v2395 = vpop.f32.mrf.mxu0
        %2396 = vdwg.mxu0
        %v2405 = vunpack.c.l.b16 %v1519
        %v2406 = vunpack.c.h.b16 %v1519
        %v2407 = vunpack.c.l.b16 %v1520
        %v2408 = vunpack.c.h.b16 %v1520
        %v2409 = vunpack.c.l.b16 %v1521
        %v2410 = vunpack.c.h.b16 %v1521
        %v2411 = vunpack.c.l.b16 %v1522
        %v2412 = vunpack.c.h.b16 %v1522
        %v2413 = vunpack.c.l.b16 %v1523
        %v2414 = vunpack.c.h.b16 %v1523
        %v2415 = vunpack.c.l.b16 %v1524
        %v2416 = vunpack.c.h.b16 %v1524
        %v2417 = vunpack.c.l.b16 %v1525
        %v2418 = vunpack.c.h.b16 %v1525
        %v2419 = vunpack.c.l.b16 %v1526
        %v2420 = vunpack.c.h.b16 %v1526
        %v2421 = vpack.c.b16 %v2407, %v2405
        %v2422 = vpack.c.b16 %v2408, %v2406
        %v2423 = vpack.c.b16 %v2411, %v2409
        %v2424 = vpack.c.b16 %v2412, %v2410
        %v2425 = vpack.c.b16 %v2415, %v2413
        %v2426 = vpack.c.b16 %v2416, %v2414
        %v2427 = vpack.c.b16 %v2419, %v2417
        %v2428 = vpack.c.b16 %v2420, %v2418
        %v2438 = vsel %vm2201, %v2263, 0
        %2440 = vmatpush.bf16.msra.mxu0 0
        %2441 = vmatpush.bf16.msra.mxu0 0
        %2442 = vmatpush.bf16.msra.mxu0 0
        %2443 = vmatpush.bf16.msra.mxu0 0
        %2444 = vmatpush.bf16.msra.mxu0 %v2427
        %2445 = vmatpush.bf16.msra.mxu0 %v2425
        %2446 = vmatpush.bf16.msra.mxu0 %v2423
        %2447 = vmatpush.bf16.msra.mxu0 %v2421
        %2448 = vmatmul.bf16.gmra.mxu0 %v2438
        %v2449 = vpop.f32.mrf.mxu0
        %v2450 = vadd.f32 %v2381, %v2449
        %v2451 = vpop.f32.mrf.mxu0
        %2452 = vdwg.mxu0
        %2453 = vmatpush.bf16.msra.mxu0 0
        %2454 = vmatpush.bf16.msra.mxu0 0
        %2455 = vmatpush.bf16.msra.mxu0 0
        %2456 = vmatpush.bf16.msra.mxu0 0
        %2457 = vmatpush.bf16.msra.mxu0 %v2428
        %2458 = vmatpush.bf16.msra.mxu0 %v2426
        %2459 = vmatpush.bf16.msra.mxu0 %v2424
        %2460 = vmatpush.bf16.msra.mxu0 %v2422
        %2461 = vmatmul.bf16.gmra.mxu0 %v2438
        %v2462 = vpop.f32.mrf.mxu0
        %v2463 = vadd.f32 %v2394, %v2462
        %v2464 = vpop.f32.mrf.mxu0
        %2465 = vdwg.mxu0
        %v2467 = vsel %vm2201, %v1765, 0
        %v2470 = vsel %vm2201, %v1981, 0
        %2472 = vmatpush.xpose.msra.mxu0 0.0
        %2473 = vmatpush.xpose.msra.mxu0 0.0
        %2474 = vmatpush.xpose.msra.mxu0 0.0
        %2475 = vmatpush.xpose.msra.mxu0 0.0
        %2476 = vmatpush.xpose.msra.mxu0 0.0
        %2477 = vmatpush.xpose.msra.mxu0 0.0
        %2478 = vmatpush.xpose.msra.mxu0 0.0
        %2479 = vmatpush.xpose.msra.mxu0 0.0
        %2480 = vmatpush.xpose.msra.mxu0 0.0
        %2481 = vmatpush.xpose.msra.mxu0 0.0
        %2482 = vmatpush.xpose.msra.mxu0 0.0
        %2483 = vmatpush.xpose.msra.mxu0 0.0
        %2484 = vmatpush.xpose.msra.mxu0 0.0
        %2485 = vmatpush.xpose.msra.mxu0 0.0
        %2486 = vmatpush.xpose.msra.mxu0 0.0
        %2487 = vmatpush.xpose.msra.mxu0 %v2470
        %2488 = vmatmul.f32.gmra.mxu0 %v2467
        %v2489 = vpop.f32.mrf.mxu0
        %v2490 = vadd.f32 0.0, %v2489
        %2491 = vdwg.mxu0
        %v2492 = vmul.f32 %v2490, 0.125
        %v2493 = vsel %vm2229, %v2492, -inf
        %2494 = vmax.xlane.f32.xlu0 %v2493
        %v2495 = vpop.xlane.xlu0 %2494
        %v2496 = vsub.f32 %v2492, %v2495
        %v2497 = vmul.f32 %v2496, 1.442695
        %v2498 = vpow.pop %v2497
        %v2499 = vsel %vm2229, %v2498, 0.0
        %2500 = vadd.xlane.f32.xlu0 %v2499
        %v2501 = vpop.xlane.xlu0 %2500
        %v2502 = vrcp.pop %v2501
        %v2503 = vmul.f32 %v2498, %v2502
        %v2504 = vpack.c.bf16 %v2503, %v2503
        %v2505 = vpack.c.bf16 %v2197, %v2197
        %v2507 = vsel %vm2229, %v2504, 0
        %v2510 = vsel %vm2246, %v2505, 0
        %2512 = vmatpush.bf16.msra.mxu0 0
        %2513 = vmatpush.bf16.msra.mxu0 0
        %2514 = vmatpush.bf16.msra.mxu0 0
        %2515 = vmatpush.bf16.msra.mxu0 0
        %2516 = vmatpush.bf16.msra.mxu0 0
        %2517 = vmatpush.bf16.msra.mxu0 0
        %2518 = vmatpush.bf16.msra.mxu0 0
        %2519 = vmatpush.bf16.msra.mxu0 %v2510
        %2520 = vmatmul.bf16.gmra.mxu0 %v2507
        %v2521 = vpop.f32.mrf.mxu0
        %v2522 = vadd.f32 0.0, %v2521
        %v2523 = vpop.f32.mrf.mxu0
        %2524 = vdwg.mxu0
        %v2525 = vpack.c.bf16 %v2522, %v2522
        %v2534 = vunpack.c.l.b16 %v1535
        %v2535 = vunpack.c.h.b16 %v1535
        %v2536 = vunpack.c.l.b16 %v1536
        %v2537 = vunpack.c.h.b16 %v1536
        %v2538 = vunpack.c.l.b16 %v1537
        %v2539 = vunpack.c.h.b16 %v1537
        %v2540 = vunpack.c.l.b16 %v1538
        %v2541 = vunpack.c.h.b16 %v1538
        %v2542 = vunpack.c.l.b16 %v1539
        %v2543 = vunpack.c.h.b16 %v1539
        %v2544 = vunpack.c.l.b16 %v1540
        %v2545 = vunpack.c.h.b16 %v1540
        %v2546 = vunpack.c.l.b16 %v1541
        %v2547 = vunpack.c.h.b16 %v1541
        %v2548 = vunpack.c.l.b16 %v1542
        %v2549 = vunpack.c.h.b16 %v1542
        %v2550 = vpack.c.b16 %v2536, %v2534
        %v2551 = vpack.c.b16 %v2537, %v2535
        %v2552 = vpack.c.b16 %v2540, %v2538
        %v2553 = vpack.c.b16 %v2541, %v2539
        %v2554 = vpack.c.b16 %v2544, %v2542
        %v2555 = vpack.c.b16 %v2545, %v2543
        %v2556 = vpack.c.b16 %v2548, %v2546
        %v2557 = vpack.c.b16 %v2549, %v2547
        %v2567 = vsel %vm2201, %v2525, 0
        %2569 = vmatpush.bf16.msra.mxu0 0
        %2570 = vmatpush.bf16.msra.mxu0 0
        %2571 = vmatpush.bf16.msra.mxu0 0
        %2572 = vmatpush.bf16.msra.mxu0 0
        %2573 = vmatpush.bf16.msra.mxu0 %v2556
        %2574 = vmatpush.bf16.msra.mxu0 %v2554
        %2575 = vmatpush.bf16.msra.mxu0 %v2552
        %2576 = vmatpush.bf16.msra.mxu0 %v2550
        %2577 = vmatmul.bf16.gmra.mxu0 %v2567
        %v2578 = vpop.f32.mrf.mxu0
        %v2579 = vadd.f32 0.0, %v2578
        %v2580 = vpop.f32.mrf.mxu0
        %2581 = vdwg.mxu0
        %2582 = vmatpush.bf16.msra.mxu0 0
        %2583 = vmatpush.bf16.msra.mxu0 0
        %2584 = vmatpush.bf16.msra.mxu0 0
        %2585 = vmatpush.bf16.msra.mxu0 0
        %2586 = vmatpush.bf16.msra.mxu0 %v2557
        %2587 = vmatpush.bf16.msra.mxu0 %v2555
        %2588 = vmatpush.bf16.msra.mxu0 %v2553
        %2589 = vmatpush.bf16.msra.mxu0 %v2551
        %2590 = vmatmul.bf16.gmra.mxu0 %v2567
        %v2591 = vpop.f32.mrf.mxu0
        %v2592 = vadd.f32 0.0, %v2591
        %v2593 = vpop.f32.mrf.mxu0
        %2594 = vdwg.mxu0
        %v2595 = vadd.f32 %v2450, %v2579
        %v2596 = vadd.f32 %v2463, %v2592
        %2597 = vrot.lane.b32.xlu0 %v1765, 64
        %v2598 = vpop.permute.xlu0 %2597
        %2599 = vrot.lane.b32.xlu0 %v1981, 64
        %v2600 = vpop.permute.xlu0 %2599
        %v2601 = vsel %vm2201, %v2598, 0
        %v2603 = vsel %vm2201, %v2600, 0
        %2605 = vmatpush.xpose.msra.mxu0 0.0
        %2606 = vmatpush.xpose.msra.mxu0 0.0
        %2607 = vmatpush.xpose.msra.mxu0 0.0
        %2608 = vmatpush.xpose.msra.mxu0 0.0
        %2609 = vmatpush.xpose.msra.mxu0 0.0
        %2610 = vmatpush.xpose.msra.mxu0 0.0
        %2611 = vmatpush.xpose.msra.mxu0 0.0
        %2612 = vmatpush.xpose.msra.mxu0 0.0
        %2613 = vmatpush.xpose.msra.mxu0 0.0
        %2614 = vmatpush.xpose.msra.mxu0 0.0
        %2615 = vmatpush.xpose.msra.mxu0 0.0
        %2616 = vmatpush.xpose.msra.mxu0 0.0
        %2617 = vmatpush.xpose.msra.mxu0 0.0
        %2618 = vmatpush.xpose.msra.mxu0 0.0
        %2619 = vmatpush.xpose.msra.mxu0 0.0
        %2620 = vmatpush.xpose.msra.mxu0 %v2603
        %2621 = vmatmul.f32.gmra.mxu0 %v2601
        %v2622 = vpop.f32.mrf.mxu0
        %v2623 = vadd.f32 0.0, %v2622
        %2624 = vdwg.mxu0
        %v2625 = vmul.f32 %v2623, 0.125
        %v2626 = vsel %vm2229, %v2625, -inf
        %2627 = vmax.xlane.f32.xlu0 %v2626
        %v2628 = vpop.xlane.xlu0 %2627
        %v2629 = vsub.f32 %v2625, %v2628
        %v2630 = vmul.f32 %v2629, 1.442695
        %v2631 = vpow.pop %v2630
        %v2632 = vsel %vm2229, %v2631, 0.0
        %2633 = vadd.xlane.f32.xlu0 %v2632
        %v2634 = vpop.xlane.xlu0 %2633
        %v2635 = vrcp.pop %v2634
        %v2636 = vmul.f32 %v2631, %v2635
        %v2637 = vpack.c.bf16 %v2636, %v2636
        %2639 = vrot.lane.b32.xlu0 %v2505, 64
        %v2640 = vpop.permute.xlu0 %2639
        %v2642 = vsel %vm2229, %v2637, 0
        %v2645 = vsel %vm2246, %v2640, 0
        %2647 = vmatpush.bf16.msra.mxu0 0
        %2648 = vmatpush.bf16.msra.mxu0 0
        %2649 = vmatpush.bf16.msra.mxu0 0
        %2650 = vmatpush.bf16.msra.mxu0 0
        %2651 = vmatpush.bf16.msra.mxu0 0
        %2652 = vmatpush.bf16.msra.mxu0 0
        %2653 = vmatpush.bf16.msra.mxu0 0
        %2654 = vmatpush.bf16.msra.mxu0 %v2645
        %2655 = vmatmul.bf16.gmra.mxu0 %v2642
        %v2656 = vpop.f32.mrf.mxu0
        %v2657 = vadd.f32 0.0, %v2656
        %v2658 = vpop.f32.mrf.mxu0
        %2659 = vdwg.mxu0
        %v2660 = vpack.c.bf16 %v2657, %v2657
        %v2669 = vunpack.c.l.b16 %v1543
        %v2670 = vunpack.c.h.b16 %v1543
        %v2671 = vunpack.c.l.b16 %v1544
        %v2672 = vunpack.c.h.b16 %v1544
        %v2673 = vunpack.c.l.b16 %v1545
        %v2674 = vunpack.c.h.b16 %v1545
        %v2675 = vunpack.c.l.b16 %v1546
        %v2676 = vunpack.c.h.b16 %v1546
        %v2677 = vunpack.c.l.b16 %v1547
        %v2678 = vunpack.c.h.b16 %v1547
        %v2679 = vunpack.c.l.b16 %v1548
        %v2680 = vunpack.c.h.b16 %v1548
        %v2681 = vunpack.c.l.b16 %v1549
        %v2682 = vunpack.c.h.b16 %v1549
        %v2683 = vunpack.c.l.b16 %v1550
        %v2684 = vunpack.c.h.b16 %v1550
        %v2685 = vpack.c.b16 %v2671, %v2669
        %v2686 = vpack.c.b16 %v2672, %v2670
        %v2687 = vpack.c.b16 %v2675, %v2673
        %v2688 = vpack.c.b16 %v2676, %v2674
        %v2689 = vpack.c.b16 %v2679, %v2677
        %v2690 = vpack.c.b16 %v2680, %v2678
        %v2691 = vpack.c.b16 %v2683, %v2681
        %v2692 = vpack.c.b16 %v2684, %v2682
        %v2702 = vsel %vm2201, %v2660, 0
        %2704 = vmatpush.bf16.msra.mxu0 0
        %2705 = vmatpush.bf16.msra.mxu0 0
        %2706 = vmatpush.bf16.msra.mxu0 0
        %2707 = vmatpush.bf16.msra.mxu0 0
        %2708 = vmatpush.bf16.msra.mxu0 %v2691
        %2709 = vmatpush.bf16.msra.mxu0 %v2689
        %2710 = vmatpush.bf16.msra.mxu0 %v2687
        %2711 = vmatpush.bf16.msra.mxu0 %v2685
        %2712 = vmatmul.bf16.gmra.mxu0 %v2702
        %v2713 = vpop.f32.mrf.mxu0
        %v2714 = vadd.f32 0.0, %v2713
        %v2715 = vpop.f32.mrf.mxu0
        %2716 = vdwg.mxu0
        %2717 = vmatpush.bf16.msra.mxu0 0
        %2718 = vmatpush.bf16.msra.mxu0 0
        %2719 = vmatpush.bf16.msra.mxu0 0
        %2720 = vmatpush.bf16.msra.mxu0 0
        %2721 = vmatpush.bf16.msra.mxu0 %v2692
        %2722 = vmatpush.bf16.msra.mxu0 %v2690
        %2723 = vmatpush.bf16.msra.mxu0 %v2688
        %2724 = vmatpush.bf16.msra.mxu0 %v2686
        %2725 = vmatmul.bf16.gmra.mxu0 %v2702
        %v2726 = vpop.f32.mrf.mxu0
        %v2727 = vadd.f32 0.0, %v2726
        %v2728 = vpop.f32.mrf.mxu0
        %2729 = vdwg.mxu0
        %v2730 = vadd.f32 %v2595, %v2714
        %v2731 = vadd.f32 %v2596, %v2727
        %v2733 = vsel %vm2201, %v1739, 0
        %v2736 = vsel %vm2201, %v1955, 0
        %2738 = vmatpush.xpose.msra.mxu0 0.0
        %2739 = vmatpush.xpose.msra.mxu0 0.0
        %2740 = vmatpush.xpose.msra.mxu0 0.0
        %2741 = vmatpush.xpose.msra.mxu0 0.0
        %2742 = vmatpush.xpose.msra.mxu0 0.0
        %2743 = vmatpush.xpose.msra.mxu0 0.0
        %2744 = vmatpush.xpose.msra.mxu0 0.0
        %2745 = vmatpush.xpose.msra.mxu0 0.0
        %2746 = vmatpush.xpose.msra.mxu0 0.0
        %2747 = vmatpush.xpose.msra.mxu0 0.0
        %2748 = vmatpush.xpose.msra.mxu0 0.0
        %2749 = vmatpush.xpose.msra.mxu0 0.0
        %2750 = vmatpush.xpose.msra.mxu0 0.0
        %2751 = vmatpush.xpose.msra.mxu0 0.0
        %2752 = vmatpush.xpose.msra.mxu0 0.0
        %2753 = vmatpush.xpose.msra.mxu0 %v2736
        %2754 = vmatmul.f32.gmra.mxu0 %v2733
        %v2755 = vpop.f32.mrf.mxu0
        %v2756 = vadd.f32 0.0, %v2755
        %2757 = vdwg.mxu0
        %v2758 = vmul.f32 %v2756, 0.125
        %v2759 = vsel %vm2229, %v2758, -inf
        %2760 = vmax.xlane.f32.xlu0 %v2759
        %v2761 = vpop.xlane.xlu0 %2760
        %v2762 = vsub.f32 %v2758, %v2761
        %v2763 = vmul.f32 %v2762, 1.442695
        %v2764 = vpow.pop %v2763
        %v2765 = vsel %vm2229, %v2764, 0.0
        %2766 = vadd.xlane.f32.xlu0 %v2765
        %v2767 = vpop.xlane.xlu0 %2766
        %v2768 = vrcp.pop %v2767
        %v2769 = vmul.f32 %v2764, %v2768
        %v2770 = vpack.c.bf16 %v2769, %v2769
        %v2771 = vpack.c.bf16 %v2171, %v2171
        %v2773 = vsel %vm2229, %v2770, 0
        %v2776 = vsel %vm2246, %v2771, 0
        %2778 = vmatpush.bf16.msra.mxu0 0
        %2779 = vmatpush.bf16.msra.mxu0 0
        %2780 = vmatpush.bf16.msra.mxu0 0
        %2781 = vmatpush.bf16.msra.mxu0 0
        %2782 = vmatpush.bf16.msra.mxu0 0
        %2783 = vmatpush.bf16.msra.mxu0 0
        %2784 = vmatpush.bf16.msra.mxu0 0
        %2785 = vmatpush.bf16.msra.mxu0 %v2776
        %2786 = vmatmul.bf16.gmra.mxu0 %v2773
        %v2787 = vpop.f32.mrf.mxu0
        %v2788 = vadd.f32 0.0, %v2787
        %v2789 = vpop.f32.mrf.mxu0
        %2790 = vdwg.mxu0
        %v2791 = vpack.c.bf16 %v2788, %v2788
        %2792 = vrot.lane.b32.xlu0 %v1739, 64
        %v2793 = vpop.permute.xlu0 %2792
        %2794 = vrot.lane.b32.xlu0 %v1955, 64
        %v2795 = vpop.permute.xlu0 %2794
        %v2796 = vsel %vm2201, %v2793, 0
        %v2798 = vsel %vm2201, %v2795, 0
        %2800 = vmatpush.xpose.msra.mxu0 0.0
        %2801 = vmatpush.xpose.msra.mxu0 0.0
        %2802 = vmatpush.xpose.msra.mxu0 0.0
        %2803 = vmatpush.xpose.msra.mxu0 0.0
        %2804 = vmatpush.xpose.msra.mxu0 0.0
        %2805 = vmatpush.xpose.msra.mxu0 0.0
        %2806 = vmatpush.xpose.msra.mxu0 0.0
        %2807 = vmatpush.xpose.msra.mxu0 0.0
        %2808 = vmatpush.xpose.msra.mxu0 0.0
        %2809 = vmatpush.xpose.msra.mxu0 0.0
        %2810 = vmatpush.xpose.msra.mxu0 0.0
        %2811 = vmatpush.xpose.msra.mxu0 0.0
        %2812 = vmatpush.xpose.msra.mxu0 0.0
        %2813 = vmatpush.xpose.msra.mxu0 0.0
        %2814 = vmatpush.xpose.msra.mxu0 0.0
        %2815 = vmatpush.xpose.msra.mxu0 %v2798
        %2816 = vmatmul.f32.gmra.mxu0 %v2796
        %v2817 = vpop.f32.mrf.mxu0
        %v2818 = vadd.f32 0.0, %v2817
        %2819 = vdwg.mxu0
        %v2820 = vmul.f32 %v2818, 0.125
        %v2821 = vsel %vm2229, %v2820, -inf
        %2822 = vmax.xlane.f32.xlu0 %v2821
        %v2823 = vpop.xlane.xlu0 %2822
        %v2824 = vsub.f32 %v2820, %v2823
        %v2825 = vmul.f32 %v2824, 1.442695
        %v2826 = vpow.pop %v2825
        %v2827 = vsel %vm2229, %v2826, 0.0
        %2828 = vadd.xlane.f32.xlu0 %v2827
        %v2829 = vpop.xlane.xlu0 %2828
        %v2830 = vrcp.pop %v2829
        %v2831 = vmul.f32 %v2826, %v2830
        %v2832 = vpack.c.bf16 %v2831, %v2831
        %2834 = vrot.lane.b32.xlu0 %v2771, 64
        %v2835 = vpop.permute.xlu0 %2834
        %v2837 = vsel %vm2229, %v2832, 0
        %v2840 = vsel %vm2246, %v2835, 0
        %2842 = vmatpush.bf16.msra.mxu0 0
        %2843 = vmatpush.bf16.msra.mxu0 0
        %2844 = vmatpush.bf16.msra.mxu0 0
        %2845 = vmatpush.bf16.msra.mxu0 0
        %2846 = vmatpush.bf16.msra.mxu0 0
        %2847 = vmatpush.bf16.msra.mxu0 0
        %2848 = vmatpush.bf16.msra.mxu0 0
        %2849 = vmatpush.bf16.msra.mxu0 %v2840
        %2850 = vmatmul.bf16.gmra.mxu0 %v2837
        %v2851 = vpop.f32.mrf.mxu0
        %v2852 = vadd.f32 0.0, %v2851
        %v2853 = vpop.f32.mrf.mxu0
        %2854 = vdwg.mxu0
        %v2855 = vpack.c.bf16 %v2852, %v2852
        %v2857 = vsel %vm2201, %v2855, 0
        %2859 = vmatpush.bf16.msra.mxu0 0
        %2860 = vmatpush.bf16.msra.mxu0 0
        %2861 = vmatpush.bf16.msra.mxu0 0
        %2862 = vmatpush.bf16.msra.mxu0 0
        %2863 = vmatpush.bf16.msra.mxu0 %v2358
        %2864 = vmatpush.bf16.msra.mxu0 %v2356
        %2865 = vmatpush.bf16.msra.mxu0 %v2354
        %2866 = vmatpush.bf16.msra.mxu0 %v2352
        %2867 = vmatmul.bf16.gmra.mxu0 %v2857
        %v2868 = vpop.f32.mrf.mxu0
        %v2869 = vadd.f32 0.0, %v2868
        %v2870 = vpop.f32.mrf.mxu0
        %2871 = vdwg.mxu0
        %2872 = vmatpush.bf16.msra.mxu0 0
        %2873 = vmatpush.bf16.msra.mxu0 0
        %2874 = vmatpush.bf16.msra.mxu0 0
        %2875 = vmatpush.bf16.msra.mxu0 0
        %2876 = vmatpush.bf16.msra.mxu0 %v2359
        %2877 = vmatpush.bf16.msra.mxu0 %v2357
        %2878 = vmatpush.bf16.msra.mxu0 %v2355
        %2879 = vmatpush.bf16.msra.mxu0 %v2353
        %2880 = vmatmul.bf16.gmra.mxu0 %v2857
        %v2881 = vpop.f32.mrf.mxu0
        %v2882 = vadd.f32 0.0, %v2881
        %v2883 = vpop.f32.mrf.mxu0
        %2884 = vdwg.mxu0
        %v2886 = vsel %vm2201, %v2791, 0
        %2888 = vmatpush.bf16.msra.mxu0 0
        %2889 = vmatpush.bf16.msra.mxu0 0
        %2890 = vmatpush.bf16.msra.mxu0 0
        %2891 = vmatpush.bf16.msra.mxu0 0
        %2892 = vmatpush.bf16.msra.mxu0 %v2427
        %2893 = vmatpush.bf16.msra.mxu0 %v2425
        %2894 = vmatpush.bf16.msra.mxu0 %v2423
        %2895 = vmatpush.bf16.msra.mxu0 %v2421
        %2896 = vmatmul.bf16.gmra.mxu0 %v2886
        %v2897 = vpop.f32.mrf.mxu0
        %v2898 = vadd.f32 %v2869, %v2897
        %v2899 = vpop.f32.mrf.mxu0
        %2900 = vdwg.mxu0
        %2901 = vmatpush.bf16.msra.mxu0 0
        %2902 = vmatpush.bf16.msra.mxu0 0
        %2903 = vmatpush.bf16.msra.mxu0 0
        %2904 = vmatpush.bf16.msra.mxu0 0
        %2905 = vmatpush.bf16.msra.mxu0 %v2428
        %2906 = vmatpush.bf16.msra.mxu0 %v2426
        %2907 = vmatpush.bf16.msra.mxu0 %v2424
        %2908 = vmatpush.bf16.msra.mxu0 %v2422
        %2909 = vmatmul.bf16.gmra.mxu0 %v2886
        %v2910 = vpop.f32.mrf.mxu0
        %v2911 = vadd.f32 %v2882, %v2910
        %v2912 = vpop.f32.mrf.mxu0
        %2913 = vdwg.mxu0
        %v2915 = vsel %vm2201, %v1767, 0
        %v2918 = vsel %vm2201, %v1983, 0
        %2920 = vmatpush.xpose.msra.mxu0 0.0
        %2921 = vmatpush.xpose.msra.mxu0 0.0
        %2922 = vmatpush.xpose.msra.mxu0 0.0
        %2923 = vmatpush.xpose.msra.mxu0 0.0
        %2924 = vmatpush.xpose.msra.mxu0 0.0
        %2925 = vmatpush.xpose.msra.mxu0 0.0
        %2926 = vmatpush.xpose.msra.mxu0 0.0
        %2927 = vmatpush.xpose.msra.mxu0 0.0
        %2928 = vmatpush.xpose.msra.mxu0 0.0
        %2929 = vmatpush.xpose.msra.mxu0 0.0
        %2930 = vmatpush.xpose.msra.mxu0 0.0
        %2931 = vmatpush.xpose.msra.mxu0 0.0
        %2932 = vmatpush.xpose.msra.mxu0 0.0
        %2933 = vmatpush.xpose.msra.mxu0 0.0
        %2934 = vmatpush.xpose.msra.mxu0 0.0
        %2935 = vmatpush.xpose.msra.mxu0 %v2918
        %2936 = vmatmul.f32.gmra.mxu0 %v2915
        %v2937 = vpop.f32.mrf.mxu0
        %v2938 = vadd.f32 0.0, %v2937
        %2939 = vdwg.mxu0
        %v2940 = vmul.f32 %v2938, 0.125
        %v2941 = vsel %vm2229, %v2940, -inf
        %2942 = vmax.xlane.f32.xlu0 %v2941
        %v2943 = vpop.xlane.xlu0 %2942
        %v2944 = vsub.f32 %v2940, %v2943
        %v2945 = vmul.f32 %v2944, 1.442695
        %v2946 = vpow.pop %v2945
        %v2947 = vsel %vm2229, %v2946, 0.0
        %2948 = vadd.xlane.f32.xlu0 %v2947
        %v2949 = vpop.xlane.xlu0 %2948
        %v2950 = vrcp.pop %v2949
        %v2951 = vmul.f32 %v2946, %v2950
        %v2952 = vpack.c.bf16 %v2951, %v2951
        %v2953 = vpack.c.bf16 %v2199, %v2199
        %v2955 = vsel %vm2229, %v2952, 0
        %v2958 = vsel %vm2246, %v2953, 0
        %2960 = vmatpush.bf16.msra.mxu0 0
        %2961 = vmatpush.bf16.msra.mxu0 0
        %2962 = vmatpush.bf16.msra.mxu0 0
        %2963 = vmatpush.bf16.msra.mxu0 0
        %2964 = vmatpush.bf16.msra.mxu0 0
        %2965 = vmatpush.bf16.msra.mxu0 0
        %2966 = vmatpush.bf16.msra.mxu0 0
        %2967 = vmatpush.bf16.msra.mxu0 %v2958
        %2968 = vmatmul.bf16.gmra.mxu0 %v2955
        %v2969 = vpop.f32.mrf.mxu0
        %v2970 = vadd.f32 0.0, %v2969
        %v2971 = vpop.f32.mrf.mxu0
        %2972 = vdwg.mxu0
        %v2973 = vpack.c.bf16 %v2970, %v2970
        %v2975 = vsel %vm2201, %v2973, 0
        %2977 = vmatpush.bf16.msra.mxu0 0
        %2978 = vmatpush.bf16.msra.mxu0 0
        %2979 = vmatpush.bf16.msra.mxu0 0
        %2980 = vmatpush.bf16.msra.mxu0 0
        %2981 = vmatpush.bf16.msra.mxu0 %v2556
        %2982 = vmatpush.bf16.msra.mxu0 %v2554
        %2983 = vmatpush.bf16.msra.mxu0 %v2552
        %2984 = vmatpush.bf16.msra.mxu0 %v2550
        %2985 = vmatmul.bf16.gmra.mxu0 %v2975
        %v2986 = vpop.f32.mrf.mxu0
        %v2987 = vadd.f32 0.0, %v2986
        %v2988 = vpop.f32.mrf.mxu0
        %2989 = vdwg.mxu0
        %2990 = vmatpush.bf16.msra.mxu0 0
        %2991 = vmatpush.bf16.msra.mxu0 0
        %2992 = vmatpush.bf16.msra.mxu0 0
        %2993 = vmatpush.bf16.msra.mxu0 0
        %2994 = vmatpush.bf16.msra.mxu0 %v2557
        %2995 = vmatpush.bf16.msra.mxu0 %v2555
        %2996 = vmatpush.bf16.msra.mxu0 %v2553
        %2997 = vmatpush.bf16.msra.mxu0 %v2551
        %2998 = vmatmul.bf16.gmra.mxu0 %v2975
        %v2999 = vpop.f32.mrf.mxu0
        %v3000 = vadd.f32 0.0, %v2999
        %v3001 = vpop.f32.mrf.mxu0
        %3002 = vdwg.mxu0
        %v3003 = vadd.f32 %v2898, %v2987
        %v3004 = vadd.f32 %v2911, %v3000
        %3005 = vrot.lane.b32.xlu0 %v1767, 64
        %v3006 = vpop.permute.xlu0 %3005
        %3007 = vrot.lane.b32.xlu0 %v1983, 64
        %v3008 = vpop.permute.xlu0 %3007
        %v3009 = vsel %vm2201, %v3006, 0
        %v3011 = vsel %vm2201, %v3008, 0
        %3013 = vmatpush.xpose.msra.mxu0 0.0
        %3014 = vmatpush.xpose.msra.mxu0 0.0
        %3015 = vmatpush.xpose.msra.mxu0 0.0
        %3016 = vmatpush.xpose.msra.mxu0 0.0
        %3017 = vmatpush.xpose.msra.mxu0 0.0
        %3018 = vmatpush.xpose.msra.mxu0 0.0
        %3019 = vmatpush.xpose.msra.mxu0 0.0
        %3020 = vmatpush.xpose.msra.mxu0 0.0
        %3021 = vmatpush.xpose.msra.mxu0 0.0
        %3022 = vmatpush.xpose.msra.mxu0 0.0
        %3023 = vmatpush.xpose.msra.mxu0 0.0
        %3024 = vmatpush.xpose.msra.mxu0 0.0
        %3025 = vmatpush.xpose.msra.mxu0 0.0
        %3026 = vmatpush.xpose.msra.mxu0 0.0
        %3027 = vmatpush.xpose.msra.mxu0 0.0
        %3028 = vmatpush.xpose.msra.mxu0 %v3011
        %3029 = vmatmul.f32.gmra.mxu0 %v3009
        %v3030 = vpop.f32.mrf.mxu0
        %v3031 = vadd.f32 0.0, %v3030
        %3032 = vdwg.mxu0
        %v3033 = vmul.f32 %v3031, 0.125
        %v3034 = vsel %vm2229, %v3033, -inf
        %3035 = vmax.xlane.f32.xlu0 %v3034
        %v3036 = vpop.xlane.xlu0 %3035
        %v3037 = vsub.f32 %v3033, %v3036
        %v3038 = vmul.f32 %v3037, 1.442695
        %v3039 = vpow.pop %v3038
        %v3040 = vsel %vm2229, %v3039, 0.0
        %3041 = vadd.xlane.f32.xlu0 %v3040
        %v3042 = vpop.xlane.xlu0 %3041
        %v3043 = vrcp.pop %v3042
        %v3044 = vmul.f32 %v3039, %v3043
        %v3045 = vpack.c.bf16 %v3044, %v3044
        %3047 = vrot.lane.b32.xlu0 %v2953, 64
        %v3048 = vpop.permute.xlu0 %3047
        %v3050 = vsel %vm2229, %v3045, 0
        %v3053 = vsel %vm2246, %v3048, 0
        %3055 = vmatpush.bf16.msra.mxu0 0
        %3056 = vmatpush.bf16.msra.mxu0 0
        %3057 = vmatpush.bf16.msra.mxu0 0
        %3058 = vmatpush.bf16.msra.mxu0 0
        %3059 = vmatpush.bf16.msra.mxu0 0
        %3060 = vmatpush.bf16.msra.mxu0 0
        %3061 = vmatpush.bf16.msra.mxu0 0
        %3062 = vmatpush.bf16.msra.mxu0 %v3053
        %3063 = vmatmul.bf16.gmra.mxu0 %v3050
        %v3064 = vpop.f32.mrf.mxu0
        %v3065 = vadd.f32 0.0, %v3064
        %v3066 = vpop.f32.mrf.mxu0
        %3067 = vdwg.mxu0
        %v3068 = vpack.c.bf16 %v3065, %v3065
        %v3070 = vsel %vm2201, %v3068, 0
        %3072 = vmatpush.bf16.msra.mxu0 0
        %3073 = vmatpush.bf16.msra.mxu0 0
        %3074 = vmatpush.bf16.msra.mxu0 0
        %3075 = vmatpush.bf16.msra.mxu0 0
        %3076 = vmatpush.bf16.msra.mxu0 %v2691
        %3077 = vmatpush.bf16.msra.mxu0 %v2689
        %3078 = vmatpush.bf16.msra.mxu0 %v2687
        %3079 = vmatpush.bf16.msra.mxu0 %v2685
        %3080 = vmatmul.bf16.gmra.mxu0 %v3070
        %v3081 = vpop.f32.mrf.mxu0
        %v3082 = vadd.f32 0.0, %v3081
        %v3083 = vpop.f32.mrf.mxu0
        %3084 = vdwg.mxu0
        %3085 = vmatpush.bf16.msra.mxu0 0
        %3086 = vmatpush.bf16.msra.mxu0 0
        %3087 = vmatpush.bf16.msra.mxu0 0
        %3088 = vmatpush.bf16.msra.mxu0 0
        %3089 = vmatpush.bf16.msra.mxu0 %v2692
        %3090 = vmatpush.bf16.msra.mxu0 %v2690
        %3091 = vmatpush.bf16.msra.mxu0 %v2688
        %3092 = vmatpush.bf16.msra.mxu0 %v2686
        %3093 = vmatmul.bf16.gmra.mxu0 %v3070
        %v3094 = vpop.f32.mrf.mxu0
        %v3095 = vadd.f32 0.0, %v3094
        %v3096 = vpop.f32.mrf.mxu0
        %3097 = vdwg.mxu0
        %v3098 = vadd.f32 %v3003, %v3082
        %v3099 = vadd.f32 %v3004, %v3095
        %v3100 = vld [vmem:[%s1075] sm:$0x3]
        %v3101 = vld [vmem:[%s1085] sm:$0x3]
        %v3102 = vadd.f32 %v2730, %v2731
        %3103 = vadd.xlane.f32.xlu0 %v3102
        %v3104 = vpop.xlane.xlu0 %3103
        %v3105 = vadd.f32 %v3098, %v3099
        %3106 = vadd.xlane.f32.xlu0 %v3105
        %v3107 = vpop.xlane.xlu0 %3106
        %v3108 = vrcp.pop 256.0
        %v3109 = vmul.f32 256.0, %v3108
        %v3110 = vsub.f32 1.0, %v3109
        %v3111 = vmul.f32 %v3108, %v3110
        %v3112 = vadd.f32 %v3108, %v3111
        %vm3113 = vweird.f32 %v3108
        %v3114 = vsel %vm3113, %v3108, %v3112
        %v3115 = vmul.f32 %v3104, %v3114
        %v3116 = vmul.f32 %v3107, %v3114
        %v3117 = vsub.f32 %v2730, %v3115
        %v3118 = vsub.f32 %v2731, %v3115
        %v3119 = vsub.f32 %v3098, %v3116
        %v3120 = vsub.f32 %v3099, %v3116
        %v3121 = vmul.f32 %v3117, %v3117
        %v3122 = vmul.f32 %v3118, %v3118
        %v3123 = vmul.f32 %v3119, %v3119
        %v3124 = vmul.f32 %v3120, %v3120
        %v3125 = vadd.f32 %v3121, %v3122
        %3126 = vadd.xlane.f32.xlu0 %v3125
        %v3127 = vpop.xlane.xlu0 %3126
        %v3128 = vadd.f32 %v3123, %v3124
        %3129 = vadd.xlane.f32.xlu0 %v3128
        %v3130 = vpop.xlane.xlu0 %3129
        %v3131 = vmul.f32 %v3127, %v3114
        %v3132 = vmul.f32 %v3130, %v3114
        %v3133 = vadd.f32 %v3131, 1e-05
        %v3134 = vadd.f32 %v3132, 1e-05
        %v3135 = vrsqrt.pop %v3133
        %v3136 = vmul.f32 %v3135, %v3133
        %v3137 = vmul.f32 %v3136, %v3135
        %v3138 = vmul.f32 0.5, %v3137
        %v3139 = vsub.f32 1.5, %v3138
        %v3140 = vmul.f32 %v3135, %v3139
        %vm3141 = vweird.f32 %v3133
        %vm3142 = vweird.f32 %v3135
        %vm3143 = vmor %vm3141, %vm3142
        %v3144 = vsel %vm3143, %v3135, %v3140
        %v3145 = vrsqrt.pop %v3134
        %v3146 = vmul.f32 %v3145, %v3134
        %v3147 = vmul.f32 %v3146, %v3145
        %v3148 = vmul.f32 0.5, %v3147
        %v3149 = vsub.f32 1.5, %v3148
        %v3150 = vmul.f32 %v3145, %v3149
        %vm3151 = vweird.f32 %v3134
        %vm3152 = vweird.f32 %v3145
        %vm3153 = vmor %vm3151, %vm3152
        %v3154 = vsel %vm3153, %v3145, %v3150
        %v3155 = vmul.f32 %v3117, %v3144
        %v3156 = vmul.f32 %v3118, %v3144
        %v3157 = vmul.f32 %v3119, %v3154
        %v3158 = vmul.f32 %v3120, %v3154
        %v3160 = vperm.slane %v3100, 0
        %v3161 = vperm.slane %v3100, 1
        %v3164 = vmul.f32 %v3155, %v3160
        %v3165 = vmul.f32 %v3156, %v3161
        %v3166 = vmul.f32 %v3157, %v3160
        %v3167 = vmul.f32 %v3158, %v3161
        %v3169 = vperm.slane %v3101, 0
        %v3170 = vperm.slane %v3101, 1
        %v3173 = vadd.f32 %v3164, %v3169
        %v3174 = vadd.f32 %v3165, %v3170
        %v3175 = vadd.f32 %v3166, %v3169
        %v3176 = vadd.f32 %v3167, %v3170
        %v3177 = vadd.f32 %v1415, %v3173
        %v3178 = vadd.f32 %v1416, %v3174
        %v3179 = vadd.f32 %v1417, %v3175
        %v3180 = vadd.f32 %v1418, %v3176
        %v3181 = vld [vmem:[%s1095] sm:$0xff]
        %v3182 = vld [vmem:[%s1095 + $0x8] sm:$0xff]
        %v3183 = vld [vmem:[%s1095 + $0x10] sm:$0xff]
        %v3184 = vld [vmem:[%s1095 + $0x18] sm:$0xff]
        %v3185 = vld [vmem:[%s1095 + $0x20] sm:$0xff]
        %v3186 = vld [vmem:[%s1095 + $0x28] sm:$0xff]
        %v3187 = vld [vmem:[%s1095 + $0x30] sm:$0xff]
        %v3188 = vld [vmem:[%s1095 + $0x38] sm:$0xff]
        %v3189 = vld [vmem:[%s1095 + $0x40] sm:$0xff]
        %v3190 = vld [vmem:[%s1095 + $0x48] sm:$0xff]
        %v3191 = vld [vmem:[%s1095 + $0x50] sm:$0xff]
        %v3192 = vld [vmem:[%s1095 + $0x58] sm:$0xff]
        %v3193 = vld [vmem:[%s1095 + $0x60] sm:$0xff]
        %v3194 = vld [vmem:[%s1095 + $0x68] sm:$0xff]
        %v3195 = vld [vmem:[%s1095 + $0x70] sm:$0xff]
        %v3196 = vld [vmem:[%s1095 + $0x78] sm:$0xff]
        %v3197 = vld [vmem:[%s1095 + $0x80] sm:$0xff]
        %v3198 = vld [vmem:[%s1095 + $0x88] sm:$0xff]
        %v3199 = vld [vmem:[%s1095 + $0x90] sm:$0xff]
        %v3200 = vld [vmem:[%s1095 + $0x98] sm:$0xff]
        %v3201 = vld [vmem:[%s1095 + $0xa0] sm:$0xff]
        %v3202 = vld [vmem:[%s1095 + $0xa8] sm:$0xff]
        %v3203 = vld [vmem:[%s1095 + $0xb0] sm:$0xff]
        %v3204 = vld [vmem:[%s1095 + $0xb8] sm:$0xff]
        %v3205 = vld [vmem:[%s1095 + $0xc0] sm:$0xff]
        %v3206 = vld [vmem:[%s1095 + $0xc8] sm:$0xff]
        %v3207 = vld [vmem:[%s1095 + $0xd0] sm:$0xff]
        %v3208 = vld [vmem:[%s1095 + $0xd8] sm:$0xff]
        %v3209 = vld [vmem:[%s1095 + $0xe0] sm:$0xff]
        %v3210 = vld [vmem:[%s1095 + $0xe8] sm:$0xff]
        %v3211 = vld [vmem:[%s1095 + $0xf0] sm:$0xff]
        %v3212 = vld [vmem:[%s1095 + $0xf8] sm:$0xff]
        %v3213 = vld [vmem:[%s1105] sm:$0xff]
        %v3214 = vld [vmem:[%s1105 + $0x8] sm:$0xff]
        %v3215 = vld [vmem:[%s1105 + $0x10] sm:$0xff]
        %v3216 = vld [vmem:[%s1105 + $0x18] sm:$0xff]
        %v3217 = vld [vmem:[%s1105 + $0x20] sm:$0xff]
        %v3218 = vld [vmem:[%s1105 + $0x28] sm:$0xff]
        %v3219 = vld [vmem:[%s1105 + $0x30] sm:$0xff]
        %v3220 = vld [vmem:[%s1105 + $0x38] sm:$0xff]
        %v3221 = vld [vmem:[%s1105 + $0x40] sm:$0xff]
        %v3222 = vld [vmem:[%s1105 + $0x48] sm:$0xff]
        %v3223 = vld [vmem:[%s1105 + $0x50] sm:$0xff]
        %v3224 = vld [vmem:[%s1105 + $0x58] sm:$0xff]
        %v3225 = vld [vmem:[%s1105 + $0x60] sm:$0xff]
        %v3226 = vld [vmem:[%s1105 + $0x68] sm:$0xff]
        %v3227 = vld [vmem:[%s1105 + $0x70] sm:$0xff]
        %v3228 = vld [vmem:[%s1105 + $0x78] sm:$0xff]
        %v3229 = vld [vmem:[%s1105 + $0x80] sm:$0xff]
        %v3230 = vld [vmem:[%s1105 + $0x88] sm:$0xff]
        %v3231 = vld [vmem:[%s1105 + $0x90] sm:$0xff]
        %v3232 = vld [vmem:[%s1105 + $0x98] sm:$0xff]
        %v3233 = vld [vmem:[%s1105 + $0xa0] sm:$0xff]
        %v3234 = vld [vmem:[%s1105 + $0xa8] sm:$0xff]
        %v3235 = vld [vmem:[%s1105 + $0xb0] sm:$0xff]
        %v3236 = vld [vmem:[%s1105 + $0xb8] sm:$0xff]
        %v3237 = vld [vmem:[%s1105 + $0xc0] sm:$0xff]
        %v3238 = vld [vmem:[%s1105 + $0xc8] sm:$0xff]
        %v3239 = vld [vmem:[%s1105 + $0xd0] sm:$0xff]
        %v3240 = vld [vmem:[%s1105 + $0xd8] sm:$0xff]
        %v3241 = vld [vmem:[%s1105 + $0xe0] sm:$0xff]
        %v3242 = vld [vmem:[%s1105 + $0xe8] sm:$0xff]
        %v3243 = vld [vmem:[%s1105 + $0xf0] sm:$0xff]
        %v3244 = vld [vmem:[%s1105 + $0xf8] sm:$0xff]
        %v3245 = vld [vmem:[%s1115] sm:$0xff]
        %v3246 = vld [vmem:[%s1115 + $0x8] sm:$0xff]
        %v3247 = vld [vmem:[%s1115 + $0x10] sm:$0xff]
        %v3248 = vld [vmem:[%s1115 + $0x18] sm:$0xff]
        %v3249 = vld [vmem:[%s1115 + $0x20] sm:$0xff]
        %v3250 = vld [vmem:[%s1115 + $0x28] sm:$0xff]
        %v3251 = vld [vmem:[%s1115 + $0x30] sm:$0xff]
        %v3252 = vld [vmem:[%s1115 + $0x38] sm:$0xff]
        %v3253 = vld [vmem:[%s1115 + $0x40] sm:$0xff]
        %v3254 = vld [vmem:[%s1115 + $0x48] sm:$0xff]
        %v3255 = vld [vmem:[%s1115 + $0x50] sm:$0xff]
        %v3256 = vld [vmem:[%s1115 + $0x58] sm:$0xff]
        %v3257 = vld [vmem:[%s1115 + $0x60] sm:$0xff]
        %v3258 = vld [vmem:[%s1115 + $0x68] sm:$0xff]
        %v3259 = vld [vmem:[%s1115 + $0x70] sm:$0xff]
        %v3260 = vld [vmem:[%s1115 + $0x78] sm:$0xff]
        %v3261 = vld [vmem:[%s1115 + $0x80] sm:$0xff]
        %v3262 = vld [vmem:[%s1115 + $0x88] sm:$0xff]
        %v3263 = vld [vmem:[%s1115 + $0x90] sm:$0xff]
        %v3264 = vld [vmem:[%s1115 + $0x98] sm:$0xff]
        %v3265 = vld [vmem:[%s1115 + $0xa0] sm:$0xff]
        %v3266 = vld [vmem:[%s1115 + $0xa8] sm:$0xff]
        %v3267 = vld [vmem:[%s1115 + $0xb0] sm:$0xff]
        %v3268 = vld [vmem:[%s1115 + $0xb8] sm:$0xff]
        %v3269 = vld [vmem:[%s1115 + $0xc0] sm:$0xff]
        %v3270 = vld [vmem:[%s1115 + $0xc8] sm:$0xff]
        %v3271 = vld [vmem:[%s1115 + $0xd0] sm:$0xff]
        %v3272 = vld [vmem:[%s1115 + $0xd8] sm:$0xff]
        %v3273 = vld [vmem:[%s1115 + $0xe0] sm:$0xff]
        %v3274 = vld [vmem:[%s1115 + $0xe8] sm:$0xff]
        %v3275 = vld [vmem:[%s1115 + $0xf0] sm:$0xff]
        %v3276 = vld [vmem:[%s1115 + $0xf8] sm:$0xff]
        %v3277 = vld [vmem:[%s1125] sm:$0xff]
        %v3278 = vld [vmem:[%s1125 + $0x8] sm:$0xff]
        %v3279 = vld [vmem:[%s1125 + $0x10] sm:$0xff]
        %v3280 = vld [vmem:[%s1125 + $0x18] sm:$0xff]
        %v3281 = vld [vmem:[%s1125 + $0x20] sm:$0xff]
        %v3282 = vld [vmem:[%s1125 + $0x28] sm:$0xff]
        %v3283 = vld [vmem:[%s1125 + $0x30] sm:$0xff]
        %v3284 = vld [vmem:[%s1125 + $0x38] sm:$0xff]
        %v3285 = vld [vmem:[%s1125 + $0x40] sm:$0xff]
        %v3286 = vld [vmem:[%s1125 + $0x48] sm:$0xff]
        %v3287 = vld [vmem:[%s1125 + $0x50] sm:$0xff]
        %v3288 = vld [vmem:[%s1125 + $0x58] sm:$0xff]
        %v3289 = vld [vmem:[%s1125 + $0x60] sm:$0xff]
        %v3290 = vld [vmem:[%s1125 + $0x68] sm:$0xff]
        %v3291 = vld [vmem:[%s1125 + $0x70] sm:$0xff]
        %v3292 = vld [vmem:[%s1125 + $0x78] sm:$0xff]
        %v3293 = vld [vmem:[%s1125 + $0x80] sm:$0xff]
        %v3294 = vld [vmem:[%s1125 + $0x88] sm:$0xff]
        %v3295 = vld [vmem:[%s1125 + $0x90] sm:$0xff]
        %v3296 = vld [vmem:[%s1125 + $0x98] sm:$0xff]
        %v3297 = vld [vmem:[%s1125 + $0xa0] sm:$0xff]
        %v3298 = vld [vmem:[%s1125 + $0xa8] sm:$0xff]
        %v3299 = vld [vmem:[%s1125 + $0xb0] sm:$0xff]
        %v3300 = vld [vmem:[%s1125 + $0xb8] sm:$0xff]
        %v3301 = vld [vmem:[%s1125 + $0xc0] sm:$0xff]
        %v3302 = vld [vmem:[%s1125 + $0xc8] sm:$0xff]
        %v3303 = vld [vmem:[%s1125 + $0xd0] sm:$0xff]
        %v3304 = vld [vmem:[%s1125 + $0xd8] sm:$0xff]
        %v3305 = vld [vmem:[%s1125 + $0xe0] sm:$0xff]
        %v3306 = vld [vmem:[%s1125 + $0xe8] sm:$0xff]
        %v3307 = vld [vmem:[%s1125 + $0xf0] sm:$0xff]
        %v3308 = vld [vmem:[%s1125 + $0xf8] sm:$0xff]
        %v3309 = vpack.c.bf16 %v3179, %v3177
        %v3310 = vpack.c.bf16 %v3180, %v3178
        %v3343 = vunpack.c.l.b16 %v3181
        %v3344 = vunpack.c.h.b16 %v3181
        %v3345 = vunpack.c.l.b16 %v3182
        %v3346 = vunpack.c.h.b16 %v3182
        %v3347 = vunpack.c.l.b16 %v3183
        %v3348 = vunpack.c.h.b16 %v3183
        %v3349 = vunpack.c.l.b16 %v3184
        %v3350 = vunpack.c.h.b16 %v3184
        %v3351 = vunpack.c.l.b16 %v3185
        %v3352 = vunpack.c.h.b16 %v3185
        %v3353 = vunpack.c.l.b16 %v3186
        %v3354 = vunpack.c.h.b16 %v3186
        %v3355 = vunpack.c.l.b16 %v3187
        %v3356 = vunpack.c.h.b16 %v3187
        %v3357 = vunpack.c.l.b16 %v3188
        %v3358 = vunpack.c.h.b16 %v3188
        %v3359 = vunpack.c.l.b16 %v3189
        %v3360 = vunpack.c.h.b16 %v3189
        %v3361 = vunpack.c.l.b16 %v3190
        %v3362 = vunpack.c.h.b16 %v3190
        %v3363 = vunpack.c.l.b16 %v3191
        %v3364 = vunpack.c.h.b16 %v3191
        %v3365 = vunpack.c.l.b16 %v3192
        %v3366 = vunpack.c.h.b16 %v3192
        %v3367 = vunpack.c.l.b16 %v3193
        %v3368 = vunpack.c.h.b16 %v3193
        %v3369 = vunpack.c.l.b16 %v3194
        %v3370 = vunpack.c.h.b16 %v3194
        %v3371 = vunpack.c.l.b16 %v3195
        %v3372 = vunpack.c.h.b16 %v3195
        %v3373 = vunpack.c.l.b16 %v3196
        %v3374 = vunpack.c.h.b16 %v3196
        %v3375 = vunpack.c.l.b16 %v3197
        %v3376 = vunpack.c.h.b16 %v3197
        %v3377 = vunpack.c.l.b16 %v3198
        %v3378 = vunpack.c.h.b16 %v3198
        %v3379 = vunpack.c.l.b16 %v3199
        %v3380 = vunpack.c.h.b16 %v3199
        %v3381 = vunpack.c.l.b16 %v3200
        %v3382 = vunpack.c.h.b16 %v3200
        %v3383 = vunpack.c.l.b16 %v3201
        %v3384 = vunpack.c.h.b16 %v3201
        %v3385 = vunpack.c.l.b16 %v3202
        %v3386 = vunpack.c.h.b16 %v3202
        %v3387 = vunpack.c.l.b16 %v3203
        %v3388 = vunpack.c.h.b16 %v3203
        %v3389 = vunpack.c.l.b16 %v3204
        %v3390 = vunpack.c.h.b16 %v3204
        %v3391 = vunpack.c.l.b16 %v3205
        %v3392 = vunpack.c.h.b16 %v3205
        %v3393 = vunpack.c.l.b16 %v3206
        %v3394 = vunpack.c.h.b16 %v3206
        %v3395 = vunpack.c.l.b16 %v3207
        %v3396 = vunpack.c.h.b16 %v3207
        %v3397 = vunpack.c.l.b16 %v3208
        %v3398 = vunpack.c.h.b16 %v3208
        %v3399 = vunpack.c.l.b16 %v3209
        %v3400 = vunpack.c.h.b16 %v3209
        %v3401 = vunpack.c.l.b16 %v3210
        %v3402 = vunpack.c.h.b16 %v3210
        %v3403 = vunpack.c.l.b16 %v3211
        %v3404 = vunpack.c.h.b16 %v3211
        %v3405 = vunpack.c.l.b16 %v3212
        %v3406 = vunpack.c.h.b16 %v3212
        %v3407 = vpack.c.b16 %v3345, %v3343
        %v3408 = vpack.c.b16 %v3346, %v3344
        %v3409 = vpack.c.b16 %v3349, %v3347
        %v3410 = vpack.c.b16 %v3350, %v3348
        %v3411 = vpack.c.b16 %v3353, %v3351
        %v3412 = vpack.c.b16 %v3354, %v3352
        %v3413 = vpack.c.b16 %v3357, %v3355
        %v3414 = vpack.c.b16 %v3358, %v3356
        %v3415 = vpack.c.b16 %v3361, %v3359
        %v3416 = vpack.c.b16 %v3362, %v3360
        %v3417 = vpack.c.b16 %v3365, %v3363
        %v3418 = vpack.c.b16 %v3366, %v3364
        %v3419 = vpack.c.b16 %v3369, %v3367
        %v3420 = vpack.c.b16 %v3370, %v3368
        %v3421 = vpack.c.b16 %v3373, %v3371
        %v3422 = vpack.c.b16 %v3374, %v3372
        %v3423 = vpack.c.b16 %v3377, %v3375
        %v3424 = vpack.c.b16 %v3378, %v3376
        %v3425 = vpack.c.b16 %v3381, %v3379
        %v3426 = vpack.c.b16 %v3382, %v3380
        %v3427 = vpack.c.b16 %v3385, %v3383
        %v3428 = vpack.c.b16 %v3386, %v3384
        %v3429 = vpack.c.b16 %v3389, %v3387
        %v3430 = vpack.c.b16 %v3390, %v3388
        %v3431 = vpack.c.b16 %v3393, %v3391
        %v3432 = vpack.c.b16 %v3394, %v3392
        %v3433 = vpack.c.b16 %v3397, %v3395
        %v3434 = vpack.c.b16 %v3398, %v3396
        %v3435 = vpack.c.b16 %v3401, %v3399
        %v3436 = vpack.c.b16 %v3402, %v3400
        %v3437 = vpack.c.b16 %v3405, %v3403
        %v3438 = vpack.c.b16 %v3406, %v3404
        %3471 = vmatpush.bf16.msra.mxu0 %v3421
        %3472 = vmatpush.bf16.msra.mxu0 %v3419
        %3473 = vmatpush.bf16.msra.mxu0 %v3417
        %3474 = vmatpush.bf16.msra.mxu0 %v3415
        %3475 = vmatpush.bf16.msra.mxu0 %v3413
        %3476 = vmatpush.bf16.msra.mxu0 %v3411
        %3477 = vmatpush.bf16.msra.mxu0 %v3409
        %3478 = vmatpush.bf16.msra.mxu0 %v3407
        %3479 = vmatmul.bf16.gmra.mxu0 %v3309
        %v3480 = vpop.f32.mrf.mxu0
        %v3481 = vadd.f32 0.0, %v3480
        %v3482 = vpop.f32.mrf.mxu0
        %v3483 = vadd.f32 0.0, %v3482
        %3484 = vdwg.mxu0
        %3485 = vmatpush.bf16.msra.mxu0 %v3437
        %3486 = vmatpush.bf16.msra.mxu0 %v3435
        %3487 = vmatpush.bf16.msra.mxu0 %v3433
        %3488 = vmatpush.bf16.msra.mxu0 %v3431
        %3489 = vmatpush.bf16.msra.mxu0 %v3429
        %3490 = vmatpush.bf16.msra.mxu0 %v3427
        %3491 = vmatpush.bf16.msra.mxu0 %v3425
        %3492 = vmatpush.bf16.msra.mxu0 %v3423
        %3493 = vmatmul.bf16.gmra.mxu0 %v3310
        %v3494 = vpop.f32.mrf.mxu0
        %v3495 = vadd.f32 %v3481, %v3494
        %v3496 = vpop.f32.mrf.mxu0
        %v3497 = vadd.f32 %v3483, %v3496
        %3498 = vdwg.mxu0
        %3499 = vmatpush.bf16.msra.mxu0 %v3422
        %3500 = vmatpush.bf16.msra.mxu0 %v3420
        %3501 = vmatpush.bf16.msra.mxu0 %v3418
        %3502 = vmatpush.bf16.msra.mxu0 %v3416
        %3503 = vmatpush.bf16.msra.mxu0 %v3414
        %3504 = vmatpush.bf16.msra.mxu0 %v3412
        %3505 = vmatpush.bf16.msra.mxu0 %v3410
        %3506 = vmatpush.bf16.msra.mxu0 %v3408
        %3507 = vmatmul.bf16.gmra.mxu0 %v3309
        %v3508 = vpop.f32.mrf.mxu0
        %v3509 = vadd.f32 0.0, %v3508
        %v3510 = vpop.f32.mrf.mxu0
        %v3511 = vadd.f32 0.0, %v3510
        %3512 = vdwg.mxu0
        %3513 = vmatpush.bf16.msra.mxu0 %v3438
        %3514 = vmatpush.bf16.msra.mxu0 %v3436
        %3515 = vmatpush.bf16.msra.mxu0 %v3434
        %3516 = vmatpush.bf16.msra.mxu0 %v3432
        %3517 = vmatpush.bf16.msra.mxu0 %v3430
        %3518 = vmatpush.bf16.msra.mxu0 %v3428
        %3519 = vmatpush.bf16.msra.mxu0 %v3426
        %3520 = vmatpush.bf16.msra.mxu0 %v3424
        %3521 = vmatmul.bf16.gmra.mxu0 %v3310
        %v3522 = vpop.f32.mrf.mxu0
        %v3523 = vadd.f32 %v3509, %v3522
        %v3524 = vpop.f32.mrf.mxu0
        %v3525 = vadd.f32 %v3511, %v3524
        %3526 = vdwg.mxu0
        %v3527 = vpack.c.bf16 %v1421, %v1419
        %v3528 = vpack.c.bf16 %v1422, %v1420
        %v3561 = vunpack.c.l.b16 %v3213
        %v3562 = vunpack.c.h.b16 %v3213
        %v3563 = vunpack.c.l.b16 %v3214
        %v3564 = vunpack.c.h.b16 %v3214
        %v3565 = vunpack.c.l.b16 %v3215
        %v3566 = vunpack.c.h.b16 %v3215
        %v3567 = vunpack.c.l.b16 %v3216
        %v3568 = vunpack.c.h.b16 %v3216
        %v3569 = vunpack.c.l.b16 %v3217
        %v3570 = vunpack.c.h.b16 %v3217
        %v3571 = vunpack.c.l.b16 %v3218
        %v3572 = vunpack.c.h.b16 %v3218
        %v3573 = vunpack.c.l.b16 %v3219
        %v3574 = vunpack.c.h.b16 %v3219
        %v3575 = vunpack.c.l.b16 %v3220
        %v3576 = vunpack.c.h.b16 %v3220
        %v3577 = vunpack.c.l.b16 %v3221
        %v3578 = vunpack.c.h.b16 %v3221
        %v3579 = vunpack.c.l.b16 %v3222
        %v3580 = vunpack.c.h.b16 %v3222
        %v3581 = vunpack.c.l.b16 %v3223
        %v3582 = vunpack.c.h.b16 %v3223
        %v3583 = vunpack.c.l.b16 %v3224
        %v3584 = vunpack.c.h.b16 %v3224
        %v3585 = vunpack.c.l.b16 %v3225
        %v3586 = vunpack.c.h.b16 %v3225
        %v3587 = vunpack.c.l.b16 %v3226
        %v3588 = vunpack.c.h.b16 %v3226
        %v3589 = vunpack.c.l.b16 %v3227
        %v3590 = vunpack.c.h.b16 %v3227
        %v3591 = vunpack.c.l.b16 %v3228
        %v3592 = vunpack.c.h.b16 %v3228
        %v3593 = vunpack.c.l.b16 %v3229
        %v3594 = vunpack.c.h.b16 %v3229
        %v3595 = vunpack.c.l.b16 %v3230
        %v3596 = vunpack.c.h.b16 %v3230
        %v3597 = vunpack.c.l.b16 %v3231
        %v3598 = vunpack.c.h.b16 %v3231
        %v3599 = vunpack.c.l.b16 %v3232
        %v3600 = vunpack.c.h.b16 %v3232
        %v3601 = vunpack.c.l.b16 %v3233
        %v3602 = vunpack.c.h.b16 %v3233
        %v3603 = vunpack.c.l.b16 %v3234
        %v3604 = vunpack.c.h.b16 %v3234
        %v3605 = vunpack.c.l.b16 %v3235
        %v3606 = vunpack.c.h.b16 %v3235
        %v3607 = vunpack.c.l.b16 %v3236
        %v3608 = vunpack.c.h.b16 %v3236
        %v3609 = vunpack.c.l.b16 %v3237
        %v3610 = vunpack.c.h.b16 %v3237
        %v3611 = vunpack.c.l.b16 %v3238
        %v3612 = vunpack.c.h.b16 %v3238
        %v3613 = vunpack.c.l.b16 %v3239
        %v3614 = vunpack.c.h.b16 %v3239
        %v3615 = vunpack.c.l.b16 %v3240
        %v3616 = vunpack.c.h.b16 %v3240
        %v3617 = vunpack.c.l.b16 %v3241
        %v3618 = vunpack.c.h.b16 %v3241
        %v3619 = vunpack.c.l.b16 %v3242
        %v3620 = vunpack.c.h.b16 %v3242
        %v3621 = vunpack.c.l.b16 %v3243
        %v3622 = vunpack.c.h.b16 %v3243
        %v3623 = vunpack.c.l.b16 %v3244
        %v3624 = vunpack.c.h.b16 %v3244
        %v3625 = vpack.c.b16 %v3563, %v3561
        %v3626 = vpack.c.b16 %v3564, %v3562
        %v3627 = vpack.c.b16 %v3567, %v3565
        %v3628 = vpack.c.b16 %v3568, %v3566
        %v3629 = vpack.c.b16 %v3571, %v3569
        %v3630 = vpack.c.b16 %v3572, %v3570
        %v3631 = vpack.c.b16 %v3575, %v3573
        %v3632 = vpack.c.b16 %v3576, %v3574
        %v3633 = vpack.c.b16 %v3579, %v3577
        %v3634 = vpack.c.b16 %v3580, %v3578
        %v3635 = vpack.c.b16 %v3583, %v3581
        %v3636 = vpack.c.b16 %v3584, %v3582
        %v3637 = vpack.c.b16 %v3587, %v3585
        %v3638 = vpack.c.b16 %v3588, %v3586
        %v3639 = vpack.c.b16 %v3591, %v3589
        %v3640 = vpack.c.b16 %v3592, %v3590
        %v3641 = vpack.c.b16 %v3595, %v3593
        %v3642 = vpack.c.b16 %v3596, %v3594
        %v3643 = vpack.c.b16 %v3599, %v3597
        %v3644 = vpack.c.b16 %v3600, %v3598
        %v3645 = vpack.c.b16 %v3603, %v3601
        %v3646 = vpack.c.b16 %v3604, %v3602
        %v3647 = vpack.c.b16 %v3607, %v3605
        %v3648 = vpack.c.b16 %v3608, %v3606
        %v3649 = vpack.c.b16 %v3611, %v3609
        %v3650 = vpack.c.b16 %v3612, %v3610
        %v3651 = vpack.c.b16 %v3615, %v3613
        %v3652 = vpack.c.b16 %v3616, %v3614
        %v3653 = vpack.c.b16 %v3619, %v3617
        %v3654 = vpack.c.b16 %v3620, %v3618
        %v3655 = vpack.c.b16 %v3623, %v3621
        %v3656 = vpack.c.b16 %v3624, %v3622
        %3689 = vmatpush.bf16.msra.mxu0 %v3639
        %3690 = vmatpush.bf16.msra.mxu0 %v3637
        %3691 = vmatpush.bf16.msra.mxu0 %v3635
        %3692 = vmatpush.bf16.msra.mxu0 %v3633
        %3693 = vmatpush.bf16.msra.mxu0 %v3631
        %3694 = vmatpush.bf16.msra.mxu0 %v3629
        %3695 = vmatpush.bf16.msra.mxu0 %v3627
        %3696 = vmatpush.bf16.msra.mxu0 %v3625
        %3697 = vmatmul.bf16.gmra.mxu0 %v3527
        %v3698 = vpop.f32.mrf.mxu0
        %v3699 = vadd.f32 0.0, %v3698
        %v3700 = vpop.f32.mrf.mxu0
        %v3701 = vadd.f32 0.0, %v3700
        %3702 = vdwg.mxu0
        %3703 = vmatpush.bf16.msra.mxu0 %v3655
        %3704 = vmatpush.bf16.msra.mxu0 %v3653
        %3705 = vmatpush.bf16.msra.mxu0 %v3651
        %3706 = vmatpush.bf16.msra.mxu0 %v3649
        %3707 = vmatpush.bf16.msra.mxu0 %v3647
        %3708 = vmatpush.bf16.msra.mxu0 %v3645
        %3709 = vmatpush.bf16.msra.mxu0 %v3643
        %3710 = vmatpush.bf16.msra.mxu0 %v3641
        %3711 = vmatmul.bf16.gmra.mxu0 %v3528
        %v3712 = vpop.f32.mrf.mxu0
        %v3713 = vadd.f32 %v3699, %v3712
        %v3714 = vpop.f32.mrf.mxu0
        %v3715 = vadd.f32 %v3701, %v3714
        %3716 = vdwg.mxu0
        %3717 = vmatpush.bf16.msra.mxu0 %v3640
        %3718 = vmatpush.bf16.msra.mxu0 %v3638
        %3719 = vmatpush.bf16.msra.mxu0 %v3636
        %3720 = vmatpush.bf16.msra.mxu0 %v3634
        %3721 = vmatpush.bf16.msra.mxu0 %v3632
        %3722 = vmatpush.bf16.msra.mxu0 %v3630
        %3723 = vmatpush.bf16.msra.mxu0 %v3628
        %3724 = vmatpush.bf16.msra.mxu0 %v3626
        %3725 = vmatmul.bf16.gmra.mxu0 %v3527
        %v3726 = vpop.f32.mrf.mxu0
        %v3727 = vadd.f32 0.0, %v3726
        %v3728 = vpop.f32.mrf.mxu0
        %v3729 = vadd.f32 0.0, %v3728
        %3730 = vdwg.mxu0
        %3731 = vmatpush.bf16.msra.mxu0 %v3656
        %3732 = vmatpush.bf16.msra.mxu0 %v3654
        %3733 = vmatpush.bf16.msra.mxu0 %v3652
        %3734 = vmatpush.bf16.msra.mxu0 %v3650
        %3735 = vmatpush.bf16.msra.mxu0 %v3648
        %3736 = vmatpush.bf16.msra.mxu0 %v3646
        %3737 = vmatpush.bf16.msra.mxu0 %v3644
        %3738 = vmatpush.bf16.msra.mxu0 %v3642
        %3739 = vmatmul.bf16.gmra.mxu0 %v3528
        %v3740 = vpop.f32.mrf.mxu0
        %v3741 = vadd.f32 %v3727, %v3740
        %v3742 = vpop.f32.mrf.mxu0
        %v3743 = vadd.f32 %v3729, %v3742
        %3744 = vdwg.mxu0
        %v3777 = vunpack.c.l.b16 %v3245
        %v3778 = vunpack.c.h.b16 %v3245
        %v3779 = vunpack.c.l.b16 %v3246
        %v3780 = vunpack.c.h.b16 %v3246
        %v3781 = vunpack.c.l.b16 %v3247
        %v3782 = vunpack.c.h.b16 %v3247
        %v3783 = vunpack.c.l.b16 %v3248
        %v3784 = vunpack.c.h.b16 %v3248
        %v3785 = vunpack.c.l.b16 %v3249
        %v3786 = vunpack.c.h.b16 %v3249
        %v3787 = vunpack.c.l.b16 %v3250
        %v3788 = vunpack.c.h.b16 %v3250
        %v3789 = vunpack.c.l.b16 %v3251
        %v3790 = vunpack.c.h.b16 %v3251
        %v3791 = vunpack.c.l.b16 %v3252
        %v3792 = vunpack.c.h.b16 %v3252
        %v3793 = vunpack.c.l.b16 %v3253
        %v3794 = vunpack.c.h.b16 %v3253
        %v3795 = vunpack.c.l.b16 %v3254
        %v3796 = vunpack.c.h.b16 %v3254
        %v3797 = vunpack.c.l.b16 %v3255
        %v3798 = vunpack.c.h.b16 %v3255
        %v3799 = vunpack.c.l.b16 %v3256
        %v3800 = vunpack.c.h.b16 %v3256
        %v3801 = vunpack.c.l.b16 %v3257
        %v3802 = vunpack.c.h.b16 %v3257
        %v3803 = vunpack.c.l.b16 %v3258
        %v3804 = vunpack.c.h.b16 %v3258
        %v3805 = vunpack.c.l.b16 %v3259
        %v3806 = vunpack.c.h.b16 %v3259
        %v3807 = vunpack.c.l.b16 %v3260
        %v3808 = vunpack.c.h.b16 %v3260
        %v3809 = vunpack.c.l.b16 %v3261
        %v3810 = vunpack.c.h.b16 %v3261
        %v3811 = vunpack.c.l.b16 %v3262
        %v3812 = vunpack.c.h.b16 %v3262
        %v3813 = vunpack.c.l.b16 %v3263
        %v3814 = vunpack.c.h.b16 %v3263
        %v3815 = vunpack.c.l.b16 %v3264
        %v3816 = vunpack.c.h.b16 %v3264
        %v3817 = vunpack.c.l.b16 %v3265
        %v3818 = vunpack.c.h.b16 %v3265
        %v3819 = vunpack.c.l.b16 %v3266
        %v3820 = vunpack.c.h.b16 %v3266
        %v3821 = vunpack.c.l.b16 %v3267
        %v3822 = vunpack.c.h.b16 %v3267
        %v3823 = vunpack.c.l.b16 %v3268
        %v3824 = vunpack.c.h.b16 %v3268
        %v3825 = vunpack.c.l.b16 %v3269
        %v3826 = vunpack.c.h.b16 %v3269
        %v3827 = vunpack.c.l.b16 %v3270
        %v3828 = vunpack.c.h.b16 %v3270
        %v3829 = vunpack.c.l.b16 %v3271
        %v3830 = vunpack.c.h.b16 %v3271
        %v3831 = vunpack.c.l.b16 %v3272
        %v3832 = vunpack.c.h.b16 %v3272
        %v3833 = vunpack.c.l.b16 %v3273
        %v3834 = vunpack.c.h.b16 %v3273
        %v3835 = vunpack.c.l.b16 %v3274
        %v3836 = vunpack.c.h.b16 %v3274
        %v3837 = vunpack.c.l.b16 %v3275
        %v3838 = vunpack.c.h.b16 %v3275
        %v3839 = vunpack.c.l.b16 %v3276
        %v3840 = vunpack.c.h.b16 %v3276
        %v3841 = vpack.c.b16 %v3779, %v3777
        %v3842 = vpack.c.b16 %v3780, %v3778
        %v3843 = vpack.c.b16 %v3783, %v3781
        %v3844 = vpack.c.b16 %v3784, %v3782
        %v3845 = vpack.c.b16 %v3787, %v3785
        %v3846 = vpack.c.b16 %v3788, %v3786
        %v3847 = vpack.c.b16 %v3791, %v3789
        %v3848 = vpack.c.b16 %v3792, %v3790
        %v3849 = vpack.c.b16 %v3795, %v3793
        %v3850 = vpack.c.b16 %v3796, %v3794
        %v3851 = vpack.c.b16 %v3799, %v3797
        %v3852 = vpack.c.b16 %v3800, %v3798
        %v3853 = vpack.c.b16 %v3803, %v3801
        %v3854 = vpack.c.b16 %v3804, %v3802
        %v3855 = vpack.c.b16 %v3807, %v3805
        %v3856 = vpack.c.b16 %v3808, %v3806
        %v3857 = vpack.c.b16 %v3811, %v3809
        %v3858 = vpack.c.b16 %v3812, %v3810
        %v3859 = vpack.c.b16 %v3815, %v3813
        %v3860 = vpack.c.b16 %v3816, %v3814
        %v3861 = vpack.c.b16 %v3819, %v3817
        %v3862 = vpack.c.b16 %v3820, %v3818
        %v3863 = vpack.c.b16 %v3823, %v3821
        %v3864 = vpack.c.b16 %v3824, %v3822
        %v3865 = vpack.c.b16 %v3827, %v3825
        %v3866 = vpack.c.b16 %v3828, %v3826
        %v3867 = vpack.c.b16 %v3831, %v3829
        %v3868 = vpack.c.b16 %v3832, %v3830
        %v3869 = vpack.c.b16 %v3835, %v3833
        %v3870 = vpack.c.b16 %v3836, %v3834
        %v3871 = vpack.c.b16 %v3839, %v3837
        %v3872 = vpack.c.b16 %v3840, %v3838
        %3905 = vmatpush.bf16.msra.mxu0 %v3855
        %3906 = vmatpush.bf16.msra.mxu0 %v3853
        %3907 = vmatpush.bf16.msra.mxu0 %v3851
        %3908 = vmatpush.bf16.msra.mxu0 %v3849
        %3909 = vmatpush.bf16.msra.mxu0 %v3847
        %3910 = vmatpush.bf16.msra.mxu0 %v3845
        %3911 = vmatpush.bf16.msra.mxu0 %v3843
        %3912 = vmatpush.bf16.msra.mxu0 %v3841
        %3913 = vmatmul.bf16.gmra.mxu0 %v3527
        %v3914 = vpop.f32.mrf.mxu0
        %v3915 = vadd.f32 0.0, %v3914
        %v3916 = vpop.f32.mrf.mxu0
        %v3917 = vadd.f32 0.0, %v3916
        %3918 = vdwg.mxu0
        %3919 = vmatpush.bf16.msra.mxu0 %v3871
        %3920 = vmatpush.bf16.msra.mxu0 %v3869
        %3921 = vmatpush.bf16.msra.mxu0 %v3867
        %3922 = vmatpush.bf16.msra.mxu0 %v3865
        %3923 = vmatpush.bf16.msra.mxu0 %v3863
        %3924 = vmatpush.bf16.msra.mxu0 %v3861
        %3925 = vmatpush.bf16.msra.mxu0 %v3859
        %3926 = vmatpush.bf16.msra.mxu0 %v3857
        %3927 = vmatmul.bf16.gmra.mxu0 %v3528
        %v3928 = vpop.f32.mrf.mxu0
        %v3929 = vadd.f32 %v3915, %v3928
        %v3930 = vpop.f32.mrf.mxu0
        %v3931 = vadd.f32 %v3917, %v3930
        %3932 = vdwg.mxu0
        %3933 = vmatpush.bf16.msra.mxu0 %v3856
        %3934 = vmatpush.bf16.msra.mxu0 %v3854
        %3935 = vmatpush.bf16.msra.mxu0 %v3852
        %3936 = vmatpush.bf16.msra.mxu0 %v3850
        %3937 = vmatpush.bf16.msra.mxu0 %v3848
        %3938 = vmatpush.bf16.msra.mxu0 %v3846
        %3939 = vmatpush.bf16.msra.mxu0 %v3844
        %3940 = vmatpush.bf16.msra.mxu0 %v3842
        %3941 = vmatmul.bf16.gmra.mxu0 %v3527
        %v3942 = vpop.f32.mrf.mxu0
        %v3943 = vadd.f32 0.0, %v3942
        %v3944 = vpop.f32.mrf.mxu0
        %v3945 = vadd.f32 0.0, %v3944
        %3946 = vdwg.mxu0
        %3947 = vmatpush.bf16.msra.mxu0 %v3872
        %3948 = vmatpush.bf16.msra.mxu0 %v3870
        %3949 = vmatpush.bf16.msra.mxu0 %v3868
        %3950 = vmatpush.bf16.msra.mxu0 %v3866
        %3951 = vmatpush.bf16.msra.mxu0 %v3864
        %3952 = vmatpush.bf16.msra.mxu0 %v3862
        %3953 = vmatpush.bf16.msra.mxu0 %v3860
        %3954 = vmatpush.bf16.msra.mxu0 %v3858
        %3955 = vmatmul.bf16.gmra.mxu0 %v3528
        %v3956 = vpop.f32.mrf.mxu0
        %v3957 = vadd.f32 %v3943, %v3956
        %v3958 = vpop.f32.mrf.mxu0
        %v3959 = vadd.f32 %v3945, %v3958
        %3960 = vdwg.mxu0
        %v3962 = vsel %vm2201, %v3495, 0
        %v3965 = vsel %vm2201, %v3713, 0
        %3967 = vmatpush.xpose.msra.mxu0 0.0
        %3968 = vmatpush.xpose.msra.mxu0 0.0
        %3969 = vmatpush.xpose.msra.mxu0 0.0
        %3970 = vmatpush.xpose.msra.mxu0 0.0
        %3971 = vmatpush.xpose.msra.mxu0 0.0
        %3972 = vmatpush.xpose.msra.mxu0 0.0
        %3973 = vmatpush.xpose.msra.mxu0 0.0
        %3974 = vmatpush.xpose.msra.mxu0 0.0
        %3975 = vmatpush.xpose.msra.mxu0 0.0
        %3976 = vmatpush.xpose.msra.mxu0 0.0
        %3977 = vmatpush.xpose.msra.mxu0 0.0
        %3978 = vmatpush.xpose.msra.mxu0 0.0
        %3979 = vmatpush.xpose.msra.mxu0 0.0
        %3980 = vmatpush.xpose.msra.mxu0 0.0
        %3981 = vmatpush.xpose.msra.mxu0 0.0
        %3982 = vmatpush.xpose.msra.mxu0 %v3965
        %3983 = vmatmul.f32.gmra.mxu0 %v3962
        %v3984 = vpop.f32.mrf.mxu0
        %v3985 = vadd.f32 0.0, %v3984
        %3986 = vdwg.mxu0
        %v3987 = vmul.f32 %v3985, 0.125
        %v3988 = vsel %vm2229, %v3987, -inf
        %3989 = vmax.xlane.f32.xlu0 %v3988
        %v3990 = vpop.xlane.xlu0 %3989
        %v3991 = vsub.f32 %v3987, %v3990
        %v3992 = vmul.f32 %v3991, 1.442695
        %v3993 = vpow.pop %v3992
        %v3994 = vsel %vm2229, %v3993, 0.0
        %3995 = vadd.xlane.f32.xlu0 %v3994
        %v3996 = vpop.xlane.xlu0 %3995
        %v3997 = vrcp.pop %v3996
        %v3998 = vmul.f32 %v3993, %v3997
        %v3999 = vpack.c.bf16 %v3998, %v3998
        %v4000 = vpack.c.bf16 %v3929, %v3929
        %v4002 = vsel %vm2229, %v3999, 0
        %v4005 = vsel %vm2246, %v4000, 0
        %4007 = vmatpush.bf16.msra.mxu0 0
        %4008 = vmatpush.bf16.msra.mxu0 0
        %4009 = vmatpush.bf16.msra.mxu0 0
        %4010 = vmatpush.bf16.msra.mxu0 0
        %4011 = vmatpush.bf16.msra.mxu0 0
        %4012 = vmatpush.bf16.msra.mxu0 0
        %4013 = vmatpush.bf16.msra.mxu0 0
        %4014 = vmatpush.bf16.msra.mxu0 %v4005
        %4015 = vmatmul.bf16.gmra.mxu0 %v4002
        %v4016 = vpop.f32.mrf.mxu0
        %v4017 = vadd.f32 0.0, %v4016
        %v4018 = vpop.f32.mrf.mxu0
        %4019 = vdwg.mxu0
        %v4020 = vpack.c.bf16 %v4017, %v4017
        %4021 = vrot.lane.b32.xlu0 %v3495, 64
        %v4022 = vpop.permute.xlu0 %4021
        %4023 = vrot.lane.b32.xlu0 %v3713, 64
        %v4024 = vpop.permute.xlu0 %4023
        %v4025 = vsel %vm2201, %v4022, 0
        %v4027 = vsel %vm2201, %v4024, 0
        %4029 = vmatpush.xpose.msra.mxu0 0.0
        %4030 = vmatpush.xpose.msra.mxu0 0.0
        %4031 = vmatpush.xpose.msra.mxu0 0.0
        %4032 = vmatpush.xpose.msra.mxu0 0.0
        %4033 = vmatpush.xpose.msra.mxu0 0.0
        %4034 = vmatpush.xpose.msra.mxu0 0.0
        %4035 = vmatpush.xpose.msra.mxu0 0.0
        %4036 = vmatpush.xpose.msra.mxu0 0.0
        %4037 = vmatpush.xpose.msra.mxu0 0.0
        %4038 = vmatpush.xpose.msra.mxu0 0.0
        %4039 = vmatpush.xpose.msra.mxu0 0.0
        %4040 = vmatpush.xpose.msra.mxu0 0.0
        %4041 = vmatpush.xpose.msra.mxu0 0.0
        %4042 = vmatpush.xpose.msra.mxu0 0.0
        %4043 = vmatpush.xpose.msra.mxu0 0.0
        %4044 = vmatpush.xpose.msra.mxu0 %v4027
        %4045 = vmatmul.f32.gmra.mxu0 %v4025
        %v4046 = vpop.f32.mrf.mxu0
        %v4047 = vadd.f32 0.0, %v4046
        %4048 = vdwg.mxu0
        %v4049 = vmul.f32 %v4047, 0.125
        %v4050 = vsel %vm2229, %v4049, -inf
        %4051 = vmax.xlane.f32.xlu0 %v4050
        %v4052 = vpop.xlane.xlu0 %4051
        %v4053 = vsub.f32 %v4049, %v4052
        %v4054 = vmul.f32 %v4053, 1.442695
        %v4055 = vpow.pop %v4054
        %v4056 = vsel %vm2229, %v4055, 0.0
        %4057 = vadd.xlane.f32.xlu0 %v4056
        %v4058 = vpop.xlane.xlu0 %4057
        %v4059 = vrcp.pop %v4058
        %v4060 = vmul.f32 %v4055, %v4059
        %v4061 = vpack.c.bf16 %v4060, %v4060
        %4063 = vrot.lane.b32.xlu0 %v4000, 64
        %v4064 = vpop.permute.xlu0 %4063
        %v4066 = vsel %vm2229, %v4061, 0
        %v4069 = vsel %vm2246, %v4064, 0
        %4071 = vmatpush.bf16.msra.mxu0 0
        %4072 = vmatpush.bf16.msra.mxu0 0
        %4073 = vmatpush.bf16.msra.mxu0 0
        %4074 = vmatpush.bf16.msra.mxu0 0
        %4075 = vmatpush.bf16.msra.mxu0 0
        %4076 = vmatpush.bf16.msra.mxu0 0
        %4077 = vmatpush.bf16.msra.mxu0 0
        %4078 = vmatpush.bf16.msra.mxu0 %v4069
        %4079 = vmatmul.bf16.gmra.mxu0 %v4066
        %v4080 = vpop.f32.mrf.mxu0
        %v4081 = vadd.f32 0.0, %v4080
        %v4082 = vpop.f32.mrf.mxu0
        %4083 = vdwg.mxu0
        %v4084 = vpack.c.bf16 %v4081, %v4081
        %v4093 = vunpack.c.l.b16 %v3285
        %v4094 = vunpack.c.h.b16 %v3285
        %v4095 = vunpack.c.l.b16 %v3286
        %v4096 = vunpack.c.h.b16 %v3286
        %v4097 = vunpack.c.l.b16 %v3287
        %v4098 = vunpack.c.h.b16 %v3287
        %v4099 = vunpack.c.l.b16 %v3288
        %v4100 = vunpack.c.h.b16 %v3288
        %v4101 = vunpack.c.l.b16 %v3289
        %v4102 = vunpack.c.h.b16 %v3289
        %v4103 = vunpack.c.l.b16 %v3290
        %v4104 = vunpack.c.h.b16 %v3290
        %v4105 = vunpack.c.l.b16 %v3291
        %v4106 = vunpack.c.h.b16 %v3291
        %v4107 = vunpack.c.l.b16 %v3292
        %v4108 = vunpack.c.h.b16 %v3292
        %v4109 = vpack.c.b16 %v4095, %v4093
        %v4110 = vpack.c.b16 %v4096, %v4094
        %v4111 = vpack.c.b16 %v4099, %v4097
        %v4112 = vpack.c.b16 %v4100, %v4098
        %v4113 = vpack.c.b16 %v4103, %v4101
        %v4114 = vpack.c.b16 %v4104, %v4102
        %v4115 = vpack.c.b16 %v4107, %v4105
        %v4116 = vpack.c.b16 %v4108, %v4106
        %v4126 = vsel %vm2201, %v4084, 0
        %4128 = vmatpush.bf16.msra.mxu0 0
        %4129 = vmatpush.bf16.msra.mxu0 0
        %4130 = vmatpush.bf16.msra.mxu0 0
        %4131 = vmatpush.bf16.msra.mxu0 0
        %4132 = vmatpush.bf16.msra.mxu0 %v4115
        %4133 = vmatpush.bf16.msra.mxu0 %v4113
        %4134 = vmatpush.bf16.msra.mxu0 %v4111
        %4135 = vmatpush.bf16.msra.mxu0 %v4109
        %4136 = vmatmul.bf16.gmra.mxu0 %v4126
        %v4137 = vpop.f32.mrf.mxu0
        %v4138 = vadd.f32 0.0, %v4137
        %v4139 = vpop.f32.mrf.mxu0
        %4140 = vdwg.mxu0
        %4141 = vmatpush.bf16.msra.mxu0 0
        %4142 = vmatpush.bf16.msra.mxu0 0
        %4143 = vmatpush.bf16.msra.mxu0 0
        %4144 = vmatpush.bf16.msra.mxu0 0
        %4145 = vmatpush.bf16.msra.mxu0 %v4116
        %4146 = vmatpush.bf16.msra.mxu0 %v4114
        %4147 = vmatpush.bf16.msra.mxu0 %v4112
        %4148 = vmatpush.bf16.msra.mxu0 %v4110
        %4149 = vmatmul.bf16.gmra.mxu0 %v4126
        %v4150 = vpop.f32.mrf.mxu0
        %v4151 = vadd.f32 0.0, %v4150
        %v4152 = vpop.f32.mrf.mxu0
        %4153 = vdwg.mxu0
        %v4162 = vunpack.c.l.b16 %v3277
        %v4163 = vunpack.c.h.b16 %v3277
        %v4164 = vunpack.c.l.b16 %v3278
        %v4165 = vunpack.c.h.b16 %v3278
        %v4166 = vunpack.c.l.b16 %v3279
        %v4167 = vunpack.c.h.b16 %v3279
        %v4168 = vunpack.c.l.b16 %v3280
        %v4169 = vunpack.c.h.b16 %v3280
        %v4170 = vunpack.c.l.b16 %v3281
        %v4171 = vunpack.c.h.b16 %v3281
        %v4172 = vunpack.c.l.b16 %v3282
        %v4173 = vunpack.c.h.b16 %v3282
        %v4174 = vunpack.c.l.b16 %v3283
        %v4175 = vunpack.c.h.b16 %v3283
        %v4176 = vunpack.c.l.b16 %v3284
        %v4177 = vunpack.c.h.b16 %v3284
        %v4178 = vpack.c.b16 %v4164, %v4162
        %v4179 = vpack.c.b16 %v4165, %v4163
        %v4180 = vpack.c.b16 %v4168, %v4166
        %v4181 = vpack.c.b16 %v4169, %v4167
        %v4182 = vpack.c.b16 %v4172, %v4170
        %v4183 = vpack.c.b16 %v4173, %v4171
        %v4184 = vpack.c.b16 %v4176, %v4174
        %v4185 = vpack.c.b16 %v4177, %v4175
        %v4195 = vsel %vm2201, %v4020, 0
        %4197 = vmatpush.bf16.msra.mxu0 0
        %4198 = vmatpush.bf16.msra.mxu0 0
        %4199 = vmatpush.bf16.msra.mxu0 0
        %4200 = vmatpush.bf16.msra.mxu0 0
        %4201 = vmatpush.bf16.msra.mxu0 %v4184
        %4202 = vmatpush.bf16.msra.mxu0 %v4182
        %4203 = vmatpush.bf16.msra.mxu0 %v4180
        %4204 = vmatpush.bf16.msra.mxu0 %v4178
        %4205 = vmatmul.bf16.gmra.mxu0 %v4195
        %v4206 = vpop.f32.mrf.mxu0
        %v4207 = vadd.f32 %v4138, %v4206
        %v4208 = vpop.f32.mrf.mxu0
        %4209 = vdwg.mxu0
        %4210 = vmatpush.bf16.msra.mxu0 0
        %4211 = vmatpush.bf16.msra.mxu0 0
        %4212 = vmatpush.bf16.msra.mxu0 0
        %4213 = vmatpush.bf16.msra.mxu0 0
        %4214 = vmatpush.bf16.msra.mxu0 %v4185
        %4215 = vmatpush.bf16.msra.mxu0 %v4183
        %4216 = vmatpush.bf16.msra.mxu0 %v4181
        %4217 = vmatpush.bf16.msra.mxu0 %v4179
        %4218 = vmatmul.bf16.gmra.mxu0 %v4195
        %v4219 = vpop.f32.mrf.mxu0
        %v4220 = vadd.f32 %v4151, %v4219
        %v4221 = vpop.f32.mrf.mxu0
        %4222 = vdwg.mxu0
        %v4224 = vsel %vm2201, %v3523, 0
        %v4227 = vsel %vm2201, %v3741, 0
        %4229 = vmatpush.xpose.msra.mxu0 0.0
        %4230 = vmatpush.xpose.msra.mxu0 0.0
        %4231 = vmatpush.xpose.msra.mxu0 0.0
        %4232 = vmatpush.xpose.msra.mxu0 0.0
        %4233 = vmatpush.xpose.msra.mxu0 0.0
        %4234 = vmatpush.xpose.msra.mxu0 0.0
        %4235 = vmatpush.xpose.msra.mxu0 0.0
        %4236 = vmatpush.xpose.msra.mxu0 0.0
        %4237 = vmatpush.xpose.msra.mxu0 0.0
        %4238 = vmatpush.xpose.msra.mxu0 0.0
        %4239 = vmatpush.xpose.msra.mxu0 0.0
        %4240 = vmatpush.xpose.msra.mxu0 0.0
        %4241 = vmatpush.xpose.msra.mxu0 0.0
        %4242 = vmatpush.xpose.msra.mxu0 0.0
        %4243 = vmatpush.xpose.msra.mxu0 0.0
        %4244 = vmatpush.xpose.msra.mxu0 %v4227
        %4245 = vmatmul.f32.gmra.mxu0 %v4224
        %v4246 = vpop.f32.mrf.mxu0
        %v4247 = vadd.f32 0.0, %v4246
        %4248 = vdwg.mxu0
        %v4249 = vmul.f32 %v4247, 0.125
        %v4250 = vsel %vm2229, %v4249, -inf
        %4251 = vmax.xlane.f32.xlu0 %v4250
        %v4252 = vpop.xlane.xlu0 %4251
        %v4253 = vsub.f32 %v4249, %v4252
        %v4254 = vmul.f32 %v4253, 1.442695
        %v4255 = vpow.pop %v4254
        %v4256 = vsel %vm2229, %v4255, 0.0
        %4257 = vadd.xlane.f32.xlu0 %v4256
        %v4258 = vpop.xlane.xlu0 %4257
        %v4259 = vrcp.pop %v4258
        %v4260 = vmul.f32 %v4255, %v4259
        %v4261 = vpack.c.bf16 %v4260, %v4260
        %v4262 = vpack.c.bf16 %v3957, %v3957
        %v4264 = vsel %vm2229, %v4261, 0
        %v4267 = vsel %vm2246, %v4262, 0
        %4269 = vmatpush.bf16.msra.mxu0 0
        %4270 = vmatpush.bf16.msra.mxu0 0
        %4271 = vmatpush.bf16.msra.mxu0 0
        %4272 = vmatpush.bf16.msra.mxu0 0
        %4273 = vmatpush.bf16.msra.mxu0 0
        %4274 = vmatpush.bf16.msra.mxu0 0
        %4275 = vmatpush.bf16.msra.mxu0 0
        %4276 = vmatpush.bf16.msra.mxu0 %v4267
        %4277 = vmatmul.bf16.gmra.mxu0 %v4264
        %v4278 = vpop.f32.mrf.mxu0
        %v4279 = vadd.f32 0.0, %v4278
        %v4280 = vpop.f32.mrf.mxu0
        %4281 = vdwg.mxu0
        %v4282 = vpack.c.bf16 %v4279, %v4279
        %v4291 = vunpack.c.l.b16 %v3293
        %v4292 = vunpack.c.h.b16 %v3293
        %v4293 = vunpack.c.l.b16 %v3294
        %v4294 = vunpack.c.h.b16 %v3294
        %v4295 = vunpack.c.l.b16 %v3295
        %v4296 = vunpack.c.h.b16 %v3295
        %v4297 = vunpack.c.l.b16 %v3296
        %v4298 = vunpack.c.h.b16 %v3296
        %v4299 = vunpack.c.l.b16 %v3297
        %v4300 = vunpack.c.h.b16 %v3297
        %v4301 = vunpack.c.l.b16 %v3298
        %v4302 = vunpack.c.h.b16 %v3298
        %v4303 = vunpack.c.l.b16 %v3299
        %v4304 = vunpack.c.h.b16 %v3299
        %v4305 = vunpack.c.l.b16 %v3300
        %v4306 = vunpack.c.h.b16 %v3300
        %v4307 = vpack.c.b16 %v4293, %v4291
        %v4308 = vpack.c.b16 %v4294, %v4292
        %v4309 = vpack.c.b16 %v4297, %v4295
        %v4310 = vpack.c.b16 %v4298, %v4296
        %v4311 = vpack.c.b16 %v4301, %v4299
        %v4312 = vpack.c.b16 %v4302, %v4300
        %v4313 = vpack.c.b16 %v4305, %v4303
        %v4314 = vpack.c.b16 %v4306, %v4304
        %v4324 = vsel %vm2201, %v4282, 0
        %4326 = vmatpush.bf16.msra.mxu0 0
        %4327 = vmatpush.bf16.msra.mxu0 0
        %4328 = vmatpush.bf16.msra.mxu0 0
        %4329 = vmatpush.bf16.msra.mxu0 0
        %4330 = vmatpush.bf16.msra.mxu0 %v4313
        %4331 = vmatpush.bf16.msra.mxu0 %v4311
        %4332 = vmatpush.bf16.msra.mxu0 %v4309
        %4333 = vmatpush.bf16.msra.mxu0 %v4307
        %4334 = vmatmul.bf16.gmra.mxu0 %v4324
        %v4335 = vpop.f32.mrf.mxu0
        %v4336 = vadd.f32 0.0, %v4335
        %v4337 = vpop.f32.mrf.mxu0
        %4338 = vdwg.mxu0
        %4339 = vmatpush.bf16.msra.mxu0 0
        %4340 = vmatpush.bf16.msra.mxu0 0
        %4341 = vmatpush.bf16.msra.mxu0 0
        %4342 = vmatpush.bf16.msra.mxu0 0
        %4343 = vmatpush.bf16.msra.mxu0 %v4314
        %4344 = vmatpush.bf16.msra.mxu0 %v4312
        %4345 = vmatpush.bf16.msra.mxu0 %v4310
        %4346 = vmatpush.bf16.msra.mxu0 %v4308
        %4347 = vmatmul.bf16.gmra.mxu0 %v4324
        %v4348 = vpop.f32.mrf.mxu0
        %v4349 = vadd.f32 0.0, %v4348
        %v4350 = vpop.f32.mrf.mxu0
        %4351 = vdwg.mxu0
        %v4352 = vadd.f32 %v4207, %v4336
        %v4353 = vadd.f32 %v4220, %v4349
        %4354 = vrot.lane.b32.xlu0 %v3523, 64
        %v4355 = vpop.permute.xlu0 %4354
        %4356 = vrot.lane.b32.xlu0 %v3741, 64
        %v4357 = vpop.permute.xlu0 %4356
        %v4358 = vsel %vm2201, %v4355, 0
        %v4360 = vsel %vm2201, %v4357, 0
        %4362 = vmatpush.xpose.msra.mxu0 0.0
        %4363 = vmatpush.xpose.msra.mxu0 0.0
        %4364 = vmatpush.xpose.msra.mxu0 0.0
        %4365 = vmatpush.xpose.msra.mxu0 0.0
        %4366 = vmatpush.xpose.msra.mxu0 0.0
        %4367 = vmatpush.xpose.msra.mxu0 0.0
        %4368 = vmatpush.xpose.msra.mxu0 0.0
        %4369 = vmatpush.xpose.msra.mxu0 0.0
        %4370 = vmatpush.xpose.msra.mxu0 0.0
        %4371 = vmatpush.xpose.msra.mxu0 0.0
        %4372 = vmatpush.xpose.msra.mxu0 0.0
        %4373 = vmatpush.xpose.msra.mxu0 0.0
        %4374 = vmatpush.xpose.msra.mxu0 0.0
        %4375 = vmatpush.xpose.msra.mxu0 0.0
        %4376 = vmatpush.xpose.msra.mxu0 0.0
        %4377 = vmatpush.xpose.msra.mxu0 %v4360
        %4378 = vmatmul.f32.gmra.mxu0 %v4358
        %v4379 = vpop.f32.mrf.mxu0
        %v4380 = vadd.f32 0.0, %v4379
        %4381 = vdwg.mxu0
        %v4382 = vmul.f32 %v4380, 0.125
        %v4383 = vsel %vm2229, %v4382, -inf
        %4384 = vmax.xlane.f32.xlu0 %v4383
        %v4385 = vpop.xlane.xlu0 %4384
        %v4386 = vsub.f32 %v4382, %v4385
        %v4387 = vmul.f32 %v4386, 1.442695
        %v4388 = vpow.pop %v4387
        %v4389 = vsel %vm2229, %v4388, 0.0
        %4390 = vadd.xlane.f32.xlu0 %v4389
        %v4391 = vpop.xlane.xlu0 %4390
        %v4392 = vrcp.pop %v4391
        %v4393 = vmul.f32 %v4388, %v4392
        %v4394 = vpack.c.bf16 %v4393, %v4393
        %4396 = vrot.lane.b32.xlu0 %v4262, 64
        %v4397 = vpop.permute.xlu0 %4396
        %v4399 = vsel %vm2229, %v4394, 0
        %v4402 = vsel %vm2246, %v4397, 0
        %4404 = vmatpush.bf16.msra.mxu0 0
        %4405 = vmatpush.bf16.msra.mxu0 0
        %4406 = vmatpush.bf16.msra.mxu0 0
        %4407 = vmatpush.bf16.msra.mxu0 0
        %4408 = vmatpush.bf16.msra.mxu0 0
        %4409 = vmatpush.bf16.msra.mxu0 0
        %4410 = vmatpush.bf16.msra.mxu0 0
        %4411 = vmatpush.bf16.msra.mxu0 %v4402
        %4412 = vmatmul.bf16.gmra.mxu0 %v4399
        %v4413 = vpop.f32.mrf.mxu0
        %v4414 = vadd.f32 0.0, %v4413
        %v4415 = vpop.f32.mrf.mxu0
        %4416 = vdwg.mxu0
        %v4417 = vpack.c.bf16 %v4414, %v4414
        %v4426 = vunpack.c.l.b16 %v3301
        %v4427 = vunpack.c.h.b16 %v3301
        %v4428 = vunpack.c.l.b16 %v3302
        %v4429 = vunpack.c.h.b16 %v3302
        %v4430 = vunpack.c.l.b16 %v3303
        %v4431 = vunpack.c.h.b16 %v3303
        %v4432 = vunpack.c.l.b16 %v3304
        %v4433 = vunpack.c.h.b16 %v3304
        %v4434 = vunpack.c.l.b16 %v3305
        %v4435 = vunpack.c.h.b16 %v3305
        %v4436 = vunpack.c.l.b16 %v3306
        %v4437 = vunpack.c.h.b16 %v3306
        %v4438 = vunpack.c.l.b16 %v3307
        %v4439 = vunpack.c.h.b16 %v3307
        %v4440 = vunpack.c.l.b16 %v3308
        %v4441 = vunpack.c.h.b16 %v3308
        %v4442 = vpack.c.b16 %v4428, %v4426
        %v4443 = vpack.c.b16 %v4429, %v4427
        %v4444 = vpack.c.b16 %v4432, %v4430
        %v4445 = vpack.c.b16 %v4433, %v4431
        %v4446 = vpack.c.b16 %v4436, %v4434
        %v4447 = vpack.c.b16 %v4437, %v4435
        %v4448 = vpack.c.b16 %v4440, %v4438
        %v4449 = vpack.c.b16 %v4441, %v4439
        %v4459 = vsel %vm2201, %v4417, 0
        %4461 = vmatpush.bf16.msra.mxu0 0
        %4462 = vmatpush.bf16.msra.mxu0 0
        %4463 = vmatpush.bf16.msra.mxu0 0
        %4464 = vmatpush.bf16.msra.mxu0 0
        %4465 = vmatpush.bf16.msra.mxu0 %v4448
        %4466 = vmatpush.bf16.msra.mxu0 %v4446
        %4467 = vmatpush.bf16.msra.mxu0 %v4444
        %4468 = vmatpush.bf16.msra.mxu0 %v4442
        %4469 = vmatmul.bf16.gmra.mxu0 %v4459
        %v4470 = vpop.f32.mrf.mxu0
        %v4471 = vadd.f32 0.0, %v4470
        %v4472 = vpop.f32.mrf.mxu0
        %4473 = vdwg.mxu0
        %4474 = vmatpush.bf16.msra.mxu0 0
        %4475 = vmatpush.bf16.msra.mxu0 0
        %4476 = vmatpush.bf16.msra.mxu0 0
        %4477 = vmatpush.bf16.msra.mxu0 0
        %4478 = vmatpush.bf16.msra.mxu0 %v4449
        %4479 = vmatpush.bf16.msra.mxu0 %v4447
        %4480 = vmatpush.bf16.msra.mxu0 %v4445
        %4481 = vmatpush.bf16.msra.mxu0 %v4443
        %4482 = vmatmul.bf16.gmra.mxu0 %v4459
        %v4483 = vpop.f32.mrf.mxu0
        %v4484 = vadd.f32 0.0, %v4483
        %v4485 = vpop.f32.mrf.mxu0
        %4486 = vdwg.mxu0
        %v4487 = vadd.f32 %v4352, %v4471
        %v4488 = vadd.f32 %v4353, %v4484
        %v4490 = vsel %vm2201, %v3497, 0
        %v4493 = vsel %vm2201, %v3715, 0
        %4495 = vmatpush.xpose.msra.mxu0 0.0
        %4496 = vmatpush.xpose.msra.mxu0 0.0
        %4497 = vmatpush.xpose.msra.mxu0 0.0
        %4498 = vmatpush.xpose.msra.mxu0 0.0
        %4499 = vmatpush.xpose.msra.mxu0 0.0
        %4500 = vmatpush.xpose.msra.mxu0 0.0
        %4501 = vmatpush.xpose.msra.mxu0 0.0
        %4502 = vmatpush.xpose.msra.mxu0 0.0
        %4503 = vmatpush.xpose.msra.mxu0 0.0
        %4504 = vmatpush.xpose.msra.mxu0 0.0
        %4505 = vmatpush.xpose.msra.mxu0 0.0
        %4506 = vmatpush.xpose.msra.mxu0 0.0
        %4507 = vmatpush.xpose.msra.mxu0 0.0
        %4508 = vmatpush.xpose.msra.mxu0 0.0
        %4509 = vmatpush.xpose.msra.mxu0 0.0
        %4510 = vmatpush.xpose.msra.mxu0 %v4493
        %4511 = vmatmul.f32.gmra.mxu0 %v4490
        %v4512 = vpop.f32.mrf.mxu0
        %v4513 = vadd.f32 0.0, %v4512
        %4514 = vdwg.mxu0
        %v4515 = vmul.f32 %v4513, 0.125
        %v4516 = vsel %vm2229, %v4515, -inf
        %4517 = vmax.xlane.f32.xlu0 %v4516
        %v4518 = vpop.xlane.xlu0 %4517
        %v4519 = vsub.f32 %v4515, %v4518
        %v4520 = vmul.f32 %v4519, 1.442695
        %v4521 = vpow.pop %v4520
        %v4522 = vsel %vm2229, %v4521, 0.0
        %4523 = vadd.xlane.f32.xlu0 %v4522
        %v4524 = vpop.xlane.xlu0 %4523
        %v4525 = vrcp.pop %v4524
        %v4526 = vmul.f32 %v4521, %v4525
        %v4527 = vpack.c.bf16 %v4526, %v4526
        %v4528 = vpack.c.bf16 %v3931, %v3931
        %v4530 = vsel %vm2229, %v4527, 0
        %v4533 = vsel %vm2246, %v4528, 0
        %4535 = vmatpush.bf16.msra.mxu0 0
        %4536 = vmatpush.bf16.msra.mxu0 0
        %4537 = vmatpush.bf16.msra.mxu0 0
        %4538 = vmatpush.bf16.msra.mxu0 0
        %4539 = vmatpush.bf16.msra.mxu0 0
        %4540 = vmatpush.bf16.msra.mxu0 0
        %4541 = vmatpush.bf16.msra.mxu0 0
        %4542 = vmatpush.bf16.msra.mxu0 %v4533
        %4543 = vmatmul.bf16.gmra.mxu0 %v4530
        %v4544 = vpop.f32.mrf.mxu0
        %v4545 = vadd.f32 0.0, %v4544
        %v4546 = vpop.f32.mrf.mxu0
        %4547 = vdwg.mxu0
        %v4548 = vpack.c.bf16 %v4545, %v4545
        %4549 = vrot.lane.b32.xlu0 %v3497, 64
        %v4550 = vpop.permute.xlu0 %4549
        %4551 = vrot.lane.b32.xlu0 %v3715, 64
        %v4552 = vpop.permute.xlu0 %4551
        %v4553 = vsel %vm2201, %v4550, 0
        %v4555 = vsel %vm2201, %v4552, 0
        %4557 = vmatpush.xpose.msra.mxu0 0.0
        %4558 = vmatpush.xpose.msra.mxu0 0.0
        %4559 = vmatpush.xpose.msra.mxu0 0.0
        %4560 = vmatpush.xpose.msra.mxu0 0.0
        %4561 = vmatpush.xpose.msra.mxu0 0.0
        %4562 = vmatpush.xpose.msra.mxu0 0.0
        %4563 = vmatpush.xpose.msra.mxu0 0.0
        %4564 = vmatpush.xpose.msra.mxu0 0.0
        %4565 = vmatpush.xpose.msra.mxu0 0.0
        %4566 = vmatpush.xpose.msra.mxu0 0.0
        %4567 = vmatpush.xpose.msra.mxu0 0.0
        %4568 = vmatpush.xpose.msra.mxu0 0.0
        %4569 = vmatpush.xpose.msra.mxu0 0.0
        %4570 = vmatpush.xpose.msra.mxu0 0.0
        %4571 = vmatpush.xpose.msra.mxu0 0.0
        %4572 = vmatpush.xpose.msra.mxu0 %v4555
        %4573 = vmatmul.f32.gmra.mxu0 %v4553
        %v4574 = vpop.f32.mrf.mxu0
        %v4575 = vadd.f32 0.0, %v4574
        %4576 = vdwg.mxu0
        %v4577 = vmul.f32 %v4575, 0.125
        %v4578 = vsel %vm2229, %v4577, -inf
        %4579 = vmax.xlane.f32.xlu0 %v4578
        %v4580 = vpop.xlane.xlu0 %4579
        %v4581 = vsub.f32 %v4577, %v4580
        %v4582 = vmul.f32 %v4581, 1.442695
        %v4583 = vpow.pop %v4582
        %v4584 = vsel %vm2229, %v4583, 0.0
        %4585 = vadd.xlane.f32.xlu0 %v4584
        %v4586 = vpop.xlane.xlu0 %4585
        %v4587 = vrcp.pop %v4586
        %v4588 = vmul.f32 %v4583, %v4587
        %v4589 = vpack.c.bf16 %v4588, %v4588
        %4591 = vrot.lane.b32.xlu0 %v4528, 64
        %v4592 = vpop.permute.xlu0 %4591
        %v4594 = vsel %vm2229, %v4589, 0
        %v4597 = vsel %vm2246, %v4592, 0
        %4599 = vmatpush.bf16.msra.mxu0 0
        %4600 = vmatpush.bf16.msra.mxu0 0
        %4601 = vmatpush.bf16.msra.mxu0 0
        %4602 = vmatpush.bf16.msra.mxu0 0
        %4603 = vmatpush.bf16.msra.mxu0 0
        %4604 = vmatpush.bf16.msra.mxu0 0
        %4605 = vmatpush.bf16.msra.mxu0 0
        %4606 = vmatpush.bf16.msra.mxu0 %v4597
        %4607 = vmatmul.bf16.gmra.mxu0 %v4594
        %v4608 = vpop.f32.mrf.mxu0
        %v4609 = vadd.f32 0.0, %v4608
        %v4610 = vpop.f32.mrf.mxu0
        %4611 = vdwg.mxu0
        %v4612 = vpack.c.bf16 %v4609, %v4609
        %v4614 = vsel %vm2201, %v4612, 0
        %4616 = vmatpush.bf16.msra.mxu0 0
        %4617 = vmatpush.bf16.msra.mxu0 0
        %4618 = vmatpush.bf16.msra.mxu0 0
        %4619 = vmatpush.bf16.msra.mxu0 0
        %4620 = vmatpush.bf16.msra.mxu0 %v4115
        %4621 = vmatpush.bf16.msra.mxu0 %v4113
        %4622 = vmatpush.bf16.msra.mxu0 %v4111
        %4623 = vmatpush.bf16.msra.mxu0 %v4109
        %4624 = vmatmul.bf16.gmra.mxu0 %v4614
        %v4625 = vpop.f32.mrf.mxu0
        %v4626 = vadd.f32 0.0, %v4625
        %v4627 = vpop.f32.mrf.mxu0
        %4628 = vdwg.mxu0
        %4629 = vmatpush.bf16.msra.mxu0 0
        %4630 = vmatpush.bf16.msra.mxu0 0
        %4631 = vmatpush.bf16.msra.mxu0 0
        %4632 = vmatpush.bf16.msra.mxu0 0
        %4633 = vmatpush.bf16.msra.mxu0 %v4116
        %4634 = vmatpush.bf16.msra.mxu0 %v4114
        %4635 = vmatpush.bf16.msra.mxu0 %v4112
        %4636 = vmatpush.bf16.msra.mxu0 %v4110
        %4637 = vmatmul.bf16.gmra.mxu0 %v4614
        %v4638 = vpop.f32.mrf.mxu0
        %v4639 = vadd.f32 0.0, %v4638
        %v4640 = vpop.f32.mrf.mxu0
        %4641 = vdwg.mxu0
        %v4643 = vsel %vm2201, %v4548, 0
        %4645 = vmatpush.bf16.msra.mxu0 0
        %4646 = vmatpush.bf16.msra.mxu0 0
        %4647 = vmatpush.bf16.msra.mxu0 0
        %4648 = vmatpush.bf16.msra.mxu0 0
        %4649 = vmatpush.bf16.msra.mxu0 %v4184
        %4650 = vmatpush.bf16.msra.mxu0 %v4182
        %4651 = vmatpush.bf16.msra.mxu0 %v4180
        %4652 = vmatpush.bf16.msra.mxu0 %v4178
        %4653 = vmatmul.bf16.gmra.mxu0 %v4643
        %v4654 = vpop.f32.mrf.mxu0
        %v4655 = vadd.f32 %v4626, %v4654
        %v4656 = vpop.f32.mrf.mxu0
        %4657 = vdwg.mxu0
        %4658 = vmatpush.bf16.msra.mxu0 0
        %4659 = vmatpush.bf16.msra.mxu0 0
        %4660 = vmatpush.bf16.msra.mxu0 0
        %4661 = vmatpush.bf16.msra.mxu0 0
        %4662 = vmatpush.bf16.msra.mxu0 %v4185
        %4663 = vmatpush.bf16.msra.mxu0 %v4183
        %4664 = vmatpush.bf16.msra.mxu0 %v4181
        %4665 = vmatpush.bf16.msra.mxu0 %v4179
        %4666 = vmatmul.bf16.gmra.mxu0 %v4643
        %v4667 = vpop.f32.mrf.mxu0
        %v4668 = vadd.f32 %v4639, %v4667
        %v4669 = vpop.f32.mrf.mxu0
        %4670 = vdwg.mxu0
        %v4672 = vsel %vm2201, %v3525, 0
        %v4675 = vsel %vm2201, %v3743, 0
        %4677 = vmatpush.xpose.msra.mxu0 0.0
        %4678 = vmatpush.xpose.msra.mxu0 0.0
        %4679 = vmatpush.xpose.msra.mxu0 0.0
        %4680 = vmatpush.xpose.msra.mxu0 0.0
        %4681 = vmatpush.xpose.msra.mxu0 0.0
        %4682 = vmatpush.xpose.msra.mxu0 0.0
        %4683 = vmatpush.xpose.msra.mxu0 0.0
        %4684 = vmatpush.xpose.msra.mxu0 0.0
        %4685 = vmatpush.xpose.msra.mxu0 0.0
        %4686 = vmatpush.xpose.msra.mxu0 0.0
        %4687 = vmatpush.xpose.msra.mxu0 0.0
        %4688 = vmatpush.xpose.msra.mxu0 0.0
        %4689 = vmatpush.xpose.msra.mxu0 0.0
        %4690 = vmatpush.xpose.msra.mxu0 0.0
        %4691 = vmatpush.xpose.msra.mxu0 0.0
        %4692 = vmatpush.xpose.msra.mxu0 %v4675
        %4693 = vmatmul.f32.gmra.mxu0 %v4672
        %v4694 = vpop.f32.mrf.mxu0
        %v4695 = vadd.f32 0.0, %v4694
        %4696 = vdwg.mxu0
        %v4697 = vmul.f32 %v4695, 0.125
        %v4698 = vsel %vm2229, %v4697, -inf
        %4699 = vmax.xlane.f32.xlu0 %v4698
        %v4700 = vpop.xlane.xlu0 %4699
        %v4701 = vsub.f32 %v4697, %v4700
        %v4702 = vmul.f32 %v4701, 1.442695
        %v4703 = vpow.pop %v4702
        %v4704 = vsel %vm2229, %v4703, 0.0
        %4705 = vadd.xlane.f32.xlu0 %v4704
        %v4706 = vpop.xlane.xlu0 %4705
        %v4707 = vrcp.pop %v4706
        %v4708 = vmul.f32 %v4703, %v4707
        %v4709 = vpack.c.bf16 %v4708, %v4708
        %v4710 = vpack.c.bf16 %v3959, %v3959
        %v4712 = vsel %vm2229, %v4709, 0
        %v4715 = vsel %vm2246, %v4710, 0
        %4717 = vmatpush.bf16.msra.mxu0 0
        %4718 = vmatpush.bf16.msra.mxu0 0
        %4719 = vmatpush.bf16.msra.mxu0 0
        %4720 = vmatpush.bf16.msra.mxu0 0
        %4721 = vmatpush.bf16.msra.mxu0 0
        %4722 = vmatpush.bf16.msra.mxu0 0
        %4723 = vmatpush.bf16.msra.mxu0 0
        %4724 = vmatpush.bf16.msra.mxu0 %v4715
        %4725 = vmatmul.bf16.gmra.mxu0 %v4712
        %v4726 = vpop.f32.mrf.mxu0
        %v4727 = vadd.f32 0.0, %v4726
        %v4728 = vpop.f32.mrf.mxu0
        %4729 = vdwg.mxu0
        %v4730 = vpack.c.bf16 %v4727, %v4727
        %v4732 = vsel %vm2201, %v4730, 0
        %4734 = vmatpush.bf16.msra.mxu0 0
        %4735 = vmatpush.bf16.msra.mxu0 0
        %4736 = vmatpush.bf16.msra.mxu0 0
        %4737 = vmatpush.bf16.msra.mxu0 0
        %4738 = vmatpush.bf16.msra.mxu0 %v4313
        %4739 = vmatpush.bf16.msra.mxu0 %v4311
        %4740 = vmatpush.bf16.msra.mxu0 %v4309
        %4741 = vmatpush.bf16.msra.mxu0 %v4307
        %4742 = vmatmul.bf16.gmra.mxu0 %v4732
        %v4743 = vpop.f32.mrf.mxu0
        %v4744 = vadd.f32 0.0, %v4743
        %v4745 = vpop.f32.mrf.mxu0
        %4746 = vdwg.mxu0
        %4747 = vmatpush.bf16.msra.mxu0 0
        %4748 = vmatpush.bf16.msra.mxu0 0
        %4749 = vmatpush.bf16.msra.mxu0 0
        %4750 = vmatpush.bf16.msra.mxu0 0
        %4751 = vmatpush.bf16.msra.mxu0 %v4314
        %4752 = vmatpush.bf16.msra.mxu0 %v4312
        %4753 = vmatpush.bf16.msra.mxu0 %v4310
        %4754 = vmatpush.bf16.msra.mxu0 %v4308
        %4755 = vmatmul.bf16.gmra.mxu0 %v4732
        %v4756 = vpop.f32.mrf.mxu0
        %v4757 = vadd.f32 0.0, %v4756
        %v4758 = vpop.f32.mrf.mxu0
        %4759 = vdwg.mxu0
        %v4760 = vadd.f32 %v4655, %v4744
        %v4761 = vadd.f32 %v4668, %v4757
        %4762 = vrot.lane.b32.xlu0 %v3525, 64
        %v4763 = vpop.permute.xlu0 %4762
        %4764 = vrot.lane.b32.xlu0 %v3743, 64
        %v4765 = vpop.permute.xlu0 %4764
        %v4766 = vsel %vm2201, %v4763, 0
        %v4768 = vsel %vm2201, %v4765, 0
        %4770 = vmatpush.xpose.msra.mxu0 0.0
        %4771 = vmatpush.xpose.msra.mxu0 0.0
        %4772 = vmatpush.xpose.msra.mxu0 0.0
        %4773 = vmatpush.xpose.msra.mxu0 0.0
        %4774 = vmatpush.xpose.msra.mxu0 0.0
        %4775 = vmatpush.xpose.msra.mxu0 0.0
        %4776 = vmatpush.xpose.msra.mxu0 0.0
        %4777 = vmatpush.xpose.msra.mxu0 0.0
        %4778 = vmatpush.xpose.msra.mxu0 0.0
        %4779 = vmatpush.xpose.msra.mxu0 0.0
        %4780 = vmatpush.xpose.msra.mxu0 0.0
        %4781 = vmatpush.xpose.msra.mxu0 0.0
        %4782 = vmatpush.xpose.msra.mxu0 0.0
        %4783 = vmatpush.xpose.msra.mxu0 0.0
        %4784 = vmatpush.xpose.msra.mxu0 0.0
        %4785 = vmatpush.xpose.msra.mxu0 %v4768
        %4786 = vmatmul.f32.gmra.mxu0 %v4766
        %v4787 = vpop.f32.mrf.mxu0
        %v4788 = vadd.f32 0.0, %v4787
        %4789 = vdwg.mxu0
        %v4790 = vmul.f32 %v4788, 0.125
        %v4791 = vsel %vm2229, %v4790, -inf
        %4792 = vmax.xlane.f32.xlu0 %v4791
        %v4793 = vpop.xlane.xlu0 %4792
        %v4794 = vsub.f32 %v4790, %v4793
        %v4795 = vmul.f32 %v4794, 1.442695
        %v4796 = vpow.pop %v4795
        %v4797 = vsel %vm2229, %v4796, 0.0
        %4798 = vadd.xlane.f32.xlu0 %v4797
        %v4799 = vpop.xlane.xlu0 %4798
        %v4800 = vrcp.pop %v4799
        %v4801 = vmul.f32 %v4796, %v4800
        %v4802 = vpack.c.bf16 %v4801, %v4801
        %4804 = vrot.lane.b32.xlu0 %v4710, 64
        %v4805 = vpop.permute.xlu0 %4804
        %v4807 = vsel %vm2229, %v4802, 0
        %v4810 = vsel %vm2246, %v4805, 0
        %4812 = vmatpush.bf16.msra.mxu0 0
        %4813 = vmatpush.bf16.msra.mxu0 0
        %4814 = vmatpush.bf16.msra.mxu0 0
        %4815 = vmatpush.bf16.msra.mxu0 0
        %4816 = vmatpush.bf16.msra.mxu0 0
        %4817 = vmatpush.bf16.msra.mxu0 0
        %4818 = vmatpush.bf16.msra.mxu0 0
        %4819 = vmatpush.bf16.msra.mxu0 %v4810
        %4820 = vmatmul.bf16.gmra.mxu0 %v4807
        %v4821 = vpop.f32.mrf.mxu0
        %v4822 = vadd.f32 0.0, %v4821
        %v4823 = vpop.f32.mrf.mxu0
        %4824 = vdwg.mxu0
        %v4825 = vpack.c.bf16 %v4822, %v4822
        %v4827 = vsel %vm2201, %v4825, 0
        %4829 = vmatpush.bf16.msra.mxu0 0
        %4830 = vmatpush.bf16.msra.mxu0 0
        %4831 = vmatpush.bf16.msra.mxu0 0
        %4832 = vmatpush.bf16.msra.mxu0 0
        %4833 = vmatpush.bf16.msra.mxu0 %v4448
        %4834 = vmatpush.bf16.msra.mxu0 %v4446
        %4835 = vmatpush.bf16.msra.mxu0 %v4444
        %4836 = vmatpush.bf16.msra.mxu0 %v4442
        %4837 = vmatmul.bf16.gmra.mxu0 %v4827
        %v4838 = vpop.f32.mrf.mxu0
        %v4839 = vadd.f32 0.0, %v4838
        %v4840 = vpop.f32.mrf.mxu0
        %4841 = vdwg.mxu0
        %4842 = vmatpush.bf16.msra.mxu0 0
        %4843 = vmatpush.bf16.msra.mxu0 0
        %4844 = vmatpush.bf16.msra.mxu0 0
        %4845 = vmatpush.bf16.msra.mxu0 0
        %4846 = vmatpush.bf16.msra.mxu0 %v4449
        %4847 = vmatpush.bf16.msra.mxu0 %v4447
        %4848 = vmatpush.bf16.msra.mxu0 %v4445
        %4849 = vmatpush.bf16.msra.mxu0 %v4443
        %4850 = vmatmul.bf16.gmra.mxu0 %v4827
        %v4851 = vpop.f32.mrf.mxu0
        %v4852 = vadd.f32 0.0, %v4851
        %v4853 = vpop.f32.mrf.mxu0
        %4854 = vdwg.mxu0
        %v4855 = vadd.f32 %v4760, %v4839
        %v4856 = vadd.f32 %v4761, %v4852
        %v4857 = vld [vmem:[%s1135] sm:$0x3]
        %v4858 = vld [vmem:[%s1145] sm:$0x3]
        %v4859 = vadd.f32 %v4487, %v4488
        %4860 = vadd.xlane.f32.xlu0 %v4859
        %v4861 = vpop.xlane.xlu0 %4860
        %v4862 = vadd.f32 %v4855, %v4856
        %4863 = vadd.xlane.f32.xlu0 %v4862
        %v4864 = vpop.xlane.xlu0 %4863
        %v4865 = vmul.f32 %v4861, %v3114
        %v4866 = vmul.f32 %v4864, %v3114
        %v4867 = vsub.f32 %v4487, %v4865
        %v4868 = vsub.f32 %v4488, %v4865
        %v4869 = vsub.f32 %v4855, %v4866
        %v4870 = vsub.f32 %v4856, %v4866
        %v4871 = vmul.f32 %v4867, %v4867
        %v4872 = vmul.f32 %v4868, %v4868
        %v4873 = vmul.f32 %v4869, %v4869
        %v4874 = vmul.f32 %v4870, %v4870
        %v4875 = vadd.f32 %v4871, %v4872
        %4876 = vadd.xlane.f32.xlu0 %v4875
        %v4877 = vpop.xlane.xlu0 %4876
        %v4878 = vadd.f32 %v4873, %v4874
        %4879 = vadd.xlane.f32.xlu0 %v4878
        %v4880 = vpop.xlane.xlu0 %4879
        %v4881 = vmul.f32 %v4877, %v3114
        %v4882 = vmul.f32 %v4880, %v3114
        %v4883 = vadd.f32 %v4881, 1e-05
        %v4884 = vadd.f32 %v4882, 1e-05
        %v4885 = vrsqrt.pop %v4883
        %v4886 = vmul.f32 %v4885, %v4883
        %v4887 = vmul.f32 %v4886, %v4885
        %v4888 = vmul.f32 0.5, %v4887
        %v4889 = vsub.f32 1.5, %v4888
        %v4890 = vmul.f32 %v4885, %v4889
        %vm4891 = vweird.f32 %v4883
        %vm4892 = vweird.f32 %v4885
        %vm4893 = vmor %vm4891, %vm4892
        %v4894 = vsel %vm4893, %v4885, %v4890
        %v4895 = vrsqrt.pop %v4884
        %v4896 = vmul.f32 %v4895, %v4884
        %v4897 = vmul.f32 %v4896, %v4895
        %v4898 = vmul.f32 0.5, %v4897
        %v4899 = vsub.f32 1.5, %v4898
        %v4900 = vmul.f32 %v4895, %v4899
        %vm4901 = vweird.f32 %v4884
        %vm4902 = vweird.f32 %v4895
        %vm4903 = vmor %vm4901, %vm4902
        %v4904 = vsel %vm4903, %v4895, %v4900
        %v4905 = vmul.f32 %v4867, %v4894
        %v4906 = vmul.f32 %v4868, %v4894
        %v4907 = vmul.f32 %v4869, %v4904
        %v4908 = vmul.f32 %v4870, %v4904
        %v4910 = vperm.slane %v4857, 0
        %v4911 = vperm.slane %v4857, 1
        %v4914 = vmul.f32 %v4905, %v4910
        %v4915 = vmul.f32 %v4906, %v4911
        %v4916 = vmul.f32 %v4907, %v4910
        %v4917 = vmul.f32 %v4908, %v4911
        %v4919 = vperm.slane %v4858, 0
        %v4920 = vperm.slane %v4858, 1
        %v4923 = vadd.f32 %v4914, %v4919
        %v4924 = vadd.f32 %v4915, %v4920
        %v4925 = vadd.f32 %v4916, %v4919
        %v4926 = vadd.f32 %v4917, %v4920
        %v4927 = vadd.f32 %v3177, %v4923
        %v4928 = vadd.f32 %v3178, %v4924
        %v4929 = vadd.f32 %v3179, %v4925
        %v4930 = vadd.f32 %v3180, %v4926
        %v4931 = vpack.c.bf16 %v4929, %v4927
        %v4932 = vpack.c.bf16 %v4930, %v4928
        %v4933 = vld [vmem:[%s1155] sm:$0xff]
        %v4934 = vld [vmem:[%s1155 + $0x8] sm:$0xff]
        %v4935 = vld [vmem:[%s1155 + $0x10] sm:$0xff]
        %v4936 = vld [vmem:[%s1155 + $0x18] sm:$0xff]
        %v4937 = vld [vmem:[%s1155 + $0x20] sm:$0xff]
        %v4938 = vld [vmem:[%s1155 + $0x28] sm:$0xff]
        %v4939 = vld [vmem:[%s1155 + $0x30] sm:$0xff]
        %v4940 = vld [vmem:[%s1155 + $0x38] sm:$0xff]
        %v4941 = vld [vmem:[%s1155 + $0x40] sm:$0xff]
        %v4942 = vld [vmem:[%s1155 + $0x48] sm:$0xff]
        %v4943 = vld [vmem:[%s1155 + $0x50] sm:$0xff]
        %v4944 = vld [vmem:[%s1155 + $0x58] sm:$0xff]
        %v4945 = vld [vmem:[%s1155 + $0x60] sm:$0xff]
        %v4946 = vld [vmem:[%s1155 + $0x68] sm:$0xff]
        %v4947 = vld [vmem:[%s1155 + $0x70] sm:$0xff]
        %v4948 = vld [vmem:[%s1155 + $0x78] sm:$0xff]
        %v4949 = vld [vmem:[%s1155 + $0x80] sm:$0xff]
        %v4950 = vld [vmem:[%s1155 + $0x88] sm:$0xff]
        %v4951 = vld [vmem:[%s1155 + $0x90] sm:$0xff]
        %v4952 = vld [vmem:[%s1155 + $0x98] sm:$0xff]
        %v4953 = vld [vmem:[%s1155 + $0xa0] sm:$0xff]
        %v4954 = vld [vmem:[%s1155 + $0xa8] sm:$0xff]
        %v4955 = vld [vmem:[%s1155 + $0xb0] sm:$0xff]
        %v4956 = vld [vmem:[%s1155 + $0xb8] sm:$0xff]
        %v4957 = vld [vmem:[%s1155 + $0xc0] sm:$0xff]
        %v4958 = vld [vmem:[%s1155 + $0xc8] sm:$0xff]
        %v4959 = vld [vmem:[%s1155 + $0xd0] sm:$0xff]
        %v4960 = vld [vmem:[%s1155 + $0xd8] sm:$0xff]
        %v4961 = vld [vmem:[%s1155 + $0xe0] sm:$0xff]
        %v4962 = vld [vmem:[%s1155 + $0xe8] sm:$0xff]
        %v4963 = vld [vmem:[%s1155 + $0xf0] sm:$0xff]
        %v4964 = vld [vmem:[%s1155 + $0xf8] sm:$0xff]
        %v4965 = vld [vmem:[%s1155 + $0x100] sm:$0xff]
        %v4966 = vld [vmem:[%s1155 + $0x108] sm:$0xff]
        %v4967 = vld [vmem:[%s1155 + $0x110] sm:$0xff]
        %v4968 = vld [vmem:[%s1155 + $0x118] sm:$0xff]
        %v4969 = vld [vmem:[%s1155 + $0x120] sm:$0xff]
        %v4970 = vld [vmem:[%s1155 + $0x128] sm:$0xff]
        %v4971 = vld [vmem:[%s1155 + $0x130] sm:$0xff]
        %v4972 = vld [vmem:[%s1155 + $0x138] sm:$0xff]
        %v4973 = vld [vmem:[%s1155 + $0x140] sm:$0xff]
        %v4974 = vld [vmem:[%s1155 + $0x148] sm:$0xff]
        %v4975 = vld [vmem:[%s1155 + $0x150] sm:$0xff]
        %v4976 = vld [vmem:[%s1155 + $0x158] sm:$0xff]
        %v4977 = vld [vmem:[%s1155 + $0x160] sm:$0xff]
        %v4978 = vld [vmem:[%s1155 + $0x168] sm:$0xff]
        %v4979 = vld [vmem:[%s1155 + $0x170] sm:$0xff]
        %v4980 = vld [vmem:[%s1155 + $0x178] sm:$0xff]
        %v4981 = vld [vmem:[%s1155 + $0x180] sm:$0xff]
        %v4982 = vld [vmem:[%s1155 + $0x188] sm:$0xff]
        %v4983 = vld [vmem:[%s1155 + $0x190] sm:$0xff]
        %v4984 = vld [vmem:[%s1155 + $0x198] sm:$0xff]
        %v4985 = vld [vmem:[%s1155 + $0x1a0] sm:$0xff]
        %v4986 = vld [vmem:[%s1155 + $0x1a8] sm:$0xff]
        %v4987 = vld [vmem:[%s1155 + $0x1b0] sm:$0xff]
        %v4988 = vld [vmem:[%s1155 + $0x1b8] sm:$0xff]
        %v4989 = vld [vmem:[%s1155 + $0x1c0] sm:$0xff]
        %v4990 = vld [vmem:[%s1155 + $0x1c8] sm:$0xff]
        %v4991 = vld [vmem:[%s1155 + $0x1d0] sm:$0xff]
        %v4992 = vld [vmem:[%s1155 + $0x1d8] sm:$0xff]
        %v4993 = vld [vmem:[%s1155 + $0x1e0] sm:$0xff]
        %v4994 = vld [vmem:[%s1155 + $0x1e8] sm:$0xff]
        %v4995 = vld [vmem:[%s1155 + $0x1f0] sm:$0xff]
        %v4996 = vld [vmem:[%s1155 + $0x1f8] sm:$0xff]
        %v4997 = vld [vmem:[%s1155 + $0x200] sm:$0xff]
        %v4998 = vld [vmem:[%s1155 + $0x208] sm:$0xff]
        %v4999 = vld [vmem:[%s1155 + $0x210] sm:$0xff]
        %v5000 = vld [vmem:[%s1155 + $0x218] sm:$0xff]
        %v5001 = vld [vmem:[%s1155 + $0x220] sm:$0xff]
        %v5002 = vld [vmem:[%s1155 + $0x228] sm:$0xff]
        %v5003 = vld [vmem:[%s1155 + $0x230] sm:$0xff]
        %v5004 = vld [vmem:[%s1155 + $0x238] sm:$0xff]
        %v5005 = vld [vmem:[%s1155 + $0x240] sm:$0xff]
        %v5006 = vld [vmem:[%s1155 + $0x248] sm:$0xff]
        %v5007 = vld [vmem:[%s1155 + $0x250] sm:$0xff]
        %v5008 = vld [vmem:[%s1155 + $0x258] sm:$0xff]
        %v5009 = vld [vmem:[%s1155 + $0x260] sm:$0xff]
        %v5010 = vld [vmem:[%s1155 + $0x268] sm:$0xff]
        %v5011 = vld [vmem:[%s1155 + $0x270] sm:$0xff]
        %v5012 = vld [vmem:[%s1155 + $0x278] sm:$0xff]
        %v5013 = vld [vmem:[%s1155 + $0x280] sm:$0xff]
        %v5014 = vld [vmem:[%s1155 + $0x288] sm:$0xff]
        %v5015 = vld [vmem:[%s1155 + $0x290] sm:$0xff]
        %v5016 = vld [vmem:[%s1155 + $0x298] sm:$0xff]
        %v5017 = vld [vmem:[%s1155 + $0x2a0] sm:$0xff]
        %v5018 = vld [vmem:[%s1155 + $0x2a8] sm:$0xff]
        %v5019 = vld [vmem:[%s1155 + $0x2b0] sm:$0xff]
        %v5020 = vld [vmem:[%s1155 + $0x2b8] sm:$0xff]
        %v5021 = vld [vmem:[%s1155 + $0x2c0] sm:$0xff]
        %v5022 = vld [vmem:[%s1155 + $0x2c8] sm:$0xff]
        %v5023 = vld [vmem:[%s1155 + $0x2d0] sm:$0xff]
        %v5024 = vld [vmem:[%s1155 + $0x2d8] sm:$0xff]
        %v5025 = vld [vmem:[%s1155 + $0x2e0] sm:$0xff]
        %v5026 = vld [vmem:[%s1155 + $0x2e8] sm:$0xff]
        %v5027 = vld [vmem:[%s1155 + $0x2f0] sm:$0xff]
        %v5028 = vld [vmem:[%s1155 + $0x2f8] sm:$0xff]
        %v5029 = vld [vmem:[%s1155 + $0x300] sm:$0xff]
        %v5030 = vld [vmem:[%s1155 + $0x308] sm:$0xff]
        %v5031 = vld [vmem:[%s1155 + $0x310] sm:$0xff]
        %v5032 = vld [vmem:[%s1155 + $0x318] sm:$0xff]
        %v5033 = vld [vmem:[%s1155 + $0x320] sm:$0xff]
        %v5034 = vld [vmem:[%s1155 + $0x328] sm:$0xff]
        %v5035 = vld [vmem:[%s1155 + $0x330] sm:$0xff]
        %v5036 = vld [vmem:[%s1155 + $0x338] sm:$0xff]
        %v5037 = vld [vmem:[%s1155 + $0x340] sm:$0xff]
        %v5038 = vld [vmem:[%s1155 + $0x348] sm:$0xff]
        %v5039 = vld [vmem:[%s1155 + $0x350] sm:$0xff]
        %v5040 = vld [vmem:[%s1155 + $0x358] sm:$0xff]
        %v5041 = vld [vmem:[%s1155 + $0x360] sm:$0xff]
        %v5042 = vld [vmem:[%s1155 + $0x368] sm:$0xff]
        %v5043 = vld [vmem:[%s1155 + $0x370] sm:$0xff]
        %v5044 = vld [vmem:[%s1155 + $0x378] sm:$0xff]
        %v5045 = vld [vmem:[%s1155 + $0x380] sm:$0xff]
        %v5046 = vld [vmem:[%s1155 + $0x388] sm:$0xff]
        %v5047 = vld [vmem:[%s1155 + $0x390] sm:$0xff]
        %v5048 = vld [vmem:[%s1155 + $0x398] sm:$0xff]
        %v5049 = vld [vmem:[%s1155 + $0x3a0] sm:$0xff]
        %v5050 = vld [vmem:[%s1155 + $0x3a8] sm:$0xff]
        %v5051 = vld [vmem:[%s1155 + $0x3b0] sm:$0xff]
        %v5052 = vld [vmem:[%s1155 + $0x3b8] sm:$0xff]
        %v5053 = vld [vmem:[%s1155 + $0x3c0] sm:$0xff]
        %v5054 = vld [vmem:[%s1155 + $0x3c8] sm:$0xff]
        %v5055 = vld [vmem:[%s1155 + $0x3d0] sm:$0xff]
        %v5056 = vld [vmem:[%s1155 + $0x3d8] sm:$0xff]
        %v5057 = vld [vmem:[%s1155 + $0x3e0] sm:$0xff]
        %v5058 = vld [vmem:[%s1155 + $0x3e8] sm:$0xff]
        %v5059 = vld [vmem:[%s1155 + $0x3f0] sm:$0xff]
        %v5060 = vld [vmem:[%s1155 + $0x3f8] sm:$0xff]
        %v5189 = vunpack.c.l.b16 %v4933
        %v5190 = vunpack.c.h.b16 %v4933
        %v5191 = vunpack.c.l.b16 %v4934
        %v5192 = vunpack.c.h.b16 %v4934
        %v5193 = vunpack.c.l.b16 %v4935
        %v5194 = vunpack.c.h.b16 %v4935
        %v5195 = vunpack.c.l.b16 %v4936
        %v5196 = vunpack.c.h.b16 %v4936
        %v5197 = vunpack.c.l.b16 %v4937
        %v5198 = vunpack.c.h.b16 %v4937
        %v5199 = vunpack.c.l.b16 %v4938
        %v5200 = vunpack.c.h.b16 %v4938
        %v5201 = vunpack.c.l.b16 %v4939
        %v5202 = vunpack.c.h.b16 %v4939
        %v5203 = vunpack.c.l.b16 %v4940
        %v5204 = vunpack.c.h.b16 %v4940
        %v5205 = vunpack.c.l.b16 %v4941
        %v5206 = vunpack.c.h.b16 %v4941
        %v5207 = vunpack.c.l.b16 %v4942
        %v5208 = vunpack.c.h.b16 %v4942
        %v5209 = vunpack.c.l.b16 %v4943
        %v5210 = vunpack.c.h.b16 %v4943
        %v5211 = vunpack.c.l.b16 %v4944
        %v5212 = vunpack.c.h.b16 %v4944
        %v5213 = vunpack.c.l.b16 %v4945
        %v5214 = vunpack.c.h.b16 %v4945
        %v5215 = vunpack.c.l.b16 %v4946
        %v5216 = vunpack.c.h.b16 %v4946
        %v5217 = vunpack.c.l.b16 %v4947
        %v5218 = vunpack.c.h.b16 %v4947
        %v5219 = vunpack.c.l.b16 %v4948
        %v5220 = vunpack.c.h.b16 %v4948
        %v5221 = vunpack.c.l.b16 %v4949
        %v5222 = vunpack.c.h.b16 %v4949
        %v5223 = vunpack.c.l.b16 %v4950
        %v5224 = vunpack.c.h.b16 %v4950
        %v5225 = vunpack.c.l.b16 %v4951
        %v5226 = vunpack.c.h.b16 %v4951
        %v5227 = vunpack.c.l.b16 %v4952
        %v5228 = vunpack.c.h.b16 %v4952
        %v5229 = vunpack.c.l.b16 %v4953
        %v5230 = vunpack.c.h.b16 %v4953
        %v5231 = vunpack.c.l.b16 %v4954
        %v5232 = vunpack.c.h.b16 %v4954
        %v5233 = vunpack.c.l.b16 %v4955
        %v5234 = vunpack.c.h.b16 %v4955
        %v5235 = vunpack.c.l.b16 %v4956
        %v5236 = vunpack.c.h.b16 %v4956
        %v5237 = vunpack.c.l.b16 %v4957
        %v5238 = vunpack.c.h.b16 %v4957
        %v5239 = vunpack.c.l.b16 %v4958
        %v5240 = vunpack.c.h.b16 %v4958
        %v5241 = vunpack.c.l.b16 %v4959
        %v5242 = vunpack.c.h.b16 %v4959
        %v5243 = vunpack.c.l.b16 %v4960
        %v5244 = vunpack.c.h.b16 %v4960
        %v5245 = vunpack.c.l.b16 %v4961
        %v5246 = vunpack.c.h.b16 %v4961
        %v5247 = vunpack.c.l.b16 %v4962
        %v5248 = vunpack.c.h.b16 %v4962
        %v5249 = vunpack.c.l.b16 %v4963
        %v5250 = vunpack.c.h.b16 %v4963
        %v5251 = vunpack.c.l.b16 %v4964
        %v5252 = vunpack.c.h.b16 %v4964
        %v5253 = vunpack.c.l.b16 %v4965
        %v5254 = vunpack.c.h.b16 %v4965
        %v5255 = vunpack.c.l.b16 %v4966
        %v5256 = vunpack.c.h.b16 %v4966
        %v5257 = vunpack.c.l.b16 %v4967
        %v5258 = vunpack.c.h.b16 %v4967
        %v5259 = vunpack.c.l.b16 %v4968
        %v5260 = vunpack.c.h.b16 %v4968
        %v5261 = vunpack.c.l.b16 %v4969
        %v5262 = vunpack.c.h.b16 %v4969
        %v5263 = vunpack.c.l.b16 %v4970
        %v5264 = vunpack.c.h.b16 %v4970
        %v5265 = vunpack.c.l.b16 %v4971
        %v5266 = vunpack.c.h.b16 %v4971
        %v5267 = vunpack.c.l.b16 %v4972
        %v5268 = vunpack.c.h.b16 %v4972
        %v5269 = vunpack.c.l.b16 %v4973
        %v5270 = vunpack.c.h.b16 %v4973
        %v5271 = vunpack.c.l.b16 %v4974
        %v5272 = vunpack.c.h.b16 %v4974
        %v5273 = vunpack.c.l.b16 %v4975
        %v5274 = vunpack.c.h.b16 %v4975
        %v5275 = vunpack.c.l.b16 %v4976
        %v5276 = vunpack.c.h.b16 %v4976
        %v5277 = vunpack.c.l.b16 %v4977
        %v5278 = vunpack.c.h.b16 %v4977
        %v5279 = vunpack.c.l.b16 %v4978
        %v5280 = vunpack.c.h.b16 %v4978
        %v5281 = vunpack.c.l.b16 %v4979
        %v5282 = vunpack.c.h.b16 %v4979
        %v5283 = vunpack.c.l.b16 %v4980
        %v5284 = vunpack.c.h.b16 %v4980
        %v5285 = vunpack.c.l.b16 %v4981
        %v5286 = vunpack.c.h.b16 %v4981
        %v5287 = vunpack.c.l.b16 %v4982
        %v5288 = vunpack.c.h.b16 %v4982
        %v5289 = vunpack.c.l.b16 %v4983
        %v5290 = vunpack.c.h.b16 %v4983
        %v5291 = vunpack.c.l.b16 %v4984
        %v5292 = vunpack.c.h.b16 %v4984
        %v5293 = vunpack.c.l.b16 %v4985
        %v5294 = vunpack.c.h.b16 %v4985
        %v5295 = vunpack.c.l.b16 %v4986
        %v5296 = vunpack.c.h.b16 %v4986
        %v5297 = vunpack.c.l.b16 %v4987
        %v5298 = vunpack.c.h.b16 %v4987
        %v5299 = vunpack.c.l.b16 %v4988
        %v5300 = vunpack.c.h.b16 %v4988
        %v5301 = vunpack.c.l.b16 %v4989
        %v5302 = vunpack.c.h.b16 %v4989
        %v5303 = vunpack.c.l.b16 %v4990
        %v5304 = vunpack.c.h.b16 %v4990
        %v5305 = vunpack.c.l.b16 %v4991
        %v5306 = vunpack.c.h.b16 %v4991
        %v5307 = vunpack.c.l.b16 %v4992
        %v5308 = vunpack.c.h.b16 %v4992
        %v5309 = vunpack.c.l.b16 %v4993
        %v5310 = vunpack.c.h.b16 %v4993
        %v5311 = vunpack.c.l.b16 %v4994
        %v5312 = vunpack.c.h.b16 %v4994
        %v5313 = vunpack.c.l.b16 %v4995
        %v5314 = vunpack.c.h.b16 %v4995
        %v5315 = vunpack.c.l.b16 %v4996
        %v5316 = vunpack.c.h.b16 %v4996
        %v5317 = vunpack.c.l.b16 %v4997
        %v5318 = vunpack.c.h.b16 %v4997
        %v5319 = vunpack.c.l.b16 %v4998
        %v5320 = vunpack.c.h.b16 %v4998
        %v5321 = vunpack.c.l.b16 %v4999
        %v5322 = vunpack.c.h.b16 %v4999
        %v5323 = vunpack.c.l.b16 %v5000
        %v5324 = vunpack.c.h.b16 %v5000
        %v5325 = vunpack.c.l.b16 %v5001
        %v5326 = vunpack.c.h.b16 %v5001
        %v5327 = vunpack.c.l.b16 %v5002
        %v5328 = vunpack.c.h.b16 %v5002
        %v5329 = vunpack.c.l.b16 %v5003
        %v5330 = vunpack.c.h.b16 %v5003
        %v5331 = vunpack.c.l.b16 %v5004
        %v5332 = vunpack.c.h.b16 %v5004
        %v5333 = vunpack.c.l.b16 %v5005
        %v5334 = vunpack.c.h.b16 %v5005
        %v5335 = vunpack.c.l.b16 %v5006
        %v5336 = vunpack.c.h.b16 %v5006
        %v5337 = vunpack.c.l.b16 %v5007
        %v5338 = vunpack.c.h.b16 %v5007
        %v5339 = vunpack.c.l.b16 %v5008
        %v5340 = vunpack.c.h.b16 %v5008
        %v5341 = vunpack.c.l.b16 %v5009
        %v5342 = vunpack.c.h.b16 %v5009
        %v5343 = vunpack.c.l.b16 %v5010
        %v5344 = vunpack.c.h.b16 %v5010
        %v5345 = vunpack.c.l.b16 %v5011
        %v5346 = vunpack.c.h.b16 %v5011
        %v5347 = vunpack.c.l.b16 %v5012
        %v5348 = vunpack.c.h.b16 %v5012
        %v5349 = vunpack.c.l.b16 %v5013
        %v5350 = vunpack.c.h.b16 %v5013
        %v5351 = vunpack.c.l.b16 %v5014
        %v5352 = vunpack.c.h.b16 %v5014
        %v5353 = vunpack.c.l.b16 %v5015
        %v5354 = vunpack.c.h.b16 %v5015
        %v5355 = vunpack.c.l.b16 %v5016
        %v5356 = vunpack.c.h.b16 %v5016
        %v5357 = vunpack.c.l.b16 %v5017
        %v5358 = vunpack.c.h.b16 %v5017
        %v5359 = vunpack.c.l.b16 %v5018
        %v5360 = vunpack.c.h.b16 %v5018
        %v5361 = vunpack.c.l.b16 %v5019
        %v5362 = vunpack.c.h.b16 %v5019
        %v5363 = vunpack.c.l.b16 %v5020
        %v5364 = vunpack.c.h.b16 %v5020
        %v5365 = vunpack.c.l.b16 %v5021
        %v5366 = vunpack.c.h.b16 %v5021
        %v5367 = vunpack.c.l.b16 %v5022
        %v5368 = vunpack.c.h.b16 %v5022
        %v5369 = vunpack.c.l.b16 %v5023
        %v5370 = vunpack.c.h.b16 %v5023
        %v5371 = vunpack.c.l.b16 %v5024
        %v5372 = vunpack.c.h.b16 %v5024
        %v5373 = vunpack.c.l.b16 %v5025
        %v5374 = vunpack.c.h.b16 %v5025
        %v5375 = vunpack.c.l.b16 %v5026
        %v5376 = vunpack.c.h.b16 %v5026
        %v5377 = vunpack.c.l.b16 %v5027
        %v5378 = vunpack.c.h.b16 %v5027
        %v5379 = vunpack.c.l.b16 %v5028
        %v5380 = vunpack.c.h.b16 %v5028
        %v5381 = vunpack.c.l.b16 %v5029
        %v5382 = vunpack.c.h.b16 %v5029
        %v5383 = vunpack.c.l.b16 %v5030
        %v5384 = vunpack.c.h.b16 %v5030
        %v5385 = vunpack.c.l.b16 %v5031
        %v5386 = vunpack.c.h.b16 %v5031
        %v5387 = vunpack.c.l.b16 %v5032
        %v5388 = vunpack.c.h.b16 %v5032
        %v5389 = vunpack.c.l.b16 %v5033
        %v5390 = vunpack.c.h.b16 %v5033
        %v5391 = vunpack.c.l.b16 %v5034
        %v5392 = vunpack.c.h.b16 %v5034
        %v5393 = vunpack.c.l.b16 %v5035
        %v5394 = vunpack.c.h.b16 %v5035
        %v5395 = vunpack.c.l.b16 %v5036
        %v5396 = vunpack.c.h.b16 %v5036
        %v5397 = vunpack.c.l.b16 %v5037
        %v5398 = vunpack.c.h.b16 %v5037
        %v5399 = vunpack.c.l.b16 %v5038
        %v5400 = vunpack.c.h.b16 %v5038
        %v5401 = vunpack.c.l.b16 %v5039
        %v5402 = vunpack.c.h.b16 %v5039
        %v5403 = vunpack.c.l.b16 %v5040
        %v5404 = vunpack.c.h.b16 %v5040
        %v5405 = vunpack.c.l.b16 %v5041
        %v5406 = vunpack.c.h.b16 %v5041
        %v5407 = vunpack.c.l.b16 %v5042
        %v5408 = vunpack.c.h.b16 %v5042
        %v5409 = vunpack.c.l.b16 %v5043
        %v5410 = vunpack.c.h.b16 %v5043
        %v5411 = vunpack.c.l.b16 %v5044
        %v5412 = vunpack.c.h.b16 %v5044
        %v5413 = vunpack.c.l.b16 %v5045
        %v5414 = vunpack.c.h.b16 %v5045
        %v5415 = vunpack.c.l.b16 %v5046
        %v5416 = vunpack.c.h.b16 %v5046
        %v5417 = vunpack.c.l.b16 %v5047
        %v5418 = vunpack.c.h.b16 %v5047
        %v5419 = vunpack.c.l.b16 %v5048
        %v5420 = vunpack.c.h.b16 %v5048
        %v5421 = vunpack.c.l.b16 %v5049
        %v5422 = vunpack.c.h.b16 %v5049
        %v5423 = vunpack.c.l.b16 %v5050
        %v5424 = vunpack.c.h.b16 %v5050
        %v5425 = vunpack.c.l.b16 %v5051
        %v5426 = vunpack.c.h.b16 %v5051
        %v5427 = vunpack.c.l.b16 %v5052
        %v5428 = vunpack.c.h.b16 %v5052
        %v5429 = vunpack.c.l.b16 %v5053
        %v5430 = vunpack.c.h.b16 %v5053
        %v5431 = vunpack.c.l.b16 %v5054
        %v5432 = vunpack.c.h.b16 %v5054
        %v5433 = vunpack.c.l.b16 %v5055
        %v5434 = vunpack.c.h.b16 %v5055
        %v5435 = vunpack.c.l.b16 %v5056
        %v5436 = vunpack.c.h.b16 %v5056
        %v5437 = vunpack.c.l.b16 %v5057
        %v5438 = vunpack.c.h.b16 %v5057
        %v5439 = vunpack.c.l.b16 %v5058
        %v5440 = vunpack.c.h.b16 %v5058
        %v5441 = vunpack.c.l.b16 %v5059
        %v5442 = vunpack.c.h.b16 %v5059
        %v5443 = vunpack.c.l.b16 %v5060
        %v5444 = vunpack.c.h.b16 %v5060
        %v5445 = vpack.c.b16 %v5197, %v5189
        %v5446 = vpack.c.b16 %v5198, %v5190
        %v5447 = vpack.c.b16 %v5199, %v5191
        %v5448 = vpack.c.b16 %v5200, %v5192
        %v5449 = vpack.c.b16 %v5201, %v5193
        %v5450 = vpack.c.b16 %v5202, %v5194
        %v5451 = vpack.c.b16 %v5203, %v5195
        %v5452 = vpack.c.b16 %v5204, %v5196
        %v5453 = vpack.c.b16 %v5213, %v5205
        %v5454 = vpack.c.b16 %v5214, %v5206
        %v5455 = vpack.c.b16 %v5215, %v5207
        %v5456 = vpack.c.b16 %v5216, %v5208
        %v5457 = vpack.c.b16 %v5217, %v5209
        %v5458 = vpack.c.b16 %v5218, %v5210
        %v5459 = vpack.c.b16 %v5219, %v5211
        %v5460 = vpack.c.b16 %v5220, %v5212
        %v5461 = vpack.c.b16 %v5229, %v5221
        %v5462 = vpack.c.b16 %v5230, %v5222
        %v5463 = vpack.c.b16 %v5231, %v5223
        %v5464 = vpack.c.b16 %v5232, %v5224
        %v5465 = vpack.c.b16 %v5233, %v5225
        %v5466 = vpack.c.b16 %v5234, %v5226
        %v5467 = vpack.c.b16 %v5235, %v5227
        %v5468 = vpack.c.b16 %v5236, %v5228
        %v5469 = vpack.c.b16 %v5245, %v5237
        %v5470 = vpack.c.b16 %v5246, %v5238
        %v5471 = vpack.c.b16 %v5247, %v5239
        %v5472 = vpack.c.b16 %v5248, %v5240
        %v5473 = vpack.c.b16 %v5249, %v5241
        %v5474 = vpack.c.b16 %v5250, %v5242
        %v5475 = vpack.c.b16 %v5251, %v5243
        %v5476 = vpack.c.b16 %v5252, %v5244
        %v5477 = vpack.c.b16 %v5261, %v5253
        %v5478 = vpack.c.b16 %v5262, %v5254
        %v5479 = vpack.c.b16 %v5263, %v5255
        %v5480 = vpack.c.b16 %v5264, %v5256
        %v5481 = vpack.c.b16 %v5265, %v5257
        %v5482 = vpack.c.b16 %v5266, %v5258
        %v5483 = vpack.c.b16 %v5267, %v5259
        %v5484 = vpack.c.b16 %v5268, %v5260
        %v5485 = vpack.c.b16 %v5277, %v5269
        %v5486 = vpack.c.b16 %v5278, %v5270
        %v5487 = vpack.c.b16 %v5279, %v5271
        %v5488 = vpack.c.b16 %v5280, %v5272
        %v5489 = vpack.c.b16 %v5281, %v5273
        %v5490 = vpack.c.b16 %v5282, %v5274
        %v5491 = vpack.c.b16 %v5283, %v5275
        %v5492 = vpack.c.b16 %v5284, %v5276
        %v5493 = vpack.c.b16 %v5293, %v5285
        %v5494 = vpack.c.b16 %v5294, %v5286
        %v5495 = vpack.c.b16 %v5295, %v5287
        %v5496 = vpack.c.b16 %v5296, %v5288
        %v5497 = vpack.c.b16 %v5297, %v5289
        %v5498 = vpack.c.b16 %v5298, %v5290
        %v5499 = vpack.c.b16 %v5299, %v5291
        %v5500 = vpack.c.b16 %v5300, %v5292
        %v5501 = vpack.c.b16 %v5309, %v5301
        %v5502 = vpack.c.b16 %v5310, %v5302
        %v5503 = vpack.c.b16 %v5311, %v5303
        %v5504 = vpack.c.b16 %v5312, %v5304
        %v5505 = vpack.c.b16 %v5313, %v5305
        %v5506 = vpack.c.b16 %v5314, %v5306
        %v5507 = vpack.c.b16 %v5315, %v5307
        %v5508 = vpack.c.b16 %v5316, %v5308
        %v5509 = vpack.c.b16 %v5325, %v5317
        %v5510 = vpack.c.b16 %v5326, %v5318
        %v5511 = vpack.c.b16 %v5327, %v5319
        %v5512 = vpack.c.b16 %v5328, %v5320
        %v5513 = vpack.c.b16 %v5329, %v5321
        %v5514 = vpack.c.b16 %v5330, %v5322
        %v5515 = vpack.c.b16 %v5331, %v5323
        %v5516 = vpack.c.b16 %v5332, %v5324
        %v5517 = vpack.c.b16 %v5341, %v5333
        %v5518 = vpack.c.b16 %v5342, %v5334
        %v5519 = vpack.c.b16 %v5343, %v5335
        %v5520 = vpack.c.b16 %v5344, %v5336
        %v5521 = vpack.c.b16 %v5345, %v5337
        %v5522 = vpack.c.b16 %v5346, %v5338
        %v5523 = vpack.c.b16 %v5347, %v5339
        %v5524 = vpack.c.b16 %v5348, %v5340
        %v5525 = vpack.c.b16 %v5357, %v5349
        %v5526 = vpack.c.b16 %v5358, %v5350
        %v5527 = vpack.c.b16 %v5359, %v5351
        %v5528 = vpack.c.b16 %v5360, %v5352
        %v5529 = vpack.c.b16 %v5361, %v5353
        %v5530 = vpack.c.b16 %v5362, %v5354
        %v5531 = vpack.c.b16 %v5363, %v5355
        %v5532 = vpack.c.b16 %v5364, %v5356
        %v5533 = vpack.c.b16 %v5373, %v5365
        %v5534 = vpack.c.b16 %v5374, %v5366
        %v5535 = vpack.c.b16 %v5375, %v5367
        %v5536 = vpack.c.b16 %v5376, %v5368
        %v5537 = vpack.c.b16 %v5377, %v5369
        %v5538 = vpack.c.b16 %v5378, %v5370
        %v5539 = vpack.c.b16 %v5379, %v5371
        %v5540 = vpack.c.b16 %v5380, %v5372
        %v5541 = vpack.c.b16 %v5389, %v5381
        %v5542 = vpack.c.b16 %v5390, %v5382
        %v5543 = vpack.c.b16 %v5391, %v5383
        %v5544 = vpack.c.b16 %v5392, %v5384
        %v5545 = vpack.c.b16 %v5393, %v5385
        %v5546 = vpack.c.b16 %v5394, %v5386
        %v5547 = vpack.c.b16 %v5395, %v5387
        %v5548 = vpack.c.b16 %v5396, %v5388
        %v5549 = vpack.c.b16 %v5405, %v5397
        %v5550 = vpack.c.b16 %v5406, %v5398
        %v5551 = vpack.c.b16 %v5407, %v5399
        %v5552 = vpack.c.b16 %v5408, %v5400
        %v5553 = vpack.c.b16 %v5409, %v5401
        %v5554 = vpack.c.b16 %v5410, %v5402
        %v5555 = vpack.c.b16 %v5411, %v5403
        %v5556 = vpack.c.b16 %v5412, %v5404
        %v5557 = vpack.c.b16 %v5421, %v5413
        %v5558 = vpack.c.b16 %v5422, %v5414
        %v5559 = vpack.c.b16 %v5423, %v5415
        %v5560 = vpack.c.b16 %v5424, %v5416
        %v5561 = vpack.c.b16 %v5425, %v5417
        %v5562 = vpack.c.b16 %v5426, %v5418
        %v5563 = vpack.c.b16 %v5427, %v5419
        %v5564 = vpack.c.b16 %v5428, %v5420
        %v5565 = vpack.c.b16 %v5437, %v5429
        %v5566 = vpack.c.b16 %v5438, %v5430
        %v5567 = vpack.c.b16 %v5439, %v5431
        %v5568 = vpack.c.b16 %v5440, %v5432
        %v5569 = vpack.c.b16 %v5441, %v5433
        %v5570 = vpack.c.b16 %v5442, %v5434
        %v5571 = vpack.c.b16 %v5443, %v5435
        %v5572 = vpack.c.b16 %v5444, %v5436
        %5701 = vmatpush.bf16.msra.mxu0 %v5501
        %5702 = vmatpush.bf16.msra.mxu0 %v5493
        %5703 = vmatpush.bf16.msra.mxu0 %v5485
        %5704 = vmatpush.bf16.msra.mxu0 %v5477
        %5705 = vmatpush.bf16.msra.mxu0 %v5469
        %5706 = vmatpush.bf16.msra.mxu0 %v5461
        %5707 = vmatpush.bf16.msra.mxu0 %v5453
        %5708 = vmatpush.bf16.msra.mxu0 %v5445
        %5709 = vmatmul.bf16.gmra.mxu0 %v4931
        %v5710 = vpop.f32.mrf.mxu0
        %v5711 = vadd.f32 0.0, %v5710
        %v5712 = vpop.f32.mrf.mxu0
        %v5713 = vadd.f32 0.0, %v5712
        %5714 = vdwg.mxu0
        %5715 = vmatpush.bf16.msra.mxu0 %v5565
        %5716 = vmatpush.bf16.msra.mxu0 %v5557
        %5717 = vmatpush.bf16.msra.mxu0 %v5549
        %5718 = vmatpush.bf16.msra.mxu0 %v5541
        %5719 = vmatpush.bf16.msra.mxu0 %v5533
        %5720 = vmatpush.bf16.msra.mxu0 %v5525
        %5721 = vmatpush.bf16.msra.mxu0 %v5517
        %5722 = vmatpush.bf16.msra.mxu0 %v5509
        %5723 = vmatmul.bf16.gmra.mxu0 %v4932
        %v5724 = vpop.f32.mrf.mxu0
        %v5725 = vadd.f32 %v5711, %v5724
        %v5726 = vpop.f32.mrf.mxu0
        %v5727 = vadd.f32 %v5713, %v5726
        %5728 = vdwg.mxu0
        %5729 = vmatpush.bf16.msra.mxu0 %v5502
        %5730 = vmatpush.bf16.msra.mxu0 %v5494
        %5731 = vmatpush.bf16.msra.mxu0 %v5486
        %5732 = vmatpush.bf16.msra.mxu0 %v5478
        %5733 = vmatpush.bf16.msra.mxu0 %v5470
        %5734 = vmatpush.bf16.msra.mxu0 %v5462
        %5735 = vmatpush.bf16.msra.mxu0 %v5454
        %5736 = vmatpush.bf16.msra.mxu0 %v5446
        %5737 = vmatmul.bf16.gmra.mxu0 %v4931
        %v5738 = vpop.f32.mrf.mxu0
        %v5739 = vadd.f32 0.0, %v5738
        %v5740 = vpop.f32.mrf.mxu0
        %v5741 = vadd.f32 0.0, %v5740
        %5742 = vdwg.mxu0
        %5743 = vmatpush.bf16.msra.mxu0 %v5566
        %5744 = vmatpush.bf16.msra.mxu0 %v5558
        %5745 = vmatpush.bf16.msra.mxu0 %v5550
        %5746 = vmatpush.bf16.msra.mxu0 %v5542
        %5747 = vmatpush.bf16.msra.mxu0 %v5534
        %5748 = vmatpush.bf16.msra.mxu0 %v5526
        %5749 = vmatpush.bf16.msra.mxu0 %v5518
        %5750 = vmatpush.bf16.msra.mxu0 %v5510
        %5751 = vmatmul.bf16.gmra.mxu0 %v4932
        %v5752 = vpop.f32.mrf.mxu0
        %v5753 = vadd.f32 %v5739, %v5752
        %v5754 = vpop.f32.mrf.mxu0
        %v5755 = vadd.f32 %v5741, %v5754
        %5756 = vdwg.mxu0
        %5757 = vmatpush.bf16.msra.mxu0 %v5503
        %5758 = vmatpush.bf16.msra.mxu0 %v5495
        %5759 = vmatpush.bf16.msra.mxu0 %v5487
        %5760 = vmatpush.bf16.msra.mxu0 %v5479
        %5761 = vmatpush.bf16.msra.mxu0 %v5471
        %5762 = vmatpush.bf16.msra.mxu0 %v5463
        %5763 = vmatpush.bf16.msra.mxu0 %v5455
        %5764 = vmatpush.bf16.msra.mxu0 %v5447
        %5765 = vmatmul.bf16.gmra.mxu0 %v4931
        %v5766 = vpop.f32.mrf.mxu0
        %v5767 = vadd.f32 0.0, %v5766
        %v5768 = vpop.f32.mrf.mxu0
        %v5769 = vadd.f32 0.0, %v5768
        %5770 = vdwg.mxu0
        %5771 = vmatpush.bf16.msra.mxu0 %v5567
        %5772 = vmatpush.bf16.msra.mxu0 %v5559
        %5773 = vmatpush.bf16.msra.mxu0 %v5551
        %5774 = vmatpush.bf16.msra.mxu0 %v5543
        %5775 = vmatpush.bf16.msra.mxu0 %v5535
        %5776 = vmatpush.bf16.msra.mxu0 %v5527
        %5777 = vmatpush.bf16.msra.mxu0 %v5519
        %5778 = vmatpush.bf16.msra.mxu0 %v5511
        %5779 = vmatmul.bf16.gmra.mxu0 %v4932
        %v5780 = vpop.f32.mrf.mxu0
        %v5781 = vadd.f32 %v5767, %v5780
        %v5782 = vpop.f32.mrf.mxu0
        %v5783 = vadd.f32 %v5769, %v5782
        %5784 = vdwg.mxu0
        %5785 = vmatpush.bf16.msra.mxu0 %v5504
        %5786 = vmatpush.bf16.msra.mxu0 %v5496
        %5787 = vmatpush.bf16.msra.mxu0 %v5488
        %5788 = vmatpush.bf16.msra.mxu0 %v5480
        %5789 = vmatpush.bf16.msra.mxu0 %v5472
        %5790 = vmatpush.bf16.msra.mxu0 %v5464
        %5791 = vmatpush.bf16.msra.mxu0 %v5456
        %5792 = vmatpush.bf16.msra.mxu0 %v5448
        %5793 = vmatmul.bf16.gmra.mxu0 %v4931
        %v5794 = vpop.f32.mrf.mxu0
        %v5795 = vadd.f32 0.0, %v5794
        %v5796 = vpop.f32.mrf.mxu0
        %v5797 = vadd.f32 0.0, %v5796
        %5798 = vdwg.mxu0
        %5799 = vmatpush.bf16.msra.mxu0 %v5568
        %5800 = vmatpush.bf16.msra.mxu0 %v5560
        %5801 = vmatpush.bf16.msra.mxu0 %v5552
        %5802 = vmatpush.bf16.msra.mxu0 %v5544
        %5803 = vmatpush.bf16.msra.mxu0 %v5536
        %5804 = vmatpush.bf16.msra.mxu0 %v5528
        %5805 = vmatpush.bf16.msra.mxu0 %v5520
        %5806 = vmatpush.bf16.msra.mxu0 %v5512
        %5807 = vmatmul.bf16.gmra.mxu0 %v4932
        %v5808 = vpop.f32.mrf.mxu0
        %v5809 = vadd.f32 %v5795, %v5808
        %v5810 = vpop.f32.mrf.mxu0
        %v5811 = vadd.f32 %v5797, %v5810
        %5812 = vdwg.mxu0
        %5813 = vmatpush.bf16.msra.mxu0 %v5505
        %5814 = vmatpush.bf16.msra.mxu0 %v5497
        %5815 = vmatpush.bf16.msra.mxu0 %v5489
        %5816 = vmatpush.bf16.msra.mxu0 %v5481
        %5817 = vmatpush.bf16.msra.mxu0 %v5473
        %5818 = vmatpush.bf16.msra.mxu0 %v5465
        %5819 = vmatpush.bf16.msra.mxu0 %v5457
        %5820 = vmatpush.bf16.msra.mxu0 %v5449
        %5821 = vmatmul.bf16.gmra.mxu0 %v4931
        %v5822 = vpop.f32.mrf.mxu0
        %v5823 = vadd.f32 0.0, %v5822
        %v5824 = vpop.f32.mrf.mxu0
        %v5825 = vadd.f32 0.0, %v5824
        %5826 = vdwg.mxu0
        %5827 = vmatpush.bf16.msra.mxu0 %v5569
        %5828 = vmatpush.bf16.msra.mxu0 %v5561
        %5829 = vmatpush.bf16.msra.mxu0 %v5553
        %5830 = vmatpush.bf16.msra.mxu0 %v5545
        %5831 = vmatpush.bf16.msra.mxu0 %v5537
        %5832 = vmatpush.bf16.msra.mxu0 %v5529
        %5833 = vmatpush.bf16.msra.mxu0 %v5521
        %5834 = vmatpush.bf16.msra.mxu0 %v5513
        %5835 = vmatmul.bf16.gmra.mxu0 %v4932
        %v5836 = vpop.f32.mrf.mxu0
        %v5837 = vadd.f32 %v5823, %v5836
        %v5838 = vpop.f32.mrf.mxu0
        %v5839 = vadd.f32 %v5825, %v5838
        %5840 = vdwg.mxu0
        %5841 = vmatpush.bf16.msra.mxu0 %v5506
        %5842 = vmatpush.bf16.msra.mxu0 %v5498
        %5843 = vmatpush.bf16.msra.mxu0 %v5490
        %5844 = vmatpush.bf16.msra.mxu0 %v5482
        %5845 = vmatpush.bf16.msra.mxu0 %v5474
        %5846 = vmatpush.bf16.msra.mxu0 %v5466
        %5847 = vmatpush.bf16.msra.mxu0 %v5458
        %5848 = vmatpush.bf16.msra.mxu0 %v5450
        %5849 = vmatmul.bf16.gmra.mxu0 %v4931
        %v5850 = vpop.f32.mrf.mxu0
        %v5851 = vadd.f32 0.0, %v5850
        %v5852 = vpop.f32.mrf.mxu0
        %v5853 = vadd.f32 0.0, %v5852
        %5854 = vdwg.mxu0
        %5855 = vmatpush.bf16.msra.mxu0 %v5570
        %5856 = vmatpush.bf16.msra.mxu0 %v5562
        %5857 = vmatpush.bf16.msra.mxu0 %v5554
        %5858 = vmatpush.bf16.msra.mxu0 %v5546
        %5859 = vmatpush.bf16.msra.mxu0 %v5538
        %5860 = vmatpush.bf16.msra.mxu0 %v5530
        %5861 = vmatpush.bf16.msra.mxu0 %v5522
        %5862 = vmatpush.bf16.msra.mxu0 %v5514
        %5863 = vmatmul.bf16.gmra.mxu0 %v4932
        %v5864 = vpop.f32.mrf.mxu0
        %v5865 = vadd.f32 %v5851, %v5864
        %v5866 = vpop.f32.mrf.mxu0
        %v5867 = vadd.f32 %v5853, %v5866
        %5868 = vdwg.mxu0
        %5869 = vmatpush.bf16.msra.mxu0 %v5507
        %5870 = vmatpush.bf16.msra.mxu0 %v5499
        %5871 = vmatpush.bf16.msra.mxu0 %v5491
        %5872 = vmatpush.bf16.msra.mxu0 %v5483
        %5873 = vmatpush.bf16.msra.mxu0 %v5475
        %5874 = vmatpush.bf16.msra.mxu0 %v5467
        %5875 = vmatpush.bf16.msra.mxu0 %v5459
        %5876 = vmatpush.bf16.msra.mxu0 %v5451
        %5877 = vmatmul.bf16.gmra.mxu0 %v4931
        %v5878 = vpop.f32.mrf.mxu0
        %v5879 = vadd.f32 0.0, %v5878
        %v5880 = vpop.f32.mrf.mxu0
        %v5881 = vadd.f32 0.0, %v5880
        %5882 = vdwg.mxu0
        %5883 = vmatpush.bf16.msra.mxu0 %v5571
        %5884 = vmatpush.bf16.msra.mxu0 %v5563
        %5885 = vmatpush.bf16.msra.mxu0 %v5555
        %5886 = vmatpush.bf16.msra.mxu0 %v5547
        %5887 = vmatpush.bf16.msra.mxu0 %v5539
        %5888 = vmatpush.bf16.msra.mxu0 %v5531
        %5889 = vmatpush.bf16.msra.mxu0 %v5523
        %5890 = vmatpush.bf16.msra.mxu0 %v5515
        %5891 = vmatmul.bf16.gmra.mxu0 %v4932
        %v5892 = vpop.f32.mrf.mxu0
        %v5893 = vadd.f32 %v5879, %v5892
        %v5894 = vpop.f32.mrf.mxu0
        %v5895 = vadd.f32 %v5881, %v5894
        %5896 = vdwg.mxu0
        %5897 = vmatpush.bf16.msra.mxu0 %v5508
        %5898 = vmatpush.bf16.msra.mxu0 %v5500
        %5899 = vmatpush.bf16.msra.mxu0 %v5492
        %5900 = vmatpush.bf16.msra.mxu0 %v5484
        %5901 = vmatpush.bf16.msra.mxu0 %v5476
        %5902 = vmatpush.bf16.msra.mxu0 %v5468
        %5903 = vmatpush.bf16.msra.mxu0 %v5460
        %5904 = vmatpush.bf16.msra.mxu0 %v5452
        %5905 = vmatmul.bf16.gmra.mxu0 %v4931
        %v5906 = vpop.f32.mrf.mxu0
        %v5907 = vadd.f32 0.0, %v5906
        %v5908 = vpop.f32.mrf.mxu0
        %v5909 = vadd.f32 0.0, %v5908
        %5910 = vdwg.mxu0
        %5911 = vmatpush.bf16.msra.mxu0 %v5572
        %5912 = vmatpush.bf16.msra.mxu0 %v5564
        %5913 = vmatpush.bf16.msra.mxu0 %v5556
        %5914 = vmatpush.bf16.msra.mxu0 %v5548
        %5915 = vmatpush.bf16.msra.mxu0 %v5540
        %5916 = vmatpush.bf16.msra.mxu0 %v5532
        %5917 = vmatpush.bf16.msra.mxu0 %v5524
        %5918 = vmatpush.bf16.msra.mxu0 %v5516
        %5919 = vmatmul.bf16.gmra.mxu0 %v4932
        %v5920 = vpop.f32.mrf.mxu0
        %v5921 = vadd.f32 %v5907, %v5920
        %v5922 = vpop.f32.mrf.mxu0
        %v5923 = vadd.f32 %v5909, %v5922
        %5924 = vdwg.mxu0
        %v5925 = vmax.f32 %v5725, 0.0
        %v5926 = vmax.f32 %v5753, 0.0
        %v5927 = vmax.f32 %v5781, 0.0
        %v5928 = vmax.f32 %v5809, 0.0
        %v5929 = vmax.f32 %v5837, 0.0
        %v5930 = vmax.f32 %v5865, 0.0
        %v5931 = vmax.f32 %v5893, 0.0
        %v5932 = vmax.f32 %v5921, 0.0
        %v5933 = vmax.f32 %v5727, 0.0
        %v5934 = vmax.f32 %v5755, 0.0
        %v5935 = vmax.f32 %v5783, 0.0
        %v5936 = vmax.f32 %v5811, 0.0
        %v5937 = vmax.f32 %v5839, 0.0
        %v5938 = vmax.f32 %v5867, 0.0
        %v5939 = vmax.f32 %v5895, 0.0
        %v5940 = vmax.f32 %v5923, 0.0
        %v5941 = vpack.c.bf16 %v5933, %v5925
        %v5942 = vpack.c.bf16 %v5934, %v5926
        %v5943 = vpack.c.bf16 %v5935, %v5927
        %v5944 = vpack.c.bf16 %v5936, %v5928
        %v5945 = vpack.c.bf16 %v5937, %v5929
        %v5946 = vpack.c.bf16 %v5938, %v5930
        %v5947 = vpack.c.bf16 %v5939, %v5931
        %v5948 = vpack.c.bf16 %v5940, %v5932
        %v5949 = vld [vmem:[%s1165] sm:$0xff]
        %v5950 = vld [vmem:[%s1165 + $0x8] sm:$0xff]
        %v5951 = vld [vmem:[%s1165 + $0x10] sm:$0xff]
        %v5952 = vld [vmem:[%s1165 + $0x18] sm:$0xff]
        %v5953 = vld [vmem:[%s1165 + $0x20] sm:$0xff]
        %v5954 = vld [vmem:[%s1165 + $0x28] sm:$0xff]
        %v5955 = vld [vmem:[%s1165 + $0x30] sm:$0xff]
        %v5956 = vld [vmem:[%s1165 + $0x38] sm:$0xff]
        %v5957 = vld [vmem:[%s1165 + $0x40] sm:$0xff]
        %v5958 = vld [vmem:[%s1165 + $0x48] sm:$0xff]
        %v5959 = vld [vmem:[%s1165 + $0x50] sm:$0xff]
        %v5960 = vld [vmem:[%s1165 + $0x58] sm:$0xff]
        %v5961 = vld [vmem:[%s1165 + $0x60] sm:$0xff]
        %v5962 = vld [vmem:[%s1165 + $0x68] sm:$0xff]
        %v5963 = vld [vmem:[%s1165 + $0x70] sm:$0xff]
        %v5964 = vld [vmem:[%s1165 + $0x78] sm:$0xff]
        %v5965 = vld [vmem:[%s1165 + $0x80] sm:$0xff]
        %v5966 = vld [vmem:[%s1165 + $0x88] sm:$0xff]
        %v5967 = vld [vmem:[%s1165 + $0x90] sm:$0xff]
        %v5968 = vld [vmem:[%s1165 + $0x98] sm:$0xff]
        %v5969 = vld [vmem:[%s1165 + $0xa0] sm:$0xff]
        %v5970 = vld [vmem:[%s1165 + $0xa8] sm:$0xff]
        %v5971 = vld [vmem:[%s1165 + $0xb0] sm:$0xff]
        %v5972 = vld [vmem:[%s1165 + $0xb8] sm:$0xff]
        %v5973 = vld [vmem:[%s1165 + $0xc0] sm:$0xff]
        %v5974 = vld [vmem:[%s1165 + $0xc8] sm:$0xff]
        %v5975 = vld [vmem:[%s1165 + $0xd0] sm:$0xff]
        %v5976 = vld [vmem:[%s1165 + $0xd8] sm:$0xff]
        %v5977 = vld [vmem:[%s1165 + $0xe0] sm:$0xff]
        %v5978 = vld [vmem:[%s1165 + $0xe8] sm:$0xff]
        %v5979 = vld [vmem:[%s1165 + $0xf0] sm:$0xff]
        %v5980 = vld [vmem:[%s1165 + $0xf8] sm:$0xff]
        %v5981 = vld [vmem:[%s1165 + $0x100] sm:$0xff]
        %v5982 = vld [vmem:[%s1165 + $0x108] sm:$0xff]
        %v5983 = vld [vmem:[%s1165 + $0x110] sm:$0xff]
        %v5984 = vld [vmem:[%s1165 + $0x118] sm:$0xff]
        %v5985 = vld [vmem:[%s1165 + $0x120] sm:$0xff]
        %v5986 = vld [vmem:[%s1165 + $0x128] sm:$0xff]
        %v5987 = vld [vmem:[%s1165 + $0x130] sm:$0xff]
        %v5988 = vld [vmem:[%s1165 + $0x138] sm:$0xff]
        %v5989 = vld [vmem:[%s1165 + $0x140] sm:$0xff]
        %v5990 = vld [vmem:[%s1165 + $0x148] sm:$0xff]
        %v5991 = vld [vmem:[%s1165 + $0x150] sm:$0xff]
        %v5992 = vld [vmem:[%s1165 + $0x158] sm:$0xff]
        %v5993 = vld [vmem:[%s1165 + $0x160] sm:$0xff]
        %v5994 = vld [vmem:[%s1165 + $0x168] sm:$0xff]
        %v5995 = vld [vmem:[%s1165 + $0x170] sm:$0xff]
        %v5996 = vld [vmem:[%s1165 + $0x178] sm:$0xff]
        %v5997 = vld [vmem:[%s1165 + $0x180] sm:$0xff]
        %v5998 = vld [vmem:[%s1165 + $0x188] sm:$0xff]
        %v5999 = vld [vmem:[%s1165 + $0x190] sm:$0xff]
        %v6000 = vld [vmem:[%s1165 + $0x198] sm:$0xff]
        %v6001 = vld [vmem:[%s1165 + $0x1a0] sm:$0xff]
        %v6002 = vld [vmem:[%s1165 + $0x1a8] sm:$0xff]
        %v6003 = vld [vmem:[%s1165 + $0x1b0] sm:$0xff]
        %v6004 = vld [vmem:[%s1165 + $0x1b8] sm:$0xff]
        %v6005 = vld [vmem:[%s1165 + $0x1c0] sm:$0xff]
        %v6006 = vld [vmem:[%s1165 + $0x1c8] sm:$0xff]
        %v6007 = vld [vmem:[%s1165 + $0x1d0] sm:$0xff]
        %v6008 = vld [vmem:[%s1165 + $0x1d8] sm:$0xff]
        %v6009 = vld [vmem:[%s1165 + $0x1e0] sm:$0xff]
        %v6010 = vld [vmem:[%s1165 + $0x1e8] sm:$0xff]
        %v6011 = vld [vmem:[%s1165 + $0x1f0] sm:$0xff]
        %v6012 = vld [vmem:[%s1165 + $0x1f8] sm:$0xff]
        %v6013 = vld [vmem:[%s1165 + $0x200] sm:$0xff]
        %v6014 = vld [vmem:[%s1165 + $0x208] sm:$0xff]
        %v6015 = vld [vmem:[%s1165 + $0x210] sm:$0xff]
        %v6016 = vld [vmem:[%s1165 + $0x218] sm:$0xff]
        %v6017 = vld [vmem:[%s1165 + $0x220] sm:$0xff]
        %v6018 = vld [vmem:[%s1165 + $0x228] sm:$0xff]
        %v6019 = vld [vmem:[%s1165 + $0x230] sm:$0xff]
        %v6020 = vld [vmem:[%s1165 + $0x238] sm:$0xff]
        %v6021 = vld [vmem:[%s1165 + $0x240] sm:$0xff]
        %v6022 = vld [vmem:[%s1165 + $0x248] sm:$0xff]
        %v6023 = vld [vmem:[%s1165 + $0x250] sm:$0xff]
        %v6024 = vld [vmem:[%s1165 + $0x258] sm:$0xff]
        %v6025 = vld [vmem:[%s1165 + $0x260] sm:$0xff]
        %v6026 = vld [vmem:[%s1165 + $0x268] sm:$0xff]
        %v6027 = vld [vmem:[%s1165 + $0x270] sm:$0xff]
        %v6028 = vld [vmem:[%s1165 + $0x278] sm:$0xff]
        %v6029 = vld [vmem:[%s1165 + $0x280] sm:$0xff]
        %v6030 = vld [vmem:[%s1165 + $0x288] sm:$0xff]
        %v6031 = vld [vmem:[%s1165 + $0x290] sm:$0xff]
        %v6032 = vld [vmem:[%s1165 + $0x298] sm:$0xff]
        %v6033 = vld [vmem:[%s1165 + $0x2a0] sm:$0xff]
        %v6034 = vld [vmem:[%s1165 + $0x2a8] sm:$0xff]
        %v6035 = vld [vmem:[%s1165 + $0x2b0] sm:$0xff]
        %v6036 = vld [vmem:[%s1165 + $0x2b8] sm:$0xff]
        %v6037 = vld [vmem:[%s1165 + $0x2c0] sm:$0xff]
        %v6038 = vld [vmem:[%s1165 + $0x2c8] sm:$0xff]
        %v6039 = vld [vmem:[%s1165 + $0x2d0] sm:$0xff]
        %v6040 = vld [vmem:[%s1165 + $0x2d8] sm:$0xff]
        %v6041 = vld [vmem:[%s1165 + $0x2e0] sm:$0xff]
        %v6042 = vld [vmem:[%s1165 + $0x2e8] sm:$0xff]
        %v6043 = vld [vmem:[%s1165 + $0x2f0] sm:$0xff]
        %v6044 = vld [vmem:[%s1165 + $0x2f8] sm:$0xff]
        %v6045 = vld [vmem:[%s1165 + $0x300] sm:$0xff]
        %v6046 = vld [vmem:[%s1165 + $0x308] sm:$0xff]
        %v6047 = vld [vmem:[%s1165 + $0x310] sm:$0xff]
        %v6048 = vld [vmem:[%s1165 + $0x318] sm:$0xff]
        %v6049 = vld [vmem:[%s1165 + $0x320] sm:$0xff]
        %v6050 = vld [vmem:[%s1165 + $0x328] sm:$0xff]
        %v6051 = vld [vmem:[%s1165 + $0x330] sm:$0xff]
        %v6052 = vld [vmem:[%s1165 + $0x338] sm:$0xff]
        %v6053 = vld [vmem:[%s1165 + $0x340] sm:$0xff]
        %v6054 = vld [vmem:[%s1165 + $0x348] sm:$0xff]
        %v6055 = vld [vmem:[%s1165 + $0x350] sm:$0xff]
        %v6056 = vld [vmem:[%s1165 + $0x358] sm:$0xff]
        %v6057 = vld [vmem:[%s1165 + $0x360] sm:$0xff]
        %v6058 = vld [vmem:[%s1165 + $0x368] sm:$0xff]
        %v6059 = vld [vmem:[%s1165 + $0x370] sm:$0xff]
        %v6060 = vld [vmem:[%s1165 + $0x378] sm:$0xff]
        %v6061 = vld [vmem:[%s1165 + $0x380] sm:$0xff]
        %v6062 = vld [vmem:[%s1165 + $0x388] sm:$0xff]
        %v6063 = vld [vmem:[%s1165 + $0x390] sm:$0xff]
        %v6064 = vld [vmem:[%s1165 + $0x398] sm:$0xff]
        %v6065 = vld [vmem:[%s1165 + $0x3a0] sm:$0xff]
        %v6066 = vld [vmem:[%s1165 + $0x3a8] sm:$0xff]
        %v6067 = vld [vmem:[%s1165 + $0x3b0] sm:$0xff]
        %v6068 = vld [vmem:[%s1165 + $0x3b8] sm:$0xff]
        %v6069 = vld [vmem:[%s1165 + $0x3c0] sm:$0xff]
        %v6070 = vld [vmem:[%s1165 + $0x3c8] sm:$0xff]
        %v6071 = vld [vmem:[%s1165 + $0x3d0] sm:$0xff]
        %v6072 = vld [vmem:[%s1165 + $0x3d8] sm:$0xff]
        %v6073 = vld [vmem:[%s1165 + $0x3e0] sm:$0xff]
        %v6074 = vld [vmem:[%s1165 + $0x3e8] sm:$0xff]
        %v6075 = vld [vmem:[%s1165 + $0x3f0] sm:$0xff]
        %v6076 = vld [vmem:[%s1165 + $0x3f8] sm:$0xff]
        %v6205 = vunpack.c.l.b16 %v5949
        %v6206 = vunpack.c.h.b16 %v5949
        %v6207 = vunpack.c.l.b16 %v5950
        %v6208 = vunpack.c.h.b16 %v5950
        %v6209 = vunpack.c.l.b16 %v5951
        %v6210 = vunpack.c.h.b16 %v5951
        %v6211 = vunpack.c.l.b16 %v5952
        %v6212 = vunpack.c.h.b16 %v5952
        %v6213 = vunpack.c.l.b16 %v5953
        %v6214 = vunpack.c.h.b16 %v5953
        %v6215 = vunpack.c.l.b16 %v5954
        %v6216 = vunpack.c.h.b16 %v5954
        %v6217 = vunpack.c.l.b16 %v5955
        %v6218 = vunpack.c.h.b16 %v5955
        %v6219 = vunpack.c.l.b16 %v5956
        %v6220 = vunpack.c.h.b16 %v5956
        %v6221 = vunpack.c.l.b16 %v5957
        %v6222 = vunpack.c.h.b16 %v5957
        %v6223 = vunpack.c.l.b16 %v5958
        %v6224 = vunpack.c.h.b16 %v5958
        %v6225 = vunpack.c.l.b16 %v5959
        %v6226 = vunpack.c.h.b16 %v5959
        %v6227 = vunpack.c.l.b16 %v5960
        %v6228 = vunpack.c.h.b16 %v5960
        %v6229 = vunpack.c.l.b16 %v5961
        %v6230 = vunpack.c.h.b16 %v5961
        %v6231 = vunpack.c.l.b16 %v5962
        %v6232 = vunpack.c.h.b16 %v5962
        %v6233 = vunpack.c.l.b16 %v5963
        %v6234 = vunpack.c.h.b16 %v5963
        %v6235 = vunpack.c.l.b16 %v5964
        %v6236 = vunpack.c.h.b16 %v5964
        %v6237 = vunpack.c.l.b16 %v5965
        %v6238 = vunpack.c.h.b16 %v5965
        %v6239 = vunpack.c.l.b16 %v5966
        %v6240 = vunpack.c.h.b16 %v5966
        %v6241 = vunpack.c.l.b16 %v5967
        %v6242 = vunpack.c.h.b16 %v5967
        %v6243 = vunpack.c.l.b16 %v5968
        %v6244 = vunpack.c.h.b16 %v5968
        %v6245 = vunpack.c.l.b16 %v5969
        %v6246 = vunpack.c.h.b16 %v5969
        %v6247 = vunpack.c.l.b16 %v5970
        %v6248 = vunpack.c.h.b16 %v5970
        %v6249 = vunpack.c.l.b16 %v5971
        %v6250 = vunpack.c.h.b16 %v5971
        %v6251 = vunpack.c.l.b16 %v5972
        %v6252 = vunpack.c.h.b16 %v5972
        %v6253 = vunpack.c.l.b16 %v5973
        %v6254 = vunpack.c.h.b16 %v5973
        %v6255 = vunpack.c.l.b16 %v5974
        %v6256 = vunpack.c.h.b16 %v5974
        %v6257 = vunpack.c.l.b16 %v5975
        %v6258 = vunpack.c.h.b16 %v5975
        %v6259 = vunpack.c.l.b16 %v5976
        %v6260 = vunpack.c.h.b16 %v5976
        %v6261 = vunpack.c.l.b16 %v5977
        %v6262 = vunpack.c.h.b16 %v5977
        %v6263 = vunpack.c.l.b16 %v5978
        %v6264 = vunpack.c.h.b16 %v5978
        %v6265 = vunpack.c.l.b16 %v5979
        %v6266 = vunpack.c.h.b16 %v5979
        %v6267 = vunpack.c.l.b16 %v5980
        %v6268 = vunpack.c.h.b16 %v5980
        %v6269 = vunpack.c.l.b16 %v5981
        %v6270 = vunpack.c.h.b16 %v5981
        %v6271 = vunpack.c.l.b16 %v5982
        %v6272 = vunpack.c.h.b16 %v5982
        %v6273 = vunpack.c.l.b16 %v5983
        %v6274 = vunpack.c.h.b16 %v5983
        %v6275 = vunpack.c.l.b16 %v5984
        %v6276 = vunpack.c.h.b16 %v5984
        %v6277 = vunpack.c.l.b16 %v5985
        %v6278 = vunpack.c.h.b16 %v5985
        %v6279 = vunpack.c.l.b16 %v5986
        %v6280 = vunpack.c.h.b16 %v5986
        %v6281 = vunpack.c.l.b16 %v5987
        %v6282 = vunpack.c.h.b16 %v5987
        %v6283 = vunpack.c.l.b16 %v5988
        %v6284 = vunpack.c.h.b16 %v5988
        %v6285 = vunpack.c.l.b16 %v5989
        %v6286 = vunpack.c.h.b16 %v5989
        %v6287 = vunpack.c.l.b16 %v5990
        %v6288 = vunpack.c.h.b16 %v5990
        %v6289 = vunpack.c.l.b16 %v5991
        %v6290 = vunpack.c.h.b16 %v5991
        %v6291 = vunpack.c.l.b16 %v5992
        %v6292 = vunpack.c.h.b16 %v5992
        %v6293 = vunpack.c.l.b16 %v5993
        %v6294 = vunpack.c.h.b16 %v5993
        %v6295 = vunpack.c.l.b16 %v5994
        %v6296 = vunpack.c.h.b16 %v5994
        %v6297 = vunpack.c.l.b16 %v5995
        %v6298 = vunpack.c.h.b16 %v5995
        %v6299 = vunpack.c.l.b16 %v5996
        %v6300 = vunpack.c.h.b16 %v5996
        %v6301 = vunpack.c.l.b16 %v5997
        %v6302 = vunpack.c.h.b16 %v5997
        %v6303 = vunpack.c.l.b16 %v5998
        %v6304 = vunpack.c.h.b16 %v5998
        %v6305 = vunpack.c.l.b16 %v5999
        %v6306 = vunpack.c.h.b16 %v5999
        %v6307 = vunpack.c.l.b16 %v6000
        %v6308 = vunpack.c.h.b16 %v6000
        %v6309 = vunpack.c.l.b16 %v6001
        %v6310 = vunpack.c.h.b16 %v6001
        %v6311 = vunpack.c.l.b16 %v6002
        %v6312 = vunpack.c.h.b16 %v6002
        %v6313 = vunpack.c.l.b16 %v6003
        %v6314 = vunpack.c.h.b16 %v6003
        %v6315 = vunpack.c.l.b16 %v6004
        %v6316 = vunpack.c.h.b16 %v6004
        %v6317 = vunpack.c.l.b16 %v6005
        %v6318 = vunpack.c.h.b16 %v6005
        %v6319 = vunpack.c.l.b16 %v6006
        %v6320 = vunpack.c.h.b16 %v6006
        %v6321 = vunpack.c.l.b16 %v6007
        %v6322 = vunpack.c.h.b16 %v6007
        %v6323 = vunpack.c.l.b16 %v6008
        %v6324 = vunpack.c.h.b16 %v6008
        %v6325 = vunpack.c.l.b16 %v6009
        %v6326 = vunpack.c.h.b16 %v6009
        %v6327 = vunpack.c.l.b16 %v6010
        %v6328 = vunpack.c.h.b16 %v6010
        %v6329 = vunpack.c.l.b16 %v6011
        %v6330 = vunpack.c.h.b16 %v6011
        %v6331 = vunpack.c.l.b16 %v6012
        %v6332 = vunpack.c.h.b16 %v6012
        %v6333 = vunpack.c.l.b16 %v6013
        %v6334 = vunpack.c.h.b16 %v6013
        %v6335 = vunpack.c.l.b16 %v6014
        %v6336 = vunpack.c.h.b16 %v6014
        %v6337 = vunpack.c.l.b16 %v6015
        %v6338 = vunpack.c.h.b16 %v6015
        %v6339 = vunpack.c.l.b16 %v6016
        %v6340 = vunpack.c.h.b16 %v6016
        %v6341 = vunpack.c.l.b16 %v6017
        %v6342 = vunpack.c.h.b16 %v6017
        %v6343 = vunpack.c.l.b16 %v6018
        %v6344 = vunpack.c.h.b16 %v6018
        %v6345 = vunpack.c.l.b16 %v6019
        %v6346 = vunpack.c.h.b16 %v6019
        %v6347 = vunpack.c.l.b16 %v6020
        %v6348 = vunpack.c.h.b16 %v6020
        %v6349 = vunpack.c.l.b16 %v6021
        %v6350 = vunpack.c.h.b16 %v6021
        %v6351 = vunpack.c.l.b16 %v6022
        %v6352 = vunpack.c.h.b16 %v6022
        %v6353 = vunpack.c.l.b16 %v6023
        %v6354 = vunpack.c.h.b16 %v6023
        %v6355 = vunpack.c.l.b16 %v6024
        %v6356 = vunpack.c.h.b16 %v6024
        %v6357 = vunpack.c.l.b16 %v6025
        %v6358 = vunpack.c.h.b16 %v6025
        %v6359 = vunpack.c.l.b16 %v6026
        %v6360 = vunpack.c.h.b16 %v6026
        %v6361 = vunpack.c.l.b16 %v6027
        %v6362 = vunpack.c.h.b16 %v6027
        %v6363 = vunpack.c.l.b16 %v6028
        %v6364 = vunpack.c.h.b16 %v6028
        %v6365 = vunpack.c.l.b16 %v6029
        %v6366 = vunpack.c.h.b16 %v6029
        %v6367 = vunpack.c.l.b16 %v6030
        %v6368 = vunpack.c.h.b16 %v6030
        %v6369 = vunpack.c.l.b16 %v6031
        %v6370 = vunpack.c.h.b16 %v6031
        %v6371 = vunpack.c.l.b16 %v6032
        %v6372 = vunpack.c.h.b16 %v6032
        %v6373 = vunpack.c.l.b16 %v6033
        %v6374 = vunpack.c.h.b16 %v6033
        %v6375 = vunpack.c.l.b16 %v6034
        %v6376 = vunpack.c.h.b16 %v6034
        %v6377 = vunpack.c.l.b16 %v6035
        %v6378 = vunpack.c.h.b16 %v6035
        %v6379 = vunpack.c.l.b16 %v6036
        %v6380 = vunpack.c.h.b16 %v6036
        %v6381 = vunpack.c.l.b16 %v6037
        %v6382 = vunpack.c.h.b16 %v6037
        %v6383 = vunpack.c.l.b16 %v6038
        %v6384 = vunpack.c.h.b16 %v6038
        %v6385 = vunpack.c.l.b16 %v6039
        %v6386 = vunpack.c.h.b16 %v6039
        %v6387 = vunpack.c.l.b16 %v6040
        %v6388 = vunpack.c.h.b16 %v6040
        %v6389 = vunpack.c.l.b16 %v6041
        %v6390 = vunpack.c.h.b16 %v6041
        %v6391 = vunpack.c.l.b16 %v6042
        %v6392 = vunpack.c.h.b16 %v6042
        %v6393 = vunpack.c.l.b16 %v6043
        %v6394 = vunpack.c.h.b16 %v6043
        %v6395 = vunpack.c.l.b16 %v6044
        %v6396 = vunpack.c.h.b16 %v6044
        %v6397 = vunpack.c.l.b16 %v6045
        %v6398 = vunpack.c.h.b16 %v6045
        %v6399 = vunpack.c.l.b16 %v6046
        %v6400 = vunpack.c.h.b16 %v6046
        %v6401 = vunpack.c.l.b16 %v6047
        %v6402 = vunpack.c.h.b16 %v6047
        %v6403 = vunpack.c.l.b16 %v6048
        %v6404 = vunpack.c.h.b16 %v6048
        %v6405 = vunpack.c.l.b16 %v6049
        %v6406 = vunpack.c.h.b16 %v6049
        %v6407 = vunpack.c.l.b16 %v6050
        %v6408 = vunpack.c.h.b16 %v6050
        %v6409 = vunpack.c.l.b16 %v6051
        %v6410 = vunpack.c.h.b16 %v6051
        %v6411 = vunpack.c.l.b16 %v6052
        %v6412 = vunpack.c.h.b16 %v6052
        %v6413 = vunpack.c.l.b16 %v6053
        %v6414 = vunpack.c.h.b16 %v6053
        %v6415 = vunpack.c.l.b16 %v6054
        %v6416 = vunpack.c.h.b16 %v6054
        %v6417 = vunpack.c.l.b16 %v6055
        %v6418 = vunpack.c.h.b16 %v6055
        %v6419 = vunpack.c.l.b16 %v6056
        %v6420 = vunpack.c.h.b16 %v6056
        %v6421 = vunpack.c.l.b16 %v6057
        %v6422 = vunpack.c.h.b16 %v6057
        %v6423 = vunpack.c.l.b16 %v6058
        %v6424 = vunpack.c.h.b16 %v6058
        %v6425 = vunpack.c.l.b16 %v6059
        %v6426 = vunpack.c.h.b16 %v6059
        %v6427 = vunpack.c.l.b16 %v6060
        %v6428 = vunpack.c.h.b16 %v6060
        %v6429 = vunpack.c.l.b16 %v6061
        %v6430 = vunpack.c.h.b16 %v6061
        %v6431 = vunpack.c.l.b16 %v6062
        %v6432 = vunpack.c.h.b16 %v6062
        %v6433 = vunpack.c.l.b16 %v6063
        %v6434 = vunpack.c.h.b16 %v6063
        %v6435 = vunpack.c.l.b16 %v6064
        %v6436 = vunpack.c.h.b16 %v6064
        %v6437 = vunpack.c.l.b16 %v6065
        %v6438 = vunpack.c.h.b16 %v6065
        %v6439 = vunpack.c.l.b16 %v6066
        %v6440 = vunpack.c.h.b16 %v6066
        %v6441 = vunpack.c.l.b16 %v6067
        %v6442 = vunpack.c.h.b16 %v6067
        %v6443 = vunpack.c.l.b16 %v6068
        %v6444 = vunpack.c.h.b16 %v6068
        %v6445 = vunpack.c.l.b16 %v6069
        %v6446 = vunpack.c.h.b16 %v6069
        %v6447 = vunpack.c.l.b16 %v6070
        %v6448 = vunpack.c.h.b16 %v6070
        %v6449 = vunpack.c.l.b16 %v6071
        %v6450 = vunpack.c.h.b16 %v6071
        %v6451 = vunpack.c.l.b16 %v6072
        %v6452 = vunpack.c.h.b16 %v6072
        %v6453 = vunpack.c.l.b16 %v6073
        %v6454 = vunpack.c.h.b16 %v6073
        %v6455 = vunpack.c.l.b16 %v6074
        %v6456 = vunpack.c.h.b16 %v6074
        %v6457 = vunpack.c.l.b16 %v6075
        %v6458 = vunpack.c.h.b16 %v6075
        %v6459 = vunpack.c.l.b16 %v6076
        %v6460 = vunpack.c.h.b16 %v6076
        %v6461 = vpack.c.b16 %v6207, %v6205
        %v6462 = vpack.c.b16 %v6208, %v6206
        %v6463 = vpack.c.b16 %v6211, %v6209
        %v6464 = vpack.c.b16 %v6212, %v6210
        %v6465 = vpack.c.b16 %v6215, %v6213
        %v6466 = vpack.c.b16 %v6216, %v6214
        %v6467 = vpack.c.b16 %v6219, %v6217
        %v6468 = vpack.c.b16 %v6220, %v6218
        %v6469 = vpack.c.b16 %v6223, %v6221
        %v6470 = vpack.c.b16 %v6224, %v6222
        %v6471 = vpack.c.b16 %v6227, %v6225
        %v6472 = vpack.c.b16 %v6228, %v6226
        %v6473 = vpack.c.b16 %v6231, %v6229
        %v6474 = vpack.c.b16 %v6232, %v6230
        %v6475 = vpack.c.b16 %v6235, %v6233
        %v6476 = vpack.c.b16 %v6236, %v6234
        %v6477 = vpack.c.b16 %v6239, %v6237
        %v6478 = vpack.c.b16 %v6240, %v6238
        %v6479 = vpack.c.b16 %v6243, %v6241
        %v6480 = vpack.c.b16 %v6244, %v6242
        %v6481 = vpack.c.b16 %v6247, %v6245
        %v6482 = vpack.c.b16 %v6248, %v6246
        %v6483 = vpack.c.b16 %v6251, %v6249
        %v6484 = vpack.c.b16 %v6252, %v6250
        %v6485 = vpack.c.b16 %v6255, %v6253
        %v6486 = vpack.c.b16 %v6256, %v6254
        %v6487 = vpack.c.b16 %v6259, %v6257
        %v6488 = vpack.c.b16 %v6260, %v6258
        %v6489 = vpack.c.b16 %v6263, %v6261
        %v6490 = vpack.c.b16 %v6264, %v6262
        %v6491 = vpack.c.b16 %v6267, %v6265
        %v6492 = vpack.c.b16 %v6268, %v6266
        %v6493 = vpack.c.b16 %v6271, %v6269
        %v6494 = vpack.c.b16 %v6272, %v6270
        %v6495 = vpack.c.b16 %v6275, %v6273
        %v6496 = vpack.c.b16 %v6276, %v6274
        %v6497 = vpack.c.b16 %v6279, %v6277
        %v6498 = vpack.c.b16 %v6280, %v6278
        %v6499 = vpack.c.b16 %v6283, %v6281
        %v6500 = vpack.c.b16 %v6284, %v6282
        %v6501 = vpack.c.b16 %v6287, %v6285
        %v6502 = vpack.c.b16 %v6288, %v6286
        %v6503 = vpack.c.b16 %v6291, %v6289
        %v6504 = vpack.c.b16 %v6292, %v6290
        %v6505 = vpack.c.b16 %v6295, %v6293
        %v6506 = vpack.c.b16 %v6296, %v6294
        %v6507 = vpack.c.b16 %v6299, %v6297
        %v6508 = vpack.c.b16 %v6300, %v6298
        %v6509 = vpack.c.b16 %v6303, %v6301
        %v6510 = vpack.c.b16 %v6304, %v6302
        %v6511 = vpack.c.b16 %v6307, %v6305
        %v6512 = vpack.c.b16 %v6308, %v6306
        %v6513 = vpack.c.b16 %v6311, %v6309
        %v6514 = vpack.c.b16 %v6312, %v6310
        %v6515 = vpack.c.b16 %v6315, %v6313
        %v6516 = vpack.c.b16 %v6316, %v6314
        %v6517 = vpack.c.b16 %v6319, %v6317
        %v6518 = vpack.c.b16 %v6320, %v6318
        %v6519 = vpack.c.b16 %v6323, %v6321
        %v6520 = vpack.c.b16 %v6324, %v6322
        %v6521 = vpack.c.b16 %v6327, %v6325
        %v6522 = vpack.c.b16 %v6328, %v6326
        %v6523 = vpack.c.b16 %v6331, %v6329
        %v6524 = vpack.c.b16 %v6332, %v6330
        %v6525 = vpack.c.b16 %v6335, %v6333
        %v6526 = vpack.c.b16 %v6336, %v6334
        %v6527 = vpack.c.b16 %v6339, %v6337
        %v6528 = vpack.c.b16 %v6340, %v6338
        %v6529 = vpack.c.b16 %v6343, %v6341
        %v6530 = vpack.c.b16 %v6344, %v6342
        %v6531 = vpack.c.b16 %v6347, %v6345
        %v6532 = vpack.c.b16 %v6348, %v6346
        %v6533 = vpack.c.b16 %v6351, %v6349
        %v6534 = vpack.c.b16 %v6352, %v6350
        %v6535 = vpack.c.b16 %v6355, %v6353
        %v6536 = vpack.c.b16 %v6356, %v6354
        %v6537 = vpack.c.b16 %v6359, %v6357
        %v6538 = vpack.c.b16 %v6360, %v6358
        %v6539 = vpack.c.b16 %v6363, %v6361
        %v6540 = vpack.c.b16 %v6364, %v6362
        %v6541 = vpack.c.b16 %v6367, %v6365
        %v6542 = vpack.c.b16 %v6368, %v6366
        %v6543 = vpack.c.b16 %v6371, %v6369
        %v6544 = vpack.c.b16 %v6372, %v6370
        %v6545 = vpack.c.b16 %v6375, %v6373
        %v6546 = vpack.c.b16 %v6376, %v6374
        %v6547 = vpack.c.b16 %v6379, %v6377
        %v6548 = vpack.c.b16 %v6380, %v6378
        %v6549 = vpack.c.b16 %v6383, %v6381
        %v6550 = vpack.c.b16 %v6384, %v6382
        %v6551 = vpack.c.b16 %v6387, %v6385
        %v6552 = vpack.c.b16 %v6388, %v6386
        %v6553 = vpack.c.b16 %v6391, %v6389
        %v6554 = vpack.c.b16 %v6392, %v6390
        %v6555 = vpack.c.b16 %v6395, %v6393
        %v6556 = vpack.c.b16 %v6396, %v6394
        %v6557 = vpack.c.b16 %v6399, %v6397
        %v6558 = vpack.c.b16 %v6400, %v6398
        %v6559 = vpack.c.b16 %v6403, %v6401
        %v6560 = vpack.c.b16 %v6404, %v6402
        %v6561 = vpack.c.b16 %v6407, %v6405
        %v6562 = vpack.c.b16 %v6408, %v6406
        %v6563 = vpack.c.b16 %v6411, %v6409
        %v6564 = vpack.c.b16 %v6412, %v6410
        %v6565 = vpack.c.b16 %v6415, %v6413
        %v6566 = vpack.c.b16 %v6416, %v6414
        %v6567 = vpack.c.b16 %v6419, %v6417
        %v6568 = vpack.c.b16 %v6420, %v6418
        %v6569 = vpack.c.b16 %v6423, %v6421
        %v6570 = vpack.c.b16 %v6424, %v6422
        %v6571 = vpack.c.b16 %v6427, %v6425
        %v6572 = vpack.c.b16 %v6428, %v6426
        %v6573 = vpack.c.b16 %v6431, %v6429
        %v6574 = vpack.c.b16 %v6432, %v6430
        %v6575 = vpack.c.b16 %v6435, %v6433
        %v6576 = vpack.c.b16 %v6436, %v6434
        %v6577 = vpack.c.b16 %v6439, %v6437
        %v6578 = vpack.c.b16 %v6440, %v6438
        %v6579 = vpack.c.b16 %v6443, %v6441
        %v6580 = vpack.c.b16 %v6444, %v6442
        %v6581 = vpack.c.b16 %v6447, %v6445
        %v6582 = vpack.c.b16 %v6448, %v6446
        %v6583 = vpack.c.b16 %v6451, %v6449
        %v6584 = vpack.c.b16 %v6452, %v6450
        %v6585 = vpack.c.b16 %v6455, %v6453
        %v6586 = vpack.c.b16 %v6456, %v6454
        %v6587 = vpack.c.b16 %v6459, %v6457
        %v6588 = vpack.c.b16 %v6460, %v6458
        %6717 = vmatpush.bf16.msra.mxu0 %v6475
        %6718 = vmatpush.bf16.msra.mxu0 %v6473
        %6719 = vmatpush.bf16.msra.mxu0 %v6471
        %6720 = vmatpush.bf16.msra.mxu0 %v6469
        %6721 = vmatpush.bf16.msra.mxu0 %v6467
        %6722 = vmatpush.bf16.msra.mxu0 %v6465
        %6723 = vmatpush.bf16.msra.mxu0 %v6463
        %6724 = vmatpush.bf16.msra.mxu0 %v6461
        %6725 = vmatmul.bf16.gmra.mxu0 %v5941
        %v6726 = vpop.f32.mrf.mxu0
        %v6727 = vadd.f32 0.0, %v6726
        %v6728 = vpop.f32.mrf.mxu0
        %v6729 = vadd.f32 0.0, %v6728
        %6730 = vdwg.mxu0
        %6731 = vmatpush.bf16.msra.mxu0 %v6491
        %6732 = vmatpush.bf16.msra.mxu0 %v6489
        %6733 = vmatpush.bf16.msra.mxu0 %v6487
        %6734 = vmatpush.bf16.msra.mxu0 %v6485
        %6735 = vmatpush.bf16.msra.mxu0 %v6483
        %6736 = vmatpush.bf16.msra.mxu0 %v6481
        %6737 = vmatpush.bf16.msra.mxu0 %v6479
        %6738 = vmatpush.bf16.msra.mxu0 %v6477
        %6739 = vmatmul.bf16.gmra.mxu0 %v5942
        %v6740 = vpop.f32.mrf.mxu0
        %v6741 = vadd.f32 %v6727, %v6740
        %v6742 = vpop.f32.mrf.mxu0
        %v6743 = vadd.f32 %v6729, %v6742
        %6744 = vdwg.mxu0
        %6745 = vmatpush.bf16.msra.mxu0 %v6507
        %6746 = vmatpush.bf16.msra.mxu0 %v6505
        %6747 = vmatpush.bf16.msra.mxu0 %v6503
        %6748 = vmatpush.bf16.msra.mxu0 %v6501
        %6749 = vmatpush.bf16.msra.mxu0 %v6499
        %6750 = vmatpush.bf16.msra.mxu0 %v6497
        %6751 = vmatpush.bf16.msra.mxu0 %v6495
        %6752 = vmatpush.bf16.msra.mxu0 %v6493
        %6753 = vmatmul.bf16.gmra.mxu0 %v5943
        %v6754 = vpop.f32.mrf.mxu0
        %v6755 = vadd.f32 %v6741, %v6754
        %v6756 = vpop.f32.mrf.mxu0
        %v6757 = vadd.f32 %v6743, %v6756
        %6758 = vdwg.mxu0
        %6759 = vmatpush.bf16.msra.mxu0 %v6523
        %6760 = vmatpush.bf16.msra.mxu0 %v6521
        %6761 = vmatpush.bf16.msra.mxu0 %v6519
        %6762 = vmatpush.bf16.msra.mxu0 %v6517
        %6763 = vmatpush.bf16.msra.mxu0 %v6515
        %6764 = vmatpush.bf16.msra.mxu0 %v6513
        %6765 = vmatpush.bf16.msra.mxu0 %v6511
        %6766 = vmatpush.bf16.msra.mxu0 %v6509
        %6767 = vmatmul.bf16.gmra.mxu0 %v5944
        %v6768 = vpop.f32.mrf.mxu0
        %v6769 = vadd.f32 %v6755, %v6768
        %v6770 = vpop.f32.mrf.mxu0
        %v6771 = vadd.f32 %v6757, %v6770
        %6772 = vdwg.mxu0
        %6773 = vmatpush.bf16.msra.mxu0 %v6539
        %6774 = vmatpush.bf16.msra.mxu0 %v6537
        %6775 = vmatpush.bf16.msra.mxu0 %v6535
        %6776 = vmatpush.bf16.msra.mxu0 %v6533
        %6777 = vmatpush.bf16.msra.mxu0 %v6531
        %6778 = vmatpush.bf16.msra.mxu0 %v6529
        %6779 = vmatpush.bf16.msra.mxu0 %v6527
        %6780 = vmatpush.bf16.msra.mxu0 %v6525
        %6781 = vmatmul.bf16.gmra.mxu0 %v5945
        %v6782 = vpop.f32.mrf.mxu0
        %v6783 = vadd.f32 %v6769, %v6782
        %v6784 = vpop.f32.mrf.mxu0
        %v6785 = vadd.f32 %v6771, %v6784
        %6786 = vdwg.mxu0
        %6787 = vmatpush.bf16.msra.mxu0 %v6555
        %6788 = vmatpush.bf16.msra.mxu0 %v6553
        %6789 = vmatpush.bf16.msra.mxu0 %v6551
        %6790 = vmatpush.bf16.msra.mxu0 %v6549
        %6791 = vmatpush.bf16.msra.mxu0 %v6547
        %6792 = vmatpush.bf16.msra.mxu0 %v6545
        %6793 = vmatpush.bf16.msra.mxu0 %v6543
        %6794 = vmatpush.bf16.msra.mxu0 %v6541
        %6795 = vmatmul.bf16.gmra.mxu0 %v5946
        %v6796 = vpop.f32.mrf.mxu0
        %v6797 = vadd.f32 %v6783, %v6796
        %v6798 = vpop.f32.mrf.mxu0
        %v6799 = vadd.f32 %v6785, %v6798
        %6800 = vdwg.mxu0
        %6801 = vmatpush.bf16.msra.mxu0 %v6571
        %6802 = vmatpush.bf16.msra.mxu0 %v6569
        %6803 = vmatpush.bf16.msra.mxu0 %v6567
        %6804 = vmatpush.bf16.msra.mxu0 %v6565
        %6805 = vmatpush.bf16.msra.mxu0 %v6563
        %6806 = vmatpush.bf16.msra.mxu0 %v6561
        %6807 = vmatpush.bf16.msra.mxu0 %v6559
        %6808 = vmatpush.bf16.msra.mxu0 %v6557
        %6809 = vmatmul.bf16.gmra.mxu0 %v5947
        %v6810 = vpop.f32.mrf.mxu0
        %v6811 = vadd.f32 %v6797, %v6810
        %v6812 = vpop.f32.mrf.mxu0
        %v6813 = vadd.f32 %v6799, %v6812
        %6814 = vdwg.mxu0
        %6815 = vmatpush.bf16.msra.mxu0 %v6587
        %6816 = vmatpush.bf16.msra.mxu0 %v6585
        %6817 = vmatpush.bf16.msra.mxu0 %v6583
        %6818 = vmatpush.bf16.msra.mxu0 %v6581
        %6819 = vmatpush.bf16.msra.mxu0 %v6579
        %6820 = vmatpush.bf16.msra.mxu0 %v6577
        %6821 = vmatpush.bf16.msra.mxu0 %v6575
        %6822 = vmatpush.bf16.msra.mxu0 %v6573
        %6823 = vmatmul.bf16.gmra.mxu0 %v5948
        %v6824 = vpop.f32.mrf.mxu0
        %v6825 = vadd.f32 %v6811, %v6824
        %v6826 = vpop.f32.mrf.mxu0
        %v6827 = vadd.f32 %v6813, %v6826
        %6828 = vdwg.mxu0
        %6829 = vmatpush.bf16.msra.mxu0 %v6476
        %6830 = vmatpush.bf16.msra.mxu0 %v6474
        %6831 = vmatpush.bf16.msra.mxu0 %v6472
        %6832 = vmatpush.bf16.msra.mxu0 %v6470
        %6833 = vmatpush.bf16.msra.mxu0 %v6468
        %6834 = vmatpush.bf16.msra.mxu0 %v6466
        %6835 = vmatpush.bf16.msra.mxu0 %v6464
        %6836 = vmatpush.bf16.msra.mxu0 %v6462
        %6837 = vmatmul.bf16.gmra.mxu0 %v5941
        %v6838 = vpop.f32.mrf.mxu0
        %v6839 = vadd.f32 0.0, %v6838
        %v6840 = vpop.f32.mrf.mxu0
        %v6841 = vadd.f32 0.0, %v6840
        %6842 = vdwg.mxu0
        %6843 = vmatpush.bf16.msra.mxu0 %v6492
        %6844 = vmatpush.bf16.msra.mxu0 %v6490
        %6845 = vmatpush.bf16.msra.mxu0 %v6488
        %6846 = vmatpush.bf16.msra.mxu0 %v6486
        %6847 = vmatpush.bf16.msra.mxu0 %v6484
        %6848 = vmatpush.bf16.msra.mxu0 %v6482
        %6849 = vmatpush.bf16.msra.mxu0 %v6480
        %6850 = vmatpush.bf16.msra.mxu0 %v6478
        %6851 = vmatmul.bf16.gmra.mxu0 %v5942
        %v6852 = vpop.f32.mrf.mxu0
        %v6853 = vadd.f32 %v6839, %v6852
        %v6854 = vpop.f32.mrf.mxu0
        %v6855 = vadd.f32 %v6841, %v6854
        %6856 = vdwg.mxu0
        %6857 = vmatpush.bf16.msra.mxu0 %v6508
        %6858 = vmatpush.bf16.msra.mxu0 %v6506
        %6859 = vmatpush.bf16.msra.mxu0 %v6504
        %6860 = vmatpush.bf16.msra.mxu0 %v6502
        %6861 = vmatpush.bf16.msra.mxu0 %v6500
        %6862 = vmatpush.bf16.msra.mxu0 %v6498
        %6863 = vmatpush.bf16.msra.mxu0 %v6496
        %6864 = vmatpush.bf16.msra.mxu0 %v6494
        %6865 = vmatmul.bf16.gmra.mxu0 %v5943
        %v6866 = vpop.f32.mrf.mxu0
        %v6867 = vadd.f32 %v6853, %v6866
        %v6868 = vpop.f32.mrf.mxu0
        %v6869 = vadd.f32 %v6855, %v6868
        %6870 = vdwg.mxu0
        %6871 = vmatpush.bf16.msra.mxu0 %v6524
        %6872 = vmatpush.bf16.msra.mxu0 %v6522
        %6873 = vmatpush.bf16.msra.mxu0 %v6520
        %6874 = vmatpush.bf16.msra.mxu0 %v6518
        %6875 = vmatpush.bf16.msra.mxu0 %v6516
        %6876 = vmatpush.bf16.msra.mxu0 %v6514
        %6877 = vmatpush.bf16.msra.mxu0 %v6512
        %6878 = vmatpush.bf16.msra.mxu0 %v6510
        %6879 = vmatmul.bf16.gmra.mxu0 %v5944
        %v6880 = vpop.f32.mrf.mxu0
        %v6881 = vadd.f32 %v6867, %v6880
        %v6882 = vpop.f32.mrf.mxu0
        %v6883 = vadd.f32 %v6869, %v6882
        %6884 = vdwg.mxu0
        %6885 = vmatpush.bf16.msra.mxu0 %v6540
        %6886 = vmatpush.bf16.msra.mxu0 %v6538
        %6887 = vmatpush.bf16.msra.mxu0 %v6536
        %6888 = vmatpush.bf16.msra.mxu0 %v6534
        %6889 = vmatpush.bf16.msra.mxu0 %v6532
        %6890 = vmatpush.bf16.msra.mxu0 %v6530
        %6891 = vmatpush.bf16.msra.mxu0 %v6528
        %6892 = vmatpush.bf16.msra.mxu0 %v6526
        %6893 = vmatmul.bf16.gmra.mxu0 %v5945
        %v6894 = vpop.f32.mrf.mxu0
        %v6895 = vadd.f32 %v6881, %v6894
        %v6896 = vpop.f32.mrf.mxu0
        %v6897 = vadd.f32 %v6883, %v6896
        %6898 = vdwg.mxu0
        %6899 = vmatpush.bf16.msra.mxu0 %v6556
        %6900 = vmatpush.bf16.msra.mxu0 %v6554
        %6901 = vmatpush.bf16.msra.mxu0 %v6552
        %6902 = vmatpush.bf16.msra.mxu0 %v6550
        %6903 = vmatpush.bf16.msra.mxu0 %v6548
        %6904 = vmatpush.bf16.msra.mxu0 %v6546
        %6905 = vmatpush.bf16.msra.mxu0 %v6544
        %6906 = vmatpush.bf16.msra.mxu0 %v6542
        %6907 = vmatmul.bf16.gmra.mxu0 %v5946
        %v6908 = vpop.f32.mrf.mxu0
        %v6909 = vadd.f32 %v6895, %v6908
        %v6910 = vpop.f32.mrf.mxu0
        %v6911 = vadd.f32 %v6897, %v6910
        %6912 = vdwg.mxu0
        %6913 = vmatpush.bf16.msra.mxu0 %v6572
        %6914 = vmatpush.bf16.msra.mxu0 %v6570
        %6915 = vmatpush.bf16.msra.mxu0 %v6568
        %6916 = vmatpush.bf16.msra.mxu0 %v6566
        %6917 = vmatpush.bf16.msra.mxu0 %v6564
        %6918 = vmatpush.bf16.msra.mxu0 %v6562
        %6919 = vmatpush.bf16.msra.mxu0 %v6560
        %6920 = vmatpush.bf16.msra.mxu0 %v6558
        %6921 = vmatmul.bf16.gmra.mxu0 %v5947
        %v6922 = vpop.f32.mrf.mxu0
        %v6923 = vadd.f32 %v6909, %v6922
        %v6924 = vpop.f32.mrf.mxu0
        %v6925 = vadd.f32 %v6911, %v6924
        %6926 = vdwg.mxu0
        %6927 = vmatpush.bf16.msra.mxu0 %v6588
        %6928 = vmatpush.bf16.msra.mxu0 %v6586
        %6929 = vmatpush.bf16.msra.mxu0 %v6584
        %6930 = vmatpush.bf16.msra.mxu0 %v6582
        %6931 = vmatpush.bf16.msra.mxu0 %v6580
        %6932 = vmatpush.bf16.msra.mxu0 %v6578
        %6933 = vmatpush.bf16.msra.mxu0 %v6576
        %6934 = vmatpush.bf16.msra.mxu0 %v6574
        %6935 = vmatmul.bf16.gmra.mxu0 %v5948
        %v6936 = vpop.f32.mrf.mxu0
        %v6937 = vadd.f32 %v6923, %v6936
        %v6938 = vpop.f32.mrf.mxu0
        %v6939 = vadd.f32 %v6925, %v6938
        %6940 = vdwg.mxu0
        %v6941 = vmax.f32 %v6825, 0.0
        %v6942 = vmax.f32 %v6937, 0.0
        %v6943 = vmax.f32 %v6827, 0.0
        %v6944 = vmax.f32 %v6939, 0.0
        %v6945 = vld [vmem:[%s1175] sm:$0x3]
        %v6946 = vld [vmem:[%s1185] sm:$0x3]
        %v6947 = vadd.f32 %v6941, %v6942
        %6948 = vadd.xlane.f32.xlu0 %v6947
        %v6949 = vpop.xlane.xlu0 %6948
        %v6950 = vadd.f32 %v6943, %v6944
        %6951 = vadd.xlane.f32.xlu0 %v6950
        %v6952 = vpop.xlane.xlu0 %6951
        %v6953 = vmul.f32 %v6949, %v3114
        %v6954 = vmul.f32 %v6952, %v3114
        %v6955 = vsub.f32 %v6941, %v6953
        %v6956 = vsub.f32 %v6942, %v6953
        %v6957 = vsub.f32 %v6943, %v6954
        %v6958 = vsub.f32 %v6944, %v6954
        %v6959 = vmul.f32 %v6955, %v6955
        %v6960 = vmul.f32 %v6956, %v6956
        %v6961 = vmul.f32 %v6957, %v6957
        %v6962 = vmul.f32 %v6958, %v6958
        %v6963 = vadd.f32 %v6959, %v6960
        %6964 = vadd.xlane.f32.xlu0 %v6963
        %v6965 = vpop.xlane.xlu0 %6964
        %v6966 = vadd.f32 %v6961, %v6962
        %6967 = vadd.xlane.f32.xlu0 %v6966
        %v6968 = vpop.xlane.xlu0 %6967
        %v6969 = vmul.f32 %v6965, %v3114
        %v6970 = vmul.f32 %v6968, %v3114
        %v6971 = vadd.f32 %v6969, 1e-05
        %v6972 = vadd.f32 %v6970, 1e-05
        %v6973 = vrsqrt.pop %v6971
        %v6974 = vmul.f32 %v6973, %v6971
        %v6975 = vmul.f32 %v6974, %v6973
        %v6976 = vmul.f32 0.5, %v6975
        %v6977 = vsub.f32 1.5, %v6976
        %v6978 = vmul.f32 %v6973, %v6977
        %vm6979 = vweird.f32 %v6971
        %vm6980 = vweird.f32 %v6973
        %vm6981 = vmor %vm6979, %vm6980
        %v6982 = vsel %vm6981, %v6973, %v6978
        %v6983 = vrsqrt.pop %v6972
        %v6984 = vmul.f32 %v6983, %v6972
        %v6985 = vmul.f32 %v6984, %v6983
        %v6986 = vmul.f32 0.5, %v6985
        %v6987 = vsub.f32 1.5, %v6986
        %v6988 = vmul.f32 %v6983, %v6987
        %vm6989 = vweird.f32 %v6972
        %vm6990 = vweird.f32 %v6983
        %vm6991 = vmor %vm6989, %vm6990
        %v6992 = vsel %vm6991, %v6983, %v6988
        %v6993 = vmul.f32 %v6955, %v6982
        %v6994 = vmul.f32 %v6956, %v6982
        %v6995 = vmul.f32 %v6957, %v6992
        %v6996 = vmul.f32 %v6958, %v6992
        %v6998 = vperm.slane %v6945, 0
        %v6999 = vperm.slane %v6945, 1
        %v7002 = vmul.f32 %v6993, %v6998
        %v7003 = vmul.f32 %v6994, %v6999
        %v7004 = vmul.f32 %v6995, %v6998
        %v7005 = vmul.f32 %v6996, %v6999
        %v7007 = vperm.slane %v6946, 0
        %v7008 = vperm.slane %v6946, 1
        %v7011 = vadd.f32 %v7002, %v7007
        %v7012 = vadd.f32 %v7003, %v7008
        %v7013 = vadd.f32 %v7004, %v7007
        %v7014 = vadd.f32 %v7005, %v7008
        %v7015 = vadd.f32 %v4927, %v7011
        %v7016 = vadd.f32 %v4928, %v7012
        %v7017 = vadd.f32 %v4929, %v7013
        %v7018 = vadd.f32 %v4930, %v7014
        %7019 = vst [vmem:[#allocation2] sm:$0xff] %v7015
        %7020 = vst [vmem:[#allocation2 + $0x8] sm:$0xff] %v7016
        %7021 = vst [vmem:[#allocation2 + $0x10] sm:$0xff] %v7017
        %7022 = vst [vmem:[#allocation2 + $0x18] sm:$0xff] %v7018
        %p7023 = scmp.eq.s32.totalorder %s60, 3
        // Predicated region
        $region189: #{decoder_forward.1} parent=103 // pred_check
          %p7024 = pneg %p7023
        $region190: #{decoder_forward.1} parent=103 // pred_check_branch
          %7026 = sbr.rel (%p7024) target = $region192
        $region191: #{decoder_forward.1} parent=103 // pred_region
          %v7027 = vpack.c.bf16 %v7017, %v7015
          %v7028 = vpack.c.bf16 %v7018, %v7016
          %v7029 = vld [vmem:[#allocation33] sm:$0xf]
          %v7030 = vld [vmem:[#allocation33 + $0x4] sm:$0xf]
          %v7031 = vld [vmem:[#allocation33 + $0x8] sm:$0xf]
          %v7032 = vld [vmem:[#allocation33 + $0xc] sm:$0xf]
          %v7033 = vld [vmem:[#allocation33 + $0x10] sm:$0xf]
          %v7034 = vld [vmem:[#allocation33 + $0x14] sm:$0xf]
          %v7035 = vld [vmem:[#allocation33 + $0x18] sm:$0xf]
          %v7036 = vld [vmem:[#allocation33 + $0x1c] sm:$0xf]
          %v7037 = vld [vmem:[#allocation33 + $0x20] sm:$0xf]
          %v7038 = vld [vmem:[#allocation33 + $0x24] sm:$0xf]
          %v7039 = vld [vmem:[#allocation33 + $0x28] sm:$0xf]
          %v7040 = vld [vmem:[#allocation33 + $0x2c] sm:$0xf]
          %v7041 = vld [vmem:[#allocation33 + $0x30] sm:$0xf]
          %v7042 = vld [vmem:[#allocation33 + $0x34] sm:$0xf]
          %v7043 = vld [vmem:[#allocation33 + $0x38] sm:$0xf]
          %v7044 = vld [vmem:[#allocation33 + $0x3c] sm:$0xf]
          %v7045 = vld [vmem:[#allocation33 + $0x40] sm:$0xf]
          %v7046 = vld [vmem:[#allocation33 + $0x44] sm:$0xf]
          %v7047 = vld [vmem:[#allocation33 + $0x48] sm:$0xf]
          %v7048 = vld [vmem:[#allocation33 + $0x4c] sm:$0xf]
          %v7049 = vld [vmem:[#allocation33 + $0x50] sm:$0xf]
          %v7050 = vld [vmem:[#allocation33 + $0x54] sm:$0xf]
          %v7051 = vld [vmem:[#allocation33 + $0x58] sm:$0xf]
          %v7052 = vld [vmem:[#allocation33 + $0x5c] sm:$0xf]
          %v7053 = vld [vmem:[#allocation33 + $0x60] sm:$0xf]
          %v7054 = vld [vmem:[#allocation33 + $0x64] sm:$0xf]
          %v7055 = vld [vmem:[#allocation33 + $0x68] sm:$0xf]
          %v7056 = vld [vmem:[#allocation33 + $0x6c] sm:$0xf]
          %v7057 = vld [vmem:[#allocation33 + $0x70] sm:$0xf]
          %v7058 = vld [vmem:[#allocation33 + $0x74] sm:$0xf]
          %v7059 = vld [vmem:[#allocation33 + $0x78] sm:$0xf]
          %v7060 = vld [vmem:[#allocation33 + $0x7c] sm:$0xf]
          %v7093 = vunpack.c.l.b16 %v7029
          %v7094 = vunpack.c.l.b16 %v7030
          %v7095 = vunpack.c.l.b16 %v7031
          %v7096 = vunpack.c.l.b16 %v7032
          %v7097 = vunpack.c.l.b16 %v7033
          %v7098 = vunpack.c.l.b16 %v7034
          %v7099 = vunpack.c.l.b16 %v7035
          %v7100 = vunpack.c.l.b16 %v7036
          %v7101 = vunpack.c.l.b16 %v7037
          %v7102 = vunpack.c.l.b16 %v7038
          %v7103 = vunpack.c.l.b16 %v7039
          %v7104 = vunpack.c.l.b16 %v7040
          %v7105 = vunpack.c.l.b16 %v7041
          %v7106 = vunpack.c.l.b16 %v7042
          %v7107 = vunpack.c.l.b16 %v7043
          %v7108 = vunpack.c.l.b16 %v7044
          %v7109 = vunpack.c.l.b16 %v7045
          %v7110 = vunpack.c.l.b16 %v7046
          %v7111 = vunpack.c.l.b16 %v7047
          %v7112 = vunpack.c.l.b16 %v7048
          %v7113 = vunpack.c.l.b16 %v7049
          %v7114 = vunpack.c.l.b16 %v7050
          %v7115 = vunpack.c.l.b16 %v7051
          %v7116 = vunpack.c.l.b16 %v7052
          %v7117 = vunpack.c.l.b16 %v7053
          %v7118 = vunpack.c.l.b16 %v7054
          %v7119 = vunpack.c.l.b16 %v7055
          %v7120 = vunpack.c.l.b16 %v7056
          %v7121 = vunpack.c.l.b16 %v7057
          %v7122 = vunpack.c.l.b16 %v7058
          %v7123 = vunpack.c.l.b16 %v7059
          %v7124 = vunpack.c.l.b16 %v7060
          %v7125 = vpack.c.b16 %v7094, %v7093
          %v7126 = vpack.c.b16 %v7096, %v7095
          %v7127 = vpack.c.b16 %v7098, %v7097
          %v7128 = vpack.c.b16 %v7100, %v7099
          %v7129 = vpack.c.b16 %v7102, %v7101
          %v7130 = vpack.c.b16 %v7104, %v7103
          %v7131 = vpack.c.b16 %v7106, %v7105
          %v7132 = vpack.c.b16 %v7108, %v7107
          %v7133 = vpack.c.b16 %v7110, %v7109
          %v7134 = vpack.c.b16 %v7112, %v7111
          %v7135 = vpack.c.b16 %v7114, %v7113
          %v7136 = vpack.c.b16 %v7116, %v7115
          %v7137 = vpack.c.b16 %v7118, %v7117
          %v7138 = vpack.c.b16 %v7120, %v7119
          %v7139 = vpack.c.b16 %v7122, %v7121
          %v7140 = vpack.c.b16 %v7124, %v7123
          %7157 = vmatpush.bf16.msra.mxu0 %v7132
          %7158 = vmatpush.bf16.msra.mxu0 %v7131
          %7159 = vmatpush.bf16.msra.mxu0 %v7130
          %7160 = vmatpush.bf16.msra.mxu0 %v7129
          %7161 = vmatpush.bf16.msra.mxu0 %v7128
          %7162 = vmatpush.bf16.msra.mxu0 %v7127
          %7163 = vmatpush.bf16.msra.mxu0 %v7126
          %7164 = vmatpush.bf16.msra.mxu0 %v7125
          %7165 = vmatmul.bf16.gmra.mxu0 %v7027
          %v7166 = vpop.f32.mrf.mxu0
          %v7167 = vadd.f32 0.0, %v7166
          %v7168 = vpop.f32.mrf.mxu0
          %v7169 = vadd.f32 0.0, %v7168
          %7170 = vdwg.mxu0
          %7171 = vmatpush.bf16.msra.mxu0 %v7140
          %7172 = vmatpush.bf16.msra.mxu0 %v7139
          %7173 = vmatpush.bf16.msra.mxu0 %v7138
          %7174 = vmatpush.bf16.msra.mxu0 %v7137
          %7175 = vmatpush.bf16.msra.mxu0 %v7136
          %7176 = vmatpush.bf16.msra.mxu0 %v7135
          %7177 = vmatpush.bf16.msra.mxu0 %v7134
          %7178 = vmatpush.bf16.msra.mxu0 %v7133
          %7179 = vmatmul.bf16.gmra.mxu0 %v7028
          %v7180 = vpop.f32.mrf.mxu0
          %v7181 = vadd.f32 %v7167, %v7180
          %v7182 = vpop.f32.mrf.mxu0
          %v7183 = vadd.f32 %v7169, %v7182
          %7184 = vdwg.mxu0
          %7185 = vst [vmem:[#allocation35] sm:$0xff] %v7181
          %7186 = vst [vmem:[#allocation35 + $0x8] sm:$0xff] %v7183
        $region192: #{decoder_forward.1} parent=103 // pred_fallthru
          _
        // Predicated region
        $region193: #{decoder_forward.1} parent=103 // pred_check
          %p7187 = pneg %p594
        $region194: #{decoder_forward.1} parent=103 // pred_check_branch
          %7189 = sbr.rel (%p7187) target = $region196
        $region195: #{decoder_forward.1} parent=103 // pred_region
          %7191 = vsyncadd [#allocation5], 0
          %s7192 = sshll.u32 [#allocation35], 4
          %s7193 = int_to_ptr.vmem [resolvable:$true] %s7192
          %s7194 = sshll.u32 %s21, 4
          %s7195 = int_to_ptr.hbm [resolvable:$true] %s7194
          %7200 = dma.vmem_to_hbm [thread:$0]  %s7193, 256, %s7195, [#allocation5], 128, 128, 8
        $region196: #{decoder_forward.1} parent=103 // pred_fallthru
          _
        // Predicated region
        $region197: #{decoder_forward.1} parent=103 // pred_check
          %p7201 = pneg %p594
        $region198: #{decoder_forward.1} parent=103 // pred_check_branch
          %7203 = sbr.rel (%p7201) target = $region200
        $region199: #{decoder_forward.1} parent=103 // pred_region
          %7205 = dma.done [#allocation5], 256
        $region200: #{decoder_forward.1} parent=103 // pred_fallthru
          _
      $region104: #{decoder_forward.1} parent=5 // pred_fallthru
        _
      %p7206 = scmp.le.s32.totalorder 2, %s55
      // Predicated region
      $region201: #{decoder_forward.1} parent=5 // pred_check
        %p7207 = pneg %p7206
      $region202: #{decoder_forward.1} parent=5 // pred_check_branch
        %7209 = sbr.rel (%p7207) target = $region204
      $region203: #{decoder_forward.1} parent=5 // pred_region
        %s7210 = ssub.s32 %s55, 2
      $region204: #{decoder_forward.1} parent=5 // pred_fallthru
        _
    $region6: #{decoder_forward.1} parent=1 // loop_footer
      %s59 = sadd.s32 1, %s55
    $region7: #{decoder_forward.1} parent=1 // loop_footer_branch
      %54 = sbr.rel target = $region3
    $region8: #{decoder_forward.1} parent=1 // loop_exit
      _
    %7211 = vsyncpa [#allocation4], 1
    %s7212 = scalar_lea.sflag [#allocation4], 1
    %7213 = vsyncpa %s7212, 1
    %7214 = vsyncpa [#allocation7], 1
    %7215 = vsyncpa [#allocation10], 1
    %s7216 = scalar_lea.sflag [#allocation10], 1
    %7217 = vsyncpa %s7216, 1
    %7218 = vsyncpa [#allocation13], 1
    %s7219 = scalar_lea.sflag [#allocation13], 1
    %7220 = vsyncpa %s7219, 1
    %7221 = vsyncpa [#allocation16], 1
    %s7222 = scalar_lea.sflag [#allocation16], 1
    %7223 = vsyncpa %s7222, 1
    %7224 = vsyncpa [#allocation19], 1
    %s7225 = scalar_lea.sflag [#allocation19], 1
    %7226 = vsyncpa %s7225, 1
    %7227 = vsyncpa [#allocation22], 1
    %s7228 = scalar_lea.sflag [#allocation22], 1
    %7229 = vsyncpa %s7228, 1
    %7230 = vsyncpa [#allocation25], 1
    %s7231 = scalar_lea.sflag [#allocation25], 1
    %7232 = vsyncpa %s7231, 1
    %7233 = vsyncpa [#allocation28], 1
    %s7234 = scalar_lea.sflag [#allocation28], 1
    %7235 = vsyncpa %s7234, 1
    %7236 = vsyncpa [#allocation31], 1
    %s7237 = scalar_lea.sflag [#allocation31], 1
    %7238 = vsyncpa %s7237, 1
    %7239 = vsyncpa [#allocation34], 1
    %7240 = vsyncpa [#allocation5], 1
    %s7241 = scalar_lea.sflag [#allocation5], 1
    %7242 = vsyncpa %s7241, 1

</llo_original>
